<compile_context>
chip_gen: v7x
topology: tpu7x:2x2x1
jax: 0.10.0
libtpu: 0.0.40
codegen_flags: <defaults>
</compile_context>

<pallas_src>
import functools

import jax
import jax.numpy as jnp
from jax.experimental import pallas as pl
from jax.experimental.pallas import tpu as pltpu


# -----------------------------------------------------------------------------
# Kernel
# -----------------------------------------------------------------------------
def pose_refine_kernel(B, N,
                       xe_ref, w_bd1_ref, b_bd1_ref,
                       w2x_ref, b2x_ref, w2e_ref, b2e_ref,
                       w5a_ref, w5bx_ref, w5be_ref, b5_ref,
                       w6_hbm_ref, b6_ref, wr1_hbm_ref, br1_ref,
                       wr2r_ref, b2r_ref, wr2t_ref, b2t_ref,
                       wr3_ref, br3_ref,
                       out_ref,
                       w6_vmem, wr1_vmem, dma_sems):
    # Kick off prefetch of the two largest weights (HBM -> VMEM) so their DMA
    # overlaps the conv1..conv5 matmuls.
    w6_cp = pltpu.make_async_copy(w6_hbm_ref, w6_vmem, dma_sems.at[0])
    wr1_cp = pltpu.make_async_copy(wr1_hbm_ref, wr1_vmem, dma_sems.at[1])
    w6_cp.start()
    wr1_cp.start()

    def mm(a_bf16, w_bf16):
        # bf16 operands, f32 accumulation on the MXU.
        return jnp.dot(a_bf16, w_bf16, preferred_element_type=jnp.float32)

    relu = lambda v: jnp.maximum(v, 0.0)
    bf16 = lambda v: v.astype(jnp.bfloat16)

    xe = bf16(xe_ref[...])                                            # (BN, 64)

    # conv1 + e_conv1 fused (block-diagonal, K padded to 64) -> pointfeat_1.
    pf1 = relu(mm(xe, w_bd1_ref[...]) + b_bd1_ref[...])               # (BN, 128) f32
    pf1_bf = bf16(pf1)                                                # cast once, reused 3x

    # conv2 / e_conv2 as half-K matmuls on the two halves of pf1 (no zero blocks).
    pf2x_bf = bf16(relu(mm(pf1_bf[:, :64], w2x_ref[...]) + b2x_ref[...]))   # (BN, 128)
    pf2e_bf = bf16(relu(mm(pf1_bf[:, 64:], w2e_ref[...]) + b2e_ref[...]))   # (BN, 128)

    # conv5 on cat([pf1, pf2x, pf2e]) as three accumulated matmuls (no concat).
    h5 = relu(mm(pf1_bf, w5a_ref[...]) + mm(pf2x_bf, w5bx_ref[...])
              + mm(pf2e_bf, w5be_ref[...]) + b5_ref[...])             # (BN, 512)
    h5_bf = bf16(h5)

    # conv6 — weight was prefetched; wait only now.
    w6_cp.wait()
    h6_bf = bf16(relu(mm(h5_bf, w6_vmem[...]) + b6_ref[...]))         # (BN, 1024)

    # AvgPool1d(N) per batch as an MXU matmul with an in-kernel 0/1 selector;
    # 1/N applied in f32 after the reduction (exact for any N).
    rows = jax.lax.broadcasted_iota(jnp.int32, (B, B * N), 0)
    cols = jax.lax.broadcasted_iota(jnp.int32, (B, B * N), 1)
    sel = jnp.where((cols >= rows * N) & (cols < (rows + 1) * N),
                    1.0, 0.0).astype(jnp.bfloat16)                    # (B, BN)
    ap = jnp.dot(sel, h6_bf, preferred_element_type=jnp.float32) * (1.0 / N)
    ap_bf = bf16(ap)                                                  # (B, 1024)

    # Fused r/t head.  Layer 1 hstacked (weight prefetched), layer 2 as two
    # half-K matmuls, layer 3 block-diagonal (output halves not lane-aligned).
    wr1_cp.wait()
    h1_bf = bf16(relu(mm(ap_bf, wr1_vmem[...]) + br1_ref[...]))       # (B, 1024) = [rx512|tx512]
    h2r = relu(mm(h1_bf[:, :512], wr2r_ref[...]) + b2r_ref[...])      # (B, 128)
    h2t = relu(mm(h1_bf[:, 512:], wr2t_ref[...]) + b2t_ref[...])      # (B, 128)
    h2_bf = bf16(jnp.concatenate([h2r, h2t], axis=-1))                # lane-aligned halves
    out_ref[...] = mm(h2_bf, wr3_ref[...]) + br3_ref[...]             # (B, 7*num_obj)


# -----------------------------------------------------------------------------
# Wrapper
# -----------------------------------------------------------------------------
def pose_refine_net(x, emb, obj, fused, num_obj):
    """x: (B, N, 3), emb: (B, 32, N), obj: (B, 1) int32 -> (out_rx (1,4), out_tx (1,3))."""
    B, N, _ = x.shape
    BN = B * N

    # Fold batch into M; channels on the lane axis; zero-pad K 35 -> 64.
    x_rows = x.reshape(BN, 3).astype(jnp.float32)
    emb_rows = jnp.transpose(emb, (0, 2, 1)).reshape(BN, 32).astype(jnp.float32)
    xe = jnp.concatenate([x_rows, emb_rows, jnp.zeros((BN, 29), jnp.float32)],
                         axis=-1)                                      # (BN, 64)

    inputs = (xe,) + tuple(fused)
    out_dim = fused[-1].shape[-1]                                      # 7 * num_obj

    vmem_spec = pl.BlockSpec(memory_space=pltpu.MemorySpace.VMEM)
    in_specs = [vmem_spec] * len(inputs)
    in_specs[11] = pl.BlockSpec(memory_space=pl.ANY)   # w6  (512,1024)  -> manual prefetch
    in_specs[13] = pl.BlockSpec(memory_space=pl.ANY)   # wr1 (1024,1024) -> manual prefetch

    kernel = functools.partial(pose_refine_kernel, B, N)
    h3 = pl.pallas_call(
        kernel,
        out_shape=jax.ShapeDtypeStruct((B, out_dim), jnp.float32),
        in_specs=in_specs,
        out_specs=pl.BlockSpec(memory_space=pltpu.MemorySpace.VMEM),
        scratch_shapes=[
            pltpu.VMEM((512, 1024), jnp.bfloat16),     # conv6 weight staging
            pltpu.VMEM((1024, 1024), jnp.bfloat16),    # head layer-1 weight staging
            pltpu.SemaphoreType.DMA((2,)),
        ],
        compiler_params=pltpu.CompilerParams(
            vmem_limit_bytes=32 * 1024 * 1024),
    )(*inputs)

    rx = h3[:, :4 * num_obj].reshape(B, num_obj, 4)
    tx = h3[:, 4 * num_obj:].reshape(B, num_obj, 3)
    # torch.index_select(rx[0], 0, obj[0]) — tiny gather, done in plain JAX.
    out_rx = jnp.take(rx[0], obj[0], axis=0)
    out_tx = jnp.take(tx[0], obj[0], axis=0)
    return out_rx, out_tx


# -----------------------------------------------------------------------------
# Parameters
# -----------------------------------------------------------------------------
def init_params(key, num_obj):
    """PyTorch-style init. Conv1d/Linear weights stored transposed as (Cin, Cout)."""
    specs = [
        ('conv1', 3, 64), ('e_conv1', 32, 64),
        ('conv2', 64, 128), ('e_conv2', 64, 128),
        ('conv5', 384, 512), ('conv6', 512, 1024),
        ('lin1_r', 1024, 512), ('lin1_t', 1024, 512),
        ('lin2_r', 512, 128), ('lin2_t', 512, 128),
        ('lin3_r', 128, 4 * num_obj), ('lin3_t', 128, 3 * num_obj),
    ]
    params = {}
    for name, cin, cout in specs:
        key, kw, kb = jax.random.split(key, 3)
        s = 1.0 / (cin ** 0.5)
        w = jax.random.uniform(kw, (cin, cout), jnp.float32, -s, s)
        b = jax.random.uniform(kb, (cout,), jnp.float32, -s, s)
        params[name] = (w, b)
    return params


def prepare_fused(p):
    """Build fused bf16 weights (block-diag only where needed) and f32 bias rows."""
    bf = lambda w: w.astype(jnp.bfloat16)
    row = lambda b: b.reshape(1, -1).astype(jnp.float32)

    def bd(a, b):
        za = jnp.zeros((a.shape[0], b.shape[1]), a.dtype)
        zb = jnp.zeros((b.shape[0], a.shape[1]), b.dtype)
        return jnp.concatenate([jnp.concatenate([a, za], axis=1),
                                jnp.concatenate([zb, b], axis=1)], axis=0)

    w1, b1 = p['conv1']; we1, be1 = p['e_conv1']
    w2, b2 = p['conv2']; we2, be2 = p['e_conv2']
    w5, b5 = p['conv5']; w6, b6 = p['conv6']
    w1r, b1r = p['lin1_r']; w1t, b1t = p['lin1_t']
    w2r, b2r = p['lin2_r']; w2t, b2t = p['lin2_t']
    w3r, b3r = p['lin3_r']; w3t, b3t = p['lin3_t']

    # Layer 1: block-diagonal (conv1 | e_conv1), K zero-padded 35 -> 64.
    w_bd1 = jnp.zeros((64, 128), jnp.float32)
    w_bd1 = w_bd1.at[0:3, 0:64].set(w1).at[3:35, 64:128].set(we1)
    b_bd1 = row(jnp.concatenate([b1, be1]))

    return (bf(w_bd1), b_bd1,                                           # 1,2
            bf(w2), row(b2), bf(we2), row(be2),                         # 3..6  conv2 / e_conv2
            bf(w5[:128]), bf(w5[128:256]), bf(w5[256:384]), row(b5),    # 7..10 conv5 split by K
            bf(w6), row(b6),                                            # 11,12 conv6 (HBM / prefetched)
            bf(jnp.concatenate([w1r, w1t], axis=1)),                    # 13    head L1 (HBM / prefetched)
            row(jnp.concatenate([b1r, b1t])),                           # 14
            bf(w2r), row(b2r), bf(w2t), row(b2t),                       # 15..18 head L2 halves
            bf(bd(w3r, w3t)), row(jnp.concatenate([b3r, b3t])))         # 19,20 head L3 block-diag


# -----------------------------------------------------------------------------
# Pure-JAX f32 reference (mirrors the PyTorch forward exactly)
# -----------------------------------------------------------------------------
def pose_refine_net_reference(x, emb, obj, p, num_obj):
    B, N, _ = x.shape
    xc = jnp.transpose(x, (0, 2, 1))                                   # (B, 3, N)

    def conv(h, wb):
        w, b = wb
        return jax.nn.relu(jnp.einsum('bcn,cd->bdn', h, w) + b[None, :, None])

    hx = conv(xc, p['conv1'])
    he = conv(emb, p['e_conv1'])
    pf1 = jnp.concatenate([hx, he], axis=1)
    hx = conv(hx, p['conv2'])
    he = conv(he, p['e_conv2'])
    pf2 = jnp.concatenate([hx, he], axis=1)
    pf3 = jnp.concatenate([pf1, pf2], axis=1)
    h5 = conv(pf3, p['conv5'])
    h6 = conv(h5, p['conv6'])
    ap = jnp.mean(h6, axis=2)                                          # AvgPool1d(N) -> (B, 1024)

    def lin(h, wb, relu=True):
        w, b = wb
        y = h @ w + b
        return jax.nn.relu(y) if relu else y

    rx = lin(ap, p['lin1_r']); tx = lin(ap, p['lin1_t'])
    rx = lin(rx, p['lin2_r']); tx = lin(tx, p['lin2_t'])
    rx = lin(rx, p['lin3_r'], relu=False).reshape(B, num_obj, 4)
    tx = lin(tx, p['lin3_t'], relu=False).reshape(B, num_obj, 3)
    out_rx = jnp.take(rx[0], obj[0], axis=0)
    out_tx = jnp.take(tx[0], obj[0], axis=0)
    return out_rx, out_tx


if __name__ == "__main__":
    key = jax.random.PRNGKey(0)
    k_x, k_e, k_p = jax.random.split(key, 3)

    B = 2
    num_points = 64      # N; AvgPool1d kernel == num_points as in the module
    num_obj = 5

    x = jax.random.normal(k_x, (B, num_points, 3), jnp.float32)       # module input layout
    emb = jax.random.normal(k_e, (B, 32, num_points), jnp.float32)
    obj = jnp.array([[1], [3]], dtype=jnp.int32)                       # (B, 1)

    params = init_params(k_p, num_obj)
    fused = prepare_fused(params)

    out_rx, out_tx = pose_refine_net(x, emb, obj, fused, num_obj)
    out_rx = jax.block_until_ready(out_rx)
    out_tx = jax.block_until_ready(out_tx)
    assert out_rx.shape == (1, 4), out_rx.shape
    assert out_tx.shape == (1, 3), out_tx.shape

    ref_rx, ref_tx = pose_refine_net_reference(x, emb, obj, params, num_obj)
    err_r = float(jnp.max(jnp.abs(out_rx - ref_rx)))
    err_t = float(jnp.max(jnp.abs(out_tx - ref_tx)))
    # bf16 matmul operands with f32 accumulation -> ~1e-2-level agreement.
    assert jnp.allclose(out_rx, ref_rx, atol=3e-2, rtol=3e-2), err_r
    assert jnp.allclose(out_tx, ref_tx, atol=3e-2, rtol=3e-2), err_t

    print("KERNEL_OK")
</pallas_src>

<mosaic_0001>
module attributes {stable_mosaic.version = 11 : i64} {
  func.func @pose_refine_kernel(%arg0: memref<128x64xf32, #tpu.memory_space<vmem>>, %arg1: memref<64x128xbf16, #tpu.memory_space<vmem>>, %arg2: memref<1x128xf32, #tpu.memory_space<vmem>>, %arg3: memref<64x128xbf16, #tpu.memory_space<vmem>>, %arg4: memref<1x128xf32, #tpu.memory_space<vmem>>, %arg5: memref<64x128xbf16, #tpu.memory_space<vmem>>, %arg6: memref<1x128xf32, #tpu.memory_space<vmem>>, %arg7: memref<128x512xbf16, #tpu.memory_space<vmem>>, %arg8: memref<128x512xbf16, #tpu.memory_space<vmem>>, %arg9: memref<128x512xbf16, #tpu.memory_space<vmem>>, %arg10: memref<1x512xf32, #tpu.memory_space<vmem>>, %arg11: memref<512x1024xbf16, #tpu.memory_space<any>>, %arg12: memref<1x1024xf32, #tpu.memory_space<vmem>>, %arg13: memref<1024x1024xbf16, #tpu.memory_space<any>>, %arg14: memref<1x1024xf32, #tpu.memory_space<vmem>>, %arg15: memref<512x128xbf16, #tpu.memory_space<vmem>>, %arg16: memref<1x128xf32, #tpu.memory_space<vmem>>, %arg17: memref<512x128xbf16, #tpu.memory_space<vmem>>, %arg18: memref<1x128xf32, #tpu.memory_space<vmem>>, %arg19: memref<256x35xbf16, #tpu.memory_space<vmem>>, %arg20: memref<1x35xf32, #tpu.memory_space<vmem>>, %arg21: memref<2x35xf32, #tpu.memory_space<vmem>>, %arg22: memref<512x1024xbf16, #tpu.memory_space<vmem>>, %arg23: memref<1024x1024xbf16, #tpu.memory_space<vmem>>, %arg24: memref<2x!tpu.dma_semaphore, #tpu.memory_space<semaphore_mem>>) attributes {dimension_semantics = [], scalar_prefetch = 0 : i64, scratch_operands = 3 : i64, tpu.core_type = #tpu.core_type<tc>} {
    %c0_i32 = arith.constant 0 : i32
    %0 = tpu.memref_slice %arg24[%c0_i32] : memref<2x!tpu.dma_semaphore, #tpu.memory_space<semaphore_mem>> -> memref<1x!tpu.dma_semaphore, #tpu.memory_space<semaphore_mem>>
    %1 = tpu.memref_squeeze %0 : memref<1x!tpu.dma_semaphore, #tpu.memory_space<semaphore_mem>> -> memref<!tpu.dma_semaphore, #tpu.memory_space<semaphore_mem>>
    tpu.enqueue_dma source(%arg11 : memref<512x1024xbf16, #tpu.memory_space<any>>) target(%arg22 : memref<512x1024xbf16, #tpu.memory_space<vmem>>) target_semaphore(%1 : memref<!tpu.dma_semaphore, #tpu.memory_space<semaphore_mem>>)
    %c1_i32 = arith.constant 1 : i32
    %2 = tpu.memref_slice %arg24[%c1_i32] : memref<2x!tpu.dma_semaphore, #tpu.memory_space<semaphore_mem>> -> memref<1x!tpu.dma_semaphore, #tpu.memory_space<semaphore_mem>>
    %3 = tpu.memref_squeeze %2 : memref<1x!tpu.dma_semaphore, #tpu.memory_space<semaphore_mem>> -> memref<!tpu.dma_semaphore, #tpu.memory_space<semaphore_mem>>
    tpu.enqueue_dma source(%arg13 : memref<1024x1024xbf16, #tpu.memory_space<any>>) target(%arg23 : memref<1024x1024xbf16, #tpu.memory_space<vmem>>) target_semaphore(%3 : memref<!tpu.dma_semaphore, #tpu.memory_space<semaphore_mem>>)
    %c0 = arith.constant 0 : index
    %c0_0 = arith.constant 0 : index
    %4 = vector.load %arg0[%c0, %c0_0] : memref<128x64xf32, #tpu.memory_space<vmem>>, vector<128x64xf32>
    %5 = arith.truncf %4 : vector<128x64xf32> to vector<128x64xbf16>
    %c0_1 = arith.constant 0 : index
    %c0_2 = arith.constant 0 : index
    %6 = vector.load %arg1[%c0_1, %c0_2] : memref<64x128xbf16, #tpu.memory_space<vmem>>, vector<64x128xbf16>
    %cst = arith.constant dense<0.000000e+00> : vector<128x128xf32>
    %7 = tpu.matmul %5, %6, %cst {dimension_numbers = #tpu.dot_dimension_numbers<[1], [0], [0], [1], [0, 0, 1, 1], [], []>} : vector<128x64xbf16>, vector<64x128xbf16>, vector<128x128xf32> -> vector<128x128xf32>
    %c0_3 = arith.constant 0 : index
    %c0_4 = arith.constant 0 : index
    %8 = vector.load %arg2[%c0_3, %c0_4] : memref<1x128xf32, #tpu.memory_space<vmem>>, vector<1x128xf32>
    %9 = vector.broadcast %8 : vector<1x128xf32> to vector<128x128xf32>
    %10 = arith.addf %7, %9 : vector<128x128xf32>
    %cst_5 = arith.constant 0.000000e+00 : f32
    %11 = vector.broadcast %cst_5 : f32 to vector<128x128xf32>
    %12 = arith.maximumf %10, %11 : vector<128x128xf32>
    %13 = arith.truncf %12 : vector<128x128xf32> to vector<128x128xbf16>
    %14 = vector.extract_strided_slice %13 {offsets = [0, 0], sizes = [128, 64], strides = [1, 1]} : vector<128x128xbf16> to vector<128x64xbf16>
    %c0_6 = arith.constant 0 : index
    %c0_7 = arith.constant 0 : index
    %15 = vector.load %arg3[%c0_6, %c0_7] : memref<64x128xbf16, #tpu.memory_space<vmem>>, vector<64x128xbf16>
    %cst_8 = arith.constant dense<0.000000e+00> : vector<128x128xf32>
    %16 = tpu.matmul %14, %15, %cst_8 {dimension_numbers = #tpu.dot_dimension_numbers<[1], [0], [0], [1], [0, 0, 1, 1], [], []>} : vector<128x64xbf16>, vector<64x128xbf16>, vector<128x128xf32> -> vector<128x128xf32>
    %c0_9 = arith.constant 0 : index
    %c0_10 = arith.constant 0 : index
    %17 = vector.load %arg4[%c0_9, %c0_10] : memref<1x128xf32, #tpu.memory_space<vmem>>, vector<1x128xf32>
    %18 = vector.broadcast %17 : vector<1x128xf32> to vector<128x128xf32>
    %19 = arith.addf %16, %18 : vector<128x128xf32>
    %cst_11 = arith.constant 0.000000e+00 : f32
    %20 = vector.broadcast %cst_11 : f32 to vector<128x128xf32>
    %21 = arith.maximumf %19, %20 : vector<128x128xf32>
    %22 = arith.truncf %21 : vector<128x128xf32> to vector<128x128xbf16>
    %23 = vector.extract_strided_slice %13 {offsets = [0, 64], sizes = [128, 64], strides = [1, 1]} : vector<128x128xbf16> to vector<128x64xbf16>
    %c0_12 = arith.constant 0 : index
    %c0_13 = arith.constant 0 : index
    %24 = vector.load %arg5[%c0_12, %c0_13] : memref<64x128xbf16, #tpu.memory_space<vmem>>, vector<64x128xbf16>
    %cst_14 = arith.constant dense<0.000000e+00> : vector<128x128xf32>
    %25 = tpu.matmul %23, %24, %cst_14 {dimension_numbers = #tpu.dot_dimension_numbers<[1], [0], [0], [1], [0, 0, 1, 1], [], []>} : vector<128x64xbf16>, vector<64x128xbf16>, vector<128x128xf32> -> vector<128x128xf32>
    %c0_15 = arith.constant 0 : index
    %c0_16 = arith.constant 0 : index
    %26 = vector.load %arg6[%c0_15, %c0_16] : memref<1x128xf32, #tpu.memory_space<vmem>>, vector<1x128xf32>
    %27 = vector.broadcast %26 : vector<1x128xf32> to vector<128x128xf32>
    %28 = arith.addf %25, %27 : vector<128x128xf32>
    %cst_17 = arith.constant 0.000000e+00 : f32
    %29 = vector.broadcast %cst_17 : f32 to vector<128x128xf32>
    %30 = arith.maximumf %28, %29 : vector<128x128xf32>
    %31 = arith.truncf %30 : vector<128x128xf32> to vector<128x128xbf16>
    %c0_18 = arith.constant 0 : index
    %c0_19 = arith.constant 0 : index
    %32 = vector.load %arg7[%c0_18, %c0_19] : memref<128x512xbf16, #tpu.memory_space<vmem>>, vector<128x512xbf16>
    %cst_20 = arith.constant dense<0.000000e+00> : vector<128x512xf32>
    %33 = tpu.matmul %13, %32, %cst_20 {dimension_numbers = #tpu.dot_dimension_numbers<[1], [0], [0], [1], [0, 0, 1, 1], [], []>} : vector<128x128xbf16>, vector<128x512xbf16>, vector<128x512xf32> -> vector<128x512xf32>
    %c0_21 = arith.constant 0 : index
    %c0_22 = arith.constant 0 : index
    %34 = vector.load %arg8[%c0_21, %c0_22] : memref<128x512xbf16, #tpu.memory_space<vmem>>, vector<128x512xbf16>
    %cst_23 = arith.constant dense<0.000000e+00> : vector<128x512xf32>
    %35 = tpu.matmul %22, %34, %cst_23 {dimension_numbers = #tpu.dot_dimension_numbers<[1], [0], [0], [1], [0, 0, 1, 1], [], []>} : vector<128x128xbf16>, vector<128x512xbf16>, vector<128x512xf32> -> vector<128x512xf32>
    %36 = arith.addf %33, %35 : vector<128x512xf32>
    %c0_24 = arith.constant 0 : index
    %c0_25 = arith.constant 0 : index
    %37 = vector.load %arg9[%c0_24, %c0_25] : memref<128x512xbf16, #tpu.memory_space<vmem>>, vector<128x512xbf16>
    %cst_26 = arith.constant dense<0.000000e+00> : vector<128x512xf32>
    %38 = tpu.matmul %31, %37, %cst_26 {dimension_numbers = #tpu.dot_dimension_numbers<[1], [0], [0], [1], [0, 0, 1, 1], [], []>} : vector<128x128xbf16>, vector<128x512xbf16>, vector<128x512xf32> -> vector<128x512xf32>
    %39 = arith.addf %36, %38 : vector<128x512xf32>
    %c0_27 = arith.constant 0 : index
    %c0_28 = arith.constant 0 : index
    %40 = vector.load %arg10[%c0_27, %c0_28] : memref<1x512xf32, #tpu.memory_space<vmem>>, vector<1x512xf32>
    %41 = vector.broadcast %40 : vector<1x512xf32> to vector<128x512xf32>
    %42 = arith.addf %39, %41 : vector<128x512xf32>
    %cst_29 = arith.constant 0.000000e+00 : f32
    %43 = vector.broadcast %cst_29 : f32 to vector<128x512xf32>
    %44 = arith.maximumf %42, %43 : vector<128x512xf32>
    %45 = arith.truncf %44 : vector<128x512xf32> to vector<128x512xbf16>
    %c0_i32_30 = arith.constant 0 : i32
    %46 = tpu.memref_slice %arg24[%c0_i32_30] : memref<2x!tpu.dma_semaphore, #tpu.memory_space<semaphore_mem>> -> memref<1x!tpu.dma_semaphore, #tpu.memory_space<semaphore_mem>>
    %47 = tpu.memref_squeeze %46 : memref<1x!tpu.dma_semaphore, #tpu.memory_space<semaphore_mem>> -> memref<!tpu.dma_semaphore, #tpu.memory_space<semaphore_mem>>
    tpu.wait_dma2 semaphore(%47 : memref<!tpu.dma_semaphore, #tpu.memory_space<semaphore_mem>>) src(%arg11 : memref<512x1024xbf16, #tpu.memory_space<any>>) dst(%arg22 : memref<512x1024xbf16, #tpu.memory_space<vmem>>)
    %c0_31 = arith.constant 0 : index
    %c0_32 = arith.constant 0 : index
    %48 = vector.load %arg22[%c0_31, %c0_32] : memref<512x1024xbf16, #tpu.memory_space<vmem>>, vector<512x1024xbf16>
    %cst_33 = arith.constant dense<0.000000e+00> : vector<128x1024xf32>
    %49 = tpu.matmul %45, %48, %cst_33 {dimension_numbers = #tpu.dot_dimension_numbers<[1], [0], [0], [1], [0, 0, 1, 1], [], []>} : vector<128x512xbf16>, vector<512x1024xbf16>, vector<128x1024xf32> -> vector<128x1024xf32>
    %c0_34 = arith.constant 0 : index
    %c0_35 = arith.constant 0 : index
    %50 = vector.load %arg12[%c0_34, %c0_35] : memref<1x1024xf32, #tpu.memory_space<vmem>>, vector<1x1024xf32>
    %51 = vector.broadcast %50 : vector<1x1024xf32> to vector<128x1024xf32>
    %52 = arith.addf %49, %51 : vector<128x1024xf32>
    %cst_36 = arith.constant 0.000000e+00 : f32
    %53 = vector.broadcast %cst_36 : f32 to vector<128x1024xf32>
    %54 = arith.maximumf %52, %53 : vector<128x1024xf32>
    %55 = arith.truncf %54 : vector<128x1024xf32> to vector<128x1024xbf16>
    %56 = tpu.iota {dimensions = array<i32: 0>} : vector<2x128xi32>
    %57 = tpu.iota {dimensions = array<i32: 1>} : vector<2x128xi32>
    %c64_i32 = arith.constant 64 : i32
    %58 = vector.broadcast %c64_i32 : i32 to vector<2x128xi32>
    %59 = arith.muli %56, %58 : vector<2x128xi32>
    %60 = arith.cmpi sge, %57, %59 : vector<2x128xi32>
    %c1_i32_37 = arith.constant 1 : i32
    %61 = vector.broadcast %c1_i32_37 : i32 to vector<2x128xi32>
    %62 = arith.addi %56, %61 : vector<2x128xi32>
    %c64_i32_38 = arith.constant 64 : i32
    %63 = vector.broadcast %c64_i32_38 : i32 to vector<2x128xi32>
    %64 = arith.muli %62, %63 : vector<2x128xi32>
    %65 = arith.cmpi slt, %57, %64 : vector<2x128xi32>
    %66 = arith.andi %60, %65 : vector<2x128xi1>
    %cst_39 = arith.constant 1.000000e+00 : f32
    %cst_40 = arith.constant 0.000000e+00 : f32
    %67 = vector.broadcast %cst_39 : f32 to vector<2x128xf32>
    %68 = vector.broadcast %cst_40 : f32 to vector<2x128xf32>
    %69 = arith.select %66, %67, %68 : vector<2x128xi1>, vector<2x128xf32>
    %70 = arith.truncf %69 : vector<2x128xf32> to vector<2x128xbf16>
    %cst_41 = arith.constant dense<0.000000e+00> : vector<2x1024xf32>
    %71 = tpu.matmul %70, %55, %cst_41 {dimension_numbers = #tpu.dot_dimension_numbers<[1], [0], [0], [1], [0, 0, 1, 1], [], []>} : vector<2x128xbf16>, vector<128x1024xbf16>, vector<2x1024xf32> -> vector<2x1024xf32>
    %cst_42 = arith.constant 1.562500e-02 : f32
    %72 = vector.broadcast %cst_42 : f32 to vector<2x1024xf32>
    %73 = arith.mulf %71, %72 : vector<2x1024xf32>
    %74 = arith.truncf %73 : vector<2x1024xf32> to vector<2x1024xbf16>
    %c1_i32_43 = arith.constant 1 : i32
    %75 = tpu.memref_slice %arg24[%c1_i32_43] : memref<2x!tpu.dma_semaphore, #tpu.memory_space<semaphore_mem>> -> memref<1x!tpu.dma_semaphore, #tpu.memory_space<semaphore_mem>>
    %76 = tpu.memref_squeeze %75 : memref<1x!tpu.dma_semaphore, #tpu.memory_space<semaphore_mem>> -> memref<!tpu.dma_semaphore, #tpu.memory_space<semaphore_mem>>
    tpu.wait_dma2 semaphore(%76 : memref<!tpu.dma_semaphore, #tpu.memory_space<semaphore_mem>>) src(%arg13 : memref<1024x1024xbf16, #tpu.memory_space<any>>) dst(%arg23 : memref<1024x1024xbf16, #tpu.memory_space<vmem>>)
    %c0_44 = arith.constant 0 : index
    %c0_45 = arith.constant 0 : index
    %77 = vector.load %arg23[%c0_44, %c0_45] : memref<1024x1024xbf16, #tpu.memory_space<vmem>>, vector<1024x1024xbf16>
    %cst_46 = arith.constant dense<0.000000e+00> : vector<2x1024xf32>
    %78 = tpu.matmul %74, %77, %cst_46 {dimension_numbers = #tpu.dot_dimension_numbers<[1], [0], [0], [1], [0, 0, 1, 1], [], []>} : vector<2x1024xbf16>, vector<1024x1024xbf16>, vector<2x1024xf32> -> vector<2x1024xf32>
    %c0_47 = arith.constant 0 : index
    %c0_48 = arith.constant 0 : index
    %79 = vector.load %arg14[%c0_47, %c0_48] : memref<1x1024xf32, #tpu.memory_space<vmem>>, vector<1x1024xf32>
    %80 = vector.broadcast %79 : vector<1x1024xf32> to vector<2x1024xf32>
    %81 = arith.addf %78, %80 : vector<2x1024xf32>
    %cst_49 = arith.constant 0.000000e+00 : f32
    %82 = vector.broadcast %cst_49 : f32 to vector<2x1024xf32>
    %83 = arith.maximumf %81, %82 : vector<2x1024xf32>
    %84 = arith.truncf %83 : vector<2x1024xf32> to vector<2x1024xbf16>
    %85 = vector.extract_strided_slice %84 {offsets = [0, 0], sizes = [2, 512], strides = [1, 1]} : vector<2x1024xbf16> to vector<2x512xbf16>
    %c0_50 = arith.constant 0 : index
    %c0_51 = arith.constant 0 : index
    %86 = vector.load %arg15[%c0_50, %c0_51] : memref<512x128xbf16, #tpu.memory_space<vmem>>, vector<512x128xbf16>
    %cst_52 = arith.constant dense<0.000000e+00> : vector<2x128xf32>
    %87 = tpu.matmul %85, %86, %cst_52 {dimension_numbers = #tpu.dot_dimension_numbers<[1], [0], [0], [1], [0, 0, 1, 1], [], []>} : vector<2x512xbf16>, vector<512x128xbf16>, vector<2x128xf32> -> vector<2x128xf32>
    %c0_53 = arith.constant 0 : index
    %c0_54 = arith.constant 0 : index
    %88 = vector.load %arg16[%c0_53, %c0_54] : memref<1x128xf32, #tpu.memory_space<vmem>>, vector<1x128xf32>
    %89 = vector.broadcast %88 : vector<1x128xf32> to vector<2x128xf32>
    %90 = arith.addf %87, %89 : vector<2x128xf32>
    %cst_55 = arith.constant 0.000000e+00 : f32
    %91 = vector.broadcast %cst_55 : f32 to vector<2x128xf32>
    %92 = arith.maximumf %90, %91 : vector<2x128xf32>
    %93 = vector.extract_strided_slice %84 {offsets = [0, 512], sizes = [2, 512], strides = [1, 1]} : vector<2x1024xbf16> to vector<2x512xbf16>
    %c0_56 = arith.constant 0 : index
    %c0_57 = arith.constant 0 : index
    %94 = vector.load %arg17[%c0_56, %c0_57] : memref<512x128xbf16, #tpu.memory_space<vmem>>, vector<512x128xbf16>
    %cst_58 = arith.constant dense<0.000000e+00> : vector<2x128xf32>
    %95 = tpu.matmul %93, %94, %cst_58 {dimension_numbers = #tpu.dot_dimension_numbers<[1], [0], [0], [1], [0, 0, 1, 1], [], []>} : vector<2x512xbf16>, vector<512x128xbf16>, vector<2x128xf32> -> vector<2x128xf32>
    %c0_59 = arith.constant 0 : index
    %c0_60 = arith.constant 0 : index
    %96 = vector.load %arg18[%c0_59, %c0_60] : memref<1x128xf32, #tpu.memory_space<vmem>>, vector<1x128xf32>
    %97 = vector.broadcast %96 : vector<1x128xf32> to vector<2x128xf32>
    %98 = arith.addf %95, %97 : vector<2x128xf32>
    %cst_61 = arith.constant 0.000000e+00 : f32
    %99 = vector.broadcast %cst_61 : f32 to vector<2x128xf32>
    %100 = arith.maximumf %98, %99 : vector<2x128xf32>
    %101 = tpu.concatenate %92, %100 in 1 : vector<2x128xf32>, vector<2x128xf32> -> vector<2x256xf32>
    %102 = arith.truncf %101 : vector<2x256xf32> to vector<2x256xbf16>
    %c0_62 = arith.constant 0 : index
    %c0_63 = arith.constant 0 : index
    %103 = vector.load %arg19[%c0_62, %c0_63] : memref<256x35xbf16, #tpu.memory_space<vmem>>, vector<256x35xbf16>
    %cst_64 = arith.constant dense<0.000000e+00> : vector<2x35xf32>
    %104 = tpu.matmul %102, %103, %cst_64 {dimension_numbers = #tpu.dot_dimension_numbers<[1], [0], [0], [1], [0, 0, 1, 1], [], []>} : vector<2x256xbf16>, vector<256x35xbf16>, vector<2x35xf32> -> vector<2x35xf32>
    %c0_65 = arith.constant 0 : index
    %c0_66 = arith.constant 0 : index
    %105 = vector.load %arg20[%c0_65, %c0_66] : memref<1x35xf32, #tpu.memory_space<vmem>>, vector<1x35xf32>
    %106 = vector.broadcast %105 : vector<1x35xf32> to vector<2x35xf32>
    %107 = arith.addf %104, %106 : vector<2x35xf32>
    %c0_67 = arith.constant 0 : index
    %c0_68 = arith.constant 0 : index
    %108 = vector.load %arg21[%c0_67, %c0_68] : memref<2x35xf32, #tpu.memory_space<vmem>>, vector<2x35xf32>
    tpu.vector_store %arg21[%c0_67, %c0_68], %107 {strides = array<i32>} : memref<2x35xf32, #tpu.memory_space<vmem>>, vector<2x35xf32>,
    return
  }
}

</mosaic_0001>

<llo_original>
// kernel: tpu_custom_call.1
$region0: #{tpu_custom_call.1}
  #allocation0 [shape = 'u32[]', space=smem, size = 0x4, offset = 0x4, fixed_abs, tag = 'smem constant byte address 0x4 - core index']
  #allocation1 [shape = 'u32[144,128]{1,0:T(1,128)}', space=vmem, size = 0x12000, scoped, tag = 'internal scratch']
  #allocation2 [shape = 'bf16[512,1024]{1,0:T(16,128)(2,1)}', space=vmem, size = 0x100000, scoped, tag = 'scratch operand']
  #allocation3 [shape = 'bf16[1024,1024]{1,0:T(16,128)(2,1)}', space=vmem, size = 0x200000, scoped, tag = 'scratch operand']
  #allocation4 [shape = 's32[2]{0}', space=sflag, size = 0x8, scoped, tag = 'scratch operand']
  #allocation33 [shape = 's32[]', space=sflag, size = 0x4, offset = 0, fixed_abs, tag = 'sflag constant byte address 0x0 - dummy sync flag']
  #allocation35 [shape = 's32[]', space=sflag, size = 0x4, offset = 0, fixed_abs, tag = 'sflag constant byte address 0x0 - dummy sync flag']
  %s0 = inlined_call_operand.vmem [shape: f32[128,64], index: 0, kind: input, shape index: {}]
  %s1 = inlined_call_operand.hbm [shape: bf16[64,128], index: 1, kind: input, shape index: {}]
  %s2 = inlined_call_operand.hbm [shape: f32[1,128], index: 2, kind: input, shape index: {}]
  %s3 = inlined_call_operand.hbm [shape: bf16[64,128], index: 3, kind: input, shape index: {}]
  %s4 = inlined_call_operand.hbm [shape: f32[1,128], index: 4, kind: input, shape index: {}]
  %s5 = inlined_call_operand.hbm [shape: bf16[64,128], index: 5, kind: input, shape index: {}]
  %s6 = inlined_call_operand.hbm [shape: f32[1,128], index: 6, kind: input, shape index: {}]
  %s7 = inlined_call_operand.hbm [shape: bf16[128,512], index: 7, kind: input, shape index: {}]
  %s8 = inlined_call_operand.hbm [shape: bf16[128,512], index: 8, kind: input, shape index: {}]
  %s9 = inlined_call_operand.hbm [shape: bf16[128,512], index: 9, kind: input, shape index: {}]
  %s10 = inlined_call_operand.hbm [shape: f32[1,512], index: 10, kind: input, shape index: {}]
  %s11 = inlined_call_operand.hbm [shape: bf16[512,1024], index: 11, kind: input, shape index: {}]
  %s12 = inlined_call_operand.hbm [shape: f32[1,1024], index: 12, kind: input, shape index: {}]
  %s13 = inlined_call_operand.hbm [shape: bf16[1024,1024], index: 13, kind: input, shape index: {}]
  %s14 = inlined_call_operand.hbm [shape: f32[1,1024], index: 14, kind: input, shape index: {}]
  %s15 = inlined_call_operand.hbm [shape: bf16[512,128], index: 15, kind: input, shape index: {}]
  %s16 = inlined_call_operand.hbm [shape: f32[1,128], index: 16, kind: input, shape index: {}]
  %s17 = inlined_call_operand.hbm [shape: bf16[512,128], index: 17, kind: input, shape index: {}]
  %s18 = inlined_call_operand.hbm [shape: f32[1,128], index: 18, kind: input, shape index: {}]
  %s19 = inlined_call_operand.vmem [shape: bf16[256,35], index: 19, kind: input, shape index: {}]
  %s20 = inlined_call_operand.hbm [shape: f32[1,35], index: 20, kind: input, shape index: {}]
  %s21 = inlined_call_operand.hbm [shape: f32[2,35], index: 21, kind: output, shape index: {}]
  %s22 = sld [smem:[#allocation0]]
  $region154: #{tpu_custom_call.1} parent=0
    _
  %s24 = ssub.s32 1, %s22
  %s25 = scalar_select 0, %s24, %s22
  $region1: #{tpu_custom_call.1} parent=0
    #allocation5 [shape = 'u8[16384]{0}', space=vmem, size = 0x4000, scoped, tag = 'input window, operand 1, single buffered']
    #allocation6 [shape = 's32[1]{0}', space=sflag, size = 0x4, scoped, tag = 'scoped memory for tpu_custom_call.1']
    #allocation7 [shape = 's32[1]{0}', space=sflag, size = 0x4, scoped, tag = 'scoped memory for tpu_custom_call.1']
    #allocation8 [shape = 'u8[512]{0}', space=vmem, size = 0x400, scoped, tag = 'input window, operand 2, single buffered']
    #allocation9 [shape = 's32[1]{0}', space=sflag, size = 0x4, scoped, tag = 'scoped memory for tpu_custom_call.1']
    #allocation10 [shape = 'u8[16384]{0}', space=vmem, size = 0x4000, scoped, tag = 'input window, operand 3, single buffered']
    #allocation11 [shape = 'u8[512]{0}', space=vmem, size = 0x400, scoped, tag = 'input window, operand 4, single buffered']
    #allocation12 [shape = 's32[1]{0}', space=sflag, size = 0x4, scoped, tag = 'scoped memory for tpu_custom_call.1']
    #allocation13 [shape = 'u8[16384]{0}', space=vmem, size = 0x4000, scoped, tag = 'input window, operand 5, single buffered']
    #allocation14 [shape = 'u8[512]{0}', space=vmem, size = 0x400, scoped, tag = 'input window, operand 6, single buffered']
    #allocation15 [shape = 's32[1]{0}', space=sflag, size = 0x4, scoped, tag = 'scoped memory for tpu_custom_call.1']
    #allocation16 [shape = 'u8[131072]{0}', space=vmem, size = 0x20000, scoped, tag = 'input window, operand 7, single buffered']
    #allocation17 [shape = 'u8[131072]{0}', space=vmem, size = 0x20000, scoped, tag = 'input window, operand 8, single buffered']
    #allocation18 [shape = 's32[1]{0}', space=sflag, size = 0x4, scoped, tag = 'scoped memory for tpu_custom_call.1']
    #allocation19 [shape = 'u8[131072]{0}', space=vmem, size = 0x20000, scoped, tag = 'input window, operand 9, single buffered']
    #allocation20 [shape = 'u8[2048]{0}', space=vmem, size = 0x800, scoped, tag = 'input window, operand 10, single buffered']
    #allocation21 [shape = 's32[1]{0}', space=sflag, size = 0x4, scoped, tag = 'scoped memory for tpu_custom_call.1']
    #allocation22 [shape = 'u8[4096]{0}', space=vmem, size = 0x1000, scoped, tag = 'input window, operand 12, single buffered']
    #allocation23 [shape = 'u8[4096]{0}', space=vmem, size = 0x1000, scoped, tag = 'input window, operand 14, single buffered']
    #allocation24 [shape = 's32[1]{0}', space=sflag, size = 0x4, scoped, tag = 'scoped memory for tpu_custom_call.1']
    #allocation25 [shape = 'u8[131072]{0}', space=vmem, size = 0x20000, scoped, tag = 'input window, operand 15, single buffered']
    #allocation26 [shape = 'u8[512]{0}', space=vmem, size = 0x400, scoped, tag = 'input window, operand 16, single buffered']
    #allocation27 [shape = 's32[1]{0}', space=sflag, size = 0x4, scoped, tag = 'scoped memory for tpu_custom_call.1']
    #allocation28 [shape = 'u8[131072]{0}', space=vmem, size = 0x20000, scoped, tag = 'input window, operand 17, single buffered']
    #allocation29 [shape = 'u8[512]{0}', space=vmem, size = 0x400, scoped, tag = 'input window, operand 18, single buffered']
    #allocation30 [shape = 's32[1]{0}', space=sflag, size = 0x4, scoped, tag = 'scoped memory for tpu_custom_call.1']
    #allocation31 [shape = 'u8[512]{0}', space=vmem, size = 0x400, scoped, tag = 'input window, operand 20, single buffered']
    #allocation32 [shape = 'u8[1024]{0}', space=vmem, size = 0x400, scoped, tag = 'output window, operand 0, single buffered']
    #allocation34 [shape = 'u32[9]{0}', space=smem, size = 0x24, scoped, tag = 'DMA stride descriptor']
    #allocation36 [shape = 'u32[9]{0}', space=smem, size = 0x24, scoped, tag = 'DMA stride descriptor']
    %26 = vsyncpa [#allocation6], 0
    %27 = vsyncpa [#allocation9], 0
    %28 = vsyncpa [#allocation12], 0
    %29 = vsyncpa [#allocation15], 0
    %30 = vsyncpa [#allocation18], 0
    %31 = vsyncpa [#allocation21], 0
    %32 = vsyncpa [#allocation24], 0
    %33 = vsyncpa [#allocation27], 0
    %34 = vsyncpa [#allocation30], 0
    %35 = vsyncpa [#allocation7], 0
    // Predicated region
    $region2: #{tpu_custom_call.1} parent=1 // pred_check
      _
    $region3: #{tpu_custom_call.1} parent=1 // pred_check_branch
      %37 = sbr.rel (0) target = $region5
    $region4: #{tpu_custom_call.1} parent=1 // pred_region
      _
    $region5: #{tpu_custom_call.1} parent=1 // pred_fallthru
      _
    // Predicated region
    $region6: #{tpu_custom_call.1} parent=1 // pred_check
      _
    $region7: #{tpu_custom_call.1} parent=1 // pred_check_branch
      %39 = sbr.rel (0) target = $region9
    $region8: #{tpu_custom_call.1} parent=1 // pred_region
      %s41 = ssub.s32 512, 512
      %42 = vsyncadd [#allocation6], %s41
      %s43 = sshll.u32 [#allocation5], 4
      %s44 = int_to_ptr.vmem [resolvable:$true] %s43
      %49 = dma.hbm_to_vmem [thread:$0]  %s1, 512, %s44, [#allocation6], 64, 64, 4
    $region9: #{tpu_custom_call.1} parent=1 // pred_fallthru
      _
    // Predicated region
    $region10: #{tpu_custom_call.1} parent=1 // pred_check
      _
    $region11: #{tpu_custom_call.1} parent=1 // pred_check_branch
      %51 = sbr.rel (0) target = $region13
    $region12: #{tpu_custom_call.1} parent=1 // pred_region
      %s53 = ssub.s32 16, 16
      %54 = vsyncadd [#allocation9], %s53
      %s56 = sshll.u32 [#allocation8], 4
      %s57 = int_to_ptr.vmem [resolvable:$true] %s56
      %59 = dma.hbm_to_vmem [thread:$0]  %s2, 16, %s57, [#allocation9]
    $region13: #{tpu_custom_call.1} parent=1 // pred_fallthru
      _
    // Predicated region
    $region14: #{tpu_custom_call.1} parent=1 // pred_check
      _
    $region15: #{tpu_custom_call.1} parent=1 // pred_check_branch
      %61 = sbr.rel (0) target = $region17
    $region16: #{tpu_custom_call.1} parent=1 // pred_region
      %s63 = ssub.s32 512, 512
      %64 = vsyncadd [#allocation9], %s63
      %s65 = sshll.u32 [#allocation10], 4
      %s66 = int_to_ptr.vmem [resolvable:$true] %s65
      %71 = dma.hbm_to_vmem [thread:$0]  %s3, 512, %s66, [#allocation9], 64, 64, 4
    $region17: #{tpu_custom_call.1} parent=1 // pred_fallthru
      _
    // Predicated region
    $region18: #{tpu_custom_call.1} parent=1 // pred_check
      _
    $region19: #{tpu_custom_call.1} parent=1 // pred_check_branch
      %73 = sbr.rel (0) target = $region21
    $region20: #{tpu_custom_call.1} parent=1 // pred_region
      %s75 = ssub.s32 16, 16
      %76 = vsyncadd [#allocation12], %s75
      %s78 = sshll.u32 [#allocation11], 4
      %s79 = int_to_ptr.vmem [resolvable:$true] %s78
      %81 = dma.hbm_to_vmem [thread:$0]  %s4, 16, %s79, [#allocation12]
    $region21: #{tpu_custom_call.1} parent=1 // pred_fallthru
      _
    // Predicated region
    $region22: #{tpu_custom_call.1} parent=1 // pred_check
      _
    $region23: #{tpu_custom_call.1} parent=1 // pred_check_branch
      %83 = sbr.rel (0) target = $region25
    $region24: #{tpu_custom_call.1} parent=1 // pred_region
      %s85 = ssub.s32 512, 512
      %86 = vsyncadd [#allocation12], %s85
      %s87 = sshll.u32 [#allocation13], 4
      %s88 = int_to_ptr.vmem [resolvable:$true] %s87
      %93 = dma.hbm_to_vmem [thread:$0]  %s5, 512, %s88, [#allocation12], 64, 64, 4
    $region25: #{tpu_custom_call.1} parent=1 // pred_fallthru
      _
    // Predicated region
    $region26: #{tpu_custom_call.1} parent=1 // pred_check
      _
    $region27: #{tpu_custom_call.1} parent=1 // pred_check_branch
      %95 = sbr.rel (0) target = $region29
    $region28: #{tpu_custom_call.1} parent=1 // pred_region
      %s97 = ssub.s32 16, 16
      %98 = vsyncadd [#allocation15], %s97
      %s100 = sshll.u32 [#allocation14], 4
      %s101 = int_to_ptr.vmem [resolvable:$true] %s100
      %103 = dma.hbm_to_vmem [thread:$0]  %s6, 16, %s101, [#allocation15]
    $region29: #{tpu_custom_call.1} parent=1 // pred_fallthru
      _
    // Predicated region
    $region30: #{tpu_custom_call.1} parent=1 // pred_check
      _
    $region31: #{tpu_custom_call.1} parent=1 // pred_check_branch
      %105 = sbr.rel (0) target = $region33
    $region32: #{tpu_custom_call.1} parent=1 // pred_region
      %s107 = ssub.s32 4096, 4096
      %108 = vsyncadd [#allocation15], %s107
      %s109 = sshll.u32 [#allocation16], 4
      %s110 = int_to_ptr.vmem [resolvable:$true] %s109
      %115 = dma.hbm_to_vmem [thread:$0]  %s7, 4096, %s110, [#allocation15], 256, 256, 16
    $region33: #{tpu_custom_call.1} parent=1 // pred_fallthru
      _
    // Predicated region
    $region34: #{tpu_custom_call.1} parent=1 // pred_check
      _
    $region35: #{tpu_custom_call.1} parent=1 // pred_check_branch
      %117 = sbr.rel (0) target = $region37
    $region36: #{tpu_custom_call.1} parent=1 // pred_region
      %s119 = ssub.s32 4096, 4096
      %120 = vsyncadd [#allocation18], %s119
      %s121 = sshll.u32 [#allocation17], 4
      %s122 = int_to_ptr.vmem [resolvable:$true] %s121
      %127 = dma.hbm_to_vmem [thread:$0]  %s8, 4096, %s122, [#allocation18], 256, 256, 16
    $region37: #{tpu_custom_call.1} parent=1 // pred_fallthru
      _
    // Predicated region
    $region38: #{tpu_custom_call.1} parent=1 // pred_check
      _
    $region39: #{tpu_custom_call.1} parent=1 // pred_check_branch
      %129 = sbr.rel (0) target = $region41
    $region40: #{tpu_custom_call.1} parent=1 // pred_region
      %s131 = ssub.s32 4096, 4096
      %132 = vsyncadd [#allocation18], %s131
      %s133 = sshll.u32 [#allocation19], 4
      %s134 = int_to_ptr.vmem [resolvable:$true] %s133
      %139 = dma.hbm_to_vmem [thread:$0]  %s9, 4096, %s134, [#allocation18], 256, 256, 16
    $region41: #{tpu_custom_call.1} parent=1 // pred_fallthru
      _
    // Predicated region
    $region42: #{tpu_custom_call.1} parent=1 // pred_check
      _
    $region43: #{tpu_custom_call.1} parent=1 // pred_check_branch
      %141 = sbr.rel (0) target = $region45
    $region44: #{tpu_custom_call.1} parent=1 // pred_region
      %s143 = ssub.s32 64, 64
      %144 = vsyncadd [#allocation21], %s143
      %s146 = sshll.u32 [#allocation20], 4
      %s147 = int_to_ptr.vmem [resolvable:$true] %s146
      %149 = dma.hbm_to_vmem [thread:$0]  %s10, 64, %s147, [#allocation21]
    $region45: #{tpu_custom_call.1} parent=1 // pred_fallthru
      _
    // Predicated region
    $region46: #{tpu_custom_call.1} parent=1 // pred_check
      _
    $region47: #{tpu_custom_call.1} parent=1 // pred_check_branch
      %151 = sbr.rel (0) target = $region49
    $region48: #{tpu_custom_call.1} parent=1 // pred_region
      %s153 = ssub.s32 128, 128
      %154 = vsyncadd [#allocation21], %s153
      %s156 = sshll.u32 [#allocation22], 4
      %s157 = int_to_ptr.vmem [resolvable:$true] %s156
      %159 = dma.hbm_to_vmem [thread:$0]  %s12, 128, %s157, [#allocation21]
    $region49: #{tpu_custom_call.1} parent=1 // pred_fallthru
      _
    // Predicated region
    $region50: #{tpu_custom_call.1} parent=1 // pred_check
      _
    $region51: #{tpu_custom_call.1} parent=1 // pred_check_branch
      %161 = sbr.rel (0) target = $region53
    $region52: #{tpu_custom_call.1} parent=1 // pred_region
      %s163 = ssub.s32 128, 128
      %164 = vsyncadd [#allocation24], %s163
      %s166 = sshll.u32 [#allocation23], 4
      %s167 = int_to_ptr.vmem [resolvable:$true] %s166
      %169 = dma.hbm_to_vmem [thread:$0]  %s14, 128, %s167, [#allocation24]
    $region53: #{tpu_custom_call.1} parent=1 // pred_fallthru
      _
    // Predicated region
    $region54: #{tpu_custom_call.1} parent=1 // pred_check
      _
    $region55: #{tpu_custom_call.1} parent=1 // pred_check_branch
      %171 = sbr.rel (0) target = $region57
    $region56: #{tpu_custom_call.1} parent=1 // pred_region
      %s173 = ssub.s32 4096, 4096
      %174 = vsyncadd [#allocation24], %s173
      %s175 = sshll.u32 [#allocation25], 4
      %s176 = int_to_ptr.vmem [resolvable:$true] %s175
      %181 = dma.hbm_to_vmem [thread:$0]  %s15, 4096, %s176, [#allocation24], 64, 64, 4
    $region57: #{tpu_custom_call.1} parent=1 // pred_fallthru
      _
    // Predicated region
    $region58: #{tpu_custom_call.1} parent=1 // pred_check
      _
    $region59: #{tpu_custom_call.1} parent=1 // pred_check_branch
      %183 = sbr.rel (0) target = $region61
    $region60: #{tpu_custom_call.1} parent=1 // pred_region
      %s185 = ssub.s32 16, 16
      %186 = vsyncadd [#allocation27], %s185
      %s188 = sshll.u32 [#allocation26], 4
      %s189 = int_to_ptr.vmem [resolvable:$true] %s188
      %191 = dma.hbm_to_vmem [thread:$0]  %s16, 16, %s189, [#allocation27]
    $region61: #{tpu_custom_call.1} parent=1 // pred_fallthru
      _
    // Predicated region
    $region62: #{tpu_custom_call.1} parent=1 // pred_check
      _
    $region63: #{tpu_custom_call.1} parent=1 // pred_check_branch
      %193 = sbr.rel (0) target = $region65
    $region64: #{tpu_custom_call.1} parent=1 // pred_region
      %s195 = ssub.s32 4096, 4096
      %196 = vsyncadd [#allocation27], %s195
      %s197 = sshll.u32 [#allocation28], 4
      %s198 = int_to_ptr.vmem [resolvable:$true] %s197
      %203 = dma.hbm_to_vmem [thread:$0]  %s17, 4096, %s198, [#allocation27], 64, 64, 4
    $region65: #{tpu_custom_call.1} parent=1 // pred_fallthru
      _
    // Predicated region
    $region66: #{tpu_custom_call.1} parent=1 // pred_check
      _
    $region67: #{tpu_custom_call.1} parent=1 // pred_check_branch
      %205 = sbr.rel (0) target = $region69
    $region68: #{tpu_custom_call.1} parent=1 // pred_region
      %s207 = ssub.s32 16, 16
      %208 = vsyncadd [#allocation30], %s207
      %s210 = sshll.u32 [#allocation29], 4
      %s211 = int_to_ptr.vmem [resolvable:$true] %s210
      %213 = dma.hbm_to_vmem [thread:$0]  %s18, 16, %s211, [#allocation30]
    $region69: #{tpu_custom_call.1} parent=1 // pred_fallthru
      _
    // Predicated region
    $region70: #{tpu_custom_call.1} parent=1 // pred_check
      _
    $region71: #{tpu_custom_call.1} parent=1 // pred_check_branch
      %215 = sbr.rel (0) target = $region73
    $region72: #{tpu_custom_call.1} parent=1 // pred_region
      _
    $region73: #{tpu_custom_call.1} parent=1 // pred_fallthru
      _
    // Predicated region
    $region74: #{tpu_custom_call.1} parent=1 // pred_check
      _
    $region75: #{tpu_custom_call.1} parent=1 // pred_check_branch
      %217 = sbr.rel (0) target = $region77
    $region76: #{tpu_custom_call.1} parent=1 // pred_region
      %s219 = ssub.s32 16, 16
      %220 = vsyncadd [#allocation30], %s219
      %s222 = sshll.u32 [#allocation31], 4
      %s223 = int_to_ptr.vmem [resolvable:$true] %s222
      %225 = dma.hbm_to_vmem [thread:$0]  %s20, 16, %s223, [#allocation30]
    $region77: #{tpu_custom_call.1} parent=1 // pred_fallthru
      _
    // Predicated region
    $region78: #{tpu_custom_call.1} parent=1 // pred_check
      _
    $region79: #{tpu_custom_call.1} parent=1 // pred_check_branch
      %227 = sbr.rel (0) target = $region81
    $region80: #{tpu_custom_call.1} parent=1 // pred_region
      %228 = dma.done [#allocation6], 512
    $region81: #{tpu_custom_call.1} parent=1 // pred_fallthru
      _
    // Predicated region
    $region82: #{tpu_custom_call.1} parent=1 // pred_check
      _
    $region83: #{tpu_custom_call.1} parent=1 // pred_check_branch
      %230 = sbr.rel (0) target = $region85
    $region84: #{tpu_custom_call.1} parent=1 // pred_region
      %231 = dma.done [#allocation9], 16
    $region85: #{tpu_custom_call.1} parent=1 // pred_fallthru
      _
    // Predicated region
    $region86: #{tpu_custom_call.1} parent=1 // pred_check
      _
    $region87: #{tpu_custom_call.1} parent=1 // pred_check_branch
      %233 = sbr.rel (0) target = $region89
    $region88: #{tpu_custom_call.1} parent=1 // pred_region
      %234 = dma.done [#allocation9], 512
    $region89: #{tpu_custom_call.1} parent=1 // pred_fallthru
      _
    // Predicated region
    $region90: #{tpu_custom_call.1} parent=1 // pred_check
      _
    $region91: #{tpu_custom_call.1} parent=1 // pred_check_branch
      %236 = sbr.rel (0) target = $region93
    $region92: #{tpu_custom_call.1} parent=1 // pred_region
      %237 = dma.done [#allocation12], 16
    $region93: #{tpu_custom_call.1} parent=1 // pred_fallthru
      _
    // Predicated region
    $region94: #{tpu_custom_call.1} parent=1 // pred_check
      _
    $region95: #{tpu_custom_call.1} parent=1 // pred_check_branch
      %239 = sbr.rel (0) target = $region97
    $region96: #{tpu_custom_call.1} parent=1 // pred_region
      %240 = dma.done [#allocation12], 512
    $region97: #{tpu_custom_call.1} parent=1 // pred_fallthru
      _
    // Predicated region
    $region98: #{tpu_custom_call.1} parent=1 // pred_check
      _
    $region99: #{tpu_custom_call.1} parent=1 // pred_check_branch
      %242 = sbr.rel (0) target = $region101
    $region100: #{tpu_custom_call.1} parent=1 // pred_region
      %243 = dma.done [#allocation15], 16
    $region101: #{tpu_custom_call.1} parent=1 // pred_fallthru
      _
    // Predicated region
    $region102: #{tpu_custom_call.1} parent=1 // pred_check
      _
    $region103: #{tpu_custom_call.1} parent=1 // pred_check_branch
      %245 = sbr.rel (0) target = $region105
    $region104: #{tpu_custom_call.1} parent=1 // pred_region
      %246 = dma.done [#allocation15], 4096
    $region105: #{tpu_custom_call.1} parent=1 // pred_fallthru
      _
    // Predicated region
    $region106: #{tpu_custom_call.1} parent=1 // pred_check
      _
    $region107: #{tpu_custom_call.1} parent=1 // pred_check_branch
      %248 = sbr.rel (0) target = $region109
    $region108: #{tpu_custom_call.1} parent=1 // pred_region
      %249 = dma.done [#allocation18], 4096
    $region109: #{tpu_custom_call.1} parent=1 // pred_fallthru
      _
    // Predicated region
    $region110: #{tpu_custom_call.1} parent=1 // pred_check
      _
    $region111: #{tpu_custom_call.1} parent=1 // pred_check_branch
      %251 = sbr.rel (0) target = $region113
    $region112: #{tpu_custom_call.1} parent=1 // pred_region
      %252 = dma.done [#allocation18], 4096
    $region113: #{tpu_custom_call.1} parent=1 // pred_fallthru
      _
    // Predicated region
    $region114: #{tpu_custom_call.1} parent=1 // pred_check
      _
    $region115: #{tpu_custom_call.1} parent=1 // pred_check_branch
      %254 = sbr.rel (0) target = $region117
    $region116: #{tpu_custom_call.1} parent=1 // pred_region
      %255 = dma.done [#allocation21], 64
    $region117: #{tpu_custom_call.1} parent=1 // pred_fallthru
      _
    // Predicated region
    $region118: #{tpu_custom_call.1} parent=1 // pred_check
      _
    $region119: #{tpu_custom_call.1} parent=1 // pred_check_branch
      %257 = sbr.rel (0) target = $region121
    $region120: #{tpu_custom_call.1} parent=1 // pred_region
      %258 = dma.done [#allocation21], 128
    $region121: #{tpu_custom_call.1} parent=1 // pred_fallthru
      _
    // Predicated region
    $region122: #{tpu_custom_call.1} parent=1 // pred_check
      _
    $region123: #{tpu_custom_call.1} parent=1 // pred_check_branch
      %260 = sbr.rel (0) target = $region125
    $region124: #{tpu_custom_call.1} parent=1 // pred_region
      %261 = dma.done [#allocation24], 128
    $region125: #{tpu_custom_call.1} parent=1 // pred_fallthru
      _
    // Predicated region
    $region126: #{tpu_custom_call.1} parent=1 // pred_check
      _
    $region127: #{tpu_custom_call.1} parent=1 // pred_check_branch
      %263 = sbr.rel (0) target = $region129
    $region128: #{tpu_custom_call.1} parent=1 // pred_region
      %264 = dma.done [#allocation24], 4096
    $region129: #{tpu_custom_call.1} parent=1 // pred_fallthru
      _
    // Predicated region
    $region130: #{tpu_custom_call.1} parent=1 // pred_check
      _
    $region131: #{tpu_custom_call.1} parent=1 // pred_check_branch
      %266 = sbr.rel (0) target = $region133
    $region132: #{tpu_custom_call.1} parent=1 // pred_region
      %267 = dma.done [#allocation27], 16
    $region133: #{tpu_custom_call.1} parent=1 // pred_fallthru
      _
    // Predicated region
    $region134: #{tpu_custom_call.1} parent=1 // pred_check
      _
    $region135: #{tpu_custom_call.1} parent=1 // pred_check_branch
      %269 = sbr.rel (0) target = $region137
    $region136: #{tpu_custom_call.1} parent=1 // pred_region
      %270 = dma.done [#allocation27], 4096
    $region137: #{tpu_custom_call.1} parent=1 // pred_fallthru
      _
    // Predicated region
    $region138: #{tpu_custom_call.1} parent=1 // pred_check
      _
    $region139: #{tpu_custom_call.1} parent=1 // pred_check_branch
      %272 = sbr.rel (0) target = $region141
    $region140: #{tpu_custom_call.1} parent=1 // pred_region
      %273 = dma.done [#allocation30], 16
    $region141: #{tpu_custom_call.1} parent=1 // pred_fallthru
      _
    // Predicated region
    $region142: #{tpu_custom_call.1} parent=1 // pred_check
      _
    $region143: #{tpu_custom_call.1} parent=1 // pred_check_branch
      %275 = sbr.rel (0) target = $region145
    $region144: #{tpu_custom_call.1} parent=1 // pred_region
      %276 = dma.done [#allocation30], 16
    $region145: #{tpu_custom_call.1} parent=1 // pred_fallthru
      _
    %s279 = sshll.u32 1, 14
    %s280 = sxor.u32 4294967295, %s279
    %s282 = sld [smem:[#allocation0]]
    %s283 = sadd.s32 2, %s282
    %s285 = sshll.u32 7, 26
    %s286 = sxor.u32 4294967295, %s285
    %s287 = sand.u32 0, %s286
    %s288 = sshll.u32 %s283, 26
    %s289 = sor.u32 %s287, %s288
    %s290 = sshll.u32 [#allocation2], 4
    %s291 = int_to_ptr.vmem [resolvable:$true] %s290
    %294 = sst [smem:[#allocation34]] 1024
    %s295 = scalar_lea.smem [#allocation34], 1
    %296 = sst [smem:[%s295]] 1024
    %s297 = scalar_lea.smem [#allocation34], 2
    %298 = sst [smem:[%s297]] 8
    %s299 = scalar_lea.smem [#allocation34], 3
    %300 = sst [smem:[%s299]] 64
    %s301 = scalar_lea.smem [#allocation34], 4
    %302 = sst [smem:[%s301]] 128
    %s303 = scalar_lea.smem [#allocation34], 5
    %304 = sst [smem:[%s303]] 2
    %s305 = scalar_lea.smem [#allocation34], 6
    %306 = sst [smem:[%s305]] 512
    %s307 = scalar_lea.smem [#allocation34], 7
    %308 = sst [smem:[%s307]] 64
    %s309 = scalar_lea.smem [#allocation34], 8
    %310 = sst [smem:[%s309]] 4
    %312 = dma.general %s11, 32768, %s291, [#allocation4], [#allocation33], [#allocation34], %s289, 0
    %s313 = scalar_lea.sflag [#allocation4], 1
    %s315 = sshll.u32 1, 14
    %s316 = sxor.u32 4294967295, %s315
    %s318 = sadd.s32 2, %s282
    %s320 = sshll.u32 7, 26
    %s321 = sxor.u32 4294967295, %s320
    %s322 = sand.u32 0, %s321
    %s323 = sshll.u32 %s318, 26
    %s324 = sor.u32 %s322, %s323
    %s325 = sshll.u32 [#allocation3], 4
    %s326 = int_to_ptr.vmem [resolvable:$true] %s325
    %329 = sst [smem:[#allocation36]] 1024
    %s330 = scalar_lea.smem [#allocation36], 1
    %331 = sst [smem:[%s330]] 1024
    %s332 = scalar_lea.smem [#allocation36], 2
    %333 = sst [smem:[%s332]] 8
    %s334 = scalar_lea.smem [#allocation36], 3
    %335 = sst [smem:[%s334]] 64
    %s336 = scalar_lea.smem [#allocation36], 4
    %337 = sst [smem:[%s336]] 128
    %s338 = scalar_lea.smem [#allocation36], 5
    %339 = sst [smem:[%s338]] 2
    %s340 = scalar_lea.smem [#allocation36], 6
    %341 = sst [smem:[%s340]] 512
    %s342 = scalar_lea.smem [#allocation36], 7
    %343 = sst [smem:[%s342]] 64
    %s344 = scalar_lea.smem [#allocation36], 8
    %345 = sst [smem:[%s344]] 4
    %347 = dma.general %s13, 65536, %s326, %s313, [#allocation35], [#allocation36], %s324, 0
    %v348 = vld [vmem:[%s0] sm:$0xff]
    %v349 = vld [vmem:[%s0 + $0x8] sm:$0xff]
    %v350 = vld [vmem:[%s0 + $0x10] sm:$0xff]
    %v351 = vld [vmem:[%s0 + $0x18] sm:$0xff]
    %v352 = vld [vmem:[%s0 + $0x20] sm:$0xff]
    %v353 = vld [vmem:[%s0 + $0x28] sm:$0xff]
    %v354 = vld [vmem:[%s0 + $0x30] sm:$0xff]
    %v355 = vld [vmem:[%s0 + $0x38] sm:$0xff]
    %v356 = vld [vmem:[%s0 + $0x40] sm:$0xff]
    %v357 = vld [vmem:[%s0 + $0x48] sm:$0xff]
    %v358 = vld [vmem:[%s0 + $0x50] sm:$0xff]
    %v359 = vld [vmem:[%s0 + $0x58] sm:$0xff]
    %v360 = vld [vmem:[%s0 + $0x60] sm:$0xff]
    %v361 = vld [vmem:[%s0 + $0x68] sm:$0xff]
    %v362 = vld [vmem:[%s0 + $0x70] sm:$0xff]
    %v363 = vld [vmem:[%s0 + $0x78] sm:$0xff]
    %v364 = vpack.c.bf16 %v349, %v348
    %v365 = vpack.c.bf16 %v351, %v350
    %v366 = vpack.c.bf16 %v353, %v352
    %v367 = vpack.c.bf16 %v355, %v354
    %v368 = vpack.c.bf16 %v357, %v356
    %v369 = vpack.c.bf16 %v359, %v358
    %v370 = vpack.c.bf16 %v361, %v360
    %v371 = vpack.c.bf16 %v363, %v362
    %v372 = vld [vmem:[#allocation5] sm:$0xf]
    %v373 = vld [vmem:[#allocation5 + $0x4] sm:$0xf]
    %v374 = vld [vmem:[#allocation5 + $0x8] sm:$0xf]
    %v375 = vld [vmem:[#allocation5 + $0xc] sm:$0xf]
    %v376 = vld [vmem:[#allocation5 + $0x10] sm:$0xf]
    %v377 = vld [vmem:[#allocation5 + $0x14] sm:$0xf]
    %v378 = vld [vmem:[#allocation5 + $0x18] sm:$0xf]
    %v379 = vld [vmem:[#allocation5 + $0x1c] sm:$0xf]
    %v380 = vld [vmem:[#allocation8] sm:$0x1]
    %v382 = vlaneseq
    %v383 = vshrl.u32 %v382, 7
    %v384 = vsub.s32 0, %v383
    %v385 = vrot.slane %v380, %v384
    %v395 = vunpack.c.l.b16 %v372
    %v396 = vunpack.c.l.b16 %v373
    %v397 = vunpack.c.l.b16 %v374
    %v398 = vunpack.c.l.b16 %v375
    %v399 = vunpack.c.l.b16 %v376
    %v400 = vunpack.c.l.b16 %v377
    %v401 = vunpack.c.l.b16 %v378
    %v402 = vunpack.c.l.b16 %v379
    %v403 = vpack.c.b16 %v396, %v395
    %v404 = vpack.c.b16 %v398, %v397
    %v405 = vpack.c.b16 %v400, %v399
    %v406 = vpack.c.b16 %v402, %v401
    %vm411 = vcmask 523264
    %v413 = vsel %vm411, %v364, 0
    %v416 = vsel %vm411, %v365, 0
    %v419 = vsel %vm411, %v366, 0
    %v422 = vsel %vm411, %v367, 0
    %v425 = vsel %vm411, %v368, 0
    %v428 = vsel %vm411, %v369, 0
    %v431 = vsel %vm411, %v370, 0
    %v434 = vsel %vm411, %v371, 0
    %436 = vmatprep.subr.bf16.mxu0 0
    %437 = vmatpush1.bf16.msra.mxu0 %v403
    %438 = vmatprep.subr.bf16.mxu0 0
    %439 = vmatpush1.bf16.msra.mxu0 %v404
    %440 = vmatprep.subr.bf16.mxu0 0
    %441 = vmatpush1.bf16.msra.mxu0 %v405
    %442 = vmatprep.subr.bf16.mxu0 0
    %443 = vmatpush1.bf16.msra.mxu0 %v406
    %444 = vmatprep.subr.bf16.mxu0 0
    %445 = vmatpush1.bf16.msra.mxu0 0
    %446 = vmatprep.subr.bf16.mxu0 0
    %447 = vmatpush1.bf16.msra.mxu0 0
    %448 = vmatprep.subr.bf16.mxu0 0
    %449 = vmatpush1.bf16.msra.mxu0 0
    %450 = vmatprep.subr.bf16.mxu0 0
    %451 = vmatpush1.bf16.msra.mxu0 0
    %452 = vmatprep.subr.bf16.mxu0 0
    %453 = vmatpush1.bf16.msra.mxu0 0
    %454 = vmatprep.subr.bf16.mxu0 0
    %455 = vmatpush1.bf16.msra.mxu0 0
    %456 = vmatprep.subr.bf16.mxu0 0
    %457 = vmatpush1.bf16.msra.mxu0 0
    %458 = vmatprep.subr.bf16.mxu0 0
    %459 = vmatpush1.bf16.msra.mxu0 0
    %460 = vmatprep.subr.bf16.mxu0 0
    %461 = vmatpush1.bf16.msra.mxu0 0
    %462 = vmatprep.subr.bf16.mxu0 0
    %463 = vmatpush1.bf16.msra.mxu0 0
    %464 = vmatprep.subr.bf16.mxu0 0
    %465 = vmatpush1.bf16.msra.mxu0 0
    %466 = vmatprep.subr.bf16.mxu0 0
    %467 = vmatpush1.bf16.msra.mxu0 0
    %468 = vmatprep.mubr.bf16.mxu0 0
    %469 = vmatmul.mubr.bf16.gmra.mrb[0].mxu0 %v413
    %v470 = vpop.f32.mrb[0].mxu0
    %v471 = vadd.f32 %v385, %v470
    %v472 = vpop.f32.mrb[0].mxu0
    %v473 = vpop.f32.mrb[0].mxu0
    %v474 = vadd.f32 %v385, %v473
    %v475 = vpop.f32.mrb[0].mxu0
    %476 = vmatprep.mubr.bf16.mxu0 0
    %477 = vmatmul.mubr.bf16.gmra.mrb[0].mxu0 %v416
    %v478 = vpop.f32.mrb[0].mxu0
    %v479 = vadd.f32 %v385, %v478
    %v480 = vpop.f32.mrb[0].mxu0
    %v481 = vpop.f32.mrb[0].mxu0
    %v482 = vadd.f32 %v385, %v481
    %v483 = vpop.f32.mrb[0].mxu0
    %484 = vmatprep.mubr.bf16.mxu0 0
    %485 = vmatmul.mubr.bf16.gmra.mrb[0].mxu0 %v419
    %v486 = vpop.f32.mrb[0].mxu0
    %v487 = vadd.f32 %v385, %v486
    %v488 = vpop.f32.mrb[0].mxu0
    %v489 = vpop.f32.mrb[0].mxu0
    %v490 = vadd.f32 %v385, %v489
    %v491 = vpop.f32.mrb[0].mxu0
    %492 = vmatprep.mubr.bf16.mxu0 0
    %493 = vmatmul.mubr.bf16.gmra.mrb[0].mxu0 %v422
    %v494 = vpop.f32.mrb[0].mxu0
    %v495 = vadd.f32 %v385, %v494
    %v496 = vpop.f32.mrb[0].mxu0
    %v497 = vpop.f32.mrb[0].mxu0
    %v498 = vadd.f32 %v385, %v497
    %v499 = vpop.f32.mrb[0].mxu0
    %500 = vmatprep.mubr.bf16.mxu0 0
    %501 = vmatmul.mubr.bf16.gmra.mrb[0].mxu0 %v425
    %v502 = vpop.f32.mrb[0].mxu0
    %v503 = vadd.f32 %v385, %v502
    %v504 = vpop.f32.mrb[0].mxu0
    %v505 = vpop.f32.mrb[0].mxu0
    %v506 = vadd.f32 %v385, %v505
    %v507 = vpop.f32.mrb[0].mxu0
    %508 = vmatprep.mubr.bf16.mxu0 0
    %509 = vmatmul.mubr.bf16.gmra.mrb[0].mxu0 %v428
    %v510 = vpop.f32.mrb[0].mxu0
    %v511 = vadd.f32 %v385, %v510
    %v512 = vpop.f32.mrb[0].mxu0
    %v513 = vpop.f32.mrb[0].mxu0
    %v514 = vadd.f32 %v385, %v513
    %v515 = vpop.f32.mrb[0].mxu0
    %516 = vmatprep.mubr.bf16.mxu0 0
    %517 = vmatmul.mubr.bf16.gmra.mrb[0].mxu0 %v431
    %v518 = vpop.f32.mrb[0].mxu0
    %v519 = vadd.f32 %v385, %v518
    %v520 = vpop.f32.mrb[0].mxu0
    %v521 = vpop.f32.mrb[0].mxu0
    %v522 = vadd.f32 %v385, %v521
    %v523 = vpop.f32.mrb[0].mxu0
    %524 = vmatprep.mubr.bf16.mxu0 0
    %525 = vmatmul.mubr.bf16.gmra.mrb[0].mxu0 %v434
    %v526 = vpop.f32.mrb[0].mxu0
    %v527 = vadd.f32 %v385, %v526
    %v528 = vpop.f32.mrb[0].mxu0
    %v529 = vpop.f32.mrb[0].mxu0
    %v530 = vadd.f32 %v385, %v529
    %v531 = vpop.f32.mrb[0].mxu0
    %532 = vdwg.mxu0
    %v533 = vmax.f32 %v471, 0.0
    %v534 = vmax.f32 %v474, 0.0
    %v535 = vmax.f32 %v479, 0.0
    %v536 = vmax.f32 %v482, 0.0
    %v537 = vmax.f32 %v487, 0.0
    %v538 = vmax.f32 %v490, 0.0
    %v539 = vmax.f32 %v495, 0.0
    %v540 = vmax.f32 %v498, 0.0
    %v541 = vmax.f32 %v503, 0.0
    %v542 = vmax.f32 %v506, 0.0
    %v543 = vmax.f32 %v511, 0.0
    %v544 = vmax.f32 %v514, 0.0
    %v545 = vmax.f32 %v519, 0.0
    %v546 = vmax.f32 %v522, 0.0
    %v547 = vmax.f32 %v527, 0.0
    %v548 = vmax.f32 %v530, 0.0
    %v549 = vpack.c.bf16 %v534, %v533
    %v550 = vpack.c.bf16 %v536, %v535
    %v551 = vpack.c.bf16 %v538, %v537
    %v552 = vpack.c.bf16 %v540, %v539
    %v553 = vpack.c.bf16 %v542, %v541
    %v554 = vpack.c.bf16 %v544, %v543
    %v555 = vpack.c.bf16 %v546, %v545
    %v556 = vpack.c.bf16 %v548, %v547
    %v557 = vld [vmem:[#allocation10] sm:$0xf]
    %v558 = vld [vmem:[#allocation10 + $0x4] sm:$0xf]
    %v559 = vld [vmem:[#allocation10 + $0x8] sm:$0xf]
    %v560 = vld [vmem:[#allocation10 + $0xc] sm:$0xf]
    %v561 = vld [vmem:[#allocation10 + $0x10] sm:$0xf]
    %v562 = vld [vmem:[#allocation10 + $0x14] sm:$0xf]
    %v563 = vld [vmem:[#allocation10 + $0x18] sm:$0xf]
    %v564 = vld [vmem:[#allocation10 + $0x1c] sm:$0xf]
    %v565 = vld [vmem:[#allocation11] sm:$0x1]
    %v567 = vlaneseq
    %v568 = vshrl.u32 %v567, 7
    %v569 = vsub.s32 0, %v568
    %v570 = vrot.slane %v565, %v569
    %v580 = vunpack.c.l.b16 %v557
    %v581 = vunpack.c.l.b16 %v558
    %v582 = vunpack.c.l.b16 %v559
    %v583 = vunpack.c.l.b16 %v560
    %v584 = vunpack.c.l.b16 %v561
    %v585 = vunpack.c.l.b16 %v562
    %v586 = vunpack.c.l.b16 %v563
    %v587 = vunpack.c.l.b16 %v564
    %v588 = vpack.c.b16 %v581, %v580
    %v589 = vpack.c.b16 %v583, %v582
    %v590 = vpack.c.b16 %v585, %v584
    %v591 = vpack.c.b16 %v587, %v586
    %v597 = vsel %vm411, %v549, 0
    %v600 = vsel %vm411, %v550, 0
    %v603 = vsel %vm411, %v551, 0
    %v606 = vsel %vm411, %v552, 0
    %v609 = vsel %vm411, %v553, 0
    %v612 = vsel %vm411, %v554, 0
    %v615 = vsel %vm411, %v555, 0
    %v618 = vsel %vm411, %v556, 0
    %620 = vmatprep.subr.bf16.mxu0 0
    %621 = vmatpush1.bf16.msra.mxu0 %v588
    %622 = vmatprep.subr.bf16.mxu0 0
    %623 = vmatpush1.bf16.msra.mxu0 %v589
    %624 = vmatprep.subr.bf16.mxu0 0
    %625 = vmatpush1.bf16.msra.mxu0 %v590
    %626 = vmatprep.subr.bf16.mxu0 0
    %627 = vmatpush1.bf16.msra.mxu0 %v591
    %628 = vmatprep.subr.bf16.mxu0 0
    %629 = vmatpush1.bf16.msra.mxu0 0
    %630 = vmatprep.subr.bf16.mxu0 0
    %631 = vmatpush1.bf16.msra.mxu0 0
    %632 = vmatprep.subr.bf16.mxu0 0
    %633 = vmatpush1.bf16.msra.mxu0 0
    %634 = vmatprep.subr.bf16.mxu0 0
    %635 = vmatpush1.bf16.msra.mxu0 0
    %636 = vmatprep.subr.bf16.mxu0 0
    %637 = vmatpush1.bf16.msra.mxu0 0
    %638 = vmatprep.subr.bf16.mxu0 0
    %639 = vmatpush1.bf16.msra.mxu0 0
    %640 = vmatprep.subr.bf16.mxu0 0
    %641 = vmatpush1.bf16.msra.mxu0 0
    %642 = vmatprep.subr.bf16.mxu0 0
    %643 = vmatpush1.bf16.msra.mxu0 0
    %644 = vmatprep.subr.bf16.mxu0 0
    %645 = vmatpush1.bf16.msra.mxu0 0
    %646 = vmatprep.subr.bf16.mxu0 0
    %647 = vmatpush1.bf16.msra.mxu0 0
    %648 = vmatprep.subr.bf16.mxu0 0
    %649 = vmatpush1.bf16.msra.mxu0 0
    %650 = vmatprep.subr.bf16.mxu0 0
    %651 = vmatpush1.bf16.msra.mxu0 0
    %652 = vmatprep.mubr.bf16.mxu0 0
    %653 = vmatmul.mubr.bf16.gmra.mrb[0].mxu0 %v597
    %v654 = vpop.f32.mrb[0].mxu0
    %v655 = vadd.f32 %v570, %v654
    %v656 = vpop.f32.mrb[0].mxu0
    %v657 = vpop.f32.mrb[0].mxu0
    %v658 = vadd.f32 %v570, %v657
    %v659 = vpop.f32.mrb[0].mxu0
    %660 = vmatprep.mubr.bf16.mxu0 0
    %661 = vmatmul.mubr.bf16.gmra.mrb[0].mxu0 %v600
    %v662 = vpop.f32.mrb[0].mxu0
    %v663 = vadd.f32 %v570, %v662
    %v664 = vpop.f32.mrb[0].mxu0
    %v665 = vpop.f32.mrb[0].mxu0
    %v666 = vadd.f32 %v570, %v665
    %v667 = vpop.f32.mrb[0].mxu0
    %668 = vmatprep.mubr.bf16.mxu0 0
    %669 = vmatmul.mubr.bf16.gmra.mrb[0].mxu0 %v603
    %v670 = vpop.f32.mrb[0].mxu0
    %v671 = vadd.f32 %v570, %v670
    %v672 = vpop.f32.mrb[0].mxu0
    %v673 = vpop.f32.mrb[0].mxu0
    %v674 = vadd.f32 %v570, %v673
    %v675 = vpop.f32.mrb[0].mxu0
    %676 = vmatprep.mubr.bf16.mxu0 0
    %677 = vmatmul.mubr.bf16.gmra.mrb[0].mxu0 %v606
    %v678 = vpop.f32.mrb[0].mxu0
    %v679 = vadd.f32 %v570, %v678
    %v680 = vpop.f32.mrb[0].mxu0
    %v681 = vpop.f32.mrb[0].mxu0
    %v682 = vadd.f32 %v570, %v681
    %v683 = vpop.f32.mrb[0].mxu0
    %684 = vmatprep.mubr.bf16.mxu0 0
    %685 = vmatmul.mubr.bf16.gmra.mrb[0].mxu0 %v609
    %v686 = vpop.f32.mrb[0].mxu0
    %v687 = vadd.f32 %v570, %v686
    %v688 = vpop.f32.mrb[0].mxu0
    %v689 = vpop.f32.mrb[0].mxu0
    %v690 = vadd.f32 %v570, %v689
    %v691 = vpop.f32.mrb[0].mxu0
    %692 = vmatprep.mubr.bf16.mxu0 0
    %693 = vmatmul.mubr.bf16.gmra.mrb[0].mxu0 %v612
    %v694 = vpop.f32.mrb[0].mxu0
    %v695 = vadd.f32 %v570, %v694
    %v696 = vpop.f32.mrb[0].mxu0
    %v697 = vpop.f32.mrb[0].mxu0
    %v698 = vadd.f32 %v570, %v697
    %v699 = vpop.f32.mrb[0].mxu0
    %700 = vmatprep.mubr.bf16.mxu0 0
    %701 = vmatmul.mubr.bf16.gmra.mrb[0].mxu0 %v615
    %v702 = vpop.f32.mrb[0].mxu0
    %v703 = vadd.f32 %v570, %v702
    %v704 = vpop.f32.mrb[0].mxu0
    %v705 = vpop.f32.mrb[0].mxu0
    %v706 = vadd.f32 %v570, %v705
    %v707 = vpop.f32.mrb[0].mxu0
    %708 = vmatprep.mubr.bf16.mxu0 0
    %709 = vmatmul.mubr.bf16.gmra.mrb[0].mxu0 %v618
    %v710 = vpop.f32.mrb[0].mxu0
    %v711 = vadd.f32 %v570, %v710
    %v712 = vpop.f32.mrb[0].mxu0
    %v713 = vpop.f32.mrb[0].mxu0
    %v714 = vadd.f32 %v570, %v713
    %v715 = vpop.f32.mrb[0].mxu0
    %716 = vdwg.mxu0
    %v717 = vmax.f32 %v655, 0.0
    %v718 = vmax.f32 %v658, 0.0
    %v719 = vmax.f32 %v663, 0.0
    %v720 = vmax.f32 %v666, 0.0
    %v721 = vmax.f32 %v671, 0.0
    %v722 = vmax.f32 %v674, 0.0
    %v723 = vmax.f32 %v679, 0.0
    %v724 = vmax.f32 %v682, 0.0
    %v725 = vmax.f32 %v687, 0.0
    %v726 = vmax.f32 %v690, 0.0
    %v727 = vmax.f32 %v695, 0.0
    %v728 = vmax.f32 %v698, 0.0
    %v729 = vmax.f32 %v703, 0.0
    %v730 = vmax.f32 %v706, 0.0
    %v731 = vmax.f32 %v711, 0.0
    %v732 = vmax.f32 %v714, 0.0
    %v733 = vpack.c.bf16 %v718, %v717
    %v734 = vpack.c.bf16 %v720, %v719
    %v735 = vpack.c.bf16 %v722, %v721
    %v736 = vpack.c.bf16 %v724, %v723
    %v737 = vpack.c.bf16 %v726, %v725
    %v738 = vpack.c.bf16 %v728, %v727
    %v739 = vpack.c.bf16 %v730, %v729
    %v740 = vpack.c.bf16 %v732, %v731
    %v741 = vld [vmem:[#allocation13] sm:$0xf]
    %v742 = vld [vmem:[#allocation13 + $0x4] sm:$0xf]
    %v743 = vld [vmem:[#allocation13 + $0x8] sm:$0xf]
    %v744 = vld [vmem:[#allocation13 + $0xc] sm:$0xf]
    %v745 = vld [vmem:[#allocation13 + $0x10] sm:$0xf]
    %v746 = vld [vmem:[#allocation13 + $0x14] sm:$0xf]
    %v747 = vld [vmem:[#allocation13 + $0x18] sm:$0xf]
    %v748 = vld [vmem:[#allocation13 + $0x1c] sm:$0xf]
    %v749 = vld [vmem:[#allocation14] sm:$0x1]
    %v751 = vlaneseq
    %v752 = vshrl.u32 %v751, 7
    %v753 = vsub.s32 0, %v752
    %v754 = vrot.slane %v749, %v753
    %764 = vrot.lane.b32.xlu0 %v549, 64
    %v765 = vpop.permute.xlu0 %764
    %766 = vrot.lane.b32.xlu0 %v550, 64
    %v767 = vpop.permute.xlu0 %766
    %768 = vrot.lane.b32.xlu0 %v551, 64
    %v769 = vpop.permute.xlu0 %768
    %770 = vrot.lane.b32.xlu0 %v552, 64
    %v771 = vpop.permute.xlu0 %770
    %772 = vrot.lane.b32.xlu0 %v553, 64
    %v773 = vpop.permute.xlu0 %772
    %774 = vrot.lane.b32.xlu0 %v554, 64
    %v775 = vpop.permute.xlu0 %774
    %776 = vrot.lane.b32.xlu0 %v555, 64
    %v777 = vpop.permute.xlu0 %776
    %778 = vrot.lane.b32.xlu0 %v556, 64
    %v779 = vpop.permute.xlu0 %778
    %v788 = vunpack.c.l.b16 %v741
    %v789 = vunpack.c.l.b16 %v742
    %v790 = vunpack.c.l.b16 %v743
    %v791 = vunpack.c.l.b16 %v744
    %v792 = vunpack.c.l.b16 %v745
    %v793 = vunpack.c.l.b16 %v746
    %v794 = vunpack.c.l.b16 %v747
    %v795 = vunpack.c.l.b16 %v748
    %v796 = vpack.c.b16 %v789, %v788
    %v797 = vpack.c.b16 %v791, %v790
    %v798 = vpack.c.b16 %v793, %v792
    %v799 = vpack.c.b16 %v795, %v794
    %v805 = vsel %vm411, %v765, 0
    %v808 = vsel %vm411, %v767, 0
    %v811 = vsel %vm411, %v769, 0
    %v814 = vsel %vm411, %v771, 0
    %v817 = vsel %vm411, %v773, 0
    %v820 = vsel %vm411, %v775, 0
    %v823 = vsel %vm411, %v777, 0
    %v826 = vsel %vm411, %v779, 0
    %828 = vmatprep.subr.bf16.mxu0 0
    %829 = vmatpush1.bf16.msra.mxu0 %v796
    %830 = vmatprep.subr.bf16.mxu0 0
    %831 = vmatpush1.bf16.msra.mxu0 %v797
    %832 = vmatprep.subr.bf16.mxu0 0
    %833 = vmatpush1.bf16.msra.mxu0 %v798
    %834 = vmatprep.subr.bf16.mxu0 0
    %835 = vmatpush1.bf16.msra.mxu0 %v799
    %836 = vmatprep.subr.bf16.mxu0 0
    %837 = vmatpush1.bf16.msra.mxu0 0
    %838 = vmatprep.subr.bf16.mxu0 0
    %839 = vmatpush1.bf16.msra.mxu0 0
    %840 = vmatprep.subr.bf16.mxu0 0
    %841 = vmatpush1.bf16.msra.mxu0 0
    %842 = vmatprep.subr.bf16.mxu0 0
    %843 = vmatpush1.bf16.msra.mxu0 0
    %844 = vmatprep.subr.bf16.mxu0 0
    %845 = vmatpush1.bf16.msra.mxu0 0
    %846 = vmatprep.subr.bf16.mxu0 0
    %847 = vmatpush1.bf16.msra.mxu0 0
    %848 = vmatprep.subr.bf16.mxu0 0
    %849 = vmatpush1.bf16.msra.mxu0 0
    %850 = vmatprep.subr.bf16.mxu0 0
    %851 = vmatpush1.bf16.msra.mxu0 0
    %852 = vmatprep.subr.bf16.mxu0 0
    %853 = vmatpush1.bf16.msra.mxu0 0
    %854 = vmatprep.subr.bf16.mxu0 0
    %855 = vmatpush1.bf16.msra.mxu0 0
    %856 = vmatprep.subr.bf16.mxu0 0
    %857 = vmatpush1.bf16.msra.mxu0 0
    %858 = vmatprep.subr.bf16.mxu0 0
    %859 = vmatpush1.bf16.msra.mxu0 0
    %860 = vmatprep.mubr.bf16.mxu0 0
    %861 = vmatmul.mubr.bf16.gmra.mrb[0].mxu0 %v805
    %v862 = vpop.f32.mrb[0].mxu0
    %v863 = vadd.f32 %v754, %v862
    %v864 = vpop.f32.mrb[0].mxu0
    %v865 = vpop.f32.mrb[0].mxu0
    %v866 = vadd.f32 %v754, %v865
    %v867 = vpop.f32.mrb[0].mxu0
    %868 = vmatprep.mubr.bf16.mxu0 0
    %869 = vmatmul.mubr.bf16.gmra.mrb[0].mxu0 %v808
    %v870 = vpop.f32.mrb[0].mxu0
    %v871 = vadd.f32 %v754, %v870
    %v872 = vpop.f32.mrb[0].mxu0
    %v873 = vpop.f32.mrb[0].mxu0
    %v874 = vadd.f32 %v754, %v873
    %v875 = vpop.f32.mrb[0].mxu0
    %876 = vmatprep.mubr.bf16.mxu0 0
    %877 = vmatmul.mubr.bf16.gmra.mrb[0].mxu0 %v811
    %v878 = vpop.f32.mrb[0].mxu0
    %v879 = vadd.f32 %v754, %v878
    %v880 = vpop.f32.mrb[0].mxu0
    %v881 = vpop.f32.mrb[0].mxu0
    %v882 = vadd.f32 %v754, %v881
    %v883 = vpop.f32.mrb[0].mxu0
    %884 = vmatprep.mubr.bf16.mxu0 0
    %885 = vmatmul.mubr.bf16.gmra.mrb[0].mxu0 %v814
    %v886 = vpop.f32.mrb[0].mxu0
    %v887 = vadd.f32 %v754, %v886
    %v888 = vpop.f32.mrb[0].mxu0
    %v889 = vpop.f32.mrb[0].mxu0
    %v890 = vadd.f32 %v754, %v889
    %v891 = vpop.f32.mrb[0].mxu0
    %892 = vmatprep.mubr.bf16.mxu0 0
    %893 = vmatmul.mubr.bf16.gmra.mrb[0].mxu0 %v817
    %v894 = vpop.f32.mrb[0].mxu0
    %v895 = vadd.f32 %v754, %v894
    %v896 = vpop.f32.mrb[0].mxu0
    %v897 = vpop.f32.mrb[0].mxu0
    %v898 = vadd.f32 %v754, %v897
    %v899 = vpop.f32.mrb[0].mxu0
    %900 = vmatprep.mubr.bf16.mxu0 0
    %901 = vmatmul.mubr.bf16.gmra.mrb[0].mxu0 %v820
    %v902 = vpop.f32.mrb[0].mxu0
    %v903 = vadd.f32 %v754, %v902
    %v904 = vpop.f32.mrb[0].mxu0
    %v905 = vpop.f32.mrb[0].mxu0
    %v906 = vadd.f32 %v754, %v905
    %v907 = vpop.f32.mrb[0].mxu0
    %908 = vmatprep.mubr.bf16.mxu0 0
    %909 = vmatmul.mubr.bf16.gmra.mrb[0].mxu0 %v823
    %v910 = vpop.f32.mrb[0].mxu0
    %v911 = vadd.f32 %v754, %v910
    %v912 = vpop.f32.mrb[0].mxu0
    %v913 = vpop.f32.mrb[0].mxu0
    %v914 = vadd.f32 %v754, %v913
    %v915 = vpop.f32.mrb[0].mxu0
    %916 = vmatprep.mubr.bf16.mxu0 0
    %917 = vmatmul.mubr.bf16.gmra.mrb[0].mxu0 %v826
    %v918 = vpop.f32.mrb[0].mxu0
    %v919 = vadd.f32 %v754, %v918
    %v920 = vpop.f32.mrb[0].mxu0
    %v921 = vpop.f32.mrb[0].mxu0
    %v922 = vadd.f32 %v754, %v921
    %v923 = vpop.f32.mrb[0].mxu0
    %924 = vdwg.mxu0
    %v925 = vmax.f32 %v863, 0.0
    %v926 = vmax.f32 %v866, 0.0
    %v927 = vmax.f32 %v871, 0.0
    %v928 = vmax.f32 %v874, 0.0
    %v929 = vmax.f32 %v879, 0.0
    %v930 = vmax.f32 %v882, 0.0
    %v931 = vmax.f32 %v887, 0.0
    %v932 = vmax.f32 %v890, 0.0
    %v933 = vmax.f32 %v895, 0.0
    %v934 = vmax.f32 %v898, 0.0
    %v935 = vmax.f32 %v903, 0.0
    %v936 = vmax.f32 %v906, 0.0
    %v937 = vmax.f32 %v911, 0.0
    %v938 = vmax.f32 %v914, 0.0
    %v939 = vmax.f32 %v919, 0.0
    %v940 = vmax.f32 %v922, 0.0
    %v941 = vpack.c.bf16 %v926, %v925
    %v942 = vpack.c.bf16 %v928, %v927
    %v943 = vpack.c.bf16 %v930, %v929
    %v944 = vpack.c.bf16 %v932, %v931
    %v945 = vpack.c.bf16 %v934, %v933
    %v946 = vpack.c.bf16 %v936, %v935
    %v947 = vpack.c.bf16 %v938, %v937
    %v948 = vpack.c.bf16 %v940, %v939
    %v949 = vld [vmem:[#allocation16] sm:$0xff]
    %v950 = vld [vmem:[#allocation16 + $0x8] sm:$0xff]
    %v951 = vld [vmem:[#allocation16 + $0x10] sm:$0xff]
    %v952 = vld [vmem:[#allocation16 + $0x18] sm:$0xff]
    %v953 = vld [vmem:[#allocation16 + $0x20] sm:$0xff]
    %v954 = vld [vmem:[#allocation16 + $0x28] sm:$0xff]
    %v955 = vld [vmem:[#allocation16 + $0x30] sm:$0xff]
    %v956 = vld [vmem:[#allocation16 + $0x38] sm:$0xff]
    %v957 = vld [vmem:[#allocation16 + $0x40] sm:$0xff]
    %v958 = vld [vmem:[#allocation16 + $0x48] sm:$0xff]
    %v959 = vld [vmem:[#allocation16 + $0x50] sm:$0xff]
    %v960 = vld [vmem:[#allocation16 + $0x58] sm:$0xff]
    %v961 = vld [vmem:[#allocation16 + $0x60] sm:$0xff]
    %v962 = vld [vmem:[#allocation16 + $0x68] sm:$0xff]
    %v963 = vld [vmem:[#allocation16 + $0x70] sm:$0xff]
    %v964 = vld [vmem:[#allocation16 + $0x78] sm:$0xff]
    %v965 = vld [vmem:[#allocation16 + $0x80] sm:$0xff]
    %v966 = vld [vmem:[#allocation16 + $0x88] sm:$0xff]
    %v967 = vld [vmem:[#allocation16 + $0x90] sm:$0xff]
    %v968 = vld [vmem:[#allocation16 + $0x98] sm:$0xff]
    %v969 = vld [vmem:[#allocation16 + $0xa0] sm:$0xff]
    %v970 = vld [vmem:[#allocation16 + $0xa8] sm:$0xff]
    %v971 = vld [vmem:[#allocation16 + $0xb0] sm:$0xff]
    %v972 = vld [vmem:[#allocation16 + $0xb8] sm:$0xff]
    %v973 = vld [vmem:[#allocation16 + $0xc0] sm:$0xff]
    %v974 = vld [vmem:[#allocation16 + $0xc8] sm:$0xff]
    %v975 = vld [vmem:[#allocation16 + $0xd0] sm:$0xff]
    %v976 = vld [vmem:[#allocation16 + $0xd8] sm:$0xff]
    %v977 = vld [vmem:[#allocation16 + $0xe0] sm:$0xff]
    %v978 = vld [vmem:[#allocation16 + $0xe8] sm:$0xff]
    %v979 = vld [vmem:[#allocation16 + $0xf0] sm:$0xff]
    %v980 = vld [vmem:[#allocation16 + $0xf8] sm:$0xff]
    %v981 = vld [vmem:[#allocation17] sm:$0xff]
    %v982 = vld [vmem:[#allocation17 + $0x8] sm:$0xff]
    %v983 = vld [vmem:[#allocation17 + $0x10] sm:$0xff]
    %v984 = vld [vmem:[#allocation17 + $0x18] sm:$0xff]
    %v985 = vld [vmem:[#allocation17 + $0x20] sm:$0xff]
    %v986 = vld [vmem:[#allocation17 + $0x28] sm:$0xff]
    %v987 = vld [vmem:[#allocation17 + $0x30] sm:$0xff]
    %v988 = vld [vmem:[#allocation17 + $0x38] sm:$0xff]
    %v989 = vld [vmem:[#allocation17 + $0x40] sm:$0xff]
    %v990 = vld [vmem:[#allocation17 + $0x48] sm:$0xff]
    %v991 = vld [vmem:[#allocation17 + $0x50] sm:$0xff]
    %v992 = vld [vmem:[#allocation17 + $0x58] sm:$0xff]
    %v993 = vld [vmem:[#allocation17 + $0x60] sm:$0xff]
    %v994 = vld [vmem:[#allocation17 + $0x68] sm:$0xff]
    %v995 = vld [vmem:[#allocation17 + $0x70] sm:$0xff]
    %v996 = vld [vmem:[#allocation17 + $0x78] sm:$0xff]
    %v997 = vld [vmem:[#allocation17 + $0x80] sm:$0xff]
    %v998 = vld [vmem:[#allocation17 + $0x88] sm:$0xff]
    %v999 = vld [vmem:[#allocation17 + $0x90] sm:$0xff]
    %v1000 = vld [vmem:[#allocation17 + $0x98] sm:$0xff]
    %v1001 = vld [vmem:[#allocation17 + $0xa0] sm:$0xff]
    %v1002 = vld [vmem:[#allocation17 + $0xa8] sm:$0xff]
    %v1003 = vld [vmem:[#allocation17 + $0xb0] sm:$0xff]
    %v1004 = vld [vmem:[#allocation17 + $0xb8] sm:$0xff]
    %v1005 = vld [vmem:[#allocation17 + $0xc0] sm:$0xff]
    %v1006 = vld [vmem:[#allocation17 + $0xc8] sm:$0xff]
    %v1007 = vld [vmem:[#allocation17 + $0xd0] sm:$0xff]
    %v1008 = vld [vmem:[#allocation17 + $0xd8] sm:$0xff]
    %v1009 = vld [vmem:[#allocation17 + $0xe0] sm:$0xff]
    %v1010 = vld [vmem:[#allocation17 + $0xe8] sm:$0xff]
    %v1011 = vld [vmem:[#allocation17 + $0xf0] sm:$0xff]
    %v1012 = vld [vmem:[#allocation17 + $0xf8] sm:$0xff]
    %v1045 = vunpack.c.l.b16 %v981
    %v1046 = vunpack.c.h.b16 %v981
    %v1047 = vunpack.c.l.b16 %v982
    %v1048 = vunpack.c.h.b16 %v982
    %v1049 = vunpack.c.l.b16 %v983
    %v1050 = vunpack.c.h.b16 %v983
    %v1051 = vunpack.c.l.b16 %v984
    %v1052 = vunpack.c.h.b16 %v984
    %v1053 = vunpack.c.l.b16 %v985
    %v1054 = vunpack.c.h.b16 %v985
    %v1055 = vunpack.c.l.b16 %v986
    %v1056 = vunpack.c.h.b16 %v986
    %v1057 = vunpack.c.l.b16 %v987
    %v1058 = vunpack.c.h.b16 %v987
    %v1059 = vunpack.c.l.b16 %v988
    %v1060 = vunpack.c.h.b16 %v988
    %v1061 = vunpack.c.l.b16 %v989
    %v1062 = vunpack.c.h.b16 %v989
    %v1063 = vunpack.c.l.b16 %v990
    %v1064 = vunpack.c.h.b16 %v990
    %v1065 = vunpack.c.l.b16 %v991
    %v1066 = vunpack.c.h.b16 %v991
    %v1067 = vunpack.c.l.b16 %v992
    %v1068 = vunpack.c.h.b16 %v992
    %v1069 = vunpack.c.l.b16 %v993
    %v1070 = vunpack.c.h.b16 %v993
    %v1071 = vunpack.c.l.b16 %v994
    %v1072 = vunpack.c.h.b16 %v994
    %v1073 = vunpack.c.l.b16 %v995
    %v1074 = vunpack.c.h.b16 %v995
    %v1075 = vunpack.c.l.b16 %v996
    %v1076 = vunpack.c.h.b16 %v996
    %v1077 = vunpack.c.l.b16 %v997
    %v1078 = vunpack.c.h.b16 %v997
    %v1079 = vunpack.c.l.b16 %v998
    %v1080 = vunpack.c.h.b16 %v998
    %v1081 = vunpack.c.l.b16 %v999
    %v1082 = vunpack.c.h.b16 %v999
    %v1083 = vunpack.c.l.b16 %v1000
    %v1084 = vunpack.c.h.b16 %v1000
    %v1085 = vunpack.c.l.b16 %v1001
    %v1086 = vunpack.c.h.b16 %v1001
    %v1087 = vunpack.c.l.b16 %v1002
    %v1088 = vunpack.c.h.b16 %v1002
    %v1089 = vunpack.c.l.b16 %v1003
    %v1090 = vunpack.c.h.b16 %v1003
    %v1091 = vunpack.c.l.b16 %v1004
    %v1092 = vunpack.c.h.b16 %v1004
    %v1093 = vunpack.c.l.b16 %v1005
    %v1094 = vunpack.c.h.b16 %v1005
    %v1095 = vunpack.c.l.b16 %v1006
    %v1096 = vunpack.c.h.b16 %v1006
    %v1097 = vunpack.c.l.b16 %v1007
    %v1098 = vunpack.c.h.b16 %v1007
    %v1099 = vunpack.c.l.b16 %v1008
    %v1100 = vunpack.c.h.b16 %v1008
    %v1101 = vunpack.c.l.b16 %v1009
    %v1102 = vunpack.c.h.b16 %v1009
    %v1103 = vunpack.c.l.b16 %v1010
    %v1104 = vunpack.c.h.b16 %v1010
    %v1105 = vunpack.c.l.b16 %v1011
    %v1106 = vunpack.c.h.b16 %v1011
    %v1107 = vunpack.c.l.b16 %v1012
    %v1108 = vunpack.c.h.b16 %v1012
    %v1109 = vpack.c.b16 %v1049, %v1045
    %v1110 = vpack.c.b16 %v1050, %v1046
    %v1111 = vpack.c.b16 %v1051, %v1047
    %v1112 = vpack.c.b16 %v1052, %v1048
    %v1113 = vpack.c.b16 %v1057, %v1053
    %v1114 = vpack.c.b16 %v1058, %v1054
    %v1115 = vpack.c.b16 %v1059, %v1055
    %v1116 = vpack.c.b16 %v1060, %v1056
    %v1117 = vpack.c.b16 %v1065, %v1061
    %v1118 = vpack.c.b16 %v1066, %v1062
    %v1119 = vpack.c.b16 %v1067, %v1063
    %v1120 = vpack.c.b16 %v1068, %v1064
    %v1121 = vpack.c.b16 %v1073, %v1069
    %v1122 = vpack.c.b16 %v1074, %v1070
    %v1123 = vpack.c.b16 %v1075, %v1071
    %v1124 = vpack.c.b16 %v1076, %v1072
    %v1125 = vpack.c.b16 %v1081, %v1077
    %v1126 = vpack.c.b16 %v1082, %v1078
    %v1127 = vpack.c.b16 %v1083, %v1079
    %v1128 = vpack.c.b16 %v1084, %v1080
    %v1129 = vpack.c.b16 %v1089, %v1085
    %v1130 = vpack.c.b16 %v1090, %v1086
    %v1131 = vpack.c.b16 %v1091, %v1087
    %v1132 = vpack.c.b16 %v1092, %v1088
    %v1133 = vpack.c.b16 %v1097, %v1093
    %v1134 = vpack.c.b16 %v1098, %v1094
    %v1135 = vpack.c.b16 %v1099, %v1095
    %v1136 = vpack.c.b16 %v1100, %v1096
    %v1137 = vpack.c.b16 %v1105, %v1101
    %v1138 = vpack.c.b16 %v1106, %v1102
    %v1139 = vpack.c.b16 %v1107, %v1103
    %v1140 = vpack.c.b16 %v1108, %v1104
    %1173 = vmatprep.subr.bf16.mxu0 %v1110
    %1174 = vmatpush1.bf16.msra.mxu0 %v1109
    %1175 = vmatprep.subr.bf16.mxu0 %v1114
    %1176 = vmatpush1.bf16.msra.mxu0 %v1113
    %1177 = vmatprep.subr.bf16.mxu0 %v1118
    %1178 = vmatpush1.bf16.msra.mxu0 %v1117
    %1179 = vmatprep.subr.bf16.mxu0 %v1122
    %1180 = vmatpush1.bf16.msra.mxu0 %v1121
    %1181 = vmatprep.subr.bf16.mxu0 %v1126
    %1182 = vmatpush1.bf16.msra.mxu0 %v1125
    %1183 = vmatprep.subr.bf16.mxu0 %v1130
    %1184 = vmatpush1.bf16.msra.mxu0 %v1129
    %1185 = vmatprep.subr.bf16.mxu0 %v1134
    %1186 = vmatpush1.bf16.msra.mxu0 %v1133
    %1187 = vmatprep.subr.bf16.mxu0 %v1138
    %1188 = vmatpush1.bf16.msra.mxu0 %v1137
    %1189 = vmatprep.subr.bf16.mxu0 0
    %1190 = vmatpush1.bf16.msra.mxu0 0
    %1191 = vmatprep.subr.bf16.mxu0 0
    %1192 = vmatpush1.bf16.msra.mxu0 0
    %1193 = vmatprep.subr.bf16.mxu0 0
    %1194 = vmatpush1.bf16.msra.mxu0 0
    %1195 = vmatprep.subr.bf16.mxu0 0
    %1196 = vmatpush1.bf16.msra.mxu0 0
    %1197 = vmatprep.subr.bf16.mxu0 0
    %1198 = vmatpush1.bf16.msra.mxu0 0
    %1199 = vmatprep.subr.bf16.mxu0 0
    %1200 = vmatpush1.bf16.msra.mxu0 0
    %1201 = vmatprep.subr.bf16.mxu0 0
    %1202 = vmatpush1.bf16.msra.mxu0 0
    %1203 = vmatprep.subr.bf16.mxu0 0
    %1204 = vmatpush1.bf16.msra.mxu0 0
    %1205 = vmatprep.mubr.bf16.mxu0 0
    %1206 = vmatmul.mubr.bf16.gmra.mrb[0].mxu0 %v733
    %v1207 = vpop.f32.mrb[0].mxu0
    %v1208 = vadd.f32 0.0, %v1207
    %v1209 = vpop.f32.mrb[0].mxu0
    %v1210 = vadd.f32 0.0, %v1209
    %v1211 = vpop.f32.mrb[0].mxu0
    %v1212 = vadd.f32 0.0, %v1211
    %v1213 = vpop.f32.mrb[0].mxu0
    %v1214 = vadd.f32 0.0, %v1213
    %1215 = vmatprep.mubr.bf16.mxu0 0
    %1216 = vmatmul.mubr.bf16.gmra.mrb[0].mxu0 %v734
    %v1217 = vpop.f32.mrb[0].mxu0
    %v1218 = vadd.f32 0.0, %v1217
    %v1219 = vpop.f32.mrb[0].mxu0
    %v1220 = vadd.f32 0.0, %v1219
    %v1221 = vpop.f32.mrb[0].mxu0
    %v1222 = vadd.f32 0.0, %v1221
    %v1223 = vpop.f32.mrb[0].mxu0
    %v1224 = vadd.f32 0.0, %v1223
    %1225 = vmatprep.mubr.bf16.mxu0 0
    %1226 = vmatmul.mubr.bf16.gmra.mrb[0].mxu0 %v735
    %v1227 = vpop.f32.mrb[0].mxu0
    %v1228 = vadd.f32 0.0, %v1227
    %v1229 = vpop.f32.mrb[0].mxu0
    %v1230 = vadd.f32 0.0, %v1229
    %v1231 = vpop.f32.mrb[0].mxu0
    %v1232 = vadd.f32 0.0, %v1231
    %v1233 = vpop.f32.mrb[0].mxu0
    %v1234 = vadd.f32 0.0, %v1233
    %1235 = vmatprep.mubr.bf16.mxu0 0
    %1236 = vmatmul.mubr.bf16.gmra.mrb[0].mxu0 %v736
    %v1237 = vpop.f32.mrb[0].mxu0
    %v1238 = vadd.f32 0.0, %v1237
    %v1239 = vpop.f32.mrb[0].mxu0
    %v1240 = vadd.f32 0.0, %v1239
    %v1241 = vpop.f32.mrb[0].mxu0
    %v1242 = vadd.f32 0.0, %v1241
    %v1243 = vpop.f32.mrb[0].mxu0
    %v1244 = vadd.f32 0.0, %v1243
    %1245 = vmatprep.mubr.bf16.mxu0 0
    %1246 = vmatmul.mubr.bf16.gmra.mrb[0].mxu0 %v737
    %v1247 = vpop.f32.mrb[0].mxu0
    %v1248 = vadd.f32 0.0, %v1247
    %v1249 = vpop.f32.mrb[0].mxu0
    %v1250 = vadd.f32 0.0, %v1249
    %v1251 = vpop.f32.mrb[0].mxu0
    %v1252 = vadd.f32 0.0, %v1251
    %v1253 = vpop.f32.mrb[0].mxu0
    %v1254 = vadd.f32 0.0, %v1253
    %1255 = vmatprep.mubr.bf16.mxu0 0
    %1256 = vmatmul.mubr.bf16.gmra.mrb[0].mxu0 %v738
    %v1257 = vpop.f32.mrb[0].mxu0
    %v1258 = vadd.f32 0.0, %v1257
    %v1259 = vpop.f32.mrb[0].mxu0
    %v1260 = vadd.f32 0.0, %v1259
    %v1261 = vpop.f32.mrb[0].mxu0
    %v1262 = vadd.f32 0.0, %v1261
    %v1263 = vpop.f32.mrb[0].mxu0
    %v1264 = vadd.f32 0.0, %v1263
    %1265 = vmatprep.mubr.bf16.mxu0 0
    %1266 = vmatmul.mubr.bf16.gmra.mrb[0].mxu0 %v739
    %v1267 = vpop.f32.mrb[0].mxu0
    %v1268 = vadd.f32 0.0, %v1267
    %v1269 = vpop.f32.mrb[0].mxu0
    %v1270 = vadd.f32 0.0, %v1269
    %v1271 = vpop.f32.mrb[0].mxu0
    %v1272 = vadd.f32 0.0, %v1271
    %v1273 = vpop.f32.mrb[0].mxu0
    %v1274 = vadd.f32 0.0, %v1273
    %1275 = vmatprep.mubr.bf16.mxu0 0
    %1276 = vmatmul.mubr.bf16.gmra.mrb[0].mxu0 %v740
    %v1277 = vpop.f32.mrb[0].mxu0
    %v1278 = vadd.f32 0.0, %v1277
    %v1279 = vpop.f32.mrb[0].mxu0
    %v1280 = vadd.f32 0.0, %v1279
    %v1281 = vpop.f32.mrb[0].mxu0
    %v1282 = vadd.f32 0.0, %v1281
    %v1283 = vpop.f32.mrb[0].mxu0
    %v1284 = vadd.f32 0.0, %v1283
    %1285 = vdwg.mxu0
    %1286 = vmatprep.subr.bf16.mxu0 %v1112
    %1287 = vmatpush1.bf16.msra.mxu0 %v1111
    %1288 = vmatprep.subr.bf16.mxu0 %v1116
    %1289 = vmatpush1.bf16.msra.mxu0 %v1115
    %1290 = vmatprep.subr.bf16.mxu0 %v1120
    %1291 = vmatpush1.bf16.msra.mxu0 %v1119
    %1292 = vmatprep.subr.bf16.mxu0 %v1124
    %1293 = vmatpush1.bf16.msra.mxu0 %v1123
    %1294 = vmatprep.subr.bf16.mxu0 %v1128
    %1295 = vmatpush1.bf16.msra.mxu0 %v1127
    %1296 = vmatprep.subr.bf16.mxu0 %v1132
    %1297 = vmatpush1.bf16.msra.mxu0 %v1131
    %1298 = vmatprep.subr.bf16.mxu0 %v1136
    %1299 = vmatpush1.bf16.msra.mxu0 %v1135
    %1300 = vmatprep.subr.bf16.mxu0 %v1140
    %1301 = vmatpush1.bf16.msra.mxu0 %v1139
    %1302 = vmatprep.subr.bf16.mxu0 0
    %1303 = vmatpush1.bf16.msra.mxu0 0
    %1304 = vmatprep.subr.bf16.mxu0 0
    %1305 = vmatpush1.bf16.msra.mxu0 0
    %1306 = vmatprep.subr.bf16.mxu0 0
    %1307 = vmatpush1.bf16.msra.mxu0 0
    %1308 = vmatprep.subr.bf16.mxu0 0
    %1309 = vmatpush1.bf16.msra.mxu0 0
    %1310 = vmatprep.subr.bf16.mxu0 0
    %1311 = vmatpush1.bf16.msra.mxu0 0
    %1312 = vmatprep.subr.bf16.mxu0 0
    %1313 = vmatpush1.bf16.msra.mxu0 0
    %1314 = vmatprep.subr.bf16.mxu0 0
    %1315 = vmatpush1.bf16.msra.mxu0 0
    %1316 = vmatprep.subr.bf16.mxu0 0
    %1317 = vmatpush1.bf16.msra.mxu0 0
    %1318 = vmatprep.mubr.bf16.mxu0 0
    %1319 = vmatmul.mubr.bf16.gmra.mrb[0].mxu0 %v733
    %v1320 = vpop.f32.mrb[0].mxu0
    %v1321 = vadd.f32 0.0, %v1320
    %v1322 = vpop.f32.mrb[0].mxu0
    %v1323 = vadd.f32 0.0, %v1322
    %v1324 = vpop.f32.mrb[0].mxu0
    %v1325 = vadd.f32 0.0, %v1324
    %v1326 = vpop.f32.mrb[0].mxu0
    %v1327 = vadd.f32 0.0, %v1326
    %1328 = vmatprep.mubr.bf16.mxu0 0
    %1329 = vmatmul.mubr.bf16.gmra.mrb[0].mxu0 %v734
    %v1330 = vpop.f32.mrb[0].mxu0
    %v1331 = vadd.f32 0.0, %v1330
    %v1332 = vpop.f32.mrb[0].mxu0
    %v1333 = vadd.f32 0.0, %v1332
    %v1334 = vpop.f32.mrb[0].mxu0
    %v1335 = vadd.f32 0.0, %v1334
    %v1336 = vpop.f32.mrb[0].mxu0
    %v1337 = vadd.f32 0.0, %v1336
    %1338 = vmatprep.mubr.bf16.mxu0 0
    %1339 = vmatmul.mubr.bf16.gmra.mrb[0].mxu0 %v735
    %v1340 = vpop.f32.mrb[0].mxu0
    %v1341 = vadd.f32 0.0, %v1340
    %v1342 = vpop.f32.mrb[0].mxu0
    %v1343 = vadd.f32 0.0, %v1342
    %v1344 = vpop.f32.mrb[0].mxu0
    %v1345 = vadd.f32 0.0, %v1344
    %v1346 = vpop.f32.mrb[0].mxu0
    %v1347 = vadd.f32 0.0, %v1346
    %1348 = vmatprep.mubr.bf16.mxu0 0
    %1349 = vmatmul.mubr.bf16.gmra.mrb[0].mxu0 %v736
    %v1350 = vpop.f32.mrb[0].mxu0
    %v1351 = vadd.f32 0.0, %v1350
    %v1352 = vpop.f32.mrb[0].mxu0
    %v1353 = vadd.f32 0.0, %v1352
    %v1354 = vpop.f32.mrb[0].mxu0
    %v1355 = vadd.f32 0.0, %v1354
    %v1356 = vpop.f32.mrb[0].mxu0
    %v1357 = vadd.f32 0.0, %v1356
    %1358 = vmatprep.mubr.bf16.mxu0 0
    %1359 = vmatmul.mubr.bf16.gmra.mrb[0].mxu0 %v737
    %v1360 = vpop.f32.mrb[0].mxu0
    %v1361 = vadd.f32 0.0, %v1360
    %v1362 = vpop.f32.mrb[0].mxu0
    %v1363 = vadd.f32 0.0, %v1362
    %v1364 = vpop.f32.mrb[0].mxu0
    %v1365 = vadd.f32 0.0, %v1364
    %v1366 = vpop.f32.mrb[0].mxu0
    %v1367 = vadd.f32 0.0, %v1366
    %1368 = vmatprep.mubr.bf16.mxu0 0
    %1369 = vmatmul.mubr.bf16.gmra.mrb[0].mxu0 %v738
    %v1370 = vpop.f32.mrb[0].mxu0
    %v1371 = vadd.f32 0.0, %v1370
    %v1372 = vpop.f32.mrb[0].mxu0
    %v1373 = vadd.f32 0.0, %v1372
    %v1374 = vpop.f32.mrb[0].mxu0
    %v1375 = vadd.f32 0.0, %v1374
    %v1376 = vpop.f32.mrb[0].mxu0
    %v1377 = vadd.f32 0.0, %v1376
    %1378 = vmatprep.mubr.bf16.mxu0 0
    %1379 = vmatmul.mubr.bf16.gmra.mrb[0].mxu0 %v739
    %v1380 = vpop.f32.mrb[0].mxu0
    %v1381 = vadd.f32 0.0, %v1380
    %v1382 = vpop.f32.mrb[0].mxu0
    %v1383 = vadd.f32 0.0, %v1382
    %v1384 = vpop.f32.mrb[0].mxu0
    %v1385 = vadd.f32 0.0, %v1384
    %v1386 = vpop.f32.mrb[0].mxu0
    %v1387 = vadd.f32 0.0, %v1386
    %1388 = vmatprep.mubr.bf16.mxu0 0
    %1389 = vmatmul.mubr.bf16.gmra.mrb[0].mxu0 %v740
    %v1390 = vpop.f32.mrb[0].mxu0
    %v1391 = vadd.f32 0.0, %v1390
    %v1392 = vpop.f32.mrb[0].mxu0
    %v1393 = vadd.f32 0.0, %v1392
    %v1394 = vpop.f32.mrb[0].mxu0
    %v1395 = vadd.f32 0.0, %v1394
    %v1396 = vpop.f32.mrb[0].mxu0
    %v1397 = vadd.f32 0.0, %v1396
    %1398 = vdwg.mxu0
    %v1431 = vunpack.c.l.b16 %v949
    %v1432 = vunpack.c.h.b16 %v949
    %v1433 = vunpack.c.l.b16 %v950
    %v1434 = vunpack.c.h.b16 %v950
    %v1435 = vunpack.c.l.b16 %v951
    %v1436 = vunpack.c.h.b16 %v951
    %v1437 = vunpack.c.l.b16 %v952
    %v1438 = vunpack.c.h.b16 %v952
    %v1439 = vunpack.c.l.b16 %v953
    %v1440 = vunpack.c.h.b16 %v953
    %v1441 = vunpack.c.l.b16 %v954
    %v1442 = vunpack.c.h.b16 %v954
    %v1443 = vunpack.c.l.b16 %v955
    %v1444 = vunpack.c.h.b16 %v955
    %v1445 = vunpack.c.l.b16 %v956
    %v1446 = vunpack.c.h.b16 %v956
    %v1447 = vunpack.c.l.b16 %v957
    %v1448 = vunpack.c.h.b16 %v957
    %v1449 = vunpack.c.l.b16 %v958
    %v1450 = vunpack.c.h.b16 %v958
    %v1451 = vunpack.c.l.b16 %v959
    %v1452 = vunpack.c.h.b16 %v959
    %v1453 = vunpack.c.l.b16 %v960
    %v1454 = vunpack.c.h.b16 %v960
    %v1455 = vunpack.c.l.b16 %v961
    %v1456 = vunpack.c.h.b16 %v961
    %v1457 = vunpack.c.l.b16 %v962
    %v1458 = vunpack.c.h.b16 %v962
    %v1459 = vunpack.c.l.b16 %v963
    %v1460 = vunpack.c.h.b16 %v963
    %v1461 = vunpack.c.l.b16 %v964
    %v1462 = vunpack.c.h.b16 %v964
    %v1463 = vunpack.c.l.b16 %v965
    %v1464 = vunpack.c.h.b16 %v965
    %v1465 = vunpack.c.l.b16 %v966
    %v1466 = vunpack.c.h.b16 %v966
    %v1467 = vunpack.c.l.b16 %v967
    %v1468 = vunpack.c.h.b16 %v967
    %v1469 = vunpack.c.l.b16 %v968
    %v1470 = vunpack.c.h.b16 %v968
    %v1471 = vunpack.c.l.b16 %v969
    %v1472 = vunpack.c.h.b16 %v969
    %v1473 = vunpack.c.l.b16 %v970
    %v1474 = vunpack.c.h.b16 %v970
    %v1475 = vunpack.c.l.b16 %v971
    %v1476 = vunpack.c.h.b16 %v971
    %v1477 = vunpack.c.l.b16 %v972
    %v1478 = vunpack.c.h.b16 %v972
    %v1479 = vunpack.c.l.b16 %v973
    %v1480 = vunpack.c.h.b16 %v973
    %v1481 = vunpack.c.l.b16 %v974
    %v1482 = vunpack.c.h.b16 %v974
    %v1483 = vunpack.c.l.b16 %v975
    %v1484 = vunpack.c.h.b16 %v975
    %v1485 = vunpack.c.l.b16 %v976
    %v1486 = vunpack.c.h.b16 %v976
    %v1487 = vunpack.c.l.b16 %v977
    %v1488 = vunpack.c.h.b16 %v977
    %v1489 = vunpack.c.l.b16 %v978
    %v1490 = vunpack.c.h.b16 %v978
    %v1491 = vunpack.c.l.b16 %v979
    %v1492 = vunpack.c.h.b16 %v979
    %v1493 = vunpack.c.l.b16 %v980
    %v1494 = vunpack.c.h.b16 %v980
    %v1495 = vpack.c.b16 %v1435, %v1431
    %v1496 = vpack.c.b16 %v1436, %v1432
    %v1497 = vpack.c.b16 %v1437, %v1433
    %v1498 = vpack.c.b16 %v1438, %v1434
    %v1499 = vpack.c.b16 %v1443, %v1439
    %v1500 = vpack.c.b16 %v1444, %v1440
    %v1501 = vpack.c.b16 %v1445, %v1441
    %v1502 = vpack.c.b16 %v1446, %v1442
    %v1503 = vpack.c.b16 %v1451, %v1447
    %v1504 = vpack.c.b16 %v1452, %v1448
    %v1505 = vpack.c.b16 %v1453, %v1449
    %v1506 = vpack.c.b16 %v1454, %v1450
    %v1507 = vpack.c.b16 %v1459, %v1455
    %v1508 = vpack.c.b16 %v1460, %v1456
    %v1509 = vpack.c.b16 %v1461, %v1457
    %v1510 = vpack.c.b16 %v1462, %v1458
    %v1511 = vpack.c.b16 %v1467, %v1463
    %v1512 = vpack.c.b16 %v1468, %v1464
    %v1513 = vpack.c.b16 %v1469, %v1465
    %v1514 = vpack.c.b16 %v1470, %v1466
    %v1515 = vpack.c.b16 %v1475, %v1471
    %v1516 = vpack.c.b16 %v1476, %v1472
    %v1517 = vpack.c.b16 %v1477, %v1473
    %v1518 = vpack.c.b16 %v1478, %v1474
    %v1519 = vpack.c.b16 %v1483, %v1479
    %v1520 = vpack.c.b16 %v1484, %v1480
    %v1521 = vpack.c.b16 %v1485, %v1481
    %v1522 = vpack.c.b16 %v1486, %v1482
    %v1523 = vpack.c.b16 %v1491, %v1487
    %v1524 = vpack.c.b16 %v1492, %v1488
    %v1525 = vpack.c.b16 %v1493, %v1489
    %v1526 = vpack.c.b16 %v1494, %v1490
    %1559 = vmatprep.subr.bf16.mxu0 %v1496
    %1560 = vmatpush1.bf16.msra.mxu0 %v1495
    %1561 = vmatprep.subr.bf16.mxu0 %v1500
    %1562 = vmatpush1.bf16.msra.mxu0 %v1499
    %1563 = vmatprep.subr.bf16.mxu0 %v1504
    %1564 = vmatpush1.bf16.msra.mxu0 %v1503
    %1565 = vmatprep.subr.bf16.mxu0 %v1508
    %1566 = vmatpush1.bf16.msra.mxu0 %v1507
    %1567 = vmatprep.subr.bf16.mxu0 %v1512
    %1568 = vmatpush1.bf16.msra.mxu0 %v1511
    %1569 = vmatprep.subr.bf16.mxu0 %v1516
    %1570 = vmatpush1.bf16.msra.mxu0 %v1515
    %1571 = vmatprep.subr.bf16.mxu0 %v1520
    %1572 = vmatpush1.bf16.msra.mxu0 %v1519
    %1573 = vmatprep.subr.bf16.mxu0 %v1524
    %1574 = vmatpush1.bf16.msra.mxu0 %v1523
    %1575 = vmatprep.subr.bf16.mxu0 0
    %1576 = vmatpush1.bf16.msra.mxu0 0
    %1577 = vmatprep.subr.bf16.mxu0 0
    %1578 = vmatpush1.bf16.msra.mxu0 0
    %1579 = vmatprep.subr.bf16.mxu0 0
    %1580 = vmatpush1.bf16.msra.mxu0 0
    %1581 = vmatprep.subr.bf16.mxu0 0
    %1582 = vmatpush1.bf16.msra.mxu0 0
    %1583 = vmatprep.subr.bf16.mxu0 0
    %1584 = vmatpush1.bf16.msra.mxu0 0
    %1585 = vmatprep.subr.bf16.mxu0 0
    %1586 = vmatpush1.bf16.msra.mxu0 0
    %1587 = vmatprep.subr.bf16.mxu0 0
    %1588 = vmatpush1.bf16.msra.mxu0 0
    %1589 = vmatprep.subr.bf16.mxu0 0
    %1590 = vmatpush1.bf16.msra.mxu0 0
    %1591 = vmatprep.mubr.bf16.mxu0 0
    %1592 = vmatmul.mubr.bf16.gmra.mrb[0].mxu0 %v549
    %v1593 = vpop.f32.mrb[0].mxu0
    %v1594 = vadd.f32 %v1208, %v1593
    %v1595 = vpop.f32.mrb[0].mxu0
    %v1596 = vadd.f32 %v1210, %v1595
    %v1597 = vpop.f32.mrb[0].mxu0
    %v1598 = vadd.f32 %v1212, %v1597
    %v1599 = vpop.f32.mrb[0].mxu0
    %v1600 = vadd.f32 %v1214, %v1599
    %1601 = vmatprep.mubr.bf16.mxu0 0
    %1602 = vmatmul.mubr.bf16.gmra.mrb[0].mxu0 %v550
    %v1603 = vpop.f32.mrb[0].mxu0
    %v1604 = vadd.f32 %v1218, %v1603
    %v1605 = vpop.f32.mrb[0].mxu0
    %v1606 = vadd.f32 %v1220, %v1605
    %v1607 = vpop.f32.mrb[0].mxu0
    %v1608 = vadd.f32 %v1222, %v1607
    %v1609 = vpop.f32.mrb[0].mxu0
    %v1610 = vadd.f32 %v1224, %v1609
    %1611 = vmatprep.mubr.bf16.mxu0 0
    %1612 = vmatmul.mubr.bf16.gmra.mrb[0].mxu0 %v551
    %v1613 = vpop.f32.mrb[0].mxu0
    %v1614 = vadd.f32 %v1228, %v1613
    %v1615 = vpop.f32.mrb[0].mxu0
    %v1616 = vadd.f32 %v1230, %v1615
    %v1617 = vpop.f32.mrb[0].mxu0
    %v1618 = vadd.f32 %v1232, %v1617
    %v1619 = vpop.f32.mrb[0].mxu0
    %v1620 = vadd.f32 %v1234, %v1619
    %1621 = vmatprep.mubr.bf16.mxu0 0
    %1622 = vmatmul.mubr.bf16.gmra.mrb[0].mxu0 %v552
    %v1623 = vpop.f32.mrb[0].mxu0
    %v1624 = vadd.f32 %v1238, %v1623
    %v1625 = vpop.f32.mrb[0].mxu0
    %v1626 = vadd.f32 %v1240, %v1625
    %v1627 = vpop.f32.mrb[0].mxu0
    %v1628 = vadd.f32 %v1242, %v1627
    %v1629 = vpop.f32.mrb[0].mxu0
    %v1630 = vadd.f32 %v1244, %v1629
    %1631 = vmatprep.mubr.bf16.mxu0 0
    %1632 = vmatmul.mubr.bf16.gmra.mrb[0].mxu0 %v553
    %v1633 = vpop.f32.mrb[0].mxu0
    %v1634 = vadd.f32 %v1248, %v1633
    %v1635 = vpop.f32.mrb[0].mxu0
    %v1636 = vadd.f32 %v1250, %v1635
    %v1637 = vpop.f32.mrb[0].mxu0
    %v1638 = vadd.f32 %v1252, %v1637
    %v1639 = vpop.f32.mrb[0].mxu0
    %v1640 = vadd.f32 %v1254, %v1639
    %1641 = vmatprep.mubr.bf16.mxu0 0
    %1642 = vmatmul.mubr.bf16.gmra.mrb[0].mxu0 %v554
    %v1643 = vpop.f32.mrb[0].mxu0
    %v1644 = vadd.f32 %v1258, %v1643
    %v1645 = vpop.f32.mrb[0].mxu0
    %v1646 = vadd.f32 %v1260, %v1645
    %v1647 = vpop.f32.mrb[0].mxu0
    %v1648 = vadd.f32 %v1262, %v1647
    %v1649 = vpop.f32.mrb[0].mxu0
    %v1650 = vadd.f32 %v1264, %v1649
    %1651 = vmatprep.mubr.bf16.mxu0 0
    %1652 = vmatmul.mubr.bf16.gmra.mrb[0].mxu0 %v555
    %v1653 = vpop.f32.mrb[0].mxu0
    %v1654 = vadd.f32 %v1268, %v1653
    %v1655 = vpop.f32.mrb[0].mxu0
    %v1656 = vadd.f32 %v1270, %v1655
    %v1657 = vpop.f32.mrb[0].mxu0
    %v1658 = vadd.f32 %v1272, %v1657
    %v1659 = vpop.f32.mrb[0].mxu0
    %v1660 = vadd.f32 %v1274, %v1659
    %1661 = vmatprep.mubr.bf16.mxu0 0
    %1662 = vmatmul.mubr.bf16.gmra.mrb[0].mxu0 %v556
    %v1663 = vpop.f32.mrb[0].mxu0
    %v1664 = vadd.f32 %v1278, %v1663
    %v1665 = vpop.f32.mrb[0].mxu0
    %v1666 = vadd.f32 %v1280, %v1665
    %v1667 = vpop.f32.mrb[0].mxu0
    %v1668 = vadd.f32 %v1282, %v1667
    %v1669 = vpop.f32.mrb[0].mxu0
    %v1670 = vadd.f32 %v1284, %v1669
    %1671 = vdwg.mxu0
    %1672 = vmatprep.subr.bf16.mxu0 %v1498
    %1673 = vmatpush1.bf16.msra.mxu0 %v1497
    %1674 = vmatprep.subr.bf16.mxu0 %v1502
    %1675 = vmatpush1.bf16.msra.mxu0 %v1501
    %1676 = vmatprep.subr.bf16.mxu0 %v1506
    %1677 = vmatpush1.bf16.msra.mxu0 %v1505
    %1678 = vmatprep.subr.bf16.mxu0 %v1510
    %1679 = vmatpush1.bf16.msra.mxu0 %v1509
    %1680 = vmatprep.subr.bf16.mxu0 %v1514
    %1681 = vmatpush1.bf16.msra.mxu0 %v1513
    %1682 = vmatprep.subr.bf16.mxu0 %v1518
    %1683 = vmatpush1.bf16.msra.mxu0 %v1517
    %1684 = vmatprep.subr.bf16.mxu0 %v1522
    %1685 = vmatpush1.bf16.msra.mxu0 %v1521
    %1686 = vmatprep.subr.bf16.mxu0 %v1526
    %1687 = vmatpush1.bf16.msra.mxu0 %v1525
    %1688 = vmatprep.subr.bf16.mxu0 0
    %1689 = vmatpush1.bf16.msra.mxu0 0
    %1690 = vmatprep.subr.bf16.mxu0 0
    %1691 = vmatpush1.bf16.msra.mxu0 0
    %1692 = vmatprep.subr.bf16.mxu0 0
    %1693 = vmatpush1.bf16.msra.mxu0 0
    %1694 = vmatprep.subr.bf16.mxu0 0
    %1695 = vmatpush1.bf16.msra.mxu0 0
    %1696 = vmatprep.subr.bf16.mxu0 0
    %1697 = vmatpush1.bf16.msra.mxu0 0
    %1698 = vmatprep.subr.bf16.mxu0 0
    %1699 = vmatpush1.bf16.msra.mxu0 0
    %1700 = vmatprep.subr.bf16.mxu0 0
    %1701 = vmatpush1.bf16.msra.mxu0 0
    %1702 = vmatprep.subr.bf16.mxu0 0
    %1703 = vmatpush1.bf16.msra.mxu0 0
    %1704 = vmatprep.mubr.bf16.mxu0 0
    %1705 = vmatmul.mubr.bf16.gmra.mrb[0].mxu0 %v549
    %v1706 = vpop.f32.mrb[0].mxu0
    %v1707 = vadd.f32 %v1321, %v1706
    %v1708 = vpop.f32.mrb[0].mxu0
    %v1709 = vadd.f32 %v1323, %v1708
    %v1710 = vpop.f32.mrb[0].mxu0
    %v1711 = vadd.f32 %v1325, %v1710
    %v1712 = vpop.f32.mrb[0].mxu0
    %v1713 = vadd.f32 %v1327, %v1712
    %1714 = vmatprep.mubr.bf16.mxu0 0
    %1715 = vmatmul.mubr.bf16.gmra.mrb[0].mxu0 %v550
    %v1716 = vpop.f32.mrb[0].mxu0
    %v1717 = vadd.f32 %v1331, %v1716
    %v1718 = vpop.f32.mrb[0].mxu0
    %v1719 = vadd.f32 %v1333, %v1718
    %v1720 = vpop.f32.mrb[0].mxu0
    %v1721 = vadd.f32 %v1335, %v1720
    %v1722 = vpop.f32.mrb[0].mxu0
    %v1723 = vadd.f32 %v1337, %v1722
    %1724 = vmatprep.mubr.bf16.mxu0 0
    %1725 = vmatmul.mubr.bf16.gmra.mrb[0].mxu0 %v551
    %v1726 = vpop.f32.mrb[0].mxu0
    %v1727 = vadd.f32 %v1341, %v1726
    %v1728 = vpop.f32.mrb[0].mxu0
    %v1729 = vadd.f32 %v1343, %v1728
    %v1730 = vpop.f32.mrb[0].mxu0
    %v1731 = vadd.f32 %v1345, %v1730
    %v1732 = vpop.f32.mrb[0].mxu0
    %v1733 = vadd.f32 %v1347, %v1732
    %1734 = vmatprep.mubr.bf16.mxu0 0
    %1735 = vmatmul.mubr.bf16.gmra.mrb[0].mxu0 %v552
    %v1736 = vpop.f32.mrb[0].mxu0
    %v1737 = vadd.f32 %v1351, %v1736
    %v1738 = vpop.f32.mrb[0].mxu0
    %v1739 = vadd.f32 %v1353, %v1738
    %v1740 = vpop.f32.mrb[0].mxu0
    %v1741 = vadd.f32 %v1355, %v1740
    %v1742 = vpop.f32.mrb[0].mxu0
    %v1743 = vadd.f32 %v1357, %v1742
    %1744 = vmatprep.mubr.bf16.mxu0 0
    %1745 = vmatmul.mubr.bf16.gmra.mrb[0].mxu0 %v553
    %v1746 = vpop.f32.mrb[0].mxu0
    %v1747 = vadd.f32 %v1361, %v1746
    %v1748 = vpop.f32.mrb[0].mxu0
    %v1749 = vadd.f32 %v1363, %v1748
    %v1750 = vpop.f32.mrb[0].mxu0
    %v1751 = vadd.f32 %v1365, %v1750
    %v1752 = vpop.f32.mrb[0].mxu0
    %v1753 = vadd.f32 %v1367, %v1752
    %1754 = vmatprep.mubr.bf16.mxu0 0
    %1755 = vmatmul.mubr.bf16.gmra.mrb[0].mxu0 %v554
    %v1756 = vpop.f32.mrb[0].mxu0
    %v1757 = vadd.f32 %v1371, %v1756
    %v1758 = vpop.f32.mrb[0].mxu0
    %v1759 = vadd.f32 %v1373, %v1758
    %v1760 = vpop.f32.mrb[0].mxu0
    %v1761 = vadd.f32 %v1375, %v1760
    %v1762 = vpop.f32.mrb[0].mxu0
    %v1763 = vadd.f32 %v1377, %v1762
    %1764 = vmatprep.mubr.bf16.mxu0 0
    %1765 = vmatmul.mubr.bf16.gmra.mrb[0].mxu0 %v555
    %v1766 = vpop.f32.mrb[0].mxu0
    %v1767 = vadd.f32 %v1381, %v1766
    %v1768 = vpop.f32.mrb[0].mxu0
    %v1769 = vadd.f32 %v1383, %v1768
    %v1770 = vpop.f32.mrb[0].mxu0
    %v1771 = vadd.f32 %v1385, %v1770
    %v1772 = vpop.f32.mrb[0].mxu0
    %v1773 = vadd.f32 %v1387, %v1772
    %1774 = vmatprep.mubr.bf16.mxu0 0
    %1775 = vmatmul.mubr.bf16.gmra.mrb[0].mxu0 %v556
    %v1776 = vpop.f32.mrb[0].mxu0
    %v1777 = vadd.f32 %v1391, %v1776
    %v1778 = vpop.f32.mrb[0].mxu0
    %v1779 = vadd.f32 %v1393, %v1778
    %v1780 = vpop.f32.mrb[0].mxu0
    %v1781 = vadd.f32 %v1395, %v1780
    %v1782 = vpop.f32.mrb[0].mxu0
    %v1783 = vadd.f32 %v1397, %v1782
    %1784 = vdwg.mxu0
    %v1785 = vld [vmem:[#allocation19] sm:$0xff]
    %v1786 = vld [vmem:[#allocation19 + $0x8] sm:$0xff]
    %v1787 = vld [vmem:[#allocation19 + $0x10] sm:$0xff]
    %v1788 = vld [vmem:[#allocation19 + $0x18] sm:$0xff]
    %v1789 = vld [vmem:[#allocation19 + $0x20] sm:$0xff]
    %v1790 = vld [vmem:[#allocation19 + $0x28] sm:$0xff]
    %v1791 = vld [vmem:[#allocation19 + $0x30] sm:$0xff]
    %v1792 = vld [vmem:[#allocation19 + $0x38] sm:$0xff]
    %v1793 = vld [vmem:[#allocation19 + $0x40] sm:$0xff]
    %v1794 = vld [vmem:[#allocation19 + $0x48] sm:$0xff]
    %v1795 = vld [vmem:[#allocation19 + $0x50] sm:$0xff]
    %v1796 = vld [vmem:[#allocation19 + $0x58] sm:$0xff]
    %v1797 = vld [vmem:[#allocation19 + $0x60] sm:$0xff]
    %v1798 = vld [vmem:[#allocation19 + $0x68] sm:$0xff]
    %v1799 = vld [vmem:[#allocation19 + $0x70] sm:$0xff]
    %v1800 = vld [vmem:[#allocation19 + $0x78] sm:$0xff]
    %v1801 = vld [vmem:[#allocation19 + $0x80] sm:$0xff]
    %v1802 = vld [vmem:[#allocation19 + $0x88] sm:$0xff]
    %v1803 = vld [vmem:[#allocation19 + $0x90] sm:$0xff]
    %v1804 = vld [vmem:[#allocation19 + $0x98] sm:$0xff]
    %v1805 = vld [vmem:[#allocation19 + $0xa0] sm:$0xff]
    %v1806 = vld [vmem:[#allocation19 + $0xa8] sm:$0xff]
    %v1807 = vld [vmem:[#allocation19 + $0xb0] sm:$0xff]
    %v1808 = vld [vmem:[#allocation19 + $0xb8] sm:$0xff]
    %v1809 = vld [vmem:[#allocation19 + $0xc0] sm:$0xff]
    %v1810 = vld [vmem:[#allocation19 + $0xc8] sm:$0xff]
    %v1811 = vld [vmem:[#allocation19 + $0xd0] sm:$0xff]
    %v1812 = vld [vmem:[#allocation19 + $0xd8] sm:$0xff]
    %v1813 = vld [vmem:[#allocation19 + $0xe0] sm:$0xff]
    %v1814 = vld [vmem:[#allocation19 + $0xe8] sm:$0xff]
    %v1815 = vld [vmem:[#allocation19 + $0xf0] sm:$0xff]
    %v1816 = vld [vmem:[#allocation19 + $0xf8] sm:$0xff]
    %v1849 = vunpack.c.l.b16 %v1785
    %v1850 = vunpack.c.h.b16 %v1785
    %v1851 = vunpack.c.l.b16 %v1786
    %v1852 = vunpack.c.h.b16 %v1786
    %v1853 = vunpack.c.l.b16 %v1787
    %v1854 = vunpack.c.h.b16 %v1787
    %v1855 = vunpack.c.l.b16 %v1788
    %v1856 = vunpack.c.h.b16 %v1788
    %v1857 = vunpack.c.l.b16 %v1789
    %v1858 = vunpack.c.h.b16 %v1789
    %v1859 = vunpack.c.l.b16 %v1790
    %v1860 = vunpack.c.h.b16 %v1790
    %v1861 = vunpack.c.l.b16 %v1791
    %v1862 = vunpack.c.h.b16 %v1791
    %v1863 = vunpack.c.l.b16 %v1792
    %v1864 = vunpack.c.h.b16 %v1792
    %v1865 = vunpack.c.l.b16 %v1793
    %v1866 = vunpack.c.h.b16 %v1793
    %v1867 = vunpack.c.l.b16 %v1794
    %v1868 = vunpack.c.h.b16 %v1794
    %v1869 = vunpack.c.l.b16 %v1795
    %v1870 = vunpack.c.h.b16 %v1795
    %v1871 = vunpack.c.l.b16 %v1796
    %v1872 = vunpack.c.h.b16 %v1796
    %v1873 = vunpack.c.l.b16 %v1797
    %v1874 = vunpack.c.h.b16 %v1797
    %v1875 = vunpack.c.l.b16 %v1798
    %v1876 = vunpack.c.h.b16 %v1798
    %v1877 = vunpack.c.l.b16 %v1799
    %v1878 = vunpack.c.h.b16 %v1799
    %v1879 = vunpack.c.l.b16 %v1800
    %v1880 = vunpack.c.h.b16 %v1800
    %v1881 = vunpack.c.l.b16 %v1801
    %v1882 = vunpack.c.h.b16 %v1801
    %v1883 = vunpack.c.l.b16 %v1802
    %v1884 = vunpack.c.h.b16 %v1802
    %v1885 = vunpack.c.l.b16 %v1803
    %v1886 = vunpack.c.h.b16 %v1803
    %v1887 = vunpack.c.l.b16 %v1804
    %v1888 = vunpack.c.h.b16 %v1804
    %v1889 = vunpack.c.l.b16 %v1805
    %v1890 = vunpack.c.h.b16 %v1805
    %v1891 = vunpack.c.l.b16 %v1806
    %v1892 = vunpack.c.h.b16 %v1806
    %v1893 = vunpack.c.l.b16 %v1807
    %v1894 = vunpack.c.h.b16 %v1807
    %v1895 = vunpack.c.l.b16 %v1808
    %v1896 = vunpack.c.h.b16 %v1808
    %v1897 = vunpack.c.l.b16 %v1809
    %v1898 = vunpack.c.h.b16 %v1809
    %v1899 = vunpack.c.l.b16 %v1810
    %v1900 = vunpack.c.h.b16 %v1810
    %v1901 = vunpack.c.l.b16 %v1811
    %v1902 = vunpack.c.h.b16 %v1811
    %v1903 = vunpack.c.l.b16 %v1812
    %v1904 = vunpack.c.h.b16 %v1812
    %v1905 = vunpack.c.l.b16 %v1813
    %v1906 = vunpack.c.h.b16 %v1813
    %v1907 = vunpack.c.l.b16 %v1814
    %v1908 = vunpack.c.h.b16 %v1814
    %v1909 = vunpack.c.l.b16 %v1815
    %v1910 = vunpack.c.h.b16 %v1815
    %v1911 = vunpack.c.l.b16 %v1816
    %v1912 = vunpack.c.h.b16 %v1816
    %v1913 = vpack.c.b16 %v1853, %v1849
    %v1914 = vpack.c.b16 %v1854, %v1850
    %v1915 = vpack.c.b16 %v1855, %v1851
    %v1916 = vpack.c.b16 %v1856, %v1852
    %v1917 = vpack.c.b16 %v1861, %v1857
    %v1918 = vpack.c.b16 %v1862, %v1858
    %v1919 = vpack.c.b16 %v1863, %v1859
    %v1920 = vpack.c.b16 %v1864, %v1860
    %v1921 = vpack.c.b16 %v1869, %v1865
    %v1922 = vpack.c.b16 %v1870, %v1866
    %v1923 = vpack.c.b16 %v1871, %v1867
    %v1924 = vpack.c.b16 %v1872, %v1868
    %v1925 = vpack.c.b16 %v1877, %v1873
    %v1926 = vpack.c.b16 %v1878, %v1874
    %v1927 = vpack.c.b16 %v1879, %v1875
    %v1928 = vpack.c.b16 %v1880, %v1876
    %v1929 = vpack.c.b16 %v1885, %v1881
    %v1930 = vpack.c.b16 %v1886, %v1882
    %v1931 = vpack.c.b16 %v1887, %v1883
    %v1932 = vpack.c.b16 %v1888, %v1884
    %v1933 = vpack.c.b16 %v1893, %v1889
    %v1934 = vpack.c.b16 %v1894, %v1890
    %v1935 = vpack.c.b16 %v1895, %v1891
    %v1936 = vpack.c.b16 %v1896, %v1892
    %v1937 = vpack.c.b16 %v1901, %v1897
    %v1938 = vpack.c.b16 %v1902, %v1898
    %v1939 = vpack.c.b16 %v1903, %v1899
    %v1940 = vpack.c.b16 %v1904, %v1900
    %v1941 = vpack.c.b16 %v1909, %v1905
    %v1942 = vpack.c.b16 %v1910, %v1906
    %v1943 = vpack.c.b16 %v1911, %v1907
    %v1944 = vpack.c.b16 %v1912, %v1908
    %1977 = vmatprep.subr.bf16.mxu0 %v1914
    %1978 = vmatpush1.bf16.msra.mxu0 %v1913
    %1979 = vmatprep.subr.bf16.mxu0 %v1918
    %1980 = vmatpush1.bf16.msra.mxu0 %v1917
    %1981 = vmatprep.subr.bf16.mxu0 %v1922
    %1982 = vmatpush1.bf16.msra.mxu0 %v1921
    %1983 = vmatprep.subr.bf16.mxu0 %v1926
    %1984 = vmatpush1.bf16.msra.mxu0 %v1925
    %1985 = vmatprep.subr.bf16.mxu0 %v1930
    %1986 = vmatpush1.bf16.msra.mxu0 %v1929
    %1987 = vmatprep.subr.bf16.mxu0 %v1934
    %1988 = vmatpush1.bf16.msra.mxu0 %v1933
    %1989 = vmatprep.subr.bf16.mxu0 %v1938
    %1990 = vmatpush1.bf16.msra.mxu0 %v1937
    %1991 = vmatprep.subr.bf16.mxu0 %v1942
    %1992 = vmatpush1.bf16.msra.mxu0 %v1941
    %1993 = vmatprep.subr.bf16.mxu0 0
    %1994 = vmatpush1.bf16.msra.mxu0 0
    %1995 = vmatprep.subr.bf16.mxu0 0
    %1996 = vmatpush1.bf16.msra.mxu0 0
    %1997 = vmatprep.subr.bf16.mxu0 0
    %1998 = vmatpush1.bf16.msra.mxu0 0
    %1999 = vmatprep.subr.bf16.mxu0 0
    %2000 = vmatpush1.bf16.msra.mxu0 0
    %2001 = vmatprep.subr.bf16.mxu0 0
    %2002 = vmatpush1.bf16.msra.mxu0 0
    %2003 = vmatprep.subr.bf16.mxu0 0
    %2004 = vmatpush1.bf16.msra.mxu0 0
    %2005 = vmatprep.subr.bf16.mxu0 0
    %2006 = vmatpush1.bf16.msra.mxu0 0
    %2007 = vmatprep.subr.bf16.mxu0 0
    %2008 = vmatpush1.bf16.msra.mxu0 0
    %2009 = vmatprep.mubr.bf16.mxu0 0
    %2010 = vmatmul.mubr.bf16.gmra.mrb[0].mxu0 %v941
    %v2011 = vpop.f32.mrb[0].mxu0
    %v2012 = vadd.f32 0.0, %v2011
    %v2013 = vpop.f32.mrb[0].mxu0
    %v2014 = vadd.f32 0.0, %v2013
    %v2015 = vpop.f32.mrb[0].mxu0
    %v2016 = vadd.f32 0.0, %v2015
    %v2017 = vpop.f32.mrb[0].mxu0
    %v2018 = vadd.f32 0.0, %v2017
    %2019 = vmatprep.mubr.bf16.mxu0 0
    %2020 = vmatmul.mubr.bf16.gmra.mrb[0].mxu0 %v942
    %v2021 = vpop.f32.mrb[0].mxu0
    %v2022 = vadd.f32 0.0, %v2021
    %v2023 = vpop.f32.mrb[0].mxu0
    %v2024 = vadd.f32 0.0, %v2023
    %v2025 = vpop.f32.mrb[0].mxu0
    %v2026 = vadd.f32 0.0, %v2025
    %v2027 = vpop.f32.mrb[0].mxu0
    %v2028 = vadd.f32 0.0, %v2027
    %2029 = vmatprep.mubr.bf16.mxu0 0
    %2030 = vmatmul.mubr.bf16.gmra.mrb[0].mxu0 %v943
    %v2031 = vpop.f32.mrb[0].mxu0
    %v2032 = vadd.f32 0.0, %v2031
    %v2033 = vpop.f32.mrb[0].mxu0
    %v2034 = vadd.f32 0.0, %v2033
    %v2035 = vpop.f32.mrb[0].mxu0
    %v2036 = vadd.f32 0.0, %v2035
    %v2037 = vpop.f32.mrb[0].mxu0
    %v2038 = vadd.f32 0.0, %v2037
    %2039 = vmatprep.mubr.bf16.mxu0 0
    %2040 = vmatmul.mubr.bf16.gmra.mrb[0].mxu0 %v944
    %v2041 = vpop.f32.mrb[0].mxu0
    %v2042 = vadd.f32 0.0, %v2041
    %v2043 = vpop.f32.mrb[0].mxu0
    %v2044 = vadd.f32 0.0, %v2043
    %v2045 = vpop.f32.mrb[0].mxu0
    %v2046 = vadd.f32 0.0, %v2045
    %v2047 = vpop.f32.mrb[0].mxu0
    %v2048 = vadd.f32 0.0, %v2047
    %2049 = vmatprep.mubr.bf16.mxu0 0
    %2050 = vmatmul.mubr.bf16.gmra.mrb[0].mxu0 %v945
    %v2051 = vpop.f32.mrb[0].mxu0
    %v2052 = vadd.f32 0.0, %v2051
    %v2053 = vpop.f32.mrb[0].mxu0
    %v2054 = vadd.f32 0.0, %v2053
    %v2055 = vpop.f32.mrb[0].mxu0
    %v2056 = vadd.f32 0.0, %v2055
    %v2057 = vpop.f32.mrb[0].mxu0
    %v2058 = vadd.f32 0.0, %v2057
    %2059 = vmatprep.mubr.bf16.mxu0 0
    %2060 = vmatmul.mubr.bf16.gmra.mrb[0].mxu0 %v946
    %v2061 = vpop.f32.mrb[0].mxu0
    %v2062 = vadd.f32 0.0, %v2061
    %v2063 = vpop.f32.mrb[0].mxu0
    %v2064 = vadd.f32 0.0, %v2063
    %v2065 = vpop.f32.mrb[0].mxu0
    %v2066 = vadd.f32 0.0, %v2065
    %v2067 = vpop.f32.mrb[0].mxu0
    %v2068 = vadd.f32 0.0, %v2067
    %2069 = vmatprep.mubr.bf16.mxu0 0
    %2070 = vmatmul.mubr.bf16.gmra.mrb[0].mxu0 %v947
    %v2071 = vpop.f32.mrb[0].mxu0
    %v2072 = vadd.f32 0.0, %v2071
    %v2073 = vpop.f32.mrb[0].mxu0
    %v2074 = vadd.f32 0.0, %v2073
    %v2075 = vpop.f32.mrb[0].mxu0
    %v2076 = vadd.f32 0.0, %v2075
    %v2077 = vpop.f32.mrb[0].mxu0
    %v2078 = vadd.f32 0.0, %v2077
    %2079 = vmatprep.mubr.bf16.mxu0 0
    %2080 = vmatmul.mubr.bf16.gmra.mrb[0].mxu0 %v948
    %v2081 = vpop.f32.mrb[0].mxu0
    %v2082 = vadd.f32 0.0, %v2081
    %v2083 = vpop.f32.mrb[0].mxu0
    %v2084 = vadd.f32 0.0, %v2083
    %v2085 = vpop.f32.mrb[0].mxu0
    %v2086 = vadd.f32 0.0, %v2085
    %v2087 = vpop.f32.mrb[0].mxu0
    %v2088 = vadd.f32 0.0, %v2087
    %2089 = vdwg.mxu0
    %2090 = vmatprep.subr.bf16.mxu0 %v1916
    %2091 = vmatpush1.bf16.msra.mxu0 %v1915
    %2092 = vmatprep.subr.bf16.mxu0 %v1920
    %2093 = vmatpush1.bf16.msra.mxu0 %v1919
    %2094 = vmatprep.subr.bf16.mxu0 %v1924
    %2095 = vmatpush1.bf16.msra.mxu0 %v1923
    %2096 = vmatprep.subr.bf16.mxu0 %v1928
    %2097 = vmatpush1.bf16.msra.mxu0 %v1927
    %2098 = vmatprep.subr.bf16.mxu0 %v1932
    %2099 = vmatpush1.bf16.msra.mxu0 %v1931
    %2100 = vmatprep.subr.bf16.mxu0 %v1936
    %2101 = vmatpush1.bf16.msra.mxu0 %v1935
    %2102 = vmatprep.subr.bf16.mxu0 %v1940
    %2103 = vmatpush1.bf16.msra.mxu0 %v1939
    %2104 = vmatprep.subr.bf16.mxu0 %v1944
    %2105 = vmatpush1.bf16.msra.mxu0 %v1943
    %2106 = vmatprep.subr.bf16.mxu0 0
    %2107 = vmatpush1.bf16.msra.mxu0 0
    %2108 = vmatprep.subr.bf16.mxu0 0
    %2109 = vmatpush1.bf16.msra.mxu0 0
    %2110 = vmatprep.subr.bf16.mxu0 0
    %2111 = vmatpush1.bf16.msra.mxu0 0
    %2112 = vmatprep.subr.bf16.mxu0 0
    %2113 = vmatpush1.bf16.msra.mxu0 0
    %2114 = vmatprep.subr.bf16.mxu0 0
    %2115 = vmatpush1.bf16.msra.mxu0 0
    %2116 = vmatprep.subr.bf16.mxu0 0
    %2117 = vmatpush1.bf16.msra.mxu0 0
    %2118 = vmatprep.subr.bf16.mxu0 0
    %2119 = vmatpush1.bf16.msra.mxu0 0
    %2120 = vmatprep.subr.bf16.mxu0 0
    %2121 = vmatpush1.bf16.msra.mxu0 0
    %2122 = vmatprep.mubr.bf16.mxu0 0
    %2123 = vmatmul.mubr.bf16.gmra.mrb[0].mxu0 %v941
    %v2124 = vpop.f32.mrb[0].mxu0
    %v2125 = vadd.f32 0.0, %v2124
    %v2126 = vpop.f32.mrb[0].mxu0
    %v2127 = vadd.f32 0.0, %v2126
    %v2128 = vpop.f32.mrb[0].mxu0
    %v2129 = vadd.f32 0.0, %v2128
    %v2130 = vpop.f32.mrb[0].mxu0
    %v2131 = vadd.f32 0.0, %v2130
    %2132 = vmatprep.mubr.bf16.mxu0 0
    %2133 = vmatmul.mubr.bf16.gmra.mrb[0].mxu0 %v942
    %v2134 = vpop.f32.mrb[0].mxu0
    %v2135 = vadd.f32 0.0, %v2134
    %v2136 = vpop.f32.mrb[0].mxu0
    %v2137 = vadd.f32 0.0, %v2136
    %v2138 = vpop.f32.mrb[0].mxu0
    %v2139 = vadd.f32 0.0, %v2138
    %v2140 = vpop.f32.mrb[0].mxu0
    %v2141 = vadd.f32 0.0, %v2140
    %2142 = vmatprep.mubr.bf16.mxu0 0
    %2143 = vmatmul.mubr.bf16.gmra.mrb[0].mxu0 %v943
    %v2144 = vpop.f32.mrb[0].mxu0
    %v2145 = vadd.f32 0.0, %v2144
    %v2146 = vpop.f32.mrb[0].mxu0
    %v2147 = vadd.f32 0.0, %v2146
    %v2148 = vpop.f32.mrb[0].mxu0
    %v2149 = vadd.f32 0.0, %v2148
    %v2150 = vpop.f32.mrb[0].mxu0
    %v2151 = vadd.f32 0.0, %v2150
    %2152 = vmatprep.mubr.bf16.mxu0 0
    %2153 = vmatmul.mubr.bf16.gmra.mrb[0].mxu0 %v944
    %v2154 = vpop.f32.mrb[0].mxu0
    %v2155 = vadd.f32 0.0, %v2154
    %v2156 = vpop.f32.mrb[0].mxu0
    %v2157 = vadd.f32 0.0, %v2156
    %v2158 = vpop.f32.mrb[0].mxu0
    %v2159 = vadd.f32 0.0, %v2158
    %v2160 = vpop.f32.mrb[0].mxu0
    %v2161 = vadd.f32 0.0, %v2160
    %2162 = vmatprep.mubr.bf16.mxu0 0
    %2163 = vmatmul.mubr.bf16.gmra.mrb[0].mxu0 %v945
    %v2164 = vpop.f32.mrb[0].mxu0
    %v2165 = vadd.f32 0.0, %v2164
    %v2166 = vpop.f32.mrb[0].mxu0
    %v2167 = vadd.f32 0.0, %v2166
    %v2168 = vpop.f32.mrb[0].mxu0
    %v2169 = vadd.f32 0.0, %v2168
    %v2170 = vpop.f32.mrb[0].mxu0
    %v2171 = vadd.f32 0.0, %v2170
    %2172 = vmatprep.mubr.bf16.mxu0 0
    %2173 = vmatmul.mubr.bf16.gmra.mrb[0].mxu0 %v946
    %v2174 = vpop.f32.mrb[0].mxu0
    %v2175 = vadd.f32 0.0, %v2174
    %v2176 = vpop.f32.mrb[0].mxu0
    %v2177 = vadd.f32 0.0, %v2176
    %v2178 = vpop.f32.mrb[0].mxu0
    %v2179 = vadd.f32 0.0, %v2178
    %v2180 = vpop.f32.mrb[0].mxu0
    %v2181 = vadd.f32 0.0, %v2180
    %2182 = vmatprep.mubr.bf16.mxu0 0
    %2183 = vmatmul.mubr.bf16.gmra.mrb[0].mxu0 %v947
    %v2184 = vpop.f32.mrb[0].mxu0
    %v2185 = vadd.f32 0.0, %v2184
    %v2186 = vpop.f32.mrb[0].mxu0
    %v2187 = vadd.f32 0.0, %v2186
    %v2188 = vpop.f32.mrb[0].mxu0
    %v2189 = vadd.f32 0.0, %v2188
    %v2190 = vpop.f32.mrb[0].mxu0
    %v2191 = vadd.f32 0.0, %v2190
    %2192 = vmatprep.mubr.bf16.mxu0 0
    %2193 = vmatmul.mubr.bf16.gmra.mrb[0].mxu0 %v948
    %v2194 = vpop.f32.mrb[0].mxu0
    %v2195 = vadd.f32 0.0, %v2194
    %v2196 = vpop.f32.mrb[0].mxu0
    %v2197 = vadd.f32 0.0, %v2196
    %v2198 = vpop.f32.mrb[0].mxu0
    %v2199 = vadd.f32 0.0, %v2198
    %v2200 = vpop.f32.mrb[0].mxu0
    %v2201 = vadd.f32 0.0, %v2200
    %2202 = vdwg.mxu0
    %v2203 = vadd.f32 %v1594, %v2012
    %v2204 = vadd.f32 %v1596, %v2014
    %v2205 = vadd.f32 %v1707, %v2125
    %v2206 = vadd.f32 %v1709, %v2127
    %v2207 = vadd.f32 %v1598, %v2016
    %v2208 = vadd.f32 %v1600, %v2018
    %v2209 = vadd.f32 %v1711, %v2129
    %v2210 = vadd.f32 %v1713, %v2131
    %v2211 = vadd.f32 %v1604, %v2022
    %v2212 = vadd.f32 %v1606, %v2024
    %v2213 = vadd.f32 %v1717, %v2135
    %v2214 = vadd.f32 %v1719, %v2137
    %v2215 = vadd.f32 %v1608, %v2026
    %v2216 = vadd.f32 %v1610, %v2028
    %v2217 = vadd.f32 %v1721, %v2139
    %v2218 = vadd.f32 %v1723, %v2141
    %v2219 = vadd.f32 %v1614, %v2032
    %v2220 = vadd.f32 %v1616, %v2034
    %v2221 = vadd.f32 %v1727, %v2145
    %v2222 = vadd.f32 %v1729, %v2147
    %v2223 = vadd.f32 %v1618, %v2036
    %v2224 = vadd.f32 %v1620, %v2038
    %v2225 = vadd.f32 %v1731, %v2149
    %v2226 = vadd.f32 %v1733, %v2151
    %v2227 = vadd.f32 %v1624, %v2042
    %v2228 = vadd.f32 %v1626, %v2044
    %v2229 = vadd.f32 %v1737, %v2155
    %v2230 = vadd.f32 %v1739, %v2157
    %v2231 = vadd.f32 %v1628, %v2046
    %v2232 = vadd.f32 %v1630, %v2048
    %v2233 = vadd.f32 %v1741, %v2159
    %v2234 = vadd.f32 %v1743, %v2161
    %v2235 = vadd.f32 %v1634, %v2052
    %v2236 = vadd.f32 %v1636, %v2054
    %v2237 = vadd.f32 %v1747, %v2165
    %v2238 = vadd.f32 %v1749, %v2167
    %v2239 = vadd.f32 %v1638, %v2056
    %v2240 = vadd.f32 %v1640, %v2058
    %v2241 = vadd.f32 %v1751, %v2169
    %v2242 = vadd.f32 %v1753, %v2171
    %v2243 = vadd.f32 %v1644, %v2062
    %v2244 = vadd.f32 %v1646, %v2064
    %v2245 = vadd.f32 %v1757, %v2175
    %v2246 = vadd.f32 %v1759, %v2177
    %v2247 = vadd.f32 %v1648, %v2066
    %v2248 = vadd.f32 %v1650, %v2068
    %v2249 = vadd.f32 %v1761, %v2179
    %v2250 = vadd.f32 %v1763, %v2181
    %v2251 = vadd.f32 %v1654, %v2072
    %v2252 = vadd.f32 %v1656, %v2074
    %v2253 = vadd.f32 %v1767, %v2185
    %v2254 = vadd.f32 %v1769, %v2187
    %v2255 = vadd.f32 %v1658, %v2076
    %v2256 = vadd.f32 %v1660, %v2078
    %v2257 = vadd.f32 %v1771, %v2189
    %v2258 = vadd.f32 %v1773, %v2191
    %v2259 = vadd.f32 %v1664, %v2082
    %v2260 = vadd.f32 %v1666, %v2084
    %v2261 = vadd.f32 %v1777, %v2195
    %v2262 = vadd.f32 %v1779, %v2197
    %v2263 = vadd.f32 %v1668, %v2086
    %v2264 = vadd.f32 %v1670, %v2088
    %v2265 = vadd.f32 %v1781, %v2199
    %v2266 = vadd.f32 %v1783, %v2201
    %v2267 = vld [vmem:[#allocation20] sm:$0xf]
    %v2269 = vlaneseq
    %v2270 = vshrl.u32 %v2269, 7
    %v2271 = vsub.s32 0, %v2270
    %v2272 = vrot.slane %v2267, %v2271
    %v2273 = vlaneseq
    %v2274 = vshrl.u32 %v2273, 7
    %v2275 = vsub.s32 1, %v2274
    %v2276 = vrot.slane %v2267, %v2275
    %v2277 = vlaneseq
    %v2278 = vshrl.u32 %v2277, 7
    %v2279 = vsub.s32 2, %v2278
    %v2280 = vrot.slane %v2267, %v2279
    %v2281 = vlaneseq
    %v2282 = vshrl.u32 %v2281, 7
    %v2283 = vsub.s32 3, %v2282
    %v2284 = vrot.slane %v2267, %v2283
    %v2289 = vadd.f32 %v2203, %v2272
    %v2290 = vadd.f32 %v2204, %v2276
    %v2291 = vadd.f32 %v2205, %v2280
    %v2292 = vadd.f32 %v2206, %v2284
    %v2293 = vadd.f32 %v2207, %v2272
    %v2294 = vadd.f32 %v2208, %v2276
    %v2295 = vadd.f32 %v2209, %v2280
    %v2296 = vadd.f32 %v2210, %v2284
    %v2297 = vadd.f32 %v2211, %v2272
    %v2298 = vadd.f32 %v2212, %v2276
    %v2299 = vadd.f32 %v2213, %v2280
    %v2300 = vadd.f32 %v2214, %v2284
    %v2301 = vadd.f32 %v2215, %v2272
    %v2302 = vadd.f32 %v2216, %v2276
    %v2303 = vadd.f32 %v2217, %v2280
    %v2304 = vadd.f32 %v2218, %v2284
    %v2305 = vadd.f32 %v2219, %v2272
    %v2306 = vadd.f32 %v2220, %v2276
    %v2307 = vadd.f32 %v2221, %v2280
    %v2308 = vadd.f32 %v2222, %v2284
    %v2309 = vadd.f32 %v2223, %v2272
    %v2310 = vadd.f32 %v2224, %v2276
    %v2311 = vadd.f32 %v2225, %v2280
    %v2312 = vadd.f32 %v2226, %v2284
    %v2313 = vadd.f32 %v2227, %v2272
    %v2314 = vadd.f32 %v2228, %v2276
    %v2315 = vadd.f32 %v2229, %v2280
    %v2316 = vadd.f32 %v2230, %v2284
    %v2317 = vadd.f32 %v2231, %v2272
    %v2318 = vadd.f32 %v2232, %v2276
    %v2319 = vadd.f32 %v2233, %v2280
    %v2320 = vadd.f32 %v2234, %v2284
    %v2321 = vadd.f32 %v2235, %v2272
    %v2322 = vadd.f32 %v2236, %v2276
    %v2323 = vadd.f32 %v2237, %v2280
    %v2324 = vadd.f32 %v2238, %v2284
    %v2325 = vadd.f32 %v2239, %v2272
    %v2326 = vadd.f32 %v2240, %v2276
    %v2327 = vadd.f32 %v2241, %v2280
    %v2328 = vadd.f32 %v2242, %v2284
    %v2329 = vadd.f32 %v2243, %v2272
    %v2330 = vadd.f32 %v2244, %v2276
    %v2331 = vadd.f32 %v2245, %v2280
    %v2332 = vadd.f32 %v2246, %v2284
    %v2333 = vadd.f32 %v2247, %v2272
    %v2334 = vadd.f32 %v2248, %v2276
    %v2335 = vadd.f32 %v2249, %v2280
    %v2336 = vadd.f32 %v2250, %v2284
    %v2337 = vadd.f32 %v2251, %v2272
    %v2338 = vadd.f32 %v2252, %v2276
    %v2339 = vadd.f32 %v2253, %v2280
    %v2340 = vadd.f32 %v2254, %v2284
    %v2341 = vadd.f32 %v2255, %v2272
    %v2342 = vadd.f32 %v2256, %v2276
    %v2343 = vadd.f32 %v2257, %v2280
    %v2344 = vadd.f32 %v2258, %v2284
    %v2345 = vadd.f32 %v2259, %v2272
    %v2346 = vadd.f32 %v2260, %v2276
    %v2347 = vadd.f32 %v2261, %v2280
    %v2348 = vadd.f32 %v2262, %v2284
    %v2349 = vadd.f32 %v2263, %v2272
    %v2350 = vadd.f32 %v2264, %v2276
    %v2351 = vadd.f32 %v2265, %v2280
    %v2352 = vadd.f32 %v2266, %v2284
    %v2353 = vmax.f32 %v2289, 0.0
    %v2354 = vmax.f32 %v2290, 0.0
    %v2355 = vmax.f32 %v2291, 0.0
    %v2356 = vmax.f32 %v2292, 0.0
    %v2357 = vmax.f32 %v2293, 0.0
    %v2358 = vmax.f32 %v2294, 0.0
    %v2359 = vmax.f32 %v2295, 0.0
    %v2360 = vmax.f32 %v2296, 0.0
    %v2361 = vmax.f32 %v2297, 0.0
    %v2362 = vmax.f32 %v2298, 0.0
    %v2363 = vmax.f32 %v2299, 0.0
    %v2364 = vmax.f32 %v2300, 0.0
    %v2365 = vmax.f32 %v2301, 0.0
    %v2366 = vmax.f32 %v2302, 0.0
    %v2367 = vmax.f32 %v2303, 0.0
    %v2368 = vmax.f32 %v2304, 0.0
    %v2369 = vmax.f32 %v2305, 0.0
    %v2370 = vmax.f32 %v2306, 0.0
    %v2371 = vmax.f32 %v2307, 0.0
    %v2372 = vmax.f32 %v2308, 0.0
    %v2373 = vmax.f32 %v2309, 0.0
    %v2374 = vmax.f32 %v2310, 0.0
    %v2375 = vmax.f32 %v2311, 0.0
    %v2376 = vmax.f32 %v2312, 0.0
    %v2377 = vmax.f32 %v2313, 0.0
    %v2378 = vmax.f32 %v2314, 0.0
    %v2379 = vmax.f32 %v2315, 0.0
    %v2380 = vmax.f32 %v2316, 0.0
    %v2381 = vmax.f32 %v2317, 0.0
    %v2382 = vmax.f32 %v2318, 0.0
    %v2383 = vmax.f32 %v2319, 0.0
    %v2384 = vmax.f32 %v2320, 0.0
    %v2385 = vmax.f32 %v2321, 0.0
    %v2386 = vmax.f32 %v2322, 0.0
    %v2387 = vmax.f32 %v2323, 0.0
    %v2388 = vmax.f32 %v2324, 0.0
    %v2389 = vmax.f32 %v2325, 0.0
    %v2390 = vmax.f32 %v2326, 0.0
    %v2391 = vmax.f32 %v2327, 0.0
    %v2392 = vmax.f32 %v2328, 0.0
    %v2393 = vmax.f32 %v2329, 0.0
    %v2394 = vmax.f32 %v2330, 0.0
    %v2395 = vmax.f32 %v2331, 0.0
    %v2396 = vmax.f32 %v2332, 0.0
    %v2397 = vmax.f32 %v2333, 0.0
    %v2398 = vmax.f32 %v2334, 0.0
    %v2399 = vmax.f32 %v2335, 0.0
    %v2400 = vmax.f32 %v2336, 0.0
    %v2401 = vmax.f32 %v2337, 0.0
    %v2402 = vmax.f32 %v2338, 0.0
    %v2403 = vmax.f32 %v2339, 0.0
    %v2404 = vmax.f32 %v2340, 0.0
    %v2405 = vmax.f32 %v2341, 0.0
    %v2406 = vmax.f32 %v2342, 0.0
    %v2407 = vmax.f32 %v2343, 0.0
    %v2408 = vmax.f32 %v2344, 0.0
    %v2409 = vmax.f32 %v2345, 0.0
    %v2410 = vmax.f32 %v2346, 0.0
    %v2411 = vmax.f32 %v2347, 0.0
    %v2412 = vmax.f32 %v2348, 0.0
    %v2413 = vmax.f32 %v2349, 0.0
    %v2414 = vmax.f32 %v2350, 0.0
    %v2415 = vmax.f32 %v2351, 0.0
    %v2416 = vmax.f32 %v2352, 0.0
    %v2417 = vpack.c.bf16 %v2357, %v2353
    %v2418 = vpack.c.bf16 %v2358, %v2354
    %v2419 = vpack.c.bf16 %v2359, %v2355
    %v2420 = vpack.c.bf16 %v2360, %v2356
    %v2421 = vpack.c.bf16 %v2365, %v2361
    %v2422 = vpack.c.bf16 %v2366, %v2362
    %v2423 = vpack.c.bf16 %v2367, %v2363
    %v2424 = vpack.c.bf16 %v2368, %v2364
    %v2425 = vpack.c.bf16 %v2373, %v2369
    %v2426 = vpack.c.bf16 %v2374, %v2370
    %v2427 = vpack.c.bf16 %v2375, %v2371
    %v2428 = vpack.c.bf16 %v2376, %v2372
    %v2429 = vpack.c.bf16 %v2381, %v2377
    %v2430 = vpack.c.bf16 %v2382, %v2378
    %v2431 = vpack.c.bf16 %v2383, %v2379
    %v2432 = vpack.c.bf16 %v2384, %v2380
    %v2433 = vpack.c.bf16 %v2389, %v2385
    %v2434 = vpack.c.bf16 %v2390, %v2386
    %v2435 = vpack.c.bf16 %v2391, %v2387
    %v2436 = vpack.c.bf16 %v2392, %v2388
    %v2437 = vpack.c.bf16 %v2397, %v2393
    %v2438 = vpack.c.bf16 %v2398, %v2394
    %v2439 = vpack.c.bf16 %v2399, %v2395
    %v2440 = vpack.c.bf16 %v2400, %v2396
    %v2441 = vpack.c.bf16 %v2405, %v2401
    %v2442 = vpack.c.bf16 %v2406, %v2402
    %v2443 = vpack.c.bf16 %v2407, %v2403
    %v2444 = vpack.c.bf16 %v2408, %v2404
    %v2445 = vpack.c.bf16 %v2413, %v2409
    %v2446 = vpack.c.bf16 %v2414, %v2410
    %v2447 = vpack.c.bf16 %v2415, %v2411
    %v2448 = vpack.c.bf16 %v2416, %v2412
    %s2449 = smul.u32 4, 64
    %s2450 = smul.u32 %s2449, 8
    %s2451 = sshll.u32 %s2450, 4
    %2452 = dma.done [#allocation4], %s2451
    %v2453 = vld [vmem:[#allocation2] sm:$0xff]
    %v2454 = vld [vmem:[#allocation2 + $0x8] sm:$0xff]
    %v2455 = vld [vmem:[#allocation2 + $0x10] sm:$0xff]
    %v2456 = vld [vmem:[#allocation2 + $0x18] sm:$0xff]
    %v2457 = vld [vmem:[#allocation2 + $0x20] sm:$0xff]
    %v2458 = vld [vmem:[#allocation2 + $0x28] sm:$0xff]
    %v2459 = vld [vmem:[#allocation2 + $0x30] sm:$0xff]
    %v2460 = vld [vmem:[#allocation2 + $0x38] sm:$0xff]
    %v2461 = vld [vmem:[#allocation2 + $0x40] sm:$0xff]
    %v2462 = vld [vmem:[#allocation2 + $0x48] sm:$0xff]
    %v2463 = vld [vmem:[#allocation2 + $0x50] sm:$0xff]
    %v2464 = vld [vmem:[#allocation2 + $0x58] sm:$0xff]
    %v2465 = vld [vmem:[#allocation2 + $0x60] sm:$0xff]
    %v2466 = vld [vmem:[#allocation2 + $0x68] sm:$0xff]
    %v2467 = vld [vmem:[#allocation2 + $0x70] sm:$0xff]
    %v2468 = vld [vmem:[#allocation2 + $0x78] sm:$0xff]
    %v2469 = vld [vmem:[#allocation2 + $0x80] sm:$0xff]
    %v2470 = vld [vmem:[#allocation2 + $0x88] sm:$0xff]
    %v2471 = vld [vmem:[#allocation2 + $0x90] sm:$0xff]
    %v2472 = vld [vmem:[#allocation2 + $0x98] sm:$0xff]
    %v2473 = vld [vmem:[#allocation2 + $0xa0] sm:$0xff]
    %v2474 = vld [vmem:[#allocation2 + $0xa8] sm:$0xff]
    %v2475 = vld [vmem:[#allocation2 + $0xb0] sm:$0xff]
    %v2476 = vld [vmem:[#allocation2 + $0xb8] sm:$0xff]
    %v2477 = vld [vmem:[#allocation2 + $0xc0] sm:$0xff]
    %v2478 = vld [vmem:[#allocation2 + $0xc8] sm:$0xff]
    %v2479 = vld [vmem:[#allocation2 + $0xd0] sm:$0xff]
    %v2480 = vld [vmem:[#allocation2 + $0xd8] sm:$0xff]
    %v2481 = vld [vmem:[#allocation2 + $0xe0] sm:$0xff]
    %v2482 = vld [vmem:[#allocation2 + $0xe8] sm:$0xff]
    %v2483 = vld [vmem:[#allocation2 + $0xf0] sm:$0xff]
    %v2484 = vld [vmem:[#allocation2 + $0xf8] sm:$0xff]
    %v2485 = vld [vmem:[#allocation2 + $0x100] sm:$0xff]
    %v2486 = vld [vmem:[#allocation2 + $0x108] sm:$0xff]
    %v2487 = vld [vmem:[#allocation2 + $0x110] sm:$0xff]
    %v2488 = vld [vmem:[#allocation2 + $0x118] sm:$0xff]
    %v2489 = vld [vmem:[#allocation2 + $0x120] sm:$0xff]
    %v2490 = vld [vmem:[#allocation2 + $0x128] sm:$0xff]
    %v2491 = vld [vmem:[#allocation2 + $0x130] sm:$0xff]
    %v2492 = vld [vmem:[#allocation2 + $0x138] sm:$0xff]
    %v2493 = vld [vmem:[#allocation2 + $0x140] sm:$0xff]
    %v2494 = vld [vmem:[#allocation2 + $0x148] sm:$0xff]
    %v2495 = vld [vmem:[#allocation2 + $0x150] sm:$0xff]
    %v2496 = vld [vmem:[#allocation2 + $0x158] sm:$0xff]
    %v2497 = vld [vmem:[#allocation2 + $0x160] sm:$0xff]
    %v2498 = vld [vmem:[#allocation2 + $0x168] sm:$0xff]
    %v2499 = vld [vmem:[#allocation2 + $0x170] sm:$0xff]
    %v2500 = vld [vmem:[#allocation2 + $0x178] sm:$0xff]
    %v2501 = vld [vmem:[#allocation2 + $0x180] sm:$0xff]
    %v2502 = vld [vmem:[#allocation2 + $0x188] sm:$0xff]
    %v2503 = vld [vmem:[#allocation2 + $0x190] sm:$0xff]
    %v2504 = vld [vmem:[#allocation2 + $0x198] sm:$0xff]
    %v2505 = vld [vmem:[#allocation2 + $0x1a0] sm:$0xff]
    %v2506 = vld [vmem:[#allocation2 + $0x1a8] sm:$0xff]
    %v2507 = vld [vmem:[#allocation2 + $0x1b0] sm:$0xff]
    %v2508 = vld [vmem:[#allocation2 + $0x1b8] sm:$0xff]
    %v2509 = vld [vmem:[#allocation2 + $0x1c0] sm:$0xff]
    %v2510 = vld [vmem:[#allocation2 + $0x1c8] sm:$0xff]
    %v2511 = vld [vmem:[#allocation2 + $0x1d0] sm:$0xff]
    %v2512 = vld [vmem:[#allocation2 + $0x1d8] sm:$0xff]
    %v2513 = vld [vmem:[#allocation2 + $0x1e0] sm:$0xff]
    %v2514 = vld [vmem:[#allocation2 + $0x1e8] sm:$0xff]
    %v2515 = vld [vmem:[#allocation2 + $0x1f0] sm:$0xff]
    %v2516 = vld [vmem:[#allocation2 + $0x1f8] sm:$0xff]
    %v2517 = vld [vmem:[#allocation2 + $0x200] sm:$0xff]
    %v2518 = vld [vmem:[#allocation2 + $0x208] sm:$0xff]
    %v2519 = vld [vmem:[#allocation2 + $0x210] sm:$0xff]
    %v2520 = vld [vmem:[#allocation2 + $0x218] sm:$0xff]
    %v2521 = vld [vmem:[#allocation2 + $0x220] sm:$0xff]
    %v2522 = vld [vmem:[#allocation2 + $0x228] sm:$0xff]
    %v2523 = vld [vmem:[#allocation2 + $0x230] sm:$0xff]
    %v2524 = vld [vmem:[#allocation2 + $0x238] sm:$0xff]
    %v2525 = vld [vmem:[#allocation2 + $0x240] sm:$0xff]
    %v2526 = vld [vmem:[#allocation2 + $0x248] sm:$0xff]
    %v2527 = vld [vmem:[#allocation2 + $0x250] sm:$0xff]
    %v2528 = vld [vmem:[#allocation2 + $0x258] sm:$0xff]
    %v2529 = vld [vmem:[#allocation2 + $0x260] sm:$0xff]
    %v2530 = vld [vmem:[#allocation2 + $0x268] sm:$0xff]
    %v2531 = vld [vmem:[#allocation2 + $0x270] sm:$0xff]
    %v2532 = vld [vmem:[#allocation2 + $0x278] sm:$0xff]
    %v2533 = vld [vmem:[#allocation2 + $0x280] sm:$0xff]
    %v2534 = vld [vmem:[#allocation2 + $0x288] sm:$0xff]
    %v2535 = vld [vmem:[#allocation2 + $0x290] sm:$0xff]
    %v2536 = vld [vmem:[#allocation2 + $0x298] sm:$0xff]
    %v2537 = vld [vmem:[#allocation2 + $0x2a0] sm:$0xff]
    %v2538 = vld [vmem:[#allocation2 + $0x2a8] sm:$0xff]
    %v2539 = vld [vmem:[#allocation2 + $0x2b0] sm:$0xff]
    %v2540 = vld [vmem:[#allocation2 + $0x2b8] sm:$0xff]
    %v2541 = vld [vmem:[#allocation2 + $0x2c0] sm:$0xff]
    %v2542 = vld [vmem:[#allocation2 + $0x2c8] sm:$0xff]
    %v2543 = vld [vmem:[#allocation2 + $0x2d0] sm:$0xff]
    %v2544 = vld [vmem:[#allocation2 + $0x2d8] sm:$0xff]
    %v2545 = vld [vmem:[#allocation2 + $0x2e0] sm:$0xff]
    %v2546 = vld [vmem:[#allocation2 + $0x2e8] sm:$0xff]
    %v2547 = vld [vmem:[#allocation2 + $0x2f0] sm:$0xff]
    %v2548 = vld [vmem:[#allocation2 + $0x2f8] sm:$0xff]
    %v2549 = vld [vmem:[#allocation2 + $0x300] sm:$0xff]
    %v2550 = vld [vmem:[#allocation2 + $0x308] sm:$0xff]
    %v2551 = vld [vmem:[#allocation2 + $0x310] sm:$0xff]
    %v2552 = vld [vmem:[#allocation2 + $0x318] sm:$0xff]
    %v2553 = vld [vmem:[#allocation2 + $0x320] sm:$0xff]
    %v2554 = vld [vmem:[#allocation2 + $0x328] sm:$0xff]
    %v2555 = vld [vmem:[#allocation2 + $0x330] sm:$0xff]
    %v2556 = vld [vmem:[#allocation2 + $0x338] sm:$0xff]
    %v2557 = vld [vmem:[#allocation2 + $0x340] sm:$0xff]
    %v2558 = vld [vmem:[#allocation2 + $0x348] sm:$0xff]
    %v2559 = vld [vmem:[#allocation2 + $0x350] sm:$0xff]
    %v2560 = vld [vmem:[#allocation2 + $0x358] sm:$0xff]
    %v2561 = vld [vmem:[#allocation2 + $0x360] sm:$0xff]
    %v2562 = vld [vmem:[#allocation2 + $0x368] sm:$0xff]
    %v2563 = vld [vmem:[#allocation2 + $0x370] sm:$0xff]
    %v2564 = vld [vmem:[#allocation2 + $0x378] sm:$0xff]
    %v2565 = vld [vmem:[#allocation2 + $0x380] sm:$0xff]
    %v2566 = vld [vmem:[#allocation2 + $0x388] sm:$0xff]
    %v2567 = vld [vmem:[#allocation2 + $0x390] sm:$0xff]
    %v2568 = vld [vmem:[#allocation2 + $0x398] sm:$0xff]
    %v2569 = vld [vmem:[#allocation2 + $0x3a0] sm:$0xff]
    %v2570 = vld [vmem:[#allocation2 + $0x3a8] sm:$0xff]
    %v2571 = vld [vmem:[#allocation2 + $0x3b0] sm:$0xff]
    %v2572 = vld [vmem:[#allocation2 + $0x3b8] sm:$0xff]
    %v2573 = vld [vmem:[#allocation2 + $0x3c0] sm:$0xff]
    %v2574 = vld [vmem:[#allocation2 + $0x3c8] sm:$0xff]
    %v2575 = vld [vmem:[#allocation2 + $0x3d0] sm:$0xff]
    %v2576 = vld [vmem:[#allocation2 + $0x3d8] sm:$0xff]
    %v2577 = vld [vmem:[#allocation2 + $0x3e0] sm:$0xff]
    %v2578 = vld [vmem:[#allocation2 + $0x3e8] sm:$0xff]
    %v2579 = vld [vmem:[#allocation2 + $0x3f0] sm:$0xff]
    %v2580 = vld [vmem:[#allocation2 + $0x3f8] sm:$0xff]
    %v2581 = vld [vmem:[#allocation2 + $0x400] sm:$0xff]
    %v2582 = vld [vmem:[#allocation2 + $0x408] sm:$0xff]
    %v2583 = vld [vmem:[#allocation2 + $0x410] sm:$0xff]
    %v2584 = vld [vmem:[#allocation2 + $0x418] sm:$0xff]
    %v2585 = vld [vmem:[#allocation2 + $0x420] sm:$0xff]
    %v2586 = vld [vmem:[#allocation2 + $0x428] sm:$0xff]
    %v2587 = vld [vmem:[#allocation2 + $0x430] sm:$0xff]
    %v2588 = vld [vmem:[#allocation2 + $0x438] sm:$0xff]
    %v2589 = vld [vmem:[#allocation2 + $0x440] sm:$0xff]
    %v2590 = vld [vmem:[#allocation2 + $0x448] sm:$0xff]
    %v2591 = vld [vmem:[#allocation2 + $0x450] sm:$0xff]
    %v2592 = vld [vmem:[#allocation2 + $0x458] sm:$0xff]
    %v2593 = vld [vmem:[#allocation2 + $0x460] sm:$0xff]
    %v2594 = vld [vmem:[#allocation2 + $0x468] sm:$0xff]
    %v2595 = vld [vmem:[#allocation2 + $0x470] sm:$0xff]
    %v2596 = vld [vmem:[#allocation2 + $0x478] sm:$0xff]
    %v2597 = vld [vmem:[#allocation2 + $0x480] sm:$0xff]
    %v2598 = vld [vmem:[#allocation2 + $0x488] sm:$0xff]
    %v2599 = vld [vmem:[#allocation2 + $0x490] sm:$0xff]
    %v2600 = vld [vmem:[#allocation2 + $0x498] sm:$0xff]
    %v2601 = vld [vmem:[#allocation2 + $0x4a0] sm:$0xff]
    %v2602 = vld [vmem:[#allocation2 + $0x4a8] sm:$0xff]
    %v2603 = vld [vmem:[#allocation2 + $0x4b0] sm:$0xff]
    %v2604 = vld [vmem:[#allocation2 + $0x4b8] sm:$0xff]
    %v2605 = vld [vmem:[#allocation2 + $0x4c0] sm:$0xff]
    %v2606 = vld [vmem:[#allocation2 + $0x4c8] sm:$0xff]
    %v2607 = vld [vmem:[#allocation2 + $0x4d0] sm:$0xff]
    %v2608 = vld [vmem:[#allocation2 + $0x4d8] sm:$0xff]
    %v2609 = vld [vmem:[#allocation2 + $0x4e0] sm:$0xff]
    %v2610 = vld [vmem:[#allocation2 + $0x4e8] sm:$0xff]
    %v2611 = vld [vmem:[#allocation2 + $0x4f0] sm:$0xff]
    %v2612 = vld [vmem:[#allocation2 + $0x4f8] sm:$0xff]
    %v2613 = vld [vmem:[#allocation2 + $0x500] sm:$0xff]
    %v2614 = vld [vmem:[#allocation2 + $0x508] sm:$0xff]
    %v2615 = vld [vmem:[#allocation2 + $0x510] sm:$0xff]
    %v2616 = vld [vmem:[#allocation2 + $0x518] sm:$0xff]
    %v2617 = vld [vmem:[#allocation2 + $0x520] sm:$0xff]
    %v2618 = vld [vmem:[#allocation2 + $0x528] sm:$0xff]
    %v2619 = vld [vmem:[#allocation2 + $0x530] sm:$0xff]
    %v2620 = vld [vmem:[#allocation2 + $0x538] sm:$0xff]
    %v2621 = vld [vmem:[#allocation2 + $0x540] sm:$0xff]
    %v2622 = vld [vmem:[#allocation2 + $0x548] sm:$0xff]
    %v2623 = vld [vmem:[#allocation2 + $0x550] sm:$0xff]
    %v2624 = vld [vmem:[#allocation2 + $0x558] sm:$0xff]
    %v2625 = vld [vmem:[#allocation2 + $0x560] sm:$0xff]
    %v2626 = vld [vmem:[#allocation2 + $0x568] sm:$0xff]
    %v2627 = vld [vmem:[#allocation2 + $0x570] sm:$0xff]
    %v2628 = vld [vmem:[#allocation2 + $0x578] sm:$0xff]
    %v2629 = vld [vmem:[#allocation2 + $0x580] sm:$0xff]
    %v2630 = vld [vmem:[#allocation2 + $0x588] sm:$0xff]
    %v2631 = vld [vmem:[#allocation2 + $0x590] sm:$0xff]
    %v2632 = vld [vmem:[#allocation2 + $0x598] sm:$0xff]
    %v2633 = vld [vmem:[#allocation2 + $0x5a0] sm:$0xff]
    %v2634 = vld [vmem:[#allocation2 + $0x5a8] sm:$0xff]
    %v2635 = vld [vmem:[#allocation2 + $0x5b0] sm:$0xff]
    %v2636 = vld [vmem:[#allocation2 + $0x5b8] sm:$0xff]
    %v2637 = vld [vmem:[#allocation2 + $0x5c0] sm:$0xff]
    %v2638 = vld [vmem:[#allocation2 + $0x5c8] sm:$0xff]
    %v2639 = vld [vmem:[#allocation2 + $0x5d0] sm:$0xff]
    %v2640 = vld [vmem:[#allocation2 + $0x5d8] sm:$0xff]
    %v2641 = vld [vmem:[#allocation2 + $0x5e0] sm:$0xff]
    %v2642 = vld [vmem:[#allocation2 + $0x5e8] sm:$0xff]
    %v2643 = vld [vmem:[#allocation2 + $0x5f0] sm:$0xff]
    %v2644 = vld [vmem:[#allocation2 + $0x5f8] sm:$0xff]
    %v2645 = vld [vmem:[#allocation2 + $0x600] sm:$0xff]
    %v2646 = vld [vmem:[#allocation2 + $0x608] sm:$0xff]
    %v2647 = vld [vmem:[#allocation2 + $0x610] sm:$0xff]
    %v2648 = vld [vmem:[#allocation2 + $0x618] sm:$0xff]
    %v2649 = vld [vmem:[#allocation2 + $0x620] sm:$0xff]
    %v2650 = vld [vmem:[#allocation2 + $0x628] sm:$0xff]
    %v2651 = vld [vmem:[#allocation2 + $0x630] sm:$0xff]
    %v2652 = vld [vmem:[#allocation2 + $0x638] sm:$0xff]
    %v2653 = vld [vmem:[#allocation2 + $0x640] sm:$0xff]
    %v2654 = vld [vmem:[#allocation2 + $0x648] sm:$0xff]
    %v2655 = vld [vmem:[#allocation2 + $0x650] sm:$0xff]
    %v2656 = vld [vmem:[#allocation2 + $0x658] sm:$0xff]
    %v2657 = vld [vmem:[#allocation2 + $0x660] sm:$0xff]
    %v2658 = vld [vmem:[#allocation2 + $0x668] sm:$0xff]
    %v2659 = vld [vmem:[#allocation2 + $0x670] sm:$0xff]
    %v2660 = vld [vmem:[#allocation2 + $0x678] sm:$0xff]
    %v2661 = vld [vmem:[#allocation2 + $0x680] sm:$0xff]
    %v2662 = vld [vmem:[#allocation2 + $0x688] sm:$0xff]
    %v2663 = vld [vmem:[#allocation2 + $0x690] sm:$0xff]
    %v2664 = vld [vmem:[#allocation2 + $0x698] sm:$0xff]
    %v2665 = vld [vmem:[#allocation2 + $0x6a0] sm:$0xff]
    %v2666 = vld [vmem:[#allocation2 + $0x6a8] sm:$0xff]
    %v2667 = vld [vmem:[#allocation2 + $0x6b0] sm:$0xff]
    %v2668 = vld [vmem:[#allocation2 + $0x6b8] sm:$0xff]
    %v2669 = vld [vmem:[#allocation2 + $0x6c0] sm:$0xff]
    %v2670 = vld [vmem:[#allocation2 + $0x6c8] sm:$0xff]
    %v2671 = vld [vmem:[#allocation2 + $0x6d0] sm:$0xff]
    %v2672 = vld [vmem:[#allocation2 + $0x6d8] sm:$0xff]
    %v2673 = vld [vmem:[#allocation2 + $0x6e0] sm:$0xff]
    %v2674 = vld [vmem:[#allocation2 + $0x6e8] sm:$0xff]
    %v2675 = vld [vmem:[#allocation2 + $0x6f0] sm:$0xff]
    %v2676 = vld [vmem:[#allocation2 + $0x6f8] sm:$0xff]
    %v2677 = vld [vmem:[#allocation2 + $0x700] sm:$0xff]
    %v2678 = vld [vmem:[#allocation2 + $0x708] sm:$0xff]
    %v2679 = vld [vmem:[#allocation2 + $0x710] sm:$0xff]
    %v2680 = vld [vmem:[#allocation2 + $0x718] sm:$0xff]
    %v2681 = vld [vmem:[#allocation2 + $0x720] sm:$0xff]
    %v2682 = vld [vmem:[#allocation2 + $0x728] sm:$0xff]
    %v2683 = vld [vmem:[#allocation2 + $0x730] sm:$0xff]
    %v2684 = vld [vmem:[#allocation2 + $0x738] sm:$0xff]
    %v2685 = vld [vmem:[#allocation2 + $0x740] sm:$0xff]
    %v2686 = vld [vmem:[#allocation2 + $0x748] sm:$0xff]
    %v2687 = vld [vmem:[#allocation2 + $0x750] sm:$0xff]
    %v2688 = vld [vmem:[#allocation2 + $0x758] sm:$0xff]
    %v2689 = vld [vmem:[#allocation2 + $0x760] sm:$0xff]
    %v2690 = vld [vmem:[#allocation2 + $0x768] sm:$0xff]
    %v2691 = vld [vmem:[#allocation2 + $0x770] sm:$0xff]
    %v2692 = vld [vmem:[#allocation2 + $0x778] sm:$0xff]
    %v2693 = vld [vmem:[#allocation2 + $0x780] sm:$0xff]
    %v2694 = vld [vmem:[#allocation2 + $0x788] sm:$0xff]
    %v2695 = vld [vmem:[#allocation2 + $0x790] sm:$0xff]
    %v2696 = vld [vmem:[#allocation2 + $0x798] sm:$0xff]
    %v2697 = vld [vmem:[#allocation2 + $0x7a0] sm:$0xff]
    %v2698 = vld [vmem:[#allocation2 + $0x7a8] sm:$0xff]
    %v2699 = vld [vmem:[#allocation2 + $0x7b0] sm:$0xff]
    %v2700 = vld [vmem:[#allocation2 + $0x7b8] sm:$0xff]
    %v2701 = vld [vmem:[#allocation2 + $0x7c0] sm:$0xff]
    %v2702 = vld [vmem:[#allocation2 + $0x7c8] sm:$0xff]
    %v2703 = vld [vmem:[#allocation2 + $0x7d0] sm:$0xff]
    %v2704 = vld [vmem:[#allocation2 + $0x7d8] sm:$0xff]
    %v2705 = vld [vmem:[#allocation2 + $0x7e0] sm:$0xff]
    %v2706 = vld [vmem:[#allocation2 + $0x7e8] sm:$0xff]
    %v2707 = vld [vmem:[#allocation2 + $0x7f0] sm:$0xff]
    %v2708 = vld [vmem:[#allocation2 + $0x7f8] sm:$0xff]
    %v2709 = vld [vmem:[#allocation22] sm:$0xff]
    %v2711 = vlaneseq
    %v2712 = vshrl.u32 %v2711, 7
    %v2713 = vsub.s32 0, %v2712
    %v2714 = vrot.slane %v2709, %v2713
    %v2715 = vlaneseq
    %v2716 = vshrl.u32 %v2715, 7
    %v2717 = vsub.s32 1, %v2716
    %v2718 = vrot.slane %v2709, %v2717
    %v2719 = vlaneseq
    %v2720 = vshrl.u32 %v2719, 7
    %v2721 = vsub.s32 2, %v2720
    %v2722 = vrot.slane %v2709, %v2721
    %v2723 = vlaneseq
    %v2724 = vshrl.u32 %v2723, 7
    %v2725 = vsub.s32 3, %v2724
    %v2726 = vrot.slane %v2709, %v2725
    %v2727 = vlaneseq
    %v2728 = vshrl.u32 %v2727, 7
    %v2729 = vsub.s32 4, %v2728
    %v2730 = vrot.slane %v2709, %v2729
    %v2731 = vlaneseq
    %v2732 = vshrl.u32 %v2731, 7
    %v2733 = vsub.s32 5, %v2732
    %v2734 = vrot.slane %v2709, %v2733
    %v2735 = vlaneseq
    %v2736 = vshrl.u32 %v2735, 7
    %v2737 = vsub.s32 6, %v2736
    %v2738 = vrot.slane %v2709, %v2737
    %v2739 = vlaneseq
    %v2740 = vshrl.u32 %v2739, 7
    %v2741 = vsub.s32 7, %v2740
    %v2742 = vrot.slane %v2709, %v2741
    %2751 = vmatprep.subr.bf16.mxu0 %v2454
    %2752 = vmatpush1.bf16.msra.mxu0 %v2453
    %2753 = vmatprep.subr.bf16.mxu0 %v2462
    %2754 = vmatpush1.bf16.msra.mxu0 %v2461
    %2755 = vmatprep.subr.bf16.mxu0 %v2470
    %2756 = vmatpush1.bf16.msra.mxu0 %v2469
    %2757 = vmatprep.subr.bf16.mxu0 %v2478
    %2758 = vmatpush1.bf16.msra.mxu0 %v2477
    %2759 = vmatprep.subr.bf16.mxu0 %v2486
    %2760 = vmatpush1.bf16.msra.mxu0 %v2485
    %2761 = vmatprep.subr.bf16.mxu0 %v2494
    %2762 = vmatpush1.bf16.msra.mxu0 %v2493
    %2763 = vmatprep.subr.bf16.mxu0 %v2502
    %2764 = vmatpush1.bf16.msra.mxu0 %v2501
    %2765 = vmatprep.subr.bf16.mxu0 %v2510
    %2766 = vmatpush1.bf16.msra.mxu0 %v2509
    %2767 = vmatprep.subr.bf16.mxu0 %v2518
    %2768 = vmatpush1.bf16.msra.mxu0 %v2517
    %2769 = vmatprep.subr.bf16.mxu0 %v2526
    %2770 = vmatpush1.bf16.msra.mxu0 %v2525
    %2771 = vmatprep.subr.bf16.mxu0 %v2534
    %2772 = vmatpush1.bf16.msra.mxu0 %v2533
    %2773 = vmatprep.subr.bf16.mxu0 %v2542
    %2774 = vmatpush1.bf16.msra.mxu0 %v2541
    %2775 = vmatprep.subr.bf16.mxu0 %v2550
    %2776 = vmatpush1.bf16.msra.mxu0 %v2549
    %2777 = vmatprep.subr.bf16.mxu0 %v2558
    %2778 = vmatpush1.bf16.msra.mxu0 %v2557
    %2779 = vmatprep.subr.bf16.mxu0 %v2566
    %2780 = vmatpush1.bf16.msra.mxu0 %v2565
    %2781 = vmatprep.subr.bf16.mxu0 %v2574
    %2782 = vmatpush1.bf16.msra.mxu0 %v2573
    %2783 = vmatprep.mubr.bf16.mxu0 %v2418
    %2784 = vmatmul.mubr.bf16.gmra.mrb[0].mxu0 %v2417
    %v2785 = vpop.f32.mrb[0].mxu0
    %v2786 = vadd.f32 %v2714, %v2785
    %v2787 = vpop.f32.mrb[0].mxu0
    %v2788 = vadd.f32 %v2718, %v2787
    %v2789 = vpop.f32.mrb[0].mxu0
    %v2790 = vadd.f32 %v2714, %v2789
    %v2791 = vpop.f32.mrb[0].mxu0
    %v2792 = vadd.f32 %v2718, %v2791
    %2793 = vmatprep.mubr.bf16.mxu0 %v2422
    %2794 = vmatmul.mubr.bf16.gmra.mrb[0].mxu0 %v2421
    %v2795 = vpop.f32.mrb[0].mxu0
    %v2796 = vadd.f32 %v2714, %v2795
    %v2797 = vpop.f32.mrb[0].mxu0
    %v2798 = vadd.f32 %v2718, %v2797
    %v2799 = vpop.f32.mrb[0].mxu0
    %v2800 = vadd.f32 %v2714, %v2799
    %v2801 = vpop.f32.mrb[0].mxu0
    %v2802 = vadd.f32 %v2718, %v2801
    %2803 = vmatprep.mubr.bf16.mxu0 %v2426
    %2804 = vmatmul.mubr.bf16.gmra.mrb[0].mxu0 %v2425
    %v2805 = vpop.f32.mrb[0].mxu0
    %v2806 = vadd.f32 %v2714, %v2805
    %v2807 = vpop.f32.mrb[0].mxu0
    %v2808 = vadd.f32 %v2718, %v2807
    %v2809 = vpop.f32.mrb[0].mxu0
    %v2810 = vadd.f32 %v2714, %v2809
    %v2811 = vpop.f32.mrb[0].mxu0
    %v2812 = vadd.f32 %v2718, %v2811
    %2813 = vmatprep.mubr.bf16.mxu0 %v2430
    %2814 = vmatmul.mubr.bf16.gmra.mrb[0].mxu0 %v2429
    %v2815 = vpop.f32.mrb[0].mxu0
    %v2816 = vadd.f32 %v2714, %v2815
    %v2817 = vpop.f32.mrb[0].mxu0
    %v2818 = vadd.f32 %v2718, %v2817
    %v2819 = vpop.f32.mrb[0].mxu0
    %v2820 = vadd.f32 %v2714, %v2819
    %v2821 = vpop.f32.mrb[0].mxu0
    %v2822 = vadd.f32 %v2718, %v2821
    %2823 = vmatprep.mubr.bf16.mxu0 %v2434
    %2824 = vmatmul.mubr.bf16.gmra.mrb[0].mxu0 %v2433
    %v2825 = vpop.f32.mrb[0].mxu0
    %v2826 = vadd.f32 %v2714, %v2825
    %v2827 = vpop.f32.mrb[0].mxu0
    %v2828 = vadd.f32 %v2718, %v2827
    %v2829 = vpop.f32.mrb[0].mxu0
    %v2830 = vadd.f32 %v2714, %v2829
    %v2831 = vpop.f32.mrb[0].mxu0
    %v2832 = vadd.f32 %v2718, %v2831
    %2833 = vmatprep.mubr.bf16.mxu0 %v2438
    %2834 = vmatmul.mubr.bf16.gmra.mrb[0].mxu0 %v2437
    %v2835 = vpop.f32.mrb[0].mxu0
    %v2836 = vadd.f32 %v2714, %v2835
    %v2837 = vpop.f32.mrb[0].mxu0
    %v2838 = vadd.f32 %v2718, %v2837
    %v2839 = vpop.f32.mrb[0].mxu0
    %v2840 = vadd.f32 %v2714, %v2839
    %v2841 = vpop.f32.mrb[0].mxu0
    %v2842 = vadd.f32 %v2718, %v2841
    %2843 = vmatprep.mubr.bf16.mxu0 %v2442
    %2844 = vmatmul.mubr.bf16.gmra.mrb[0].mxu0 %v2441
    %v2845 = vpop.f32.mrb[0].mxu0
    %v2846 = vadd.f32 %v2714, %v2845
    %v2847 = vpop.f32.mrb[0].mxu0
    %v2848 = vadd.f32 %v2718, %v2847
    %v2849 = vpop.f32.mrb[0].mxu0
    %v2850 = vadd.f32 %v2714, %v2849
    %v2851 = vpop.f32.mrb[0].mxu0
    %v2852 = vadd.f32 %v2718, %v2851
    %2853 = vmatprep.mubr.bf16.mxu0 %v2446
    %2854 = vmatmul.mubr.bf16.gmra.mrb[0].mxu0 %v2445
    %v2855 = vpop.f32.mrb[0].mxu0
    %v2856 = vadd.f32 %v2714, %v2855
    %v2857 = vpop.f32.mrb[0].mxu0
    %v2858 = vadd.f32 %v2718, %v2857
    %v2859 = vpop.f32.mrb[0].mxu0
    %v2860 = vadd.f32 %v2714, %v2859
    %v2861 = vpop.f32.mrb[0].mxu0
    %v2862 = vadd.f32 %v2718, %v2861
    %2863 = vdwg.mxu0
    %2864 = vmatprep.subr.bf16.mxu0 %v2582
    %2865 = vmatpush1.bf16.msra.mxu0 %v2581
    %2866 = vmatprep.subr.bf16.mxu0 %v2590
    %2867 = vmatpush1.bf16.msra.mxu0 %v2589
    %2868 = vmatprep.subr.bf16.mxu0 %v2598
    %2869 = vmatpush1.bf16.msra.mxu0 %v2597
    %2870 = vmatprep.subr.bf16.mxu0 %v2606
    %2871 = vmatpush1.bf16.msra.mxu0 %v2605
    %2872 = vmatprep.subr.bf16.mxu0 %v2614
    %2873 = vmatpush1.bf16.msra.mxu0 %v2613
    %2874 = vmatprep.subr.bf16.mxu0 %v2622
    %2875 = vmatpush1.bf16.msra.mxu0 %v2621
    %2876 = vmatprep.subr.bf16.mxu0 %v2630
    %2877 = vmatpush1.bf16.msra.mxu0 %v2629
    %2878 = vmatprep.subr.bf16.mxu0 %v2638
    %2879 = vmatpush1.bf16.msra.mxu0 %v2637
    %2880 = vmatprep.subr.bf16.mxu0 %v2646
    %2881 = vmatpush1.bf16.msra.mxu0 %v2645
    %2882 = vmatprep.subr.bf16.mxu0 %v2654
    %2883 = vmatpush1.bf16.msra.mxu0 %v2653
    %2884 = vmatprep.subr.bf16.mxu0 %v2662
    %2885 = vmatpush1.bf16.msra.mxu0 %v2661
    %2886 = vmatprep.subr.bf16.mxu0 %v2670
    %2887 = vmatpush1.bf16.msra.mxu0 %v2669
    %2888 = vmatprep.subr.bf16.mxu0 %v2678
    %2889 = vmatpush1.bf16.msra.mxu0 %v2677
    %2890 = vmatprep.subr.bf16.mxu0 %v2686
    %2891 = vmatpush1.bf16.msra.mxu0 %v2685
    %2892 = vmatprep.subr.bf16.mxu0 %v2694
    %2893 = vmatpush1.bf16.msra.mxu0 %v2693
    %2894 = vmatprep.subr.bf16.mxu0 %v2702
    %2895 = vmatpush1.bf16.msra.mxu0 %v2701
    %2896 = vmatprep.mubr.bf16.mxu0 %v2420
    %2897 = vmatmul.mubr.bf16.gmra.mrb[0].mxu0 %v2419
    %v2898 = vpop.f32.mrb[0].mxu0
    %v2899 = vadd.f32 %v2786, %v2898
    %v2900 = vpop.f32.mrb[0].mxu0
    %v2901 = vadd.f32 %v2788, %v2900
    %v2902 = vpop.f32.mrb[0].mxu0
    %v2903 = vadd.f32 %v2790, %v2902
    %v2904 = vpop.f32.mrb[0].mxu0
    %v2905 = vadd.f32 %v2792, %v2904
    %2906 = vmatprep.mubr.bf16.mxu0 %v2424
    %2907 = vmatmul.mubr.bf16.gmra.mrb[0].mxu0 %v2423
    %v2908 = vpop.f32.mrb[0].mxu0
    %v2909 = vadd.f32 %v2796, %v2908
    %v2910 = vpop.f32.mrb[0].mxu0
    %v2911 = vadd.f32 %v2798, %v2910
    %v2912 = vpop.f32.mrb[0].mxu0
    %v2913 = vadd.f32 %v2800, %v2912
    %v2914 = vpop.f32.mrb[0].mxu0
    %v2915 = vadd.f32 %v2802, %v2914
    %2916 = vmatprep.mubr.bf16.mxu0 %v2428
    %2917 = vmatmul.mubr.bf16.gmra.mrb[0].mxu0 %v2427
    %v2918 = vpop.f32.mrb[0].mxu0
    %v2919 = vadd.f32 %v2806, %v2918
    %v2920 = vpop.f32.mrb[0].mxu0
    %v2921 = vadd.f32 %v2808, %v2920
    %v2922 = vpop.f32.mrb[0].mxu0
    %v2923 = vadd.f32 %v2810, %v2922
    %v2924 = vpop.f32.mrb[0].mxu0
    %v2925 = vadd.f32 %v2812, %v2924
    %2926 = vmatprep.mubr.bf16.mxu0 %v2432
    %2927 = vmatmul.mubr.bf16.gmra.mrb[0].mxu0 %v2431
    %v2928 = vpop.f32.mrb[0].mxu0
    %v2929 = vadd.f32 %v2816, %v2928
    %v2930 = vpop.f32.mrb[0].mxu0
    %v2931 = vadd.f32 %v2818, %v2930
    %v2932 = vpop.f32.mrb[0].mxu0
    %v2933 = vadd.f32 %v2820, %v2932
    %v2934 = vpop.f32.mrb[0].mxu0
    %v2935 = vadd.f32 %v2822, %v2934
    %2936 = vmatprep.mubr.bf16.mxu0 %v2436
    %2937 = vmatmul.mubr.bf16.gmra.mrb[0].mxu0 %v2435
    %v2938 = vpop.f32.mrb[0].mxu0
    %v2939 = vadd.f32 %v2826, %v2938
    %v2940 = vpop.f32.mrb[0].mxu0
    %v2941 = vadd.f32 %v2828, %v2940
    %v2942 = vpop.f32.mrb[0].mxu0
    %v2943 = vadd.f32 %v2830, %v2942
    %v2944 = vpop.f32.mrb[0].mxu0
    %v2945 = vadd.f32 %v2832, %v2944
    %2946 = vmatprep.mubr.bf16.mxu0 %v2440
    %2947 = vmatmul.mubr.bf16.gmra.mrb[0].mxu0 %v2439
    %v2948 = vpop.f32.mrb[0].mxu0
    %v2949 = vadd.f32 %v2836, %v2948
    %v2950 = vpop.f32.mrb[0].mxu0
    %v2951 = vadd.f32 %v2838, %v2950
    %v2952 = vpop.f32.mrb[0].mxu0
    %v2953 = vadd.f32 %v2840, %v2952
    %v2954 = vpop.f32.mrb[0].mxu0
    %v2955 = vadd.f32 %v2842, %v2954
    %2956 = vmatprep.mubr.bf16.mxu0 %v2444
    %2957 = vmatmul.mubr.bf16.gmra.mrb[0].mxu0 %v2443
    %v2958 = vpop.f32.mrb[0].mxu0
    %v2959 = vadd.f32 %v2846, %v2958
    %v2960 = vpop.f32.mrb[0].mxu0
    %v2961 = vadd.f32 %v2848, %v2960
    %v2962 = vpop.f32.mrb[0].mxu0
    %v2963 = vadd.f32 %v2850, %v2962
    %v2964 = vpop.f32.mrb[0].mxu0
    %v2965 = vadd.f32 %v2852, %v2964
    %2966 = vmatprep.mubr.bf16.mxu0 %v2448
    %2967 = vmatmul.mubr.bf16.gmra.mrb[0].mxu0 %v2447
    %v2968 = vpop.f32.mrb[0].mxu0
    %v2969 = vadd.f32 %v2856, %v2968
    %v2970 = vpop.f32.mrb[0].mxu0
    %v2971 = vadd.f32 %v2858, %v2970
    %v2972 = vpop.f32.mrb[0].mxu0
    %v2973 = vadd.f32 %v2860, %v2972
    %v2974 = vpop.f32.mrb[0].mxu0
    %v2975 = vadd.f32 %v2862, %v2974
    %2976 = vdwg.mxu0
    %2977 = vmatprep.subr.bf16.mxu0 %v2456
    %2978 = vmatpush1.bf16.msra.mxu0 %v2455
    %2979 = vmatprep.subr.bf16.mxu0 %v2464
    %2980 = vmatpush1.bf16.msra.mxu0 %v2463
    %2981 = vmatprep.subr.bf16.mxu0 %v2472
    %2982 = vmatpush1.bf16.msra.mxu0 %v2471
    %2983 = vmatprep.subr.bf16.mxu0 %v2480
    %2984 = vmatpush1.bf16.msra.mxu0 %v2479
    %2985 = vmatprep.subr.bf16.mxu0 %v2488
    %2986 = vmatpush1.bf16.msra.mxu0 %v2487
    %2987 = vmatprep.subr.bf16.mxu0 %v2496
    %2988 = vmatpush1.bf16.msra.mxu0 %v2495
    %2989 = vmatprep.subr.bf16.mxu0 %v2504
    %2990 = vmatpush1.bf16.msra.mxu0 %v2503
    %2991 = vmatprep.subr.bf16.mxu0 %v2512
    %2992 = vmatpush1.bf16.msra.mxu0 %v2511
    %2993 = vmatprep.subr.bf16.mxu0 %v2520
    %2994 = vmatpush1.bf16.msra.mxu0 %v2519
    %2995 = vmatprep.subr.bf16.mxu0 %v2528
    %2996 = vmatpush1.bf16.msra.mxu0 %v2527
    %2997 = vmatprep.subr.bf16.mxu0 %v2536
    %2998 = vmatpush1.bf16.msra.mxu0 %v2535
    %2999 = vmatprep.subr.bf16.mxu0 %v2544
    %3000 = vmatpush1.bf16.msra.mxu0 %v2543
    %3001 = vmatprep.subr.bf16.mxu0 %v2552
    %3002 = vmatpush1.bf16.msra.mxu0 %v2551
    %3003 = vmatprep.subr.bf16.mxu0 %v2560
    %3004 = vmatpush1.bf16.msra.mxu0 %v2559
    %3005 = vmatprep.subr.bf16.mxu0 %v2568
    %3006 = vmatpush1.bf16.msra.mxu0 %v2567
    %3007 = vmatprep.subr.bf16.mxu0 %v2576
    %3008 = vmatpush1.bf16.msra.mxu0 %v2575
    %3009 = vmatprep.mubr.bf16.mxu0 %v2418
    %3010 = vmatmul.mubr.bf16.gmra.mrb[0].mxu0 %v2417
    %v3011 = vpop.f32.mrb[0].mxu0
    %v3012 = vadd.f32 %v2722, %v3011
    %v3013 = vpop.f32.mrb[0].mxu0
    %v3014 = vadd.f32 %v2726, %v3013
    %v3015 = vpop.f32.mrb[0].mxu0
    %v3016 = vadd.f32 %v2722, %v3015
    %v3017 = vpop.f32.mrb[0].mxu0
    %v3018 = vadd.f32 %v2726, %v3017
    %3019 = vmatprep.mubr.bf16.mxu0 %v2422
    %3020 = vmatmul.mubr.bf16.gmra.mrb[0].mxu0 %v2421
    %v3021 = vpop.f32.mrb[0].mxu0
    %v3022 = vadd.f32 %v2722, %v3021
    %v3023 = vpop.f32.mrb[0].mxu0
    %v3024 = vadd.f32 %v2726, %v3023
    %v3025 = vpop.f32.mrb[0].mxu0
    %v3026 = vadd.f32 %v2722, %v3025
    %v3027 = vpop.f32.mrb[0].mxu0
    %v3028 = vadd.f32 %v2726, %v3027
    %3029 = vmatprep.mubr.bf16.mxu0 %v2426
    %3030 = vmatmul.mubr.bf16.gmra.mrb[0].mxu0 %v2425
    %v3031 = vpop.f32.mrb[0].mxu0
    %v3032 = vadd.f32 %v2722, %v3031
    %v3033 = vpop.f32.mrb[0].mxu0
    %v3034 = vadd.f32 %v2726, %v3033
    %v3035 = vpop.f32.mrb[0].mxu0
    %v3036 = vadd.f32 %v2722, %v3035
    %v3037 = vpop.f32.mrb[0].mxu0
    %v3038 = vadd.f32 %v2726, %v3037
    %3039 = vmatprep.mubr.bf16.mxu0 %v2430
    %3040 = vmatmul.mubr.bf16.gmra.mrb[0].mxu0 %v2429
    %v3041 = vpop.f32.mrb[0].mxu0
    %v3042 = vadd.f32 %v2722, %v3041
    %v3043 = vpop.f32.mrb[0].mxu0
    %v3044 = vadd.f32 %v2726, %v3043
    %v3045 = vpop.f32.mrb[0].mxu0
    %v3046 = vadd.f32 %v2722, %v3045
    %v3047 = vpop.f32.mrb[0].mxu0
    %v3048 = vadd.f32 %v2726, %v3047
    %3049 = vmatprep.mubr.bf16.mxu0 %v2434
    %3050 = vmatmul.mubr.bf16.gmra.mrb[0].mxu0 %v2433
    %v3051 = vpop.f32.mrb[0].mxu0
    %v3052 = vadd.f32 %v2722, %v3051
    %v3053 = vpop.f32.mrb[0].mxu0
    %v3054 = vadd.f32 %v2726, %v3053
    %v3055 = vpop.f32.mrb[0].mxu0
    %v3056 = vadd.f32 %v2722, %v3055
    %v3057 = vpop.f32.mrb[0].mxu0
    %v3058 = vadd.f32 %v2726, %v3057
    %3059 = vmatprep.mubr.bf16.mxu0 %v2438
    %3060 = vmatmul.mubr.bf16.gmra.mrb[0].mxu0 %v2437
    %v3061 = vpop.f32.mrb[0].mxu0
    %v3062 = vadd.f32 %v2722, %v3061
    %v3063 = vpop.f32.mrb[0].mxu0
    %v3064 = vadd.f32 %v2726, %v3063
    %v3065 = vpop.f32.mrb[0].mxu0
    %v3066 = vadd.f32 %v2722, %v3065
    %v3067 = vpop.f32.mrb[0].mxu0
    %v3068 = vadd.f32 %v2726, %v3067
    %3069 = vmatprep.mubr.bf16.mxu0 %v2442
    %3070 = vmatmul.mubr.bf16.gmra.mrb[0].mxu0 %v2441
    %v3071 = vpop.f32.mrb[0].mxu0
    %v3072 = vadd.f32 %v2722, %v3071
    %v3073 = vpop.f32.mrb[0].mxu0
    %v3074 = vadd.f32 %v2726, %v3073
    %v3075 = vpop.f32.mrb[0].mxu0
    %v3076 = vadd.f32 %v2722, %v3075
    %v3077 = vpop.f32.mrb[0].mxu0
    %v3078 = vadd.f32 %v2726, %v3077
    %3079 = vmatprep.mubr.bf16.mxu0 %v2446
    %3080 = vmatmul.mubr.bf16.gmra.mrb[0].mxu0 %v2445
    %v3081 = vpop.f32.mrb[0].mxu0
    %v3082 = vadd.f32 %v2722, %v3081
    %v3083 = vpop.f32.mrb[0].mxu0
    %v3084 = vadd.f32 %v2726, %v3083
    %v3085 = vpop.f32.mrb[0].mxu0
    %v3086 = vadd.f32 %v2722, %v3085
    %v3087 = vpop.f32.mrb[0].mxu0
    %v3088 = vadd.f32 %v2726, %v3087
    %3089 = vdwg.mxu0
    %3090 = vmatprep.subr.bf16.mxu0 %v2584
    %3091 = vmatpush1.bf16.msra.mxu0 %v2583
    %3092 = vmatprep.subr.bf16.mxu0 %v2592
    %3093 = vmatpush1.bf16.msra.mxu0 %v2591
    %3094 = vmatprep.subr.bf16.mxu0 %v2600
    %3095 = vmatpush1.bf16.msra.mxu0 %v2599
    %3096 = vmatprep.subr.bf16.mxu0 %v2608
    %3097 = vmatpush1.bf16.msra.mxu0 %v2607
    %3098 = vmatprep.subr.bf16.mxu0 %v2616
    %3099 = vmatpush1.bf16.msra.mxu0 %v2615
    %3100 = vmatprep.subr.bf16.mxu0 %v2624
    %3101 = vmatpush1.bf16.msra.mxu0 %v2623
    %3102 = vmatprep.subr.bf16.mxu0 %v2632
    %3103 = vmatpush1.bf16.msra.mxu0 %v2631
    %3104 = vmatprep.subr.bf16.mxu0 %v2640
    %3105 = vmatpush1.bf16.msra.mxu0 %v2639
    %3106 = vmatprep.subr.bf16.mxu0 %v2648
    %3107 = vmatpush1.bf16.msra.mxu0 %v2647
    %3108 = vmatprep.subr.bf16.mxu0 %v2656
    %3109 = vmatpush1.bf16.msra.mxu0 %v2655
    %3110 = vmatprep.subr.bf16.mxu0 %v2664
    %3111 = vmatpush1.bf16.msra.mxu0 %v2663
    %3112 = vmatprep.subr.bf16.mxu0 %v2672
    %3113 = vmatpush1.bf16.msra.mxu0 %v2671
    %3114 = vmatprep.subr.bf16.mxu0 %v2680
    %3115 = vmatpush1.bf16.msra.mxu0 %v2679
    %3116 = vmatprep.subr.bf16.mxu0 %v2688
    %3117 = vmatpush1.bf16.msra.mxu0 %v2687
    %3118 = vmatprep.subr.bf16.mxu0 %v2696
    %3119 = vmatpush1.bf16.msra.mxu0 %v2695
    %3120 = vmatprep.subr.bf16.mxu0 %v2704
    %3121 = vmatpush1.bf16.msra.mxu0 %v2703
    %3122 = vmatprep.mubr.bf16.mxu0 %v2420
    %3123 = vmatmul.mubr.bf16.gmra.mrb[0].mxu0 %v2419
    %v3124 = vpop.f32.mrb[0].mxu0
    %v3125 = vadd.f32 %v3012, %v3124
    %v3126 = vpop.f32.mrb[0].mxu0
    %v3127 = vadd.f32 %v3014, %v3126
    %v3128 = vpop.f32.mrb[0].mxu0
    %v3129 = vadd.f32 %v3016, %v3128
    %v3130 = vpop.f32.mrb[0].mxu0
    %v3131 = vadd.f32 %v3018, %v3130
    %3132 = vmatprep.mubr.bf16.mxu0 %v2424
    %3133 = vmatmul.mubr.bf16.gmra.mrb[0].mxu0 %v2423
    %v3134 = vpop.f32.mrb[0].mxu0
    %v3135 = vadd.f32 %v3022, %v3134
    %v3136 = vpop.f32.mrb[0].mxu0
    %v3137 = vadd.f32 %v3024, %v3136
    %v3138 = vpop.f32.mrb[0].mxu0
    %v3139 = vadd.f32 %v3026, %v3138
    %v3140 = vpop.f32.mrb[0].mxu0
    %v3141 = vadd.f32 %v3028, %v3140
    %3142 = vmatprep.mubr.bf16.mxu0 %v2428
    %3143 = vmatmul.mubr.bf16.gmra.mrb[0].mxu0 %v2427
    %v3144 = vpop.f32.mrb[0].mxu0
    %v3145 = vadd.f32 %v3032, %v3144
    %v3146 = vpop.f32.mrb[0].mxu0
    %v3147 = vadd.f32 %v3034, %v3146
    %v3148 = vpop.f32.mrb[0].mxu0
    %v3149 = vadd.f32 %v3036, %v3148
    %v3150 = vpop.f32.mrb[0].mxu0
    %v3151 = vadd.f32 %v3038, %v3150
    %3152 = vmatprep.mubr.bf16.mxu0 %v2432
    %3153 = vmatmul.mubr.bf16.gmra.mrb[0].mxu0 %v2431
    %v3154 = vpop.f32.mrb[0].mxu0
    %v3155 = vadd.f32 %v3042, %v3154
    %v3156 = vpop.f32.mrb[0].mxu0
    %v3157 = vadd.f32 %v3044, %v3156
    %v3158 = vpop.f32.mrb[0].mxu0
    %v3159 = vadd.f32 %v3046, %v3158
    %v3160 = vpop.f32.mrb[0].mxu0
    %v3161 = vadd.f32 %v3048, %v3160
    %3162 = vmatprep.mubr.bf16.mxu0 %v2436
    %3163 = vmatmul.mubr.bf16.gmra.mrb[0].mxu0 %v2435
    %v3164 = vpop.f32.mrb[0].mxu0
    %v3165 = vadd.f32 %v3052, %v3164
    %v3166 = vpop.f32.mrb[0].mxu0
    %v3167 = vadd.f32 %v3054, %v3166
    %v3168 = vpop.f32.mrb[0].mxu0
    %v3169 = vadd.f32 %v3056, %v3168
    %v3170 = vpop.f32.mrb[0].mxu0
    %v3171 = vadd.f32 %v3058, %v3170
    %3172 = vmatprep.mubr.bf16.mxu0 %v2440
    %3173 = vmatmul.mubr.bf16.gmra.mrb[0].mxu0 %v2439
    %v3174 = vpop.f32.mrb[0].mxu0
    %v3175 = vadd.f32 %v3062, %v3174
    %v3176 = vpop.f32.mrb[0].mxu0
    %v3177 = vadd.f32 %v3064, %v3176
    %v3178 = vpop.f32.mrb[0].mxu0
    %v3179 = vadd.f32 %v3066, %v3178
    %v3180 = vpop.f32.mrb[0].mxu0
    %v3181 = vadd.f32 %v3068, %v3180
    %3182 = vmatprep.mubr.bf16.mxu0 %v2444
    %3183 = vmatmul.mubr.bf16.gmra.mrb[0].mxu0 %v2443
    %v3184 = vpop.f32.mrb[0].mxu0
    %v3185 = vadd.f32 %v3072, %v3184
    %v3186 = vpop.f32.mrb[0].mxu0
    %v3187 = vadd.f32 %v3074, %v3186
    %v3188 = vpop.f32.mrb[0].mxu0
    %v3189 = vadd.f32 %v3076, %v3188
    %v3190 = vpop.f32.mrb[0].mxu0
    %v3191 = vadd.f32 %v3078, %v3190
    %3192 = vmatprep.mubr.bf16.mxu0 %v2448
    %3193 = vmatmul.mubr.bf16.gmra.mrb[0].mxu0 %v2447
    %v3194 = vpop.f32.mrb[0].mxu0
    %v3195 = vadd.f32 %v3082, %v3194
    %v3196 = vpop.f32.mrb[0].mxu0
    %v3197 = vadd.f32 %v3084, %v3196
    %v3198 = vpop.f32.mrb[0].mxu0
    %v3199 = vadd.f32 %v3086, %v3198
    %v3200 = vpop.f32.mrb[0].mxu0
    %v3201 = vadd.f32 %v3088, %v3200
    %3202 = vdwg.mxu0
    %3203 = vmatprep.subr.bf16.mxu0 %v2458
    %3204 = vmatpush1.bf16.msra.mxu0 %v2457
    %3205 = vmatprep.subr.bf16.mxu0 %v2466
    %3206 = vmatpush1.bf16.msra.mxu0 %v2465
    %3207 = vmatprep.subr.bf16.mxu0 %v2474
    %3208 = vmatpush1.bf16.msra.mxu0 %v2473
    %3209 = vmatprep.subr.bf16.mxu0 %v2482
    %3210 = vmatpush1.bf16.msra.mxu0 %v2481
    %3211 = vmatprep.subr.bf16.mxu0 %v2490
    %3212 = vmatpush1.bf16.msra.mxu0 %v2489
    %3213 = vmatprep.subr.bf16.mxu0 %v2498
    %3214 = vmatpush1.bf16.msra.mxu0 %v2497
    %3215 = vmatprep.subr.bf16.mxu0 %v2506
    %3216 = vmatpush1.bf16.msra.mxu0 %v2505
    %3217 = vmatprep.subr.bf16.mxu0 %v2514
    %3218 = vmatpush1.bf16.msra.mxu0 %v2513
    %3219 = vmatprep.subr.bf16.mxu0 %v2522
    %3220 = vmatpush1.bf16.msra.mxu0 %v2521
    %3221 = vmatprep.subr.bf16.mxu0 %v2530
    %3222 = vmatpush1.bf16.msra.mxu0 %v2529
    %3223 = vmatprep.subr.bf16.mxu0 %v2538
    %3224 = vmatpush1.bf16.msra.mxu0 %v2537
    %3225 = vmatprep.subr.bf16.mxu0 %v2546
    %3226 = vmatpush1.bf16.msra.mxu0 %v2545
    %3227 = vmatprep.subr.bf16.mxu0 %v2554
    %3228 = vmatpush1.bf16.msra.mxu0 %v2553
    %3229 = vmatprep.subr.bf16.mxu0 %v2562
    %3230 = vmatpush1.bf16.msra.mxu0 %v2561
    %3231 = vmatprep.subr.bf16.mxu0 %v2570
    %3232 = vmatpush1.bf16.msra.mxu0 %v2569
    %3233 = vmatprep.subr.bf16.mxu0 %v2578
    %3234 = vmatpush1.bf16.msra.mxu0 %v2577
    %3235 = vmatprep.mubr.bf16.mxu0 %v2418
    %3236 = vmatmul.mubr.bf16.gmra.mrb[0].mxu0 %v2417
    %v3237 = vpop.f32.mrb[0].mxu0
    %v3238 = vadd.f32 %v2730, %v3237
    %v3239 = vpop.f32.mrb[0].mxu0
    %v3240 = vadd.f32 %v2734, %v3239
    %v3241 = vpop.f32.mrb[0].mxu0
    %v3242 = vadd.f32 %v2730, %v3241
    %v3243 = vpop.f32.mrb[0].mxu0
    %v3244 = vadd.f32 %v2734, %v3243
    %3245 = vmatprep.mubr.bf16.mxu0 %v2422
    %3246 = vmatmul.mubr.bf16.gmra.mrb[0].mxu0 %v2421
    %v3247 = vpop.f32.mrb[0].mxu0
    %v3248 = vadd.f32 %v2730, %v3247
    %v3249 = vpop.f32.mrb[0].mxu0
    %v3250 = vadd.f32 %v2734, %v3249
    %v3251 = vpop.f32.mrb[0].mxu0
    %v3252 = vadd.f32 %v2730, %v3251
    %v3253 = vpop.f32.mrb[0].mxu0
    %v3254 = vadd.f32 %v2734, %v3253
    %3255 = vmatprep.mubr.bf16.mxu0 %v2426
    %3256 = vmatmul.mubr.bf16.gmra.mrb[0].mxu0 %v2425
    %v3257 = vpop.f32.mrb[0].mxu0
    %v3258 = vadd.f32 %v2730, %v3257
    %v3259 = vpop.f32.mrb[0].mxu0
    %v3260 = vadd.f32 %v2734, %v3259
    %v3261 = vpop.f32.mrb[0].mxu0
    %v3262 = vadd.f32 %v2730, %v3261
    %v3263 = vpop.f32.mrb[0].mxu0
    %v3264 = vadd.f32 %v2734, %v3263
    %3265 = vmatprep.mubr.bf16.mxu0 %v2430
    %3266 = vmatmul.mubr.bf16.gmra.mrb[0].mxu0 %v2429
    %v3267 = vpop.f32.mrb[0].mxu0
    %v3268 = vadd.f32 %v2730, %v3267
    %v3269 = vpop.f32.mrb[0].mxu0
    %v3270 = vadd.f32 %v2734, %v3269
    %v3271 = vpop.f32.mrb[0].mxu0
    %v3272 = vadd.f32 %v2730, %v3271
    %v3273 = vpop.f32.mrb[0].mxu0
    %v3274 = vadd.f32 %v2734, %v3273
    %3275 = vmatprep.mubr.bf16.mxu0 %v2434
    %3276 = vmatmul.mubr.bf16.gmra.mrb[0].mxu0 %v2433
    %v3277 = vpop.f32.mrb[0].mxu0
    %v3278 = vadd.f32 %v2730, %v3277
    %v3279 = vpop.f32.mrb[0].mxu0
    %v3280 = vadd.f32 %v2734, %v3279
    %v3281 = vpop.f32.mrb[0].mxu0
    %v3282 = vadd.f32 %v2730, %v3281
    %v3283 = vpop.f32.mrb[0].mxu0
    %v3284 = vadd.f32 %v2734, %v3283
    %3285 = vmatprep.mubr.bf16.mxu0 %v2438
    %3286 = vmatmul.mubr.bf16.gmra.mrb[0].mxu0 %v2437
    %v3287 = vpop.f32.mrb[0].mxu0
    %v3288 = vadd.f32 %v2730, %v3287
    %v3289 = vpop.f32.mrb[0].mxu0
    %v3290 = vadd.f32 %v2734, %v3289
    %v3291 = vpop.f32.mrb[0].mxu0
    %v3292 = vadd.f32 %v2730, %v3291
    %v3293 = vpop.f32.mrb[0].mxu0
    %v3294 = vadd.f32 %v2734, %v3293
    %3295 = vmatprep.mubr.bf16.mxu0 %v2442
    %3296 = vmatmul.mubr.bf16.gmra.mrb[0].mxu0 %v2441
    %v3297 = vpop.f32.mrb[0].mxu0
    %v3298 = vadd.f32 %v2730, %v3297
    %v3299 = vpop.f32.mrb[0].mxu0
    %v3300 = vadd.f32 %v2734, %v3299
    %v3301 = vpop.f32.mrb[0].mxu0
    %v3302 = vadd.f32 %v2730, %v3301
    %v3303 = vpop.f32.mrb[0].mxu0
    %v3304 = vadd.f32 %v2734, %v3303
    %3305 = vmatprep.mubr.bf16.mxu0 %v2446
    %3306 = vmatmul.mubr.bf16.gmra.mrb[0].mxu0 %v2445
    %v3307 = vpop.f32.mrb[0].mxu0
    %v3308 = vadd.f32 %v2730, %v3307
    %v3309 = vpop.f32.mrb[0].mxu0
    %v3310 = vadd.f32 %v2734, %v3309
    %v3311 = vpop.f32.mrb[0].mxu0
    %v3312 = vadd.f32 %v2730, %v3311
    %v3313 = vpop.f32.mrb[0].mxu0
    %v3314 = vadd.f32 %v2734, %v3313
    %3315 = vdwg.mxu0
    %3316 = vmatprep.subr.bf16.mxu0 %v2586
    %3317 = vmatpush1.bf16.msra.mxu0 %v2585
    %3318 = vmatprep.subr.bf16.mxu0 %v2594
    %3319 = vmatpush1.bf16.msra.mxu0 %v2593
    %3320 = vmatprep.subr.bf16.mxu0 %v2602
    %3321 = vmatpush1.bf16.msra.mxu0 %v2601
    %3322 = vmatprep.subr.bf16.mxu0 %v2610
    %3323 = vmatpush1.bf16.msra.mxu0 %v2609
    %3324 = vmatprep.subr.bf16.mxu0 %v2618
    %3325 = vmatpush1.bf16.msra.mxu0 %v2617
    %3326 = vmatprep.subr.bf16.mxu0 %v2626
    %3327 = vmatpush1.bf16.msra.mxu0 %v2625
    %3328 = vmatprep.subr.bf16.mxu0 %v2634
    %3329 = vmatpush1.bf16.msra.mxu0 %v2633
    %3330 = vmatprep.subr.bf16.mxu0 %v2642
    %3331 = vmatpush1.bf16.msra.mxu0 %v2641
    %3332 = vmatprep.subr.bf16.mxu0 %v2650
    %3333 = vmatpush1.bf16.msra.mxu0 %v2649
    %3334 = vmatprep.subr.bf16.mxu0 %v2658
    %3335 = vmatpush1.bf16.msra.mxu0 %v2657
    %3336 = vmatprep.subr.bf16.mxu0 %v2666
    %3337 = vmatpush1.bf16.msra.mxu0 %v2665
    %3338 = vmatprep.subr.bf16.mxu0 %v2674
    %3339 = vmatpush1.bf16.msra.mxu0 %v2673
    %3340 = vmatprep.subr.bf16.mxu0 %v2682
    %3341 = vmatpush1.bf16.msra.mxu0 %v2681
    %3342 = vmatprep.subr.bf16.mxu0 %v2690
    %3343 = vmatpush1.bf16.msra.mxu0 %v2689
    %3344 = vmatprep.subr.bf16.mxu0 %v2698
    %3345 = vmatpush1.bf16.msra.mxu0 %v2697
    %3346 = vmatprep.subr.bf16.mxu0 %v2706
    %3347 = vmatpush1.bf16.msra.mxu0 %v2705
    %3348 = vmatprep.mubr.bf16.mxu0 %v2420
    %3349 = vmatmul.mubr.bf16.gmra.mrb[0].mxu0 %v2419
    %v3350 = vpop.f32.mrb[0].mxu0
    %v3351 = vadd.f32 %v3238, %v3350
    %v3352 = vpop.f32.mrb[0].mxu0
    %v3353 = vadd.f32 %v3240, %v3352
    %v3354 = vpop.f32.mrb[0].mxu0
    %v3355 = vadd.f32 %v3242, %v3354
    %v3356 = vpop.f32.mrb[0].mxu0
    %v3357 = vadd.f32 %v3244, %v3356
    %3358 = vmatprep.mubr.bf16.mxu0 %v2424
    %3359 = vmatmul.mubr.bf16.gmra.mrb[0].mxu0 %v2423
    %v3360 = vpop.f32.mrb[0].mxu0
    %v3361 = vadd.f32 %v3248, %v3360
    %v3362 = vpop.f32.mrb[0].mxu0
    %v3363 = vadd.f32 %v3250, %v3362
    %v3364 = vpop.f32.mrb[0].mxu0
    %v3365 = vadd.f32 %v3252, %v3364
    %v3366 = vpop.f32.mrb[0].mxu0
    %v3367 = vadd.f32 %v3254, %v3366
    %3368 = vmatprep.mubr.bf16.mxu0 %v2428
    %3369 = vmatmul.mubr.bf16.gmra.mrb[0].mxu0 %v2427
    %v3370 = vpop.f32.mrb[0].mxu0
    %v3371 = vadd.f32 %v3258, %v3370
    %v3372 = vpop.f32.mrb[0].mxu0
    %v3373 = vadd.f32 %v3260, %v3372
    %v3374 = vpop.f32.mrb[0].mxu0
    %v3375 = vadd.f32 %v3262, %v3374
    %v3376 = vpop.f32.mrb[0].mxu0
    %v3377 = vadd.f32 %v3264, %v3376
    %3378 = vmatprep.mubr.bf16.mxu0 %v2432
    %3379 = vmatmul.mubr.bf16.gmra.mrb[0].mxu0 %v2431
    %v3380 = vpop.f32.mrb[0].mxu0
    %v3381 = vadd.f32 %v3268, %v3380
    %v3382 = vpop.f32.mrb[0].mxu0
    %v3383 = vadd.f32 %v3270, %v3382
    %v3384 = vpop.f32.mrb[0].mxu0
    %v3385 = vadd.f32 %v3272, %v3384
    %v3386 = vpop.f32.mrb[0].mxu0
    %v3387 = vadd.f32 %v3274, %v3386
    %3388 = vmatprep.mubr.bf16.mxu0 %v2436
    %3389 = vmatmul.mubr.bf16.gmra.mrb[0].mxu0 %v2435
    %v3390 = vpop.f32.mrb[0].mxu0
    %v3391 = vadd.f32 %v3278, %v3390
    %v3392 = vpop.f32.mrb[0].mxu0
    %v3393 = vadd.f32 %v3280, %v3392
    %v3394 = vpop.f32.mrb[0].mxu0
    %v3395 = vadd.f32 %v3282, %v3394
    %v3396 = vpop.f32.mrb[0].mxu0
    %v3397 = vadd.f32 %v3284, %v3396
    %3398 = vmatprep.mubr.bf16.mxu0 %v2440
    %3399 = vmatmul.mubr.bf16.gmra.mrb[0].mxu0 %v2439
    %v3400 = vpop.f32.mrb[0].mxu0
    %v3401 = vadd.f32 %v3288, %v3400
    %v3402 = vpop.f32.mrb[0].mxu0
    %v3403 = vadd.f32 %v3290, %v3402
    %v3404 = vpop.f32.mrb[0].mxu0
    %v3405 = vadd.f32 %v3292, %v3404
    %v3406 = vpop.f32.mrb[0].mxu0
    %v3407 = vadd.f32 %v3294, %v3406
    %3408 = vmatprep.mubr.bf16.mxu0 %v2444
    %3409 = vmatmul.mubr.bf16.gmra.mrb[0].mxu0 %v2443
    %v3410 = vpop.f32.mrb[0].mxu0
    %v3411 = vadd.f32 %v3298, %v3410
    %v3412 = vpop.f32.mrb[0].mxu0
    %v3413 = vadd.f32 %v3300, %v3412
    %v3414 = vpop.f32.mrb[0].mxu0
    %v3415 = vadd.f32 %v3302, %v3414
    %v3416 = vpop.f32.mrb[0].mxu0
    %v3417 = vadd.f32 %v3304, %v3416
    %3418 = vmatprep.mubr.bf16.mxu0 %v2448
    %3419 = vmatmul.mubr.bf16.gmra.mrb[0].mxu0 %v2447
    %v3420 = vpop.f32.mrb[0].mxu0
    %v3421 = vadd.f32 %v3308, %v3420
    %v3422 = vpop.f32.mrb[0].mxu0
    %v3423 = vadd.f32 %v3310, %v3422
    %v3424 = vpop.f32.mrb[0].mxu0
    %v3425 = vadd.f32 %v3312, %v3424
    %v3426 = vpop.f32.mrb[0].mxu0
    %v3427 = vadd.f32 %v3314, %v3426
    %3428 = vdwg.mxu0
    %3429 = vmatprep.subr.bf16.mxu0 %v2460
    %3430 = vmatpush1.bf16.msra.mxu0 %v2459
    %3431 = vmatprep.subr.bf16.mxu0 %v2468
    %3432 = vmatpush1.bf16.msra.mxu0 %v2467
    %3433 = vmatprep.subr.bf16.mxu0 %v2476
    %3434 = vmatpush1.bf16.msra.mxu0 %v2475
    %3435 = vmatprep.subr.bf16.mxu0 %v2484
    %3436 = vmatpush1.bf16.msra.mxu0 %v2483
    %3437 = vmatprep.subr.bf16.mxu0 %v2492
    %3438 = vmatpush1.bf16.msra.mxu0 %v2491
    %3439 = vmatprep.subr.bf16.mxu0 %v2500
    %3440 = vmatpush1.bf16.msra.mxu0 %v2499
    %3441 = vmatprep.subr.bf16.mxu0 %v2508
    %3442 = vmatpush1.bf16.msra.mxu0 %v2507
    %3443 = vmatprep.subr.bf16.mxu0 %v2516
    %3444 = vmatpush1.bf16.msra.mxu0 %v2515
    %3445 = vmatprep.subr.bf16.mxu0 %v2524
    %3446 = vmatpush1.bf16.msra.mxu0 %v2523
    %3447 = vmatprep.subr.bf16.mxu0 %v2532
    %3448 = vmatpush1.bf16.msra.mxu0 %v2531
    %3449 = vmatprep.subr.bf16.mxu0 %v2540
    %3450 = vmatpush1.bf16.msra.mxu0 %v2539
    %3451 = vmatprep.subr.bf16.mxu0 %v2548
    %3452 = vmatpush1.bf16.msra.mxu0 %v2547
    %3453 = vmatprep.subr.bf16.mxu0 %v2556
    %3454 = vmatpush1.bf16.msra.mxu0 %v2555
    %3455 = vmatprep.subr.bf16.mxu0 %v2564
    %3456 = vmatpush1.bf16.msra.mxu0 %v2563
    %3457 = vmatprep.subr.bf16.mxu0 %v2572
    %3458 = vmatpush1.bf16.msra.mxu0 %v2571
    %3459 = vmatprep.subr.bf16.mxu0 %v2580
    %3460 = vmatpush1.bf16.msra.mxu0 %v2579
    %3461 = vmatprep.mubr.bf16.mxu0 %v2418
    %3462 = vmatmul.mubr.bf16.gmra.mrb[0].mxu0 %v2417
    %v3463 = vpop.f32.mrb[0].mxu0
    %v3464 = vadd.f32 %v2738, %v3463
    %v3465 = vpop.f32.mrb[0].mxu0
    %v3466 = vadd.f32 %v2742, %v3465
    %v3467 = vpop.f32.mrb[0].mxu0
    %v3468 = vadd.f32 %v2738, %v3467
    %v3469 = vpop.f32.mrb[0].mxu0
    %v3470 = vadd.f32 %v2742, %v3469
    %3471 = vmatprep.mubr.bf16.mxu0 %v2422
    %3472 = vmatmul.mubr.bf16.gmra.mrb[0].mxu0 %v2421
    %v3473 = vpop.f32.mrb[0].mxu0
    %v3474 = vadd.f32 %v2738, %v3473
    %v3475 = vpop.f32.mrb[0].mxu0
    %v3476 = vadd.f32 %v2742, %v3475
    %v3477 = vpop.f32.mrb[0].mxu0
    %v3478 = vadd.f32 %v2738, %v3477
    %v3479 = vpop.f32.mrb[0].mxu0
    %v3480 = vadd.f32 %v2742, %v3479
    %3481 = vmatprep.mubr.bf16.mxu0 %v2426
    %3482 = vmatmul.mubr.bf16.gmra.mrb[0].mxu0 %v2425
    %v3483 = vpop.f32.mrb[0].mxu0
    %v3484 = vadd.f32 %v2738, %v3483
    %v3485 = vpop.f32.mrb[0].mxu0
    %v3486 = vadd.f32 %v2742, %v3485
    %v3487 = vpop.f32.mrb[0].mxu0
    %v3488 = vadd.f32 %v2738, %v3487
    %v3489 = vpop.f32.mrb[0].mxu0
    %v3490 = vadd.f32 %v2742, %v3489
    %3491 = vmatprep.mubr.bf16.mxu0 %v2430
    %3492 = vmatmul.mubr.bf16.gmra.mrb[0].mxu0 %v2429
    %v3493 = vpop.f32.mrb[0].mxu0
    %v3494 = vadd.f32 %v2738, %v3493
    %v3495 = vpop.f32.mrb[0].mxu0
    %v3496 = vadd.f32 %v2742, %v3495
    %v3497 = vpop.f32.mrb[0].mxu0
    %v3498 = vadd.f32 %v2738, %v3497
    %v3499 = vpop.f32.mrb[0].mxu0
    %v3500 = vadd.f32 %v2742, %v3499
    %3501 = vmatprep.mubr.bf16.mxu0 %v2434
    %3502 = vmatmul.mubr.bf16.gmra.mrb[0].mxu0 %v2433
    %v3503 = vpop.f32.mrb[0].mxu0
    %v3504 = vadd.f32 %v2738, %v3503
    %v3505 = vpop.f32.mrb[0].mxu0
    %v3506 = vadd.f32 %v2742, %v3505
    %v3507 = vpop.f32.mrb[0].mxu0
    %v3508 = vadd.f32 %v2738, %v3507
    %v3509 = vpop.f32.mrb[0].mxu0
    %v3510 = vadd.f32 %v2742, %v3509
    %3511 = vmatprep.mubr.bf16.mxu0 %v2438
    %3512 = vmatmul.mubr.bf16.gmra.mrb[0].mxu0 %v2437
    %v3513 = vpop.f32.mrb[0].mxu0
    %v3514 = vadd.f32 %v2738, %v3513
    %v3515 = vpop.f32.mrb[0].mxu0
    %v3516 = vadd.f32 %v2742, %v3515
    %v3517 = vpop.f32.mrb[0].mxu0
    %v3518 = vadd.f32 %v2738, %v3517
    %v3519 = vpop.f32.mrb[0].mxu0
    %v3520 = vadd.f32 %v2742, %v3519
    %3521 = vmatprep.mubr.bf16.mxu0 %v2442
    %3522 = vmatmul.mubr.bf16.gmra.mrb[0].mxu0 %v2441
    %v3523 = vpop.f32.mrb[0].mxu0
    %v3524 = vadd.f32 %v2738, %v3523
    %v3525 = vpop.f32.mrb[0].mxu0
    %v3526 = vadd.f32 %v2742, %v3525
    %v3527 = vpop.f32.mrb[0].mxu0
    %v3528 = vadd.f32 %v2738, %v3527
    %v3529 = vpop.f32.mrb[0].mxu0
    %v3530 = vadd.f32 %v2742, %v3529
    %3531 = vmatprep.mubr.bf16.mxu0 %v2446
    %3532 = vmatmul.mubr.bf16.gmra.mrb[0].mxu0 %v2445
    %v3533 = vpop.f32.mrb[0].mxu0
    %v3534 = vadd.f32 %v2738, %v3533
    %v3535 = vpop.f32.mrb[0].mxu0
    %v3536 = vadd.f32 %v2742, %v3535
    %v3537 = vpop.f32.mrb[0].mxu0
    %v3538 = vadd.f32 %v2738, %v3537
    %v3539 = vpop.f32.mrb[0].mxu0
    %v3540 = vadd.f32 %v2742, %v3539
    %3541 = vdwg.mxu0
    %3542 = vmatprep.subr.bf16.mxu0 %v2588
    %3543 = vmatpush1.bf16.msra.mxu0 %v2587
    %3544 = vmatprep.subr.bf16.mxu0 %v2596
    %3545 = vmatpush1.bf16.msra.mxu0 %v2595
    %3546 = vmatprep.subr.bf16.mxu0 %v2604
    %3547 = vmatpush1.bf16.msra.mxu0 %v2603
    %3548 = vmatprep.subr.bf16.mxu0 %v2612
    %3549 = vmatpush1.bf16.msra.mxu0 %v2611
    %3550 = vmatprep.subr.bf16.mxu0 %v2620
    %3551 = vmatpush1.bf16.msra.mxu0 %v2619
    %3552 = vmatprep.subr.bf16.mxu0 %v2628
    %3553 = vmatpush1.bf16.msra.mxu0 %v2627
    %3554 = vmatprep.subr.bf16.mxu0 %v2636
    %3555 = vmatpush1.bf16.msra.mxu0 %v2635
    %3556 = vmatprep.subr.bf16.mxu0 %v2644
    %3557 = vmatpush1.bf16.msra.mxu0 %v2643
    %3558 = vmatprep.subr.bf16.mxu0 %v2652
    %3559 = vmatpush1.bf16.msra.mxu0 %v2651
    %3560 = vmatprep.subr.bf16.mxu0 %v2660
    %3561 = vmatpush1.bf16.msra.mxu0 %v2659
    %3562 = vmatprep.subr.bf16.mxu0 %v2668
    %3563 = vmatpush1.bf16.msra.mxu0 %v2667
    %3564 = vmatprep.subr.bf16.mxu0 %v2676
    %3565 = vmatpush1.bf16.msra.mxu0 %v2675
    %3566 = vmatprep.subr.bf16.mxu0 %v2684
    %3567 = vmatpush1.bf16.msra.mxu0 %v2683
    %3568 = vmatprep.subr.bf16.mxu0 %v2692
    %3569 = vmatpush1.bf16.msra.mxu0 %v2691
    %3570 = vmatprep.subr.bf16.mxu0 %v2700
    %3571 = vmatpush1.bf16.msra.mxu0 %v2699
    %3572 = vmatprep.subr.bf16.mxu0 %v2708
    %3573 = vmatpush1.bf16.msra.mxu0 %v2707
    %3574 = vmatprep.mubr.bf16.mxu0 %v2420
    %3575 = vmatmul.mubr.bf16.gmra.mrb[0].mxu0 %v2419
    %v3576 = vpop.f32.mrb[0].mxu0
    %v3577 = vadd.f32 %v3464, %v3576
    %v3578 = vpop.f32.mrb[0].mxu0
    %v3579 = vadd.f32 %v3466, %v3578
    %v3580 = vpop.f32.mrb[0].mxu0
    %v3581 = vadd.f32 %v3468, %v3580
    %v3582 = vpop.f32.mrb[0].mxu0
    %v3583 = vadd.f32 %v3470, %v3582
    %3584 = vmatprep.mubr.bf16.mxu0 %v2424
    %3585 = vmatmul.mubr.bf16.gmra.mrb[0].mxu0 %v2423
    %v3586 = vpop.f32.mrb[0].mxu0
    %v3587 = vadd.f32 %v3474, %v3586
    %v3588 = vpop.f32.mrb[0].mxu0
    %v3589 = vadd.f32 %v3476, %v3588
    %v3590 = vpop.f32.mrb[0].mxu0
    %v3591 = vadd.f32 %v3478, %v3590
    %v3592 = vpop.f32.mrb[0].mxu0
    %v3593 = vadd.f32 %v3480, %v3592
    %3594 = vmatprep.mubr.bf16.mxu0 %v2428
    %3595 = vmatmul.mubr.bf16.gmra.mrb[0].mxu0 %v2427
    %v3596 = vpop.f32.mrb[0].mxu0
    %v3597 = vadd.f32 %v3484, %v3596
    %v3598 = vpop.f32.mrb[0].mxu0
    %v3599 = vadd.f32 %v3486, %v3598
    %v3600 = vpop.f32.mrb[0].mxu0
    %v3601 = vadd.f32 %v3488, %v3600
    %v3602 = vpop.f32.mrb[0].mxu0
    %v3603 = vadd.f32 %v3490, %v3602
    %3604 = vmatprep.mubr.bf16.mxu0 %v2432
    %3605 = vmatmul.mubr.bf16.gmra.mrb[0].mxu0 %v2431
    %v3606 = vpop.f32.mrb[0].mxu0
    %v3607 = vadd.f32 %v3494, %v3606
    %v3608 = vpop.f32.mrb[0].mxu0
    %v3609 = vadd.f32 %v3496, %v3608
    %v3610 = vpop.f32.mrb[0].mxu0
    %v3611 = vadd.f32 %v3498, %v3610
    %v3612 = vpop.f32.mrb[0].mxu0
    %v3613 = vadd.f32 %v3500, %v3612
    %3614 = vmatprep.mubr.bf16.mxu0 %v2436
    %3615 = vmatmul.mubr.bf16.gmra.mrb[0].mxu0 %v2435
    %v3616 = vpop.f32.mrb[0].mxu0
    %v3617 = vadd.f32 %v3504, %v3616
    %v3618 = vpop.f32.mrb[0].mxu0
    %v3619 = vadd.f32 %v3506, %v3618
    %v3620 = vpop.f32.mrb[0].mxu0
    %v3621 = vadd.f32 %v3508, %v3620
    %v3622 = vpop.f32.mrb[0].mxu0
    %v3623 = vadd.f32 %v3510, %v3622
    %3624 = vmatprep.mubr.bf16.mxu0 %v2440
    %3625 = vmatmul.mubr.bf16.gmra.mrb[0].mxu0 %v2439
    %v3626 = vpop.f32.mrb[0].mxu0
    %v3627 = vadd.f32 %v3514, %v3626
    %v3628 = vpop.f32.mrb[0].mxu0
    %v3629 = vadd.f32 %v3516, %v3628
    %v3630 = vpop.f32.mrb[0].mxu0
    %v3631 = vadd.f32 %v3518, %v3630
    %v3632 = vpop.f32.mrb[0].mxu0
    %v3633 = vadd.f32 %v3520, %v3632
    %3634 = vmatprep.mubr.bf16.mxu0 %v2444
    %3635 = vmatmul.mubr.bf16.gmra.mrb[0].mxu0 %v2443
    %v3636 = vpop.f32.mrb[0].mxu0
    %v3637 = vadd.f32 %v3524, %v3636
    %v3638 = vpop.f32.mrb[0].mxu0
    %v3639 = vadd.f32 %v3526, %v3638
    %v3640 = vpop.f32.mrb[0].mxu0
    %v3641 = vadd.f32 %v3528, %v3640
    %v3642 = vpop.f32.mrb[0].mxu0
    %v3643 = vadd.f32 %v3530, %v3642
    %3644 = vmatprep.mubr.bf16.mxu0 %v2448
    %3645 = vmatmul.mubr.bf16.gmra.mrb[0].mxu0 %v2447
    %v3646 = vpop.f32.mrb[0].mxu0
    %v3647 = vadd.f32 %v3534, %v3646
    %v3648 = vpop.f32.mrb[0].mxu0
    %v3649 = vadd.f32 %v3536, %v3648
    %v3650 = vpop.f32.mrb[0].mxu0
    %v3651 = vadd.f32 %v3538, %v3650
    %v3652 = vpop.f32.mrb[0].mxu0
    %v3653 = vadd.f32 %v3540, %v3652
    %3654 = vdwg.mxu0
    %v3655 = vmax.f32 %v2899, 0.0
    %v3656 = vmax.f32 %v2901, 0.0
    %v3657 = vmax.f32 %v3125, 0.0
    %v3658 = vmax.f32 %v3127, 0.0
    %v3659 = vmax.f32 %v3351, 0.0
    %v3660 = vmax.f32 %v3353, 0.0
    %v3661 = vmax.f32 %v3577, 0.0
    %v3662 = vmax.f32 %v3579, 0.0
    %v3663 = vmax.f32 %v2903, 0.0
    %v3664 = vmax.f32 %v2905, 0.0
    %v3665 = vmax.f32 %v3129, 0.0
    %v3666 = vmax.f32 %v3131, 0.0
    %v3667 = vmax.f32 %v3355, 0.0
    %v3668 = vmax.f32 %v3357, 0.0
    %v3669 = vmax.f32 %v3581, 0.0
    %v3670 = vmax.f32 %v3583, 0.0
    %v3671 = vmax.f32 %v2909, 0.0
    %v3672 = vmax.f32 %v2911, 0.0
    %v3673 = vmax.f32 %v3135, 0.0
    %v3674 = vmax.f32 %v3137, 0.0
    %v3675 = vmax.f32 %v3361, 0.0
    %v3676 = vmax.f32 %v3363, 0.0
    %v3677 = vmax.f32 %v3587, 0.0
    %v3678 = vmax.f32 %v3589, 0.0
    %v3679 = vmax.f32 %v2913, 0.0
    %v3680 = vmax.f32 %v2915, 0.0
    %v3681 = vmax.f32 %v3139, 0.0
    %v3682 = vmax.f32 %v3141, 0.0
    %v3683 = vmax.f32 %v3365, 0.0
    %v3684 = vmax.f32 %v3367, 0.0
    %v3685 = vmax.f32 %v3591, 0.0
    %v3686 = vmax.f32 %v3593, 0.0
    %v3687 = vmax.f32 %v2919, 0.0
    %v3688 = vmax.f32 %v2921, 0.0
    %v3689 = vmax.f32 %v3145, 0.0
    %v3690 = vmax.f32 %v3147, 0.0
    %v3691 = vmax.f32 %v3371, 0.0
    %v3692 = vmax.f32 %v3373, 0.0
    %v3693 = vmax.f32 %v3597, 0.0
    %v3694 = vmax.f32 %v3599, 0.0
    %v3695 = vmax.f32 %v2923, 0.0
    %v3696 = vmax.f32 %v2925, 0.0
    %v3697 = vmax.f32 %v3149, 0.0
    %v3698 = vmax.f32 %v3151, 0.0
    %v3699 = vmax.f32 %v3375, 0.0
    %v3700 = vmax.f32 %v3377, 0.0
    %v3701 = vmax.f32 %v3601, 0.0
    %v3702 = vmax.f32 %v3603, 0.0
    %v3703 = vmax.f32 %v2929, 0.0
    %v3704 = vmax.f32 %v2931, 0.0
    %v3705 = vmax.f32 %v3155, 0.0
    %v3706 = vmax.f32 %v3157, 0.0
    %v3707 = vmax.f32 %v3381, 0.0
    %v3708 = vmax.f32 %v3383, 0.0
    %v3709 = vmax.f32 %v3607, 0.0
    %v3710 = vmax.f32 %v3609, 0.0
    %v3711 = vmax.f32 %v2933, 0.0
    %v3712 = vmax.f32 %v2935, 0.0
    %v3713 = vmax.f32 %v3159, 0.0
    %v3714 = vmax.f32 %v3161, 0.0
    %v3715 = vmax.f32 %v3385, 0.0
    %v3716 = vmax.f32 %v3387, 0.0
    %v3717 = vmax.f32 %v3611, 0.0
    %v3718 = vmax.f32 %v3613, 0.0
    %v3719 = vmax.f32 %v2939, 0.0
    %v3720 = vmax.f32 %v2941, 0.0
    %v3721 = vmax.f32 %v3165, 0.0
    %v3722 = vmax.f32 %v3167, 0.0
    %v3723 = vmax.f32 %v3391, 0.0
    %v3724 = vmax.f32 %v3393, 0.0
    %v3725 = vmax.f32 %v3617, 0.0
    %v3726 = vmax.f32 %v3619, 0.0
    %v3727 = vmax.f32 %v2943, 0.0
    %v3728 = vmax.f32 %v2945, 0.0
    %v3729 = vmax.f32 %v3169, 0.0
    %v3730 = vmax.f32 %v3171, 0.0
    %v3731 = vmax.f32 %v3395, 0.0
    %v3732 = vmax.f32 %v3397, 0.0
    %v3733 = vmax.f32 %v3621, 0.0
    %v3734 = vmax.f32 %v3623, 0.0
    %v3735 = vmax.f32 %v2949, 0.0
    %v3736 = vmax.f32 %v2951, 0.0
    %v3737 = vmax.f32 %v3175, 0.0
    %v3738 = vmax.f32 %v3177, 0.0
    %v3739 = vmax.f32 %v3401, 0.0
    %v3740 = vmax.f32 %v3403, 0.0
    %v3741 = vmax.f32 %v3627, 0.0
    %v3742 = vmax.f32 %v3629, 0.0
    %v3743 = vmax.f32 %v2953, 0.0
    %v3744 = vmax.f32 %v2955, 0.0
    %v3745 = vmax.f32 %v3179, 0.0
    %v3746 = vmax.f32 %v3181, 0.0
    %v3747 = vmax.f32 %v3405, 0.0
    %v3748 = vmax.f32 %v3407, 0.0
    %v3749 = vmax.f32 %v3631, 0.0
    %v3750 = vmax.f32 %v3633, 0.0
    %v3751 = vmax.f32 %v2959, 0.0
    %v3752 = vmax.f32 %v2961, 0.0
    %v3753 = vmax.f32 %v3185, 0.0
    %v3754 = vmax.f32 %v3187, 0.0
    %v3755 = vmax.f32 %v3411, 0.0
    %v3756 = vmax.f32 %v3413, 0.0
    %v3757 = vmax.f32 %v3637, 0.0
    %v3758 = vmax.f32 %v3639, 0.0
    %v3759 = vmax.f32 %v2963, 0.0
    %v3760 = vmax.f32 %v2965, 0.0
    %v3761 = vmax.f32 %v3189, 0.0
    %v3762 = vmax.f32 %v3191, 0.0
    %v3763 = vmax.f32 %v3415, 0.0
    %v3764 = vmax.f32 %v3417, 0.0
    %v3765 = vmax.f32 %v3641, 0.0
    %v3766 = vmax.f32 %v3643, 0.0
    %v3767 = vmax.f32 %v2969, 0.0
    %v3768 = vmax.f32 %v2971, 0.0
    %v3769 = vmax.f32 %v3195, 0.0
    %v3770 = vmax.f32 %v3197, 0.0
    %v3771 = vmax.f32 %v3421, 0.0
    %v3772 = vmax.f32 %v3423, 0.0
    %v3773 = vmax.f32 %v3647, 0.0
    %v3774 = vmax.f32 %v3649, 0.0
    %v3775 = vmax.f32 %v2973, 0.0
    %v3776 = vmax.f32 %v2975, 0.0
    %v3777 = vmax.f32 %v3199, 0.0
    %v3778 = vmax.f32 %v3201, 0.0
    %v3779 = vmax.f32 %v3425, 0.0
    %v3780 = vmax.f32 %v3427, 0.0
    %v3781 = vmax.f32 %v3651, 0.0
    %v3782 = vmax.f32 %v3653, 0.0
    %v3783 = vpack.c.bf16 %v3663, %v3655
    %v3784 = vpack.c.bf16 %v3664, %v3656
    %v3785 = vpack.c.bf16 %v3665, %v3657
    %v3786 = vpack.c.bf16 %v3666, %v3658
    %v3787 = vpack.c.bf16 %v3667, %v3659
    %v3788 = vpack.c.bf16 %v3668, %v3660
    %v3789 = vpack.c.bf16 %v3669, %v3661
    %v3790 = vpack.c.bf16 %v3670, %v3662
    %v3791 = vpack.c.bf16 %v3679, %v3671
    %v3792 = vpack.c.bf16 %v3680, %v3672
    %v3793 = vpack.c.bf16 %v3681, %v3673
    %v3794 = vpack.c.bf16 %v3682, %v3674
    %v3795 = vpack.c.bf16 %v3683, %v3675
    %v3796 = vpack.c.bf16 %v3684, %v3676
    %v3797 = vpack.c.bf16 %v3685, %v3677
    %v3798 = vpack.c.bf16 %v3686, %v3678
    %v3799 = vpack.c.bf16 %v3695, %v3687
    %v3800 = vpack.c.bf16 %v3696, %v3688
    %v3801 = vpack.c.bf16 %v3697, %v3689
    %v3802 = vpack.c.bf16 %v3698, %v3690
    %v3803 = vpack.c.bf16 %v3699, %v3691
    %v3804 = vpack.c.bf16 %v3700, %v3692
    %v3805 = vpack.c.bf16 %v3701, %v3693
    %v3806 = vpack.c.bf16 %v3702, %v3694
    %v3807 = vpack.c.bf16 %v3711, %v3703
    %v3808 = vpack.c.bf16 %v3712, %v3704
    %v3809 = vpack.c.bf16 %v3713, %v3705
    %v3810 = vpack.c.bf16 %v3714, %v3706
    %v3811 = vpack.c.bf16 %v3715, %v3707
    %v3812 = vpack.c.bf16 %v3716, %v3708
    %v3813 = vpack.c.bf16 %v3717, %v3709
    %v3814 = vpack.c.bf16 %v3718, %v3710
    %v3815 = vpack.c.bf16 %v3727, %v3719
    %v3816 = vpack.c.bf16 %v3728, %v3720
    %v3817 = vpack.c.bf16 %v3729, %v3721
    %v3818 = vpack.c.bf16 %v3730, %v3722
    %v3819 = vpack.c.bf16 %v3731, %v3723
    %v3820 = vpack.c.bf16 %v3732, %v3724
    %v3821 = vpack.c.bf16 %v3733, %v3725
    %v3822 = vpack.c.bf16 %v3734, %v3726
    %v3823 = vpack.c.bf16 %v3743, %v3735
    %v3824 = vpack.c.bf16 %v3744, %v3736
    %v3825 = vpack.c.bf16 %v3745, %v3737
    %v3826 = vpack.c.bf16 %v3746, %v3738
    %v3827 = vpack.c.bf16 %v3747, %v3739
    %v3828 = vpack.c.bf16 %v3748, %v3740
    %v3829 = vpack.c.bf16 %v3749, %v3741
    %v3830 = vpack.c.bf16 %v3750, %v3742
    %v3831 = vpack.c.bf16 %v3759, %v3751
    %v3832 = vpack.c.bf16 %v3760, %v3752
    %v3833 = vpack.c.bf16 %v3761, %v3753
    %v3834 = vpack.c.bf16 %v3762, %v3754
    %v3835 = vpack.c.bf16 %v3763, %v3755
    %v3836 = vpack.c.bf16 %v3764, %v3756
    %v3837 = vpack.c.bf16 %v3765, %v3757
    %v3838 = vpack.c.bf16 %v3766, %v3758
    %v3839 = vpack.c.bf16 %v3775, %v3767
    %v3840 = vpack.c.bf16 %v3776, %v3768
    %v3841 = vpack.c.bf16 %v3777, %v3769
    %v3842 = vpack.c.bf16 %v3778, %v3770
    %v3843 = vpack.c.bf16 %v3779, %v3771
    %v3844 = vpack.c.bf16 %v3780, %v3772
    %v3845 = vpack.c.bf16 %v3781, %v3773
    %v3846 = vpack.c.bf16 %v3782, %v3774
    %v3847 = vlaneseq
    %v3848 = vshrl.u32 %v3847, 7
    %v3849 = vlaneseq
    %v3850 = vand.u32 %v3849, 127
    %v3851 = vmul.u32 %v3848, 64
    %vm3852 = vcmp.ge.s32.totalorder %v3850, %v3851
    %v3853 = vadd.s32 %v3848, 1
    %v3854 = vmul.u32 %v3853, 64
    %vm3855 = vcmp.lt.s32.totalorder %v3850, %v3854
    %vm3856 = vmand %vm3852, %vm3855
    %v3857 = vsel %vm3856, 1.0, 0.0
    %v3858 = vpack.c.bf16 %v3857, %v3857
    %3859 = vmatprep.subr.bf16.mxu0 %v3784
    %3860 = vmatpush1.bf16.msra.mxu0 %v3783
    %3861 = vmatprep.subr.bf16.mxu0 %v3792
    %3862 = vmatpush1.bf16.msra.mxu0 %v3791
    %3863 = vmatprep.subr.bf16.mxu0 %v3800
    %3864 = vmatpush1.bf16.msra.mxu0 %v3799
    %3865 = vmatprep.subr.bf16.mxu0 %v3808
    %3866 = vmatpush1.bf16.msra.mxu0 %v3807
    %3867 = vmatprep.subr.bf16.mxu0 %v3816
    %3868 = vmatpush1.bf16.msra.mxu0 %v3815
    %3869 = vmatprep.subr.bf16.mxu0 %v3824
    %3870 = vmatpush1.bf16.msra.mxu0 %v3823
    %3871 = vmatprep.subr.bf16.mxu0 %v3832
    %3872 = vmatpush1.bf16.msra.mxu0 %v3831
    %3873 = vmatprep.subr.bf16.mxu0 %v3840
    %3874 = vmatpush1.bf16.msra.mxu0 %v3839
    %3875 = vmatprep.subr.bf16.mxu0 0
    %3876 = vmatpush1.bf16.msra.mxu0 0
    %3877 = vmatprep.subr.bf16.mxu0 0
    %3878 = vmatpush1.bf16.msra.mxu0 0
    %3879 = vmatprep.subr.bf16.mxu0 0
    %3880 = vmatpush1.bf16.msra.mxu0 0
    %3881 = vmatprep.subr.bf16.mxu0 0
    %3882 = vmatpush1.bf16.msra.mxu0 0
    %3883 = vmatprep.subr.bf16.mxu0 0
    %3884 = vmatpush1.bf16.msra.mxu0 0
    %3885 = vmatprep.subr.bf16.mxu0 0
    %3886 = vmatpush1.bf16.msra.mxu0 0
    %3887 = vmatprep.subr.bf16.mxu0 0
    %3888 = vmatpush1.bf16.msra.mxu0 0
    %3889 = vmatprep.subr.bf16.mxu0 0
    %3890 = vmatpush1.bf16.msra.mxu0 0
    %3891 = vmatprep.mubr.bf16.mxu0 0
    %3892 = vmatmul.mubr.bf16.gmra.mrb[0].mxu0 %v3858
    %v3893 = vpop.f32.mrb[0].mxu0
    %v3894 = vadd.f32 0.0, %v3893
    %v3895 = vpop.f32.mrb[0].mxu0
    %v3896 = vadd.f32 0.0, %v3895
    %v3897 = vpop.f32.mrb[0].mxu0
    %v3898 = vpop.f32.mrb[0].mxu0
    %3899 = vdwg.mxu0
    %3900 = vmatprep.subr.bf16.mxu0 %v3786
    %3901 = vmatpush1.bf16.msra.mxu0 %v3785
    %3902 = vmatprep.subr.bf16.mxu0 %v3794
    %3903 = vmatpush1.bf16.msra.mxu0 %v3793
    %3904 = vmatprep.subr.bf16.mxu0 %v3802
    %3905 = vmatpush1.bf16.msra.mxu0 %v3801
    %3906 = vmatprep.subr.bf16.mxu0 %v3810
    %3907 = vmatpush1.bf16.msra.mxu0 %v3809
    %3908 = vmatprep.subr.bf16.mxu0 %v3818
    %3909 = vmatpush1.bf16.msra.mxu0 %v3817
    %3910 = vmatprep.subr.bf16.mxu0 %v3826
    %3911 = vmatpush1.bf16.msra.mxu0 %v3825
    %3912 = vmatprep.subr.bf16.mxu0 %v3834
    %3913 = vmatpush1.bf16.msra.mxu0 %v3833
    %3914 = vmatprep.subr.bf16.mxu0 %v3842
    %3915 = vmatpush1.bf16.msra.mxu0 %v3841
    %3916 = vmatprep.subr.bf16.mxu0 0
    %3917 = vmatpush1.bf16.msra.mxu0 0
    %3918 = vmatprep.subr.bf16.mxu0 0
    %3919 = vmatpush1.bf16.msra.mxu0 0
    %3920 = vmatprep.subr.bf16.mxu0 0
    %3921 = vmatpush1.bf16.msra.mxu0 0
    %3922 = vmatprep.subr.bf16.mxu0 0
    %3923 = vmatpush1.bf16.msra.mxu0 0
    %3924 = vmatprep.subr.bf16.mxu0 0
    %3925 = vmatpush1.bf16.msra.mxu0 0
    %3926 = vmatprep.subr.bf16.mxu0 0
    %3927 = vmatpush1.bf16.msra.mxu0 0
    %3928 = vmatprep.subr.bf16.mxu0 0
    %3929 = vmatpush1.bf16.msra.mxu0 0
    %3930 = vmatprep.subr.bf16.mxu0 0
    %3931 = vmatpush1.bf16.msra.mxu0 0
    %3932 = vmatprep.mubr.bf16.mxu0 0
    %3933 = vmatmul.mubr.bf16.gmra.mrb[0].mxu0 %v3858
    %v3934 = vpop.f32.mrb[0].mxu0
    %v3935 = vadd.f32 0.0, %v3934
    %v3936 = vpop.f32.mrb[0].mxu0
    %v3937 = vadd.f32 0.0, %v3936
    %v3938 = vpop.f32.mrb[0].mxu0
    %v3939 = vpop.f32.mrb[0].mxu0
    %3940 = vdwg.mxu0
    %3941 = vmatprep.subr.bf16.mxu0 %v3788
    %3942 = vmatpush1.bf16.msra.mxu0 %v3787
    %3943 = vmatprep.subr.bf16.mxu0 %v3796
    %3944 = vmatpush1.bf16.msra.mxu0 %v3795
    %3945 = vmatprep.subr.bf16.mxu0 %v3804
    %3946 = vmatpush1.bf16.msra.mxu0 %v3803
    %3947 = vmatprep.subr.bf16.mxu0 %v3812
    %3948 = vmatpush1.bf16.msra.mxu0 %v3811
    %3949 = vmatprep.subr.bf16.mxu0 %v3820
    %3950 = vmatpush1.bf16.msra.mxu0 %v3819
    %3951 = vmatprep.subr.bf16.mxu0 %v3828
    %3952 = vmatpush1.bf16.msra.mxu0 %v3827
    %3953 = vmatprep.subr.bf16.mxu0 %v3836
    %3954 = vmatpush1.bf16.msra.mxu0 %v3835
    %3955 = vmatprep.subr.bf16.mxu0 %v3844
    %3956 = vmatpush1.bf16.msra.mxu0 %v3843
    %3957 = vmatprep.subr.bf16.mxu0 0
    %3958 = vmatpush1.bf16.msra.mxu0 0
    %3959 = vmatprep.subr.bf16.mxu0 0
    %3960 = vmatpush1.bf16.msra.mxu0 0
    %3961 = vmatprep.subr.bf16.mxu0 0
    %3962 = vmatpush1.bf16.msra.mxu0 0
    %3963 = vmatprep.subr.bf16.mxu0 0
    %3964 = vmatpush1.bf16.msra.mxu0 0
    %3965 = vmatprep.subr.bf16.mxu0 0
    %3966 = vmatpush1.bf16.msra.mxu0 0
    %3967 = vmatprep.subr.bf16.mxu0 0
    %3968 = vmatpush1.bf16.msra.mxu0 0
    %3969 = vmatprep.subr.bf16.mxu0 0
    %3970 = vmatpush1.bf16.msra.mxu0 0
    %3971 = vmatprep.subr.bf16.mxu0 0
    %3972 = vmatpush1.bf16.msra.mxu0 0
    %3973 = vmatprep.mubr.bf16.mxu0 0
    %3974 = vmatmul.mubr.bf16.gmra.mrb[0].mxu0 %v3858
    %v3975 = vpop.f32.mrb[0].mxu0
    %v3976 = vadd.f32 0.0, %v3975
    %v3977 = vpop.f32.mrb[0].mxu0
    %v3978 = vadd.f32 0.0, %v3977
    %v3979 = vpop.f32.mrb[0].mxu0
    %v3980 = vpop.f32.mrb[0].mxu0
    %3981 = vdwg.mxu0
    %3982 = vmatprep.subr.bf16.mxu0 %v3790
    %3983 = vmatpush1.bf16.msra.mxu0 %v3789
    %3984 = vmatprep.subr.bf16.mxu0 %v3798
    %3985 = vmatpush1.bf16.msra.mxu0 %v3797
    %3986 = vmatprep.subr.bf16.mxu0 %v3806
    %3987 = vmatpush1.bf16.msra.mxu0 %v3805
    %3988 = vmatprep.subr.bf16.mxu0 %v3814
    %3989 = vmatpush1.bf16.msra.mxu0 %v3813
    %3990 = vmatprep.subr.bf16.mxu0 %v3822
    %3991 = vmatpush1.bf16.msra.mxu0 %v3821
    %3992 = vmatprep.subr.bf16.mxu0 %v3830
    %3993 = vmatpush1.bf16.msra.mxu0 %v3829
    %3994 = vmatprep.subr.bf16.mxu0 %v3838
    %3995 = vmatpush1.bf16.msra.mxu0 %v3837
    %3996 = vmatprep.subr.bf16.mxu0 %v3846
    %3997 = vmatpush1.bf16.msra.mxu0 %v3845
    %3998 = vmatprep.subr.bf16.mxu0 0
    %3999 = vmatpush1.bf16.msra.mxu0 0
    %4000 = vmatprep.subr.bf16.mxu0 0
    %4001 = vmatpush1.bf16.msra.mxu0 0
    %4002 = vmatprep.subr.bf16.mxu0 0
    %4003 = vmatpush1.bf16.msra.mxu0 0
    %4004 = vmatprep.subr.bf16.mxu0 0
    %4005 = vmatpush1.bf16.msra.mxu0 0
    %4006 = vmatprep.subr.bf16.mxu0 0
    %4007 = vmatpush1.bf16.msra.mxu0 0
    %4008 = vmatprep.subr.bf16.mxu0 0
    %4009 = vmatpush1.bf16.msra.mxu0 0
    %4010 = vmatprep.subr.bf16.mxu0 0
    %4011 = vmatpush1.bf16.msra.mxu0 0
    %4012 = vmatprep.subr.bf16.mxu0 0
    %4013 = vmatpush1.bf16.msra.mxu0 0
    %4014 = vmatprep.mubr.bf16.mxu0 0
    %4015 = vmatmul.mubr.bf16.gmra.mrb[0].mxu0 %v3858
    %v4016 = vpop.f32.mrb[0].mxu0
    %v4017 = vadd.f32 0.0, %v4016
    %v4018 = vpop.f32.mrb[0].mxu0
    %v4019 = vadd.f32 0.0, %v4018
    %v4020 = vpop.f32.mrb[0].mxu0
    %v4021 = vpop.f32.mrb[0].mxu0
    %4022 = vdwg.mxu0
    %v4023 = vmul.f32 %v3894, 0.015625
    %v4024 = vmul.f32 %v3896, 0.015625
    %v4025 = vmul.f32 %v3935, 0.015625
    %v4026 = vmul.f32 %v3937, 0.015625
    %v4027 = vmul.f32 %v3976, 0.015625
    %v4028 = vmul.f32 %v3978, 0.015625
    %v4029 = vmul.f32 %v4017, 0.015625
    %v4030 = vmul.f32 %v4019, 0.015625
    %v4031 = vpack.c.bf16 %v4023, %v4023
    %v4032 = vpack.c.bf16 %v4024, %v4024
    %v4033 = vpack.c.bf16 %v4025, %v4025
    %v4034 = vpack.c.bf16 %v4026, %v4026
    %v4035 = vpack.c.bf16 %v4027, %v4027
    %v4036 = vpack.c.bf16 %v4028, %v4028
    %v4037 = vpack.c.bf16 %v4029, %v4029
    %v4038 = vpack.c.bf16 %v4030, %v4030
    %s4039 = smul.u32 4, 128
    %s4040 = smul.u32 %s4039, 8
    %s4041 = sshll.u32 %s4040, 4
    %4042 = dma.done %s313, %s4041
    %v4043 = vld [vmem:[#allocation3] sm:$0xff]
    %v4044 = vld [vmem:[#allocation3 + $0x8] sm:$0xff]
    %v4045 = vld [vmem:[#allocation3 + $0x10] sm:$0xff]
    %v4046 = vld [vmem:[#allocation3 + $0x18] sm:$0xff]
    %v4047 = vld [vmem:[#allocation3 + $0x20] sm:$0xff]
    %v4048 = vld [vmem:[#allocation3 + $0x28] sm:$0xff]
    %v4049 = vld [vmem:[#allocation3 + $0x30] sm:$0xff]
    %v4050 = vld [vmem:[#allocation3 + $0x38] sm:$0xff]
    %v4051 = vld [vmem:[#allocation3 + $0x40] sm:$0xff]
    %v4052 = vld [vmem:[#allocation3 + $0x48] sm:$0xff]
    %v4053 = vld [vmem:[#allocation3 + $0x50] sm:$0xff]
    %v4054 = vld [vmem:[#allocation3 + $0x58] sm:$0xff]
    %v4055 = vld [vmem:[#allocation3 + $0x60] sm:$0xff]
    %v4056 = vld [vmem:[#allocation3 + $0x68] sm:$0xff]
    %v4057 = vld [vmem:[#allocation3 + $0x70] sm:$0xff]
    %v4058 = vld [vmem:[#allocation3 + $0x78] sm:$0xff]
    %v4059 = vld [vmem:[#allocation3 + $0x80] sm:$0xff]
    %v4060 = vld [vmem:[#allocation3 + $0x88] sm:$0xff]
    %v4061 = vld [vmem:[#allocation3 + $0x90] sm:$0xff]
    %v4062 = vld [vmem:[#allocation3 + $0x98] sm:$0xff]
    %v4063 = vld [vmem:[#allocation3 + $0xa0] sm:$0xff]
    %v4064 = vld [vmem:[#allocation3 + $0xa8] sm:$0xff]
    %v4065 = vld [vmem:[#allocation3 + $0xb0] sm:$0xff]
    %v4066 = vld [vmem:[#allocation3 + $0xb8] sm:$0xff]
    %v4067 = vld [vmem:[#allocation3 + $0xc0] sm:$0xff]
    %v4068 = vld [vmem:[#allocation3 + $0xc8] sm:$0xff]
    %v4069 = vld [vmem:[#allocation3 + $0xd0] sm:$0xff]
    %v4070 = vld [vmem:[#allocation3 + $0xd8] sm:$0xff]
    %v4071 = vld [vmem:[#allocation3 + $0xe0] sm:$0xff]
    %v4072 = vld [vmem:[#allocation3 + $0xe8] sm:$0xff]
    %v4073 = vld [vmem:[#allocation3 + $0xf0] sm:$0xff]
    %v4074 = vld [vmem:[#allocation3 + $0xf8] sm:$0xff]
    %v4075 = vld [vmem:[#allocation3 + $0x100] sm:$0xff]
    %v4076 = vld [vmem:[#allocation3 + $0x108] sm:$0xff]
    %v4077 = vld [vmem:[#allocation3 + $0x110] sm:$0xff]
    %v4078 = vld [vmem:[#allocation3 + $0x118] sm:$0xff]
    %v4079 = vld [vmem:[#allocation3 + $0x120] sm:$0xff]
    %v4080 = vld [vmem:[#allocation3 + $0x128] sm:$0xff]
    %v4081 = vld [vmem:[#allocation3 + $0x130] sm:$0xff]
    %v4082 = vld [vmem:[#allocation3 + $0x138] sm:$0xff]
    %v4083 = vld [vmem:[#allocation3 + $0x140] sm:$0xff]
    %v4084 = vld [vmem:[#allocation3 + $0x148] sm:$0xff]
    %v4085 = vld [vmem:[#allocation3 + $0x150] sm:$0xff]
    %v4086 = vld [vmem:[#allocation3 + $0x158] sm:$0xff]
    %v4087 = vld [vmem:[#allocation3 + $0x160] sm:$0xff]
    %v4088 = vld [vmem:[#allocation3 + $0x168] sm:$0xff]
    %v4089 = vld [vmem:[#allocation3 + $0x170] sm:$0xff]
    %v4090 = vld [vmem:[#allocation3 + $0x178] sm:$0xff]
    %v4091 = vld [vmem:[#allocation3 + $0x180] sm:$0xff]
    %v4092 = vld [vmem:[#allocation3 + $0x188] sm:$0xff]
    %v4093 = vld [vmem:[#allocation3 + $0x190] sm:$0xff]
    %v4094 = vld [vmem:[#allocation3 + $0x198] sm:$0xff]
    %v4095 = vld [vmem:[#allocation3 + $0x1a0] sm:$0xff]
    %v4096 = vld [vmem:[#allocation3 + $0x1a8] sm:$0xff]
    %v4097 = vld [vmem:[#allocation3 + $0x1b0] sm:$0xff]
    %v4098 = vld [vmem:[#allocation3 + $0x1b8] sm:$0xff]
    %v4099 = vld [vmem:[#allocation3 + $0x1c0] sm:$0xff]
    %v4100 = vld [vmem:[#allocation3 + $0x1c8] sm:$0xff]
    %v4101 = vld [vmem:[#allocation3 + $0x1d0] sm:$0xff]
    %v4102 = vld [vmem:[#allocation3 + $0x1d8] sm:$0xff]
    %v4103 = vld [vmem:[#allocation3 + $0x1e0] sm:$0xff]
    %v4104 = vld [vmem:[#allocation3 + $0x1e8] sm:$0xff]
    %v4105 = vld [vmem:[#allocation3 + $0x1f0] sm:$0xff]
    %v4106 = vld [vmem:[#allocation3 + $0x1f8] sm:$0xff]
    %v4107 = vld [vmem:[#allocation3 + $0x200] sm:$0xff]
    %v4108 = vld [vmem:[#allocation3 + $0x208] sm:$0xff]
    %v4109 = vld [vmem:[#allocation3 + $0x210] sm:$0xff]
    %v4110 = vld [vmem:[#allocation3 + $0x218] sm:$0xff]
    %v4111 = vld [vmem:[#allocation3 + $0x220] sm:$0xff]
    %v4112 = vld [vmem:[#allocation3 + $0x228] sm:$0xff]
    %v4113 = vld [vmem:[#allocation3 + $0x230] sm:$0xff]
    %v4114 = vld [vmem:[#allocation3 + $0x238] sm:$0xff]
    %v4115 = vld [vmem:[#allocation3 + $0x240] sm:$0xff]
    %v4116 = vld [vmem:[#allocation3 + $0x248] sm:$0xff]
    %v4117 = vld [vmem:[#allocation3 + $0x250] sm:$0xff]
    %v4118 = vld [vmem:[#allocation3 + $0x258] sm:$0xff]
    %v4119 = vld [vmem:[#allocation3 + $0x260] sm:$0xff]
    %v4120 = vld [vmem:[#allocation3 + $0x268] sm:$0xff]
    %v4121 = vld [vmem:[#allocation3 + $0x270] sm:$0xff]
    %v4122 = vld [vmem:[#allocation3 + $0x278] sm:$0xff]
    %v4123 = vld [vmem:[#allocation3 + $0x280] sm:$0xff]
    %v4124 = vld [vmem:[#allocation3 + $0x288] sm:$0xff]
    %v4125 = vld [vmem:[#allocation3 + $0x290] sm:$0xff]
    %v4126 = vld [vmem:[#allocation3 + $0x298] sm:$0xff]
    %v4127 = vld [vmem:[#allocation3 + $0x2a0] sm:$0xff]
    %v4128 = vld [vmem:[#allocation3 + $0x2a8] sm:$0xff]
    %v4129 = vld [vmem:[#allocation3 + $0x2b0] sm:$0xff]
    %v4130 = vld [vmem:[#allocation3 + $0x2b8] sm:$0xff]
    %v4131 = vld [vmem:[#allocation3 + $0x2c0] sm:$0xff]
    %v4132 = vld [vmem:[#allocation3 + $0x2c8] sm:$0xff]
    %v4133 = vld [vmem:[#allocation3 + $0x2d0] sm:$0xff]
    %v4134 = vld [vmem:[#allocation3 + $0x2d8] sm:$0xff]
    %v4135 = vld [vmem:[#allocation3 + $0x2e0] sm:$0xff]
    %v4136 = vld [vmem:[#allocation3 + $0x2e8] sm:$0xff]
    %v4137 = vld [vmem:[#allocation3 + $0x2f0] sm:$0xff]
    %v4138 = vld [vmem:[#allocation3 + $0x2f8] sm:$0xff]
    %v4139 = vld [vmem:[#allocation3 + $0x300] sm:$0xff]
    %v4140 = vld [vmem:[#allocation3 + $0x308] sm:$0xff]
    %v4141 = vld [vmem:[#allocation3 + $0x310] sm:$0xff]
    %v4142 = vld [vmem:[#allocation3 + $0x318] sm:$0xff]
    %v4143 = vld [vmem:[#allocation3 + $0x320] sm:$0xff]
    %v4144 = vld [vmem:[#allocation3 + $0x328] sm:$0xff]
    %v4145 = vld [vmem:[#allocation3 + $0x330] sm:$0xff]
    %v4146 = vld [vmem:[#allocation3 + $0x338] sm:$0xff]
    %v4147 = vld [vmem:[#allocation3 + $0x340] sm:$0xff]
    %v4148 = vld [vmem:[#allocation3 + $0x348] sm:$0xff]
    %v4149 = vld [vmem:[#allocation3 + $0x350] sm:$0xff]
    %v4150 = vld [vmem:[#allocation3 + $0x358] sm:$0xff]
    %v4151 = vld [vmem:[#allocation3 + $0x360] sm:$0xff]
    %v4152 = vld [vmem:[#allocation3 + $0x368] sm:$0xff]
    %v4153 = vld [vmem:[#allocation3 + $0x370] sm:$0xff]
    %v4154 = vld [vmem:[#allocation3 + $0x378] sm:$0xff]
    %v4155 = vld [vmem:[#allocation3 + $0x380] sm:$0xff]
    %v4156 = vld [vmem:[#allocation3 + $0x388] sm:$0xff]
    %v4157 = vld [vmem:[#allocation3 + $0x390] sm:$0xff]
    %v4158 = vld [vmem:[#allocation3 + $0x398] sm:$0xff]
    %v4159 = vld [vmem:[#allocation3 + $0x3a0] sm:$0xff]
    %v4160 = vld [vmem:[#allocation3 + $0x3a8] sm:$0xff]
    %v4161 = vld [vmem:[#allocation3 + $0x3b0] sm:$0xff]
    %v4162 = vld [vmem:[#allocation3 + $0x3b8] sm:$0xff]
    %v4163 = vld [vmem:[#allocation3 + $0x3c0] sm:$0xff]
    %v4164 = vld [vmem:[#allocation3 + $0x3c8] sm:$0xff]
    %v4165 = vld [vmem:[#allocation3 + $0x3d0] sm:$0xff]
    %v4166 = vld [vmem:[#allocation3 + $0x3d8] sm:$0xff]
    %v4167 = vld [vmem:[#allocation3 + $0x3e0] sm:$0xff]
    %v4168 = vld [vmem:[#allocation3 + $0x3e8] sm:$0xff]
    %v4169 = vld [vmem:[#allocation3 + $0x3f0] sm:$0xff]
    %v4170 = vld [vmem:[#allocation3 + $0x3f8] sm:$0xff]
    %v4171 = vld [vmem:[#allocation3 + $0x400] sm:$0xff]
    %v4172 = vld [vmem:[#allocation3 + $0x408] sm:$0xff]
    %v4173 = vld [vmem:[#allocation3 + $0x410] sm:$0xff]
    %v4174 = vld [vmem:[#allocation3 + $0x418] sm:$0xff]
    %v4175 = vld [vmem:[#allocation3 + $0x420] sm:$0xff]
    %v4176 = vld [vmem:[#allocation3 + $0x428] sm:$0xff]
    %v4177 = vld [vmem:[#allocation3 + $0x430] sm:$0xff]
    %v4178 = vld [vmem:[#allocation3 + $0x438] sm:$0xff]
    %v4179 = vld [vmem:[#allocation3 + $0x440] sm:$0xff]
    %v4180 = vld [vmem:[#allocation3 + $0x448] sm:$0xff]
    %v4181 = vld [vmem:[#allocation3 + $0x450] sm:$0xff]
    %v4182 = vld [vmem:[#allocation3 + $0x458] sm:$0xff]
    %v4183 = vld [vmem:[#allocation3 + $0x460] sm:$0xff]
    %v4184 = vld [vmem:[#allocation3 + $0x468] sm:$0xff]
    %v4185 = vld [vmem:[#allocation3 + $0x470] sm:$0xff]
    %v4186 = vld [vmem:[#allocation3 + $0x478] sm:$0xff]
    %v4187 = vld [vmem:[#allocation3 + $0x480] sm:$0xff]
    %v4188 = vld [vmem:[#allocation3 + $0x488] sm:$0xff]
    %v4189 = vld [vmem:[#allocation3 + $0x490] sm:$0xff]
    %v4190 = vld [vmem:[#allocation3 + $0x498] sm:$0xff]
    %v4191 = vld [vmem:[#allocation3 + $0x4a0] sm:$0xff]
    %v4192 = vld [vmem:[#allocation3 + $0x4a8] sm:$0xff]
    %v4193 = vld [vmem:[#allocation3 + $0x4b0] sm:$0xff]
    %v4194 = vld [vmem:[#allocation3 + $0x4b8] sm:$0xff]
    %v4195 = vld [vmem:[#allocation3 + $0x4c0] sm:$0xff]
    %v4196 = vld [vmem:[#allocation3 + $0x4c8] sm:$0xff]
    %v4197 = vld [vmem:[#allocation3 + $0x4d0] sm:$0xff]
    %v4198 = vld [vmem:[#allocation3 + $0x4d8] sm:$0xff]
    %v4199 = vld [vmem:[#allocation3 + $0x4e0] sm:$0xff]
    %v4200 = vld [vmem:[#allocation3 + $0x4e8] sm:$0xff]
    %v4201 = vld [vmem:[#allocation3 + $0x4f0] sm:$0xff]
    %v4202 = vld [vmem:[#allocation3 + $0x4f8] sm:$0xff]
    %v4203 = vld [vmem:[#allocation3 + $0x500] sm:$0xff]
    %v4204 = vld [vmem:[#allocation3 + $0x508] sm:$0xff]
    %v4205 = vld [vmem:[#allocation3 + $0x510] sm:$0xff]
    %v4206 = vld [vmem:[#allocation3 + $0x518] sm:$0xff]
    %v4207 = vld [vmem:[#allocation3 + $0x520] sm:$0xff]
    %v4208 = vld [vmem:[#allocation3 + $0x528] sm:$0xff]
    %v4209 = vld [vmem:[#allocation3 + $0x530] sm:$0xff]
    %v4210 = vld [vmem:[#allocation3 + $0x538] sm:$0xff]
    %v4211 = vld [vmem:[#allocation3 + $0x540] sm:$0xff]
    %v4212 = vld [vmem:[#allocation3 + $0x548] sm:$0xff]
    %v4213 = vld [vmem:[#allocation3 + $0x550] sm:$0xff]
    %v4214 = vld [vmem:[#allocation3 + $0x558] sm:$0xff]
    %v4215 = vld [vmem:[#allocation3 + $0x560] sm:$0xff]
    %v4216 = vld [vmem:[#allocation3 + $0x568] sm:$0xff]
    %v4217 = vld [vmem:[#allocation3 + $0x570] sm:$0xff]
    %v4218 = vld [vmem:[#allocation3 + $0x578] sm:$0xff]
    %v4219 = vld [vmem:[#allocation3 + $0x580] sm:$0xff]
    %v4220 = vld [vmem:[#allocation3 + $0x588] sm:$0xff]
    %v4221 = vld [vmem:[#allocation3 + $0x590] sm:$0xff]
    %v4222 = vld [vmem:[#allocation3 + $0x598] sm:$0xff]
    %v4223 = vld [vmem:[#allocation3 + $0x5a0] sm:$0xff]
    %v4224 = vld [vmem:[#allocation3 + $0x5a8] sm:$0xff]
    %v4225 = vld [vmem:[#allocation3 + $0x5b0] sm:$0xff]
    %v4226 = vld [vmem:[#allocation3 + $0x5b8] sm:$0xff]
    %v4227 = vld [vmem:[#allocation3 + $0x5c0] sm:$0xff]
    %v4228 = vld [vmem:[#allocation3 + $0x5c8] sm:$0xff]
    %v4229 = vld [vmem:[#allocation3 + $0x5d0] sm:$0xff]
    %v4230 = vld [vmem:[#allocation3 + $0x5d8] sm:$0xff]
    %v4231 = vld [vmem:[#allocation3 + $0x5e0] sm:$0xff]
    %v4232 = vld [vmem:[#allocation3 + $0x5e8] sm:$0xff]
    %v4233 = vld [vmem:[#allocation3 + $0x5f0] sm:$0xff]
    %v4234 = vld [vmem:[#allocation3 + $0x5f8] sm:$0xff]
    %v4235 = vld [vmem:[#allocation3 + $0x600] sm:$0xff]
    %v4236 = vld [vmem:[#allocation3 + $0x608] sm:$0xff]
    %v4237 = vld [vmem:[#allocation3 + $0x610] sm:$0xff]
    %v4238 = vld [vmem:[#allocation3 + $0x618] sm:$0xff]
    %v4239 = vld [vmem:[#allocation3 + $0x620] sm:$0xff]
    %v4240 = vld [vmem:[#allocation3 + $0x628] sm:$0xff]
    %v4241 = vld [vmem:[#allocation3 + $0x630] sm:$0xff]
    %v4242 = vld [vmem:[#allocation3 + $0x638] sm:$0xff]
    %v4243 = vld [vmem:[#allocation3 + $0x640] sm:$0xff]
    %v4244 = vld [vmem:[#allocation3 + $0x648] sm:$0xff]
    %v4245 = vld [vmem:[#allocation3 + $0x650] sm:$0xff]
    %v4246 = vld [vmem:[#allocation3 + $0x658] sm:$0xff]
    %v4247 = vld [vmem:[#allocation3 + $0x660] sm:$0xff]
    %v4248 = vld [vmem:[#allocation3 + $0x668] sm:$0xff]
    %v4249 = vld [vmem:[#allocation3 + $0x670] sm:$0xff]
    %v4250 = vld [vmem:[#allocation3 + $0x678] sm:$0xff]
    %v4251 = vld [vmem:[#allocation3 + $0x680] sm:$0xff]
    %v4252 = vld [vmem:[#allocation3 + $0x688] sm:$0xff]
    %v4253 = vld [vmem:[#allocation3 + $0x690] sm:$0xff]
    %v4254 = vld [vmem:[#allocation3 + $0x698] sm:$0xff]
    %v4255 = vld [vmem:[#allocation3 + $0x6a0] sm:$0xff]
    %v4256 = vld [vmem:[#allocation3 + $0x6a8] sm:$0xff]
    %v4257 = vld [vmem:[#allocation3 + $0x6b0] sm:$0xff]
    %v4258 = vld [vmem:[#allocation3 + $0x6b8] sm:$0xff]
    %v4259 = vld [vmem:[#allocation3 + $0x6c0] sm:$0xff]
    %v4260 = vld [vmem:[#allocation3 + $0x6c8] sm:$0xff]
    %v4261 = vld [vmem:[#allocation3 + $0x6d0] sm:$0xff]
    %v4262 = vld [vmem:[#allocation3 + $0x6d8] sm:$0xff]
    %v4263 = vld [vmem:[#allocation3 + $0x6e0] sm:$0xff]
    %v4264 = vld [vmem:[#allocation3 + $0x6e8] sm:$0xff]
    %v4265 = vld [vmem:[#allocation3 + $0x6f0] sm:$0xff]
    %v4266 = vld [vmem:[#allocation3 + $0x6f8] sm:$0xff]
    %v4267 = vld [vmem:[#allocation3 + $0x700] sm:$0xff]
    %v4268 = vld [vmem:[#allocation3 + $0x708] sm:$0xff]
    %v4269 = vld [vmem:[#allocation3 + $0x710] sm:$0xff]
    %v4270 = vld [vmem:[#allocation3 + $0x718] sm:$0xff]
    %v4271 = vld [vmem:[#allocation3 + $0x720] sm:$0xff]
    %v4272 = vld [vmem:[#allocation3 + $0x728] sm:$0xff]
    %v4273 = vld [vmem:[#allocation3 + $0x730] sm:$0xff]
    %v4274 = vld [vmem:[#allocation3 + $0x738] sm:$0xff]
    %v4275 = vld [vmem:[#allocation3 + $0x740] sm:$0xff]
    %v4276 = vld [vmem:[#allocation3 + $0x748] sm:$0xff]
    %v4277 = vld [vmem:[#allocation3 + $0x750] sm:$0xff]
    %v4278 = vld [vmem:[#allocation3 + $0x758] sm:$0xff]
    %v4279 = vld [vmem:[#allocation3 + $0x760] sm:$0xff]
    %v4280 = vld [vmem:[#allocation3 + $0x768] sm:$0xff]
    %v4281 = vld [vmem:[#allocation3 + $0x770] sm:$0xff]
    %v4282 = vld [vmem:[#allocation3 + $0x778] sm:$0xff]
    %v4283 = vld [vmem:[#allocation3 + $0x780] sm:$0xff]
    %v4284 = vld [vmem:[#allocation3 + $0x788] sm:$0xff]
    %v4285 = vld [vmem:[#allocation3 + $0x790] sm:$0xff]
    %v4286 = vld [vmem:[#allocation3 + $0x798] sm:$0xff]
    %v4287 = vld [vmem:[#allocation3 + $0x7a0] sm:$0xff]
    %v4288 = vld [vmem:[#allocation3 + $0x7a8] sm:$0xff]
    %v4289 = vld [vmem:[#allocation3 + $0x7b0] sm:$0xff]
    %v4290 = vld [vmem:[#allocation3 + $0x7b8] sm:$0xff]
    %v4291 = vld [vmem:[#allocation3 + $0x7c0] sm:$0xff]
    %v4292 = vld [vmem:[#allocation3 + $0x7c8] sm:$0xff]
    %v4293 = vld [vmem:[#allocation3 + $0x7d0] sm:$0xff]
    %v4294 = vld [vmem:[#allocation3 + $0x7d8] sm:$0xff]
    %v4295 = vld [vmem:[#allocation3 + $0x7e0] sm:$0xff]
    %v4296 = vld [vmem:[#allocation3 + $0x7e8] sm:$0xff]
    %v4297 = vld [vmem:[#allocation3 + $0x7f0] sm:$0xff]
    %v4298 = vld [vmem:[#allocation3 + $0x7f8] sm:$0xff]
    %v4299 = vld [vmem:[#allocation3 + $0x800] sm:$0xff]
    %v4300 = vld [vmem:[#allocation3 + $0x808] sm:$0xff]
    %v4301 = vld [vmem:[#allocation3 + $0x810] sm:$0xff]
    %v4302 = vld [vmem:[#allocation3 + $0x818] sm:$0xff]
    %v4303 = vld [vmem:[#allocation3 + $0x820] sm:$0xff]
    %v4304 = vld [vmem:[#allocation3 + $0x828] sm:$0xff]
    %v4305 = vld [vmem:[#allocation3 + $0x830] sm:$0xff]
    %v4306 = vld [vmem:[#allocation3 + $0x838] sm:$0xff]
    %v4307 = vld [vmem:[#allocation3 + $0x840] sm:$0xff]
    %v4308 = vld [vmem:[#allocation3 + $0x848] sm:$0xff]
    %v4309 = vld [vmem:[#allocation3 + $0x850] sm:$0xff]
    %v4310 = vld [vmem:[#allocation3 + $0x858] sm:$0xff]
    %v4311 = vld [vmem:[#allocation3 + $0x860] sm:$0xff]
    %v4312 = vld [vmem:[#allocation3 + $0x868] sm:$0xff]
    %v4313 = vld [vmem:[#allocation3 + $0x870] sm:$0xff]
    %v4314 = vld [vmem:[#allocation3 + $0x878] sm:$0xff]
    %v4315 = vld [vmem:[#allocation3 + $0x880] sm:$0xff]
    %v4316 = vld [vmem:[#allocation3 + $0x888] sm:$0xff]
    %v4317 = vld [vmem:[#allocation3 + $0x890] sm:$0xff]
    %v4318 = vld [vmem:[#allocation3 + $0x898] sm:$0xff]
    %v4319 = vld [vmem:[#allocation3 + $0x8a0] sm:$0xff]
    %v4320 = vld [vmem:[#allocation3 + $0x8a8] sm:$0xff]
    %v4321 = vld [vmem:[#allocation3 + $0x8b0] sm:$0xff]
    %v4322 = vld [vmem:[#allocation3 + $0x8b8] sm:$0xff]
    %v4323 = vld [vmem:[#allocation3 + $0x8c0] sm:$0xff]
    %v4324 = vld [vmem:[#allocation3 + $0x8c8] sm:$0xff]
    %v4325 = vld [vmem:[#allocation3 + $0x8d0] sm:$0xff]
    %v4326 = vld [vmem:[#allocation3 + $0x8d8] sm:$0xff]
    %v4327 = vld [vmem:[#allocation3 + $0x8e0] sm:$0xff]
    %v4328 = vld [vmem:[#allocation3 + $0x8e8] sm:$0xff]
    %v4329 = vld [vmem:[#allocation3 + $0x8f0] sm:$0xff]
    %v4330 = vld [vmem:[#allocation3 + $0x8f8] sm:$0xff]
    %v4331 = vld [vmem:[#allocation3 + $0x900] sm:$0xff]
    %v4332 = vld [vmem:[#allocation3 + $0x908] sm:$0xff]
    %v4333 = vld [vmem:[#allocation3 + $0x910] sm:$0xff]
    %v4334 = vld [vmem:[#allocation3 + $0x918] sm:$0xff]
    %v4335 = vld [vmem:[#allocation3 + $0x920] sm:$0xff]
    %v4336 = vld [vmem:[#allocation3 + $0x928] sm:$0xff]
    %v4337 = vld [vmem:[#allocation3 + $0x930] sm:$0xff]
    %v4338 = vld [vmem:[#allocation3 + $0x938] sm:$0xff]
    %v4339 = vld [vmem:[#allocation3 + $0x940] sm:$0xff]
    %v4340 = vld [vmem:[#allocation3 + $0x948] sm:$0xff]
    %v4341 = vld [vmem:[#allocation3 + $0x950] sm:$0xff]
    %v4342 = vld [vmem:[#allocation3 + $0x958] sm:$0xff]
    %v4343 = vld [vmem:[#allocation3 + $0x960] sm:$0xff]
    %v4344 = vld [vmem:[#allocation3 + $0x968] sm:$0xff]
    %v4345 = vld [vmem:[#allocation3 + $0x970] sm:$0xff]
    %v4346 = vld [vmem:[#allocation3 + $0x978] sm:$0xff]
    %v4347 = vld [vmem:[#allocation3 + $0x980] sm:$0xff]
    %v4348 = vld [vmem:[#allocation3 + $0x988] sm:$0xff]
    %v4349 = vld [vmem:[#allocation3 + $0x990] sm:$0xff]
    %v4350 = vld [vmem:[#allocation3 + $0x998] sm:$0xff]
    %v4351 = vld [vmem:[#allocation3 + $0x9a0] sm:$0xff]
    %v4352 = vld [vmem:[#allocation3 + $0x9a8] sm:$0xff]
    %v4353 = vld [vmem:[#allocation3 + $0x9b0] sm:$0xff]
    %v4354 = vld [vmem:[#allocation3 + $0x9b8] sm:$0xff]
    %v4355 = vld [vmem:[#allocation3 + $0x9c0] sm:$0xff]
    %v4356 = vld [vmem:[#allocation3 + $0x9c8] sm:$0xff]
    %v4357 = vld [vmem:[#allocation3 + $0x9d0] sm:$0xff]
    %v4358 = vld [vmem:[#allocation3 + $0x9d8] sm:$0xff]
    %v4359 = vld [vmem:[#allocation3 + $0x9e0] sm:$0xff]
    %v4360 = vld [vmem:[#allocation3 + $0x9e8] sm:$0xff]
    %v4361 = vld [vmem:[#allocation3 + $0x9f0] sm:$0xff]
    %v4362 = vld [vmem:[#allocation3 + $0x9f8] sm:$0xff]
    %v4363 = vld [vmem:[#allocation3 + $0xa00] sm:$0xff]
    %v4364 = vld [vmem:[#allocation3 + $0xa08] sm:$0xff]
    %v4365 = vld [vmem:[#allocation3 + $0xa10] sm:$0xff]
    %v4366 = vld [vmem:[#allocation3 + $0xa18] sm:$0xff]
    %v4367 = vld [vmem:[#allocation3 + $0xa20] sm:$0xff]
    %v4368 = vld [vmem:[#allocation3 + $0xa28] sm:$0xff]
    %v4369 = vld [vmem:[#allocation3 + $0xa30] sm:$0xff]
    %v4370 = vld [vmem:[#allocation3 + $0xa38] sm:$0xff]
    %v4371 = vld [vmem:[#allocation3 + $0xa40] sm:$0xff]
    %v4372 = vld [vmem:[#allocation3 + $0xa48] sm:$0xff]
    %v4373 = vld [vmem:[#allocation3 + $0xa50] sm:$0xff]
    %v4374 = vld [vmem:[#allocation3 + $0xa58] sm:$0xff]
    %v4375 = vld [vmem:[#allocation3 + $0xa60] sm:$0xff]
    %v4376 = vld [vmem:[#allocation3 + $0xa68] sm:$0xff]
    %v4377 = vld [vmem:[#allocation3 + $0xa70] sm:$0xff]
    %v4378 = vld [vmem:[#allocation3 + $0xa78] sm:$0xff]
    %v4379 = vld [vmem:[#allocation3 + $0xa80] sm:$0xff]
    %v4380 = vld [vmem:[#allocation3 + $0xa88] sm:$0xff]
    %v4381 = vld [vmem:[#allocation3 + $0xa90] sm:$0xff]
    %v4382 = vld [vmem:[#allocation3 + $0xa98] sm:$0xff]
    %v4383 = vld [vmem:[#allocation3 + $0xaa0] sm:$0xff]
    %v4384 = vld [vmem:[#allocation3 + $0xaa8] sm:$0xff]
    %v4385 = vld [vmem:[#allocation3 + $0xab0] sm:$0xff]
    %v4386 = vld [vmem:[#allocation3 + $0xab8] sm:$0xff]
    %v4387 = vld [vmem:[#allocation3 + $0xac0] sm:$0xff]
    %v4388 = vld [vmem:[#allocation3 + $0xac8] sm:$0xff]
    %v4389 = vld [vmem:[#allocation3 + $0xad0] sm:$0xff]
    %v4390 = vld [vmem:[#allocation3 + $0xad8] sm:$0xff]
    %v4391 = vld [vmem:[#allocation3 + $0xae0] sm:$0xff]
    %v4392 = vld [vmem:[#allocation3 + $0xae8] sm:$0xff]
    %v4393 = vld [vmem:[#allocation3 + $0xaf0] sm:$0xff]
    %v4394 = vld [vmem:[#allocation3 + $0xaf8] sm:$0xff]
    %v4395 = vld [vmem:[#allocation3 + $0xb00] sm:$0xff]
    %v4396 = vld [vmem:[#allocation3 + $0xb08] sm:$0xff]
    %v4397 = vld [vmem:[#allocation3 + $0xb10] sm:$0xff]
    %v4398 = vld [vmem:[#allocation3 + $0xb18] sm:$0xff]
    %v4399 = vld [vmem:[#allocation3 + $0xb20] sm:$0xff]
    %v4400 = vld [vmem:[#allocation3 + $0xb28] sm:$0xff]
    %v4401 = vld [vmem:[#allocation3 + $0xb30] sm:$0xff]
    %v4402 = vld [vmem:[#allocation3 + $0xb38] sm:$0xff]
    %v4403 = vld [vmem:[#allocation3 + $0xb40] sm:$0xff]
    %v4404 = vld [vmem:[#allocation3 + $0xb48] sm:$0xff]
    %v4405 = vld [vmem:[#allocation3 + $0xb50] sm:$0xff]
    %v4406 = vld [vmem:[#allocation3 + $0xb58] sm:$0xff]
    %v4407 = vld [vmem:[#allocation3 + $0xb60] sm:$0xff]
    %v4408 = vld [vmem:[#allocation3 + $0xb68] sm:$0xff]
    %v4409 = vld [vmem:[#allocation3 + $0xb70] sm:$0xff]
    %v4410 = vld [vmem:[#allocation3 + $0xb78] sm:$0xff]
    %v4411 = vld [vmem:[#allocation3 + $0xb80] sm:$0xff]
    %v4412 = vld [vmem:[#allocation3 + $0xb88] sm:$0xff]
    %v4413 = vld [vmem:[#allocation3 + $0xb90] sm:$0xff]
    %v4414 = vld [vmem:[#allocation3 + $0xb98] sm:$0xff]
    %v4415 = vld [vmem:[#allocation3 + $0xba0] sm:$0xff]
    %v4416 = vld [vmem:[#allocation3 + $0xba8] sm:$0xff]
    %v4417 = vld [vmem:[#allocation3 + $0xbb0] sm:$0xff]
    %v4418 = vld [vmem:[#allocation3 + $0xbb8] sm:$0xff]
    %v4419 = vld [vmem:[#allocation3 + $0xbc0] sm:$0xff]
    %v4420 = vld [vmem:[#allocation3 + $0xbc8] sm:$0xff]
    %v4421 = vld [vmem:[#allocation3 + $0xbd0] sm:$0xff]
    %v4422 = vld [vmem:[#allocation3 + $0xbd8] sm:$0xff]
    %v4423 = vld [vmem:[#allocation3 + $0xbe0] sm:$0xff]
    %v4424 = vld [vmem:[#allocation3 + $0xbe8] sm:$0xff]
    %v4425 = vld [vmem:[#allocation3 + $0xbf0] sm:$0xff]
    %v4426 = vld [vmem:[#allocation3 + $0xbf8] sm:$0xff]
    %v4427 = vld [vmem:[#allocation3 + $0xc00] sm:$0xff]
    %v4428 = vld [vmem:[#allocation3 + $0xc08] sm:$0xff]
    %v4429 = vld [vmem:[#allocation3 + $0xc10] sm:$0xff]
    %v4430 = vld [vmem:[#allocation3 + $0xc18] sm:$0xff]
    %v4431 = vld [vmem:[#allocation3 + $0xc20] sm:$0xff]
    %v4432 = vld [vmem:[#allocation3 + $0xc28] sm:$0xff]
    %v4433 = vld [vmem:[#allocation3 + $0xc30] sm:$0xff]
    %v4434 = vld [vmem:[#allocation3 + $0xc38] sm:$0xff]
    %v4435 = vld [vmem:[#allocation3 + $0xc40] sm:$0xff]
    %v4436 = vld [vmem:[#allocation3 + $0xc48] sm:$0xff]
    %v4437 = vld [vmem:[#allocation3 + $0xc50] sm:$0xff]
    %v4438 = vld [vmem:[#allocation3 + $0xc58] sm:$0xff]
    %v4439 = vld [vmem:[#allocation3 + $0xc60] sm:$0xff]
    %v4440 = vld [vmem:[#allocation3 + $0xc68] sm:$0xff]
    %v4441 = vld [vmem:[#allocation3 + $0xc70] sm:$0xff]
    %v4442 = vld [vmem:[#allocation3 + $0xc78] sm:$0xff]
    %v4443 = vld [vmem:[#allocation3 + $0xc80] sm:$0xff]
    %v4444 = vld [vmem:[#allocation3 + $0xc88] sm:$0xff]
    %v4445 = vld [vmem:[#allocation3 + $0xc90] sm:$0xff]
    %v4446 = vld [vmem:[#allocation3 + $0xc98] sm:$0xff]
    %v4447 = vld [vmem:[#allocation3 + $0xca0] sm:$0xff]
    %v4448 = vld [vmem:[#allocation3 + $0xca8] sm:$0xff]
    %v4449 = vld [vmem:[#allocation3 + $0xcb0] sm:$0xff]
    %v4450 = vld [vmem:[#allocation3 + $0xcb8] sm:$0xff]
    %v4451 = vld [vmem:[#allocation3 + $0xcc0] sm:$0xff]
    %v4452 = vld [vmem:[#allocation3 + $0xcc8] sm:$0xff]
    %v4453 = vld [vmem:[#allocation3 + $0xcd0] sm:$0xff]
    %v4454 = vld [vmem:[#allocation3 + $0xcd8] sm:$0xff]
    %v4455 = vld [vmem:[#allocation3 + $0xce0] sm:$0xff]
    %v4456 = vld [vmem:[#allocation3 + $0xce8] sm:$0xff]
    %v4457 = vld [vmem:[#allocation3 + $0xcf0] sm:$0xff]
    %v4458 = vld [vmem:[#allocation3 + $0xcf8] sm:$0xff]
    %v4459 = vld [vmem:[#allocation3 + $0xd00] sm:$0xff]
    %v4460 = vld [vmem:[#allocation3 + $0xd08] sm:$0xff]
    %v4461 = vld [vmem:[#allocation3 + $0xd10] sm:$0xff]
    %v4462 = vld [vmem:[#allocation3 + $0xd18] sm:$0xff]
    %v4463 = vld [vmem:[#allocation3 + $0xd20] sm:$0xff]
    %v4464 = vld [vmem:[#allocation3 + $0xd28] sm:$0xff]
    %v4465 = vld [vmem:[#allocation3 + $0xd30] sm:$0xff]
    %v4466 = vld [vmem:[#allocation3 + $0xd38] sm:$0xff]
    %v4467 = vld [vmem:[#allocation3 + $0xd40] sm:$0xff]
    %v4468 = vld [vmem:[#allocation3 + $0xd48] sm:$0xff]
    %v4469 = vld [vmem:[#allocation3 + $0xd50] sm:$0xff]
    %v4470 = vld [vmem:[#allocation3 + $0xd58] sm:$0xff]
    %v4471 = vld [vmem:[#allocation3 + $0xd60] sm:$0xff]
    %v4472 = vld [vmem:[#allocation3 + $0xd68] sm:$0xff]
    %v4473 = vld [vmem:[#allocation3 + $0xd70] sm:$0xff]
    %v4474 = vld [vmem:[#allocation3 + $0xd78] sm:$0xff]
    %v4475 = vld [vmem:[#allocation3 + $0xd80] sm:$0xff]
    %v4476 = vld [vmem:[#allocation3 + $0xd88] sm:$0xff]
    %v4477 = vld [vmem:[#allocation3 + $0xd90] sm:$0xff]
    %v4478 = vld [vmem:[#allocation3 + $0xd98] sm:$0xff]
    %v4479 = vld [vmem:[#allocation3 + $0xda0] sm:$0xff]
    %v4480 = vld [vmem:[#allocation3 + $0xda8] sm:$0xff]
    %v4481 = vld [vmem:[#allocation3 + $0xdb0] sm:$0xff]
    %v4482 = vld [vmem:[#allocation3 + $0xdb8] sm:$0xff]
    %v4483 = vld [vmem:[#allocation3 + $0xdc0] sm:$0xff]
    %v4484 = vld [vmem:[#allocation3 + $0xdc8] sm:$0xff]
    %v4485 = vld [vmem:[#allocation3 + $0xdd0] sm:$0xff]
    %v4486 = vld [vmem:[#allocation3 + $0xdd8] sm:$0xff]
    %v4487 = vld [vmem:[#allocation3 + $0xde0] sm:$0xff]
    %v4488 = vld [vmem:[#allocation3 + $0xde8] sm:$0xff]
    %v4489 = vld [vmem:[#allocation3 + $0xdf0] sm:$0xff]
    %v4490 = vld [vmem:[#allocation3 + $0xdf8] sm:$0xff]
    %v4491 = vld [vmem:[#allocation3 + $0xe00] sm:$0xff]
    %v4492 = vld [vmem:[#allocation3 + $0xe08] sm:$0xff]
    %v4493 = vld [vmem:[#allocation3 + $0xe10] sm:$0xff]
    %v4494 = vld [vmem:[#allocation3 + $0xe18] sm:$0xff]
    %v4495 = vld [vmem:[#allocation3 + $0xe20] sm:$0xff]
    %v4496 = vld [vmem:[#allocation3 + $0xe28] sm:$0xff]
    %v4497 = vld [vmem:[#allocation3 + $0xe30] sm:$0xff]
    %v4498 = vld [vmem:[#allocation3 + $0xe38] sm:$0xff]
    %v4499 = vld [vmem:[#allocation3 + $0xe40] sm:$0xff]
    %v4500 = vld [vmem:[#allocation3 + $0xe48] sm:$0xff]
    %v4501 = vld [vmem:[#allocation3 + $0xe50] sm:$0xff]
    %v4502 = vld [vmem:[#allocation3 + $0xe58] sm:$0xff]
    %v4503 = vld [vmem:[#allocation3 + $0xe60] sm:$0xff]
    %v4504 = vld [vmem:[#allocation3 + $0xe68] sm:$0xff]
    %v4505 = vld [vmem:[#allocation3 + $0xe70] sm:$0xff]
    %v4506 = vld [vmem:[#allocation3 + $0xe78] sm:$0xff]
    %v4507 = vld [vmem:[#allocation3 + $0xe80] sm:$0xff]
    %v4508 = vld [vmem:[#allocation3 + $0xe88] sm:$0xff]
    %v4509 = vld [vmem:[#allocation3 + $0xe90] sm:$0xff]
    %v4510 = vld [vmem:[#allocation3 + $0xe98] sm:$0xff]
    %v4511 = vld [vmem:[#allocation3 + $0xea0] sm:$0xff]
    %v4512 = vld [vmem:[#allocation3 + $0xea8] sm:$0xff]
    %v4513 = vld [vmem:[#allocation3 + $0xeb0] sm:$0xff]
    %v4514 = vld [vmem:[#allocation3 + $0xeb8] sm:$0xff]
    %v4515 = vld [vmem:[#allocation3 + $0xec0] sm:$0xff]
    %v4516 = vld [vmem:[#allocation3 + $0xec8] sm:$0xff]
    %v4517 = vld [vmem:[#allocation3 + $0xed0] sm:$0xff]
    %v4518 = vld [vmem:[#allocation3 + $0xed8] sm:$0xff]
    %v4519 = vld [vmem:[#allocation3 + $0xee0] sm:$0xff]
    %v4520 = vld [vmem:[#allocation3 + $0xee8] sm:$0xff]
    %v4521 = vld [vmem:[#allocation3 + $0xef0] sm:$0xff]
    %v4522 = vld [vmem:[#allocation3 + $0xef8] sm:$0xff]
    %v4523 = vld [vmem:[#allocation3 + $0xf00] sm:$0xff]
    %v4524 = vld [vmem:[#allocation3 + $0xf08] sm:$0xff]
    %v4525 = vld [vmem:[#allocation3 + $0xf10] sm:$0xff]
    %v4526 = vld [vmem:[#allocation3 + $0xf18] sm:$0xff]
    %v4527 = vld [vmem:[#allocation3 + $0xf20] sm:$0xff]
    %v4528 = vld [vmem:[#allocation3 + $0xf28] sm:$0xff]
    %v4529 = vld [vmem:[#allocation3 + $0xf30] sm:$0xff]
    %v4530 = vld [vmem:[#allocation3 + $0xf38] sm:$0xff]
    %v4531 = vld [vmem:[#allocation3 + $0xf40] sm:$0xff]
    %v4532 = vld [vmem:[#allocation3 + $0xf48] sm:$0xff]
    %v4533 = vld [vmem:[#allocation3 + $0xf50] sm:$0xff]
    %v4534 = vld [vmem:[#allocation3 + $0xf58] sm:$0xff]
    %v4535 = vld [vmem:[#allocation3 + $0xf60] sm:$0xff]
    %v4536 = vld [vmem:[#allocation3 + $0xf68] sm:$0xff]
    %v4537 = vld [vmem:[#allocation3 + $0xf70] sm:$0xff]
    %v4538 = vld [vmem:[#allocation3 + $0xf78] sm:$0xff]
    %v4539 = vld [vmem:[#allocation3 + $0xf80] sm:$0xff]
    %v4540 = vld [vmem:[#allocation3 + $0xf88] sm:$0xff]
    %v4541 = vld [vmem:[#allocation3 + $0xf90] sm:$0xff]
    %v4542 = vld [vmem:[#allocation3 + $0xf98] sm:$0xff]
    %v4543 = vld [vmem:[#allocation3 + $0xfa0] sm:$0xff]
    %v4544 = vld [vmem:[#allocation3 + $0xfa8] sm:$0xff]
    %v4545 = vld [vmem:[#allocation3 + $0xfb0] sm:$0xff]
    %v4546 = vld [vmem:[#allocation3 + $0xfb8] sm:$0xff]
    %v4547 = vld [vmem:[#allocation3 + $0xfc0] sm:$0xff]
    %v4548 = vld [vmem:[#allocation3 + $0xfc8] sm:$0xff]
    %v4549 = vld [vmem:[#allocation3 + $0xfd0] sm:$0xff]
    %v4550 = vld [vmem:[#allocation3 + $0xfd8] sm:$0xff]
    %v4551 = vld [vmem:[#allocation3 + $0xfe0] sm:$0xff]
    %v4552 = vld [vmem:[#allocation3 + $0xfe8] sm:$0xff]
    %v4553 = vld [vmem:[#allocation3 + $0xff0] sm:$0xff]
    %v4554 = vld [vmem:[#allocation3 + $0xff8] sm:$0xff]
    %v4555 = vld [vmem:[#allocation23] sm:$0xff]
    %v4557 = vlaneseq
    %v4558 = vshrl.u32 %v4557, 7
    %v4559 = vsub.s32 0, %v4558
    %v4560 = vrot.slane %v4555, %v4559
    %v4561 = vlaneseq
    %v4562 = vshrl.u32 %v4561, 7
    %v4563 = vsub.s32 1, %v4562
    %v4564 = vrot.slane %v4555, %v4563
    %v4565 = vlaneseq
    %v4566 = vshrl.u32 %v4565, 7
    %v4567 = vsub.s32 2, %v4566
    %v4568 = vrot.slane %v4555, %v4567
    %v4569 = vlaneseq
    %v4570 = vshrl.u32 %v4569, 7
    %v4571 = vsub.s32 3, %v4570
    %v4572 = vrot.slane %v4555, %v4571
    %v4573 = vlaneseq
    %v4574 = vshrl.u32 %v4573, 7
    %v4575 = vsub.s32 4, %v4574
    %v4576 = vrot.slane %v4555, %v4575
    %v4577 = vlaneseq
    %v4578 = vshrl.u32 %v4577, 7
    %v4579 = vsub.s32 5, %v4578
    %v4580 = vrot.slane %v4555, %v4579
    %v4581 = vlaneseq
    %v4582 = vshrl.u32 %v4581, 7
    %v4583 = vsub.s32 6, %v4582
    %v4584 = vrot.slane %v4555, %v4583
    %v4585 = vlaneseq
    %v4586 = vshrl.u32 %v4585, 7
    %v4587 = vsub.s32 7, %v4586
    %v4588 = vrot.slane %v4555, %v4587
    %4597 = vmatprep.subr.bf16.mxu0 %v4044
    %4598 = vmatpush1.bf16.msra.mxu0 %v4043
    %4599 = vmatprep.subr.bf16.mxu0 %v4052
    %4600 = vmatpush1.bf16.msra.mxu0 %v4051
    %4601 = vmatprep.subr.bf16.mxu0 %v4060
    %4602 = vmatpush1.bf16.msra.mxu0 %v4059
    %4603 = vmatprep.subr.bf16.mxu0 %v4068
    %4604 = vmatpush1.bf16.msra.mxu0 %v4067
    %4605 = vmatprep.subr.bf16.mxu0 %v4076
    %4606 = vmatpush1.bf16.msra.mxu0 %v4075
    %4607 = vmatprep.subr.bf16.mxu0 %v4084
    %4608 = vmatpush1.bf16.msra.mxu0 %v4083
    %4609 = vmatprep.subr.bf16.mxu0 %v4092
    %4610 = vmatpush1.bf16.msra.mxu0 %v4091
    %4611 = vmatprep.subr.bf16.mxu0 %v4100
    %4612 = vmatpush1.bf16.msra.mxu0 %v4099
    %4613 = vmatprep.subr.bf16.mxu0 %v4108
    %4614 = vmatpush1.bf16.msra.mxu0 %v4107
    %4615 = vmatprep.subr.bf16.mxu0 %v4116
    %4616 = vmatpush1.bf16.msra.mxu0 %v4115
    %4617 = vmatprep.subr.bf16.mxu0 %v4124
    %4618 = vmatpush1.bf16.msra.mxu0 %v4123
    %4619 = vmatprep.subr.bf16.mxu0 %v4132
    %4620 = vmatpush1.bf16.msra.mxu0 %v4131
    %4621 = vmatprep.subr.bf16.mxu0 %v4140
    %4622 = vmatpush1.bf16.msra.mxu0 %v4139
    %4623 = vmatprep.subr.bf16.mxu0 %v4148
    %4624 = vmatpush1.bf16.msra.mxu0 %v4147
    %4625 = vmatprep.subr.bf16.mxu0 %v4156
    %4626 = vmatpush1.bf16.msra.mxu0 %v4155
    %4627 = vmatprep.subr.bf16.mxu0 %v4164
    %4628 = vmatpush1.bf16.msra.mxu0 %v4163
    %4629 = vmatprep.mubr.bf16.mxu0 %v4032
    %4630 = vmatmul.mubr.bf16.gmra.mrb[0].mxu0 %v4031
    %v4631 = vpop.f32.mrb[0].mxu0
    %v4632 = vadd.f32 %v4560, %v4631
    %v4633 = vpop.f32.mrb[0].mxu0
    %v4634 = vadd.f32 %v4564, %v4633
    %v4635 = vpop.f32.mrb[0].mxu0
    %v4636 = vpop.f32.mrb[0].mxu0
    %4637 = vdwg.mxu0
    %4638 = vmatprep.subr.bf16.mxu0 %v4172
    %4639 = vmatpush1.bf16.msra.mxu0 %v4171
    %4640 = vmatprep.subr.bf16.mxu0 %v4180
    %4641 = vmatpush1.bf16.msra.mxu0 %v4179
    %4642 = vmatprep.subr.bf16.mxu0 %v4188
    %4643 = vmatpush1.bf16.msra.mxu0 %v4187
    %4644 = vmatprep.subr.bf16.mxu0 %v4196
    %4645 = vmatpush1.bf16.msra.mxu0 %v4195
    %4646 = vmatprep.subr.bf16.mxu0 %v4204
    %4647 = vmatpush1.bf16.msra.mxu0 %v4203
    %4648 = vmatprep.subr.bf16.mxu0 %v4212
    %4649 = vmatpush1.bf16.msra.mxu0 %v4211
    %4650 = vmatprep.subr.bf16.mxu0 %v4220
    %4651 = vmatpush1.bf16.msra.mxu0 %v4219
    %4652 = vmatprep.subr.bf16.mxu0 %v4228
    %4653 = vmatpush1.bf16.msra.mxu0 %v4227
    %4654 = vmatprep.subr.bf16.mxu0 %v4236
    %4655 = vmatpush1.bf16.msra.mxu0 %v4235
    %4656 = vmatprep.subr.bf16.mxu0 %v4244
    %4657 = vmatpush1.bf16.msra.mxu0 %v4243
    %4658 = vmatprep.subr.bf16.mxu0 %v4252
    %4659 = vmatpush1.bf16.msra.mxu0 %v4251
    %4660 = vmatprep.subr.bf16.mxu0 %v4260
    %4661 = vmatpush1.bf16.msra.mxu0 %v4259
    %4662 = vmatprep.subr.bf16.mxu0 %v4268
    %4663 = vmatpush1.bf16.msra.mxu0 %v4267
    %4664 = vmatprep.subr.bf16.mxu0 %v4276
    %4665 = vmatpush1.bf16.msra.mxu0 %v4275
    %4666 = vmatprep.subr.bf16.mxu0 %v4284
    %4667 = vmatpush1.bf16.msra.mxu0 %v4283
    %4668 = vmatprep.subr.bf16.mxu0 %v4292
    %4669 = vmatpush1.bf16.msra.mxu0 %v4291
    %4670 = vmatprep.mubr.bf16.mxu0 %v4034
    %4671 = vmatmul.mubr.bf16.gmra.mrb[0].mxu0 %v4033
    %v4672 = vpop.f32.mrb[0].mxu0
    %v4673 = vadd.f32 %v4632, %v4672
    %v4674 = vpop.f32.mrb[0].mxu0
    %v4675 = vadd.f32 %v4634, %v4674
    %v4676 = vpop.f32.mrb[0].mxu0
    %v4677 = vpop.f32.mrb[0].mxu0
    %4678 = vdwg.mxu0
    %4679 = vmatprep.subr.bf16.mxu0 %v4300
    %4680 = vmatpush1.bf16.msra.mxu0 %v4299
    %4681 = vmatprep.subr.bf16.mxu0 %v4308
    %4682 = vmatpush1.bf16.msra.mxu0 %v4307
    %4683 = vmatprep.subr.bf16.mxu0 %v4316
    %4684 = vmatpush1.bf16.msra.mxu0 %v4315
    %4685 = vmatprep.subr.bf16.mxu0 %v4324
    %4686 = vmatpush1.bf16.msra.mxu0 %v4323
    %4687 = vmatprep.subr.bf16.mxu0 %v4332
    %4688 = vmatpush1.bf16.msra.mxu0 %v4331
    %4689 = vmatprep.subr.bf16.mxu0 %v4340
    %4690 = vmatpush1.bf16.msra.mxu0 %v4339
    %4691 = vmatprep.subr.bf16.mxu0 %v4348
    %4692 = vmatpush1.bf16.msra.mxu0 %v4347
    %4693 = vmatprep.subr.bf16.mxu0 %v4356
    %4694 = vmatpush1.bf16.msra.mxu0 %v4355
    %4695 = vmatprep.subr.bf16.mxu0 %v4364
    %4696 = vmatpush1.bf16.msra.mxu0 %v4363
    %4697 = vmatprep.subr.bf16.mxu0 %v4372
    %4698 = vmatpush1.bf16.msra.mxu0 %v4371
    %4699 = vmatprep.subr.bf16.mxu0 %v4380
    %4700 = vmatpush1.bf16.msra.mxu0 %v4379
    %4701 = vmatprep.subr.bf16.mxu0 %v4388
    %4702 = vmatpush1.bf16.msra.mxu0 %v4387
    %4703 = vmatprep.subr.bf16.mxu0 %v4396
    %4704 = vmatpush1.bf16.msra.mxu0 %v4395
    %4705 = vmatprep.subr.bf16.mxu0 %v4404
    %4706 = vmatpush1.bf16.msra.mxu0 %v4403
    %4707 = vmatprep.subr.bf16.mxu0 %v4412
    %4708 = vmatpush1.bf16.msra.mxu0 %v4411
    %4709 = vmatprep.subr.bf16.mxu0 %v4420
    %4710 = vmatpush1.bf16.msra.mxu0 %v4419
    %4711 = vmatprep.mubr.bf16.mxu0 %v4036
    %4712 = vmatmul.mubr.bf16.gmra.mrb[0].mxu0 %v4035
    %v4713 = vpop.f32.mrb[0].mxu0
    %v4714 = vadd.f32 %v4673, %v4713
    %v4715 = vpop.f32.mrb[0].mxu0
    %v4716 = vadd.f32 %v4675, %v4715
    %v4717 = vpop.f32.mrb[0].mxu0
    %v4718 = vpop.f32.mrb[0].mxu0
    %4719 = vdwg.mxu0
    %4720 = vmatprep.subr.bf16.mxu0 %v4428
    %4721 = vmatpush1.bf16.msra.mxu0 %v4427
    %4722 = vmatprep.subr.bf16.mxu0 %v4436
    %4723 = vmatpush1.bf16.msra.mxu0 %v4435
    %4724 = vmatprep.subr.bf16.mxu0 %v4444
    %4725 = vmatpush1.bf16.msra.mxu0 %v4443
    %4726 = vmatprep.subr.bf16.mxu0 %v4452
    %4727 = vmatpush1.bf16.msra.mxu0 %v4451
    %4728 = vmatprep.subr.bf16.mxu0 %v4460
    %4729 = vmatpush1.bf16.msra.mxu0 %v4459
    %4730 = vmatprep.subr.bf16.mxu0 %v4468
    %4731 = vmatpush1.bf16.msra.mxu0 %v4467
    %4732 = vmatprep.subr.bf16.mxu0 %v4476
    %4733 = vmatpush1.bf16.msra.mxu0 %v4475
    %4734 = vmatprep.subr.bf16.mxu0 %v4484
    %4735 = vmatpush1.bf16.msra.mxu0 %v4483
    %4736 = vmatprep.subr.bf16.mxu0 %v4492
    %4737 = vmatpush1.bf16.msra.mxu0 %v4491
    %4738 = vmatprep.subr.bf16.mxu0 %v4500
    %4739 = vmatpush1.bf16.msra.mxu0 %v4499
    %4740 = vmatprep.subr.bf16.mxu0 %v4508
    %4741 = vmatpush1.bf16.msra.mxu0 %v4507
    %4742 = vmatprep.subr.bf16.mxu0 %v4516
    %4743 = vmatpush1.bf16.msra.mxu0 %v4515
    %4744 = vmatprep.subr.bf16.mxu0 %v4524
    %4745 = vmatpush1.bf16.msra.mxu0 %v4523
    %4746 = vmatprep.subr.bf16.mxu0 %v4532
    %4747 = vmatpush1.bf16.msra.mxu0 %v4531
    %4748 = vmatprep.subr.bf16.mxu0 %v4540
    %4749 = vmatpush1.bf16.msra.mxu0 %v4539
    %4750 = vmatprep.subr.bf16.mxu0 %v4548
    %4751 = vmatpush1.bf16.msra.mxu0 %v4547
    %4752 = vmatprep.mubr.bf16.mxu0 %v4038
    %4753 = vmatmul.mubr.bf16.gmra.mrb[0].mxu0 %v4037
    %v4754 = vpop.f32.mrb[0].mxu0
    %v4755 = vadd.f32 %v4714, %v4754
    %v4756 = vpop.f32.mrb[0].mxu0
    %v4757 = vadd.f32 %v4716, %v4756
    %v4758 = vpop.f32.mrb[0].mxu0
    %v4759 = vpop.f32.mrb[0].mxu0
    %4760 = vdwg.mxu0
    %4761 = vmatprep.subr.bf16.mxu0 %v4046
    %4762 = vmatpush1.bf16.msra.mxu0 %v4045
    %4763 = vmatprep.subr.bf16.mxu0 %v4054
    %4764 = vmatpush1.bf16.msra.mxu0 %v4053
    %4765 = vmatprep.subr.bf16.mxu0 %v4062
    %4766 = vmatpush1.bf16.msra.mxu0 %v4061
    %4767 = vmatprep.subr.bf16.mxu0 %v4070
    %4768 = vmatpush1.bf16.msra.mxu0 %v4069
    %4769 = vmatprep.subr.bf16.mxu0 %v4078
    %4770 = vmatpush1.bf16.msra.mxu0 %v4077
    %4771 = vmatprep.subr.bf16.mxu0 %v4086
    %4772 = vmatpush1.bf16.msra.mxu0 %v4085
    %4773 = vmatprep.subr.bf16.mxu0 %v4094
    %4774 = vmatpush1.bf16.msra.mxu0 %v4093
    %4775 = vmatprep.subr.bf16.mxu0 %v4102
    %4776 = vmatpush1.bf16.msra.mxu0 %v4101
    %4777 = vmatprep.subr.bf16.mxu0 %v4110
    %4778 = vmatpush1.bf16.msra.mxu0 %v4109
    %4779 = vmatprep.subr.bf16.mxu0 %v4118
    %4780 = vmatpush1.bf16.msra.mxu0 %v4117
    %4781 = vmatprep.subr.bf16.mxu0 %v4126
    %4782 = vmatpush1.bf16.msra.mxu0 %v4125
    %4783 = vmatprep.subr.bf16.mxu0 %v4134
    %4784 = vmatpush1.bf16.msra.mxu0 %v4133
    %4785 = vmatprep.subr.bf16.mxu0 %v4142
    %4786 = vmatpush1.bf16.msra.mxu0 %v4141
    %4787 = vmatprep.subr.bf16.mxu0 %v4150
    %4788 = vmatpush1.bf16.msra.mxu0 %v4149
    %4789 = vmatprep.subr.bf16.mxu0 %v4158
    %4790 = vmatpush1.bf16.msra.mxu0 %v4157
    %4791 = vmatprep.subr.bf16.mxu0 %v4166
    %4792 = vmatpush1.bf16.msra.mxu0 %v4165
    %4793 = vmatprep.mubr.bf16.mxu0 %v4032
    %4794 = vmatmul.mubr.bf16.gmra.mrb[0].mxu0 %v4031
    %v4795 = vpop.f32.mrb[0].mxu0
    %v4796 = vadd.f32 %v4568, %v4795
    %v4797 = vpop.f32.mrb[0].mxu0
    %v4798 = vadd.f32 %v4572, %v4797
    %v4799 = vpop.f32.mrb[0].mxu0
    %v4800 = vpop.f32.mrb[0].mxu0
    %4801 = vdwg.mxu0
    %4802 = vmatprep.subr.bf16.mxu0 %v4174
    %4803 = vmatpush1.bf16.msra.mxu0 %v4173
    %4804 = vmatprep.subr.bf16.mxu0 %v4182
    %4805 = vmatpush1.bf16.msra.mxu0 %v4181
    %4806 = vmatprep.subr.bf16.mxu0 %v4190
    %4807 = vmatpush1.bf16.msra.mxu0 %v4189
    %4808 = vmatprep.subr.bf16.mxu0 %v4198
    %4809 = vmatpush1.bf16.msra.mxu0 %v4197
    %4810 = vmatprep.subr.bf16.mxu0 %v4206
    %4811 = vmatpush1.bf16.msra.mxu0 %v4205
    %4812 = vmatprep.subr.bf16.mxu0 %v4214
    %4813 = vmatpush1.bf16.msra.mxu0 %v4213
    %4814 = vmatprep.subr.bf16.mxu0 %v4222
    %4815 = vmatpush1.bf16.msra.mxu0 %v4221
    %4816 = vmatprep.subr.bf16.mxu0 %v4230
    %4817 = vmatpush1.bf16.msra.mxu0 %v4229
    %4818 = vmatprep.subr.bf16.mxu0 %v4238
    %4819 = vmatpush1.bf16.msra.mxu0 %v4237
    %4820 = vmatprep.subr.bf16.mxu0 %v4246
    %4821 = vmatpush1.bf16.msra.mxu0 %v4245
    %4822 = vmatprep.subr.bf16.mxu0 %v4254
    %4823 = vmatpush1.bf16.msra.mxu0 %v4253
    %4824 = vmatprep.subr.bf16.mxu0 %v4262
    %4825 = vmatpush1.bf16.msra.mxu0 %v4261
    %4826 = vmatprep.subr.bf16.mxu0 %v4270
    %4827 = vmatpush1.bf16.msra.mxu0 %v4269
    %4828 = vmatprep.subr.bf16.mxu0 %v4278
    %4829 = vmatpush1.bf16.msra.mxu0 %v4277
    %4830 = vmatprep.subr.bf16.mxu0 %v4286
    %4831 = vmatpush1.bf16.msra.mxu0 %v4285
    %4832 = vmatprep.subr.bf16.mxu0 %v4294
    %4833 = vmatpush1.bf16.msra.mxu0 %v4293
    %4834 = vmatprep.mubr.bf16.mxu0 %v4034
    %4835 = vmatmul.mubr.bf16.gmra.mrb[0].mxu0 %v4033
    %v4836 = vpop.f32.mrb[0].mxu0
    %v4837 = vadd.f32 %v4796, %v4836
    %v4838 = vpop.f32.mrb[0].mxu0
    %v4839 = vadd.f32 %v4798, %v4838
    %v4840 = vpop.f32.mrb[0].mxu0
    %v4841 = vpop.f32.mrb[0].mxu0
    %4842 = vdwg.mxu0
    %4843 = vmatprep.subr.bf16.mxu0 %v4302
    %4844 = vmatpush1.bf16.msra.mxu0 %v4301
    %4845 = vmatprep.subr.bf16.mxu0 %v4310
    %4846 = vmatpush1.bf16.msra.mxu0 %v4309
    %4847 = vmatprep.subr.bf16.mxu0 %v4318
    %4848 = vmatpush1.bf16.msra.mxu0 %v4317
    %4849 = vmatprep.subr.bf16.mxu0 %v4326
    %4850 = vmatpush1.bf16.msra.mxu0 %v4325
    %4851 = vmatprep.subr.bf16.mxu0 %v4334
    %4852 = vmatpush1.bf16.msra.mxu0 %v4333
    %4853 = vmatprep.subr.bf16.mxu0 %v4342
    %4854 = vmatpush1.bf16.msra.mxu0 %v4341
    %4855 = vmatprep.subr.bf16.mxu0 %v4350
    %4856 = vmatpush1.bf16.msra.mxu0 %v4349
    %4857 = vmatprep.subr.bf16.mxu0 %v4358
    %4858 = vmatpush1.bf16.msra.mxu0 %v4357
    %4859 = vmatprep.subr.bf16.mxu0 %v4366
    %4860 = vmatpush1.bf16.msra.mxu0 %v4365
    %4861 = vmatprep.subr.bf16.mxu0 %v4374
    %4862 = vmatpush1.bf16.msra.mxu0 %v4373
    %4863 = vmatprep.subr.bf16.mxu0 %v4382
    %4864 = vmatpush1.bf16.msra.mxu0 %v4381
    %4865 = vmatprep.subr.bf16.mxu0 %v4390
    %4866 = vmatpush1.bf16.msra.mxu0 %v4389
    %4867 = vmatprep.subr.bf16.mxu0 %v4398
    %4868 = vmatpush1.bf16.msra.mxu0 %v4397
    %4869 = vmatprep.subr.bf16.mxu0 %v4406
    %4870 = vmatpush1.bf16.msra.mxu0 %v4405
    %4871 = vmatprep.subr.bf16.mxu0 %v4414
    %4872 = vmatpush1.bf16.msra.mxu0 %v4413
    %4873 = vmatprep.subr.bf16.mxu0 %v4422
    %4874 = vmatpush1.bf16.msra.mxu0 %v4421
    %4875 = vmatprep.mubr.bf16.mxu0 %v4036
    %4876 = vmatmul.mubr.bf16.gmra.mrb[0].mxu0 %v4035
    %v4877 = vpop.f32.mrb[0].mxu0
    %v4878 = vadd.f32 %v4837, %v4877
    %v4879 = vpop.f32.mrb[0].mxu0
    %v4880 = vadd.f32 %v4839, %v4879
    %v4881 = vpop.f32.mrb[0].mxu0
    %v4882 = vpop.f32.mrb[0].mxu0
    %4883 = vdwg.mxu0
    %4884 = vmatprep.subr.bf16.mxu0 %v4430
    %4885 = vmatpush1.bf16.msra.mxu0 %v4429
    %4886 = vmatprep.subr.bf16.mxu0 %v4438
    %4887 = vmatpush1.bf16.msra.mxu0 %v4437
    %4888 = vmatprep.subr.bf16.mxu0 %v4446
    %4889 = vmatpush1.bf16.msra.mxu0 %v4445
    %4890 = vmatprep.subr.bf16.mxu0 %v4454
    %4891 = vmatpush1.bf16.msra.mxu0 %v4453
    %4892 = vmatprep.subr.bf16.mxu0 %v4462
    %4893 = vmatpush1.bf16.msra.mxu0 %v4461
    %4894 = vmatprep.subr.bf16.mxu0 %v4470
    %4895 = vmatpush1.bf16.msra.mxu0 %v4469
    %4896 = vmatprep.subr.bf16.mxu0 %v4478
    %4897 = vmatpush1.bf16.msra.mxu0 %v4477
    %4898 = vmatprep.subr.bf16.mxu0 %v4486
    %4899 = vmatpush1.bf16.msra.mxu0 %v4485
    %4900 = vmatprep.subr.bf16.mxu0 %v4494
    %4901 = vmatpush1.bf16.msra.mxu0 %v4493
    %4902 = vmatprep.subr.bf16.mxu0 %v4502
    %4903 = vmatpush1.bf16.msra.mxu0 %v4501
    %4904 = vmatprep.subr.bf16.mxu0 %v4510
    %4905 = vmatpush1.bf16.msra.mxu0 %v4509
    %4906 = vmatprep.subr.bf16.mxu0 %v4518
    %4907 = vmatpush1.bf16.msra.mxu0 %v4517
    %4908 = vmatprep.subr.bf16.mxu0 %v4526
    %4909 = vmatpush1.bf16.msra.mxu0 %v4525
    %4910 = vmatprep.subr.bf16.mxu0 %v4534
    %4911 = vmatpush1.bf16.msra.mxu0 %v4533
    %4912 = vmatprep.subr.bf16.mxu0 %v4542
    %4913 = vmatpush1.bf16.msra.mxu0 %v4541
    %4914 = vmatprep.subr.bf16.mxu0 %v4550
    %4915 = vmatpush1.bf16.msra.mxu0 %v4549
    %4916 = vmatprep.mubr.bf16.mxu0 %v4038
    %4917 = vmatmul.mubr.bf16.gmra.mrb[0].mxu0 %v4037
    %v4918 = vpop.f32.mrb[0].mxu0
    %v4919 = vadd.f32 %v4878, %v4918
    %v4920 = vpop.f32.mrb[0].mxu0
    %v4921 = vadd.f32 %v4880, %v4920
    %v4922 = vpop.f32.mrb[0].mxu0
    %v4923 = vpop.f32.mrb[0].mxu0
    %4924 = vdwg.mxu0
    %4925 = vmatprep.subr.bf16.mxu0 %v4048
    %4926 = vmatpush1.bf16.msra.mxu0 %v4047
    %4927 = vmatprep.subr.bf16.mxu0 %v4056
    %4928 = vmatpush1.bf16.msra.mxu0 %v4055
    %4929 = vmatprep.subr.bf16.mxu0 %v4064
    %4930 = vmatpush1.bf16.msra.mxu0 %v4063
    %4931 = vmatprep.subr.bf16.mxu0 %v4072
    %4932 = vmatpush1.bf16.msra.mxu0 %v4071
    %4933 = vmatprep.subr.bf16.mxu0 %v4080
    %4934 = vmatpush1.bf16.msra.mxu0 %v4079
    %4935 = vmatprep.subr.bf16.mxu0 %v4088
    %4936 = vmatpush1.bf16.msra.mxu0 %v4087
    %4937 = vmatprep.subr.bf16.mxu0 %v4096
    %4938 = vmatpush1.bf16.msra.mxu0 %v4095
    %4939 = vmatprep.subr.bf16.mxu0 %v4104
    %4940 = vmatpush1.bf16.msra.mxu0 %v4103
    %4941 = vmatprep.subr.bf16.mxu0 %v4112
    %4942 = vmatpush1.bf16.msra.mxu0 %v4111
    %4943 = vmatprep.subr.bf16.mxu0 %v4120
    %4944 = vmatpush1.bf16.msra.mxu0 %v4119
    %4945 = vmatprep.subr.bf16.mxu0 %v4128
    %4946 = vmatpush1.bf16.msra.mxu0 %v4127
    %4947 = vmatprep.subr.bf16.mxu0 %v4136
    %4948 = vmatpush1.bf16.msra.mxu0 %v4135
    %4949 = vmatprep.subr.bf16.mxu0 %v4144
    %4950 = vmatpush1.bf16.msra.mxu0 %v4143
    %4951 = vmatprep.subr.bf16.mxu0 %v4152
    %4952 = vmatpush1.bf16.msra.mxu0 %v4151
    %4953 = vmatprep.subr.bf16.mxu0 %v4160
    %4954 = vmatpush1.bf16.msra.mxu0 %v4159
    %4955 = vmatprep.subr.bf16.mxu0 %v4168
    %4956 = vmatpush1.bf16.msra.mxu0 %v4167
    %4957 = vmatprep.mubr.bf16.mxu0 %v4032
    %4958 = vmatmul.mubr.bf16.gmra.mrb[0].mxu0 %v4031
    %v4959 = vpop.f32.mrb[0].mxu0
    %v4960 = vadd.f32 %v4576, %v4959
    %v4961 = vpop.f32.mrb[0].mxu0
    %v4962 = vadd.f32 %v4580, %v4961
    %v4963 = vpop.f32.mrb[0].mxu0
    %v4964 = vpop.f32.mrb[0].mxu0
    %4965 = vdwg.mxu0
    %4966 = vmatprep.subr.bf16.mxu0 %v4176
    %4967 = vmatpush1.bf16.msra.mxu0 %v4175
    %4968 = vmatprep.subr.bf16.mxu0 %v4184
    %4969 = vmatpush1.bf16.msra.mxu0 %v4183
    %4970 = vmatprep.subr.bf16.mxu0 %v4192
    %4971 = vmatpush1.bf16.msra.mxu0 %v4191
    %4972 = vmatprep.subr.bf16.mxu0 %v4200
    %4973 = vmatpush1.bf16.msra.mxu0 %v4199
    %4974 = vmatprep.subr.bf16.mxu0 %v4208
    %4975 = vmatpush1.bf16.msra.mxu0 %v4207
    %4976 = vmatprep.subr.bf16.mxu0 %v4216
    %4977 = vmatpush1.bf16.msra.mxu0 %v4215
    %4978 = vmatprep.subr.bf16.mxu0 %v4224
    %4979 = vmatpush1.bf16.msra.mxu0 %v4223
    %4980 = vmatprep.subr.bf16.mxu0 %v4232
    %4981 = vmatpush1.bf16.msra.mxu0 %v4231
    %4982 = vmatprep.subr.bf16.mxu0 %v4240
    %4983 = vmatpush1.bf16.msra.mxu0 %v4239
    %4984 = vmatprep.subr.bf16.mxu0 %v4248
    %4985 = vmatpush1.bf16.msra.mxu0 %v4247
    %4986 = vmatprep.subr.bf16.mxu0 %v4256
    %4987 = vmatpush1.bf16.msra.mxu0 %v4255
    %4988 = vmatprep.subr.bf16.mxu0 %v4264
    %4989 = vmatpush1.bf16.msra.mxu0 %v4263
    %4990 = vmatprep.subr.bf16.mxu0 %v4272
    %4991 = vmatpush1.bf16.msra.mxu0 %v4271
    %4992 = vmatprep.subr.bf16.mxu0 %v4280
    %4993 = vmatpush1.bf16.msra.mxu0 %v4279
    %4994 = vmatprep.subr.bf16.mxu0 %v4288
    %4995 = vmatpush1.bf16.msra.mxu0 %v4287
    %4996 = vmatprep.subr.bf16.mxu0 %v4296
    %4997 = vmatpush1.bf16.msra.mxu0 %v4295
    %4998 = vmatprep.mubr.bf16.mxu0 %v4034
    %4999 = vmatmul.mubr.bf16.gmra.mrb[0].mxu0 %v4033
    %v5000 = vpop.f32.mrb[0].mxu0
    %v5001 = vadd.f32 %v4960, %v5000
    %v5002 = vpop.f32.mrb[0].mxu0
    %v5003 = vadd.f32 %v4962, %v5002
    %v5004 = vpop.f32.mrb[0].mxu0
    %v5005 = vpop.f32.mrb[0].mxu0
    %5006 = vdwg.mxu0
    %5007 = vmatprep.subr.bf16.mxu0 %v4304
    %5008 = vmatpush1.bf16.msra.mxu0 %v4303
    %5009 = vmatprep.subr.bf16.mxu0 %v4312
    %5010 = vmatpush1.bf16.msra.mxu0 %v4311
    %5011 = vmatprep.subr.bf16.mxu0 %v4320
    %5012 = vmatpush1.bf16.msra.mxu0 %v4319
    %5013 = vmatprep.subr.bf16.mxu0 %v4328
    %5014 = vmatpush1.bf16.msra.mxu0 %v4327
    %5015 = vmatprep.subr.bf16.mxu0 %v4336
    %5016 = vmatpush1.bf16.msra.mxu0 %v4335
    %5017 = vmatprep.subr.bf16.mxu0 %v4344
    %5018 = vmatpush1.bf16.msra.mxu0 %v4343
    %5019 = vmatprep.subr.bf16.mxu0 %v4352
    %5020 = vmatpush1.bf16.msra.mxu0 %v4351
    %5021 = vmatprep.subr.bf16.mxu0 %v4360
    %5022 = vmatpush1.bf16.msra.mxu0 %v4359
    %5023 = vmatprep.subr.bf16.mxu0 %v4368
    %5024 = vmatpush1.bf16.msra.mxu0 %v4367
    %5025 = vmatprep.subr.bf16.mxu0 %v4376
    %5026 = vmatpush1.bf16.msra.mxu0 %v4375
    %5027 = vmatprep.subr.bf16.mxu0 %v4384
    %5028 = vmatpush1.bf16.msra.mxu0 %v4383
    %5029 = vmatprep.subr.bf16.mxu0 %v4392
    %5030 = vmatpush1.bf16.msra.mxu0 %v4391
    %5031 = vmatprep.subr.bf16.mxu0 %v4400
    %5032 = vmatpush1.bf16.msra.mxu0 %v4399
    %5033 = vmatprep.subr.bf16.mxu0 %v4408
    %5034 = vmatpush1.bf16.msra.mxu0 %v4407
    %5035 = vmatprep.subr.bf16.mxu0 %v4416
    %5036 = vmatpush1.bf16.msra.mxu0 %v4415
    %5037 = vmatprep.subr.bf16.mxu0 %v4424
    %5038 = vmatpush1.bf16.msra.mxu0 %v4423
    %5039 = vmatprep.mubr.bf16.mxu0 %v4036
    %5040 = vmatmul.mubr.bf16.gmra.mrb[0].mxu0 %v4035
    %v5041 = vpop.f32.mrb[0].mxu0
    %v5042 = vadd.f32 %v5001, %v5041
    %v5043 = vpop.f32.mrb[0].mxu0
    %v5044 = vadd.f32 %v5003, %v5043
    %v5045 = vpop.f32.mrb[0].mxu0
    %v5046 = vpop.f32.mrb[0].mxu0
    %5047 = vdwg.mxu0
    %5048 = vmatprep.subr.bf16.mxu0 %v4432
    %5049 = vmatpush1.bf16.msra.mxu0 %v4431
    %5050 = vmatprep.subr.bf16.mxu0 %v4440
    %5051 = vmatpush1.bf16.msra.mxu0 %v4439
    %5052 = vmatprep.subr.bf16.mxu0 %v4448
    %5053 = vmatpush1.bf16.msra.mxu0 %v4447
    %5054 = vmatprep.subr.bf16.mxu0 %v4456
    %5055 = vmatpush1.bf16.msra.mxu0 %v4455
    %5056 = vmatprep.subr.bf16.mxu0 %v4464
    %5057 = vmatpush1.bf16.msra.mxu0 %v4463
    %5058 = vmatprep.subr.bf16.mxu0 %v4472
    %5059 = vmatpush1.bf16.msra.mxu0 %v4471
    %5060 = vmatprep.subr.bf16.mxu0 %v4480
    %5061 = vmatpush1.bf16.msra.mxu0 %v4479
    %5062 = vmatprep.subr.bf16.mxu0 %v4488
    %5063 = vmatpush1.bf16.msra.mxu0 %v4487
    %5064 = vmatprep.subr.bf16.mxu0 %v4496
    %5065 = vmatpush1.bf16.msra.mxu0 %v4495
    %5066 = vmatprep.subr.bf16.mxu0 %v4504
    %5067 = vmatpush1.bf16.msra.mxu0 %v4503
    %5068 = vmatprep.subr.bf16.mxu0 %v4512
    %5069 = vmatpush1.bf16.msra.mxu0 %v4511
    %5070 = vmatprep.subr.bf16.mxu0 %v4520
    %5071 = vmatpush1.bf16.msra.mxu0 %v4519
    %5072 = vmatprep.subr.bf16.mxu0 %v4528
    %5073 = vmatpush1.bf16.msra.mxu0 %v4527
    %5074 = vmatprep.subr.bf16.mxu0 %v4536
    %5075 = vmatpush1.bf16.msra.mxu0 %v4535
    %5076 = vmatprep.subr.bf16.mxu0 %v4544
    %5077 = vmatpush1.bf16.msra.mxu0 %v4543
    %5078 = vmatprep.subr.bf16.mxu0 %v4552
    %5079 = vmatpush1.bf16.msra.mxu0 %v4551
    %5080 = vmatprep.mubr.bf16.mxu0 %v4038
    %5081 = vmatmul.mubr.bf16.gmra.mrb[0].mxu0 %v4037
    %v5082 = vpop.f32.mrb[0].mxu0
    %v5083 = vadd.f32 %v5042, %v5082
    %v5084 = vpop.f32.mrb[0].mxu0
    %v5085 = vadd.f32 %v5044, %v5084
    %v5086 = vpop.f32.mrb[0].mxu0
    %v5087 = vpop.f32.mrb[0].mxu0
    %5088 = vdwg.mxu0
    %5089 = vmatprep.subr.bf16.mxu0 %v4050
    %5090 = vmatpush1.bf16.msra.mxu0 %v4049
    %5091 = vmatprep.subr.bf16.mxu0 %v4058
    %5092 = vmatpush1.bf16.msra.mxu0 %v4057
    %5093 = vmatprep.subr.bf16.mxu0 %v4066
    %5094 = vmatpush1.bf16.msra.mxu0 %v4065
    %5095 = vmatprep.subr.bf16.mxu0 %v4074
    %5096 = vmatpush1.bf16.msra.mxu0 %v4073
    %5097 = vmatprep.subr.bf16.mxu0 %v4082
    %5098 = vmatpush1.bf16.msra.mxu0 %v4081
    %5099 = vmatprep.subr.bf16.mxu0 %v4090
    %5100 = vmatpush1.bf16.msra.mxu0 %v4089
    %5101 = vmatprep.subr.bf16.mxu0 %v4098
    %5102 = vmatpush1.bf16.msra.mxu0 %v4097
    %5103 = vmatprep.subr.bf16.mxu0 %v4106
    %5104 = vmatpush1.bf16.msra.mxu0 %v4105
    %5105 = vmatprep.subr.bf16.mxu0 %v4114
    %5106 = vmatpush1.bf16.msra.mxu0 %v4113
    %5107 = vmatprep.subr.bf16.mxu0 %v4122
    %5108 = vmatpush1.bf16.msra.mxu0 %v4121
    %5109 = vmatprep.subr.bf16.mxu0 %v4130
    %5110 = vmatpush1.bf16.msra.mxu0 %v4129
    %5111 = vmatprep.subr.bf16.mxu0 %v4138
    %5112 = vmatpush1.bf16.msra.mxu0 %v4137
    %5113 = vmatprep.subr.bf16.mxu0 %v4146
    %5114 = vmatpush1.bf16.msra.mxu0 %v4145
    %5115 = vmatprep.subr.bf16.mxu0 %v4154
    %5116 = vmatpush1.bf16.msra.mxu0 %v4153
    %5117 = vmatprep.subr.bf16.mxu0 %v4162
    %5118 = vmatpush1.bf16.msra.mxu0 %v4161
    %5119 = vmatprep.subr.bf16.mxu0 %v4170
    %5120 = vmatpush1.bf16.msra.mxu0 %v4169
    %5121 = vmatprep.mubr.bf16.mxu0 %v4032
    %5122 = vmatmul.mubr.bf16.gmra.mrb[0].mxu0 %v4031
    %v5123 = vpop.f32.mrb[0].mxu0
    %v5124 = vadd.f32 %v4584, %v5123
    %v5125 = vpop.f32.mrb[0].mxu0
    %v5126 = vadd.f32 %v4588, %v5125
    %v5127 = vpop.f32.mrb[0].mxu0
    %v5128 = vpop.f32.mrb[0].mxu0
    %5129 = vdwg.mxu0
    %5130 = vmatprep.subr.bf16.mxu0 %v4178
    %5131 = vmatpush1.bf16.msra.mxu0 %v4177
    %5132 = vmatprep.subr.bf16.mxu0 %v4186
    %5133 = vmatpush1.bf16.msra.mxu0 %v4185
    %5134 = vmatprep.subr.bf16.mxu0 %v4194
    %5135 = vmatpush1.bf16.msra.mxu0 %v4193
    %5136 = vmatprep.subr.bf16.mxu0 %v4202
    %5137 = vmatpush1.bf16.msra.mxu0 %v4201
    %5138 = vmatprep.subr.bf16.mxu0 %v4210
    %5139 = vmatpush1.bf16.msra.mxu0 %v4209
    %5140 = vmatprep.subr.bf16.mxu0 %v4218
    %5141 = vmatpush1.bf16.msra.mxu0 %v4217
    %5142 = vmatprep.subr.bf16.mxu0 %v4226
    %5143 = vmatpush1.bf16.msra.mxu0 %v4225
    %5144 = vmatprep.subr.bf16.mxu0 %v4234
    %5145 = vmatpush1.bf16.msra.mxu0 %v4233
    %5146 = vmatprep.subr.bf16.mxu0 %v4242
    %5147 = vmatpush1.bf16.msra.mxu0 %v4241
    %5148 = vmatprep.subr.bf16.mxu0 %v4250
    %5149 = vmatpush1.bf16.msra.mxu0 %v4249
    %5150 = vmatprep.subr.bf16.mxu0 %v4258
    %5151 = vmatpush1.bf16.msra.mxu0 %v4257
    %5152 = vmatprep.subr.bf16.mxu0 %v4266
    %5153 = vmatpush1.bf16.msra.mxu0 %v4265
    %5154 = vmatprep.subr.bf16.mxu0 %v4274
    %5155 = vmatpush1.bf16.msra.mxu0 %v4273
    %5156 = vmatprep.subr.bf16.mxu0 %v4282
    %5157 = vmatpush1.bf16.msra.mxu0 %v4281
    %5158 = vmatprep.subr.bf16.mxu0 %v4290
    %5159 = vmatpush1.bf16.msra.mxu0 %v4289
    %5160 = vmatprep.subr.bf16.mxu0 %v4298
    %5161 = vmatpush1.bf16.msra.mxu0 %v4297
    %5162 = vmatprep.mubr.bf16.mxu0 %v4034
    %5163 = vmatmul.mubr.bf16.gmra.mrb[0].mxu0 %v4033
    %v5164 = vpop.f32.mrb[0].mxu0
    %v5165 = vadd.f32 %v5124, %v5164
    %v5166 = vpop.f32.mrb[0].mxu0
    %v5167 = vadd.f32 %v5126, %v5166
    %v5168 = vpop.f32.mrb[0].mxu0
    %v5169 = vpop.f32.mrb[0].mxu0
    %5170 = vdwg.mxu0
    %5171 = vmatprep.subr.bf16.mxu0 %v4306
    %5172 = vmatpush1.bf16.msra.mxu0 %v4305
    %5173 = vmatprep.subr.bf16.mxu0 %v4314
    %5174 = vmatpush1.bf16.msra.mxu0 %v4313
    %5175 = vmatprep.subr.bf16.mxu0 %v4322
    %5176 = vmatpush1.bf16.msra.mxu0 %v4321
    %5177 = vmatprep.subr.bf16.mxu0 %v4330
    %5178 = vmatpush1.bf16.msra.mxu0 %v4329
    %5179 = vmatprep.subr.bf16.mxu0 %v4338
    %5180 = vmatpush1.bf16.msra.mxu0 %v4337
    %5181 = vmatprep.subr.bf16.mxu0 %v4346
    %5182 = vmatpush1.bf16.msra.mxu0 %v4345
    %5183 = vmatprep.subr.bf16.mxu0 %v4354
    %5184 = vmatpush1.bf16.msra.mxu0 %v4353
    %5185 = vmatprep.subr.bf16.mxu0 %v4362
    %5186 = vmatpush1.bf16.msra.mxu0 %v4361
    %5187 = vmatprep.subr.bf16.mxu0 %v4370
    %5188 = vmatpush1.bf16.msra.mxu0 %v4369
    %5189 = vmatprep.subr.bf16.mxu0 %v4378
    %5190 = vmatpush1.bf16.msra.mxu0 %v4377
    %5191 = vmatprep.subr.bf16.mxu0 %v4386
    %5192 = vmatpush1.bf16.msra.mxu0 %v4385
    %5193 = vmatprep.subr.bf16.mxu0 %v4394
    %5194 = vmatpush1.bf16.msra.mxu0 %v4393
    %5195 = vmatprep.subr.bf16.mxu0 %v4402
    %5196 = vmatpush1.bf16.msra.mxu0 %v4401
    %5197 = vmatprep.subr.bf16.mxu0 %v4410
    %5198 = vmatpush1.bf16.msra.mxu0 %v4409
    %5199 = vmatprep.subr.bf16.mxu0 %v4418
    %5200 = vmatpush1.bf16.msra.mxu0 %v4417
    %5201 = vmatprep.subr.bf16.mxu0 %v4426
    %5202 = vmatpush1.bf16.msra.mxu0 %v4425
    %5203 = vmatprep.mubr.bf16.mxu0 %v4036
    %5204 = vmatmul.mubr.bf16.gmra.mrb[0].mxu0 %v4035
    %v5205 = vpop.f32.mrb[0].mxu0
    %v5206 = vadd.f32 %v5165, %v5205
    %v5207 = vpop.f32.mrb[0].mxu0
    %v5208 = vadd.f32 %v5167, %v5207
    %v5209 = vpop.f32.mrb[0].mxu0
    %v5210 = vpop.f32.mrb[0].mxu0
    %5211 = vdwg.mxu0
    %5212 = vmatprep.subr.bf16.mxu0 %v4434
    %5213 = vmatpush1.bf16.msra.mxu0 %v4433
    %5214 = vmatprep.subr.bf16.mxu0 %v4442
    %5215 = vmatpush1.bf16.msra.mxu0 %v4441
    %5216 = vmatprep.subr.bf16.mxu0 %v4450
    %5217 = vmatpush1.bf16.msra.mxu0 %v4449
    %5218 = vmatprep.subr.bf16.mxu0 %v4458
    %5219 = vmatpush1.bf16.msra.mxu0 %v4457
    %5220 = vmatprep.subr.bf16.mxu0 %v4466
    %5221 = vmatpush1.bf16.msra.mxu0 %v4465
    %5222 = vmatprep.subr.bf16.mxu0 %v4474
    %5223 = vmatpush1.bf16.msra.mxu0 %v4473
    %5224 = vmatprep.subr.bf16.mxu0 %v4482
    %5225 = vmatpush1.bf16.msra.mxu0 %v4481
    %5226 = vmatprep.subr.bf16.mxu0 %v4490
    %5227 = vmatpush1.bf16.msra.mxu0 %v4489
    %5228 = vmatprep.subr.bf16.mxu0 %v4498
    %5229 = vmatpush1.bf16.msra.mxu0 %v4497
    %5230 = vmatprep.subr.bf16.mxu0 %v4506
    %5231 = vmatpush1.bf16.msra.mxu0 %v4505
    %5232 = vmatprep.subr.bf16.mxu0 %v4514
    %5233 = vmatpush1.bf16.msra.mxu0 %v4513
    %5234 = vmatprep.subr.bf16.mxu0 %v4522
    %5235 = vmatpush1.bf16.msra.mxu0 %v4521
    %5236 = vmatprep.subr.bf16.mxu0 %v4530
    %5237 = vmatpush1.bf16.msra.mxu0 %v4529
    %5238 = vmatprep.subr.bf16.mxu0 %v4538
    %5239 = vmatpush1.bf16.msra.mxu0 %v4537
    %5240 = vmatprep.subr.bf16.mxu0 %v4546
    %5241 = vmatpush1.bf16.msra.mxu0 %v4545
    %5242 = vmatprep.subr.bf16.mxu0 %v4554
    %5243 = vmatpush1.bf16.msra.mxu0 %v4553
    %5244 = vmatprep.mubr.bf16.mxu0 %v4038
    %5245 = vmatmul.mubr.bf16.gmra.mrb[0].mxu0 %v4037
    %v5246 = vpop.f32.mrb[0].mxu0
    %v5247 = vadd.f32 %v5206, %v5246
    %v5248 = vpop.f32.mrb[0].mxu0
    %v5249 = vadd.f32 %v5208, %v5248
    %v5250 = vpop.f32.mrb[0].mxu0
    %v5251 = vpop.f32.mrb[0].mxu0
    %5252 = vdwg.mxu0
    %v5253 = vmax.f32 %v4755, 0.0
    %v5254 = vmax.f32 %v4757, 0.0
    %v5255 = vmax.f32 %v4919, 0.0
    %v5256 = vmax.f32 %v4921, 0.0
    %v5257 = vmax.f32 %v5083, 0.0
    %v5258 = vmax.f32 %v5085, 0.0
    %v5259 = vmax.f32 %v5247, 0.0
    %v5260 = vmax.f32 %v5249, 0.0
    %v5261 = vpack.c.bf16 %v5253, %v5253
    %v5262 = vpack.c.bf16 %v5254, %v5254
    %v5263 = vpack.c.bf16 %v5255, %v5255
    %v5264 = vpack.c.bf16 %v5256, %v5256
    %v5265 = vpack.c.bf16 %v5257, %v5257
    %v5266 = vpack.c.bf16 %v5258, %v5258
    %v5267 = vpack.c.bf16 %v5259, %v5259
    %v5268 = vpack.c.bf16 %v5260, %v5260
    %v5269 = vld [vmem:[#allocation25] sm:$0xf]
    %v5270 = vld [vmem:[#allocation25 + $0x4] sm:$0xf]
    %v5271 = vld [vmem:[#allocation25 + $0x8] sm:$0xf]
    %v5272 = vld [vmem:[#allocation25 + $0xc] sm:$0xf]
    %v5273 = vld [vmem:[#allocation25 + $0x10] sm:$0xf]
    %v5274 = vld [vmem:[#allocation25 + $0x14] sm:$0xf]
    %v5275 = vld [vmem:[#allocation25 + $0x18] sm:$0xf]
    %v5276 = vld [vmem:[#allocation25 + $0x1c] sm:$0xf]
    %v5277 = vld [vmem:[#allocation25 + $0x20] sm:$0xf]
    %v5278 = vld [vmem:[#allocation25 + $0x24] sm:$0xf]
    %v5279 = vld [vmem:[#allocation25 + $0x28] sm:$0xf]
    %v5280 = vld [vmem:[#allocation25 + $0x2c] sm:$0xf]
    %v5281 = vld [vmem:[#allocation25 + $0x30] sm:$0xf]
    %v5282 = vld [vmem:[#allocation25 + $0x34] sm:$0xf]
    %v5283 = vld [vmem:[#allocation25 + $0x38] sm:$0xf]
    %v5284 = vld [vmem:[#allocation25 + $0x3c] sm:$0xf]
    %v5285 = vld [vmem:[#allocation25 + $0x40] sm:$0xf]
    %v5286 = vld [vmem:[#allocation25 + $0x44] sm:$0xf]
    %v5287 = vld [vmem:[#allocation25 + $0x48] sm:$0xf]
    %v5288 = vld [vmem:[#allocation25 + $0x4c] sm:$0xf]
    %v5289 = vld [vmem:[#allocation25 + $0x50] sm:$0xf]
    %v5290 = vld [vmem:[#allocation25 + $0x54] sm:$0xf]
    %v5291 = vld [vmem:[#allocation25 + $0x58] sm:$0xf]
    %v5292 = vld [vmem:[#allocation25 + $0x5c] sm:$0xf]
    %v5293 = vld [vmem:[#allocation25 + $0x60] sm:$0xf]
    %v5294 = vld [vmem:[#allocation25 + $0x64] sm:$0xf]
    %v5295 = vld [vmem:[#allocation25 + $0x68] sm:$0xf]
    %v5296 = vld [vmem:[#allocation25 + $0x6c] sm:$0xf]
    %v5297 = vld [vmem:[#allocation25 + $0x70] sm:$0xf]
    %v5298 = vld [vmem:[#allocation25 + $0x74] sm:$0xf]
    %v5299 = vld [vmem:[#allocation25 + $0x78] sm:$0xf]
    %v5300 = vld [vmem:[#allocation25 + $0x7c] sm:$0xf]
    %v5301 = vld [vmem:[#allocation25 + $0x80] sm:$0xf]
    %v5302 = vld [vmem:[#allocation25 + $0x84] sm:$0xf]
    %v5303 = vld [vmem:[#allocation25 + $0x88] sm:$0xf]
    %v5304 = vld [vmem:[#allocation25 + $0x8c] sm:$0xf]
    %v5305 = vld [vmem:[#allocation25 + $0x90] sm:$0xf]
    %v5306 = vld [vmem:[#allocation25 + $0x94] sm:$0xf]
    %v5307 = vld [vmem:[#allocation25 + $0x98] sm:$0xf]
    %v5308 = vld [vmem:[#allocation25 + $0x9c] sm:$0xf]
    %v5309 = vld [vmem:[#allocation25 + $0xa0] sm:$0xf]
    %v5310 = vld [vmem:[#allocation25 + $0xa4] sm:$0xf]
    %v5311 = vld [vmem:[#allocation25 + $0xa8] sm:$0xf]
    %v5312 = vld [vmem:[#allocation25 + $0xac] sm:$0xf]
    %v5313 = vld [vmem:[#allocation25 + $0xb0] sm:$0xf]
    %v5314 = vld [vmem:[#allocation25 + $0xb4] sm:$0xf]
    %v5315 = vld [vmem:[#allocation25 + $0xb8] sm:$0xf]
    %v5316 = vld [vmem:[#allocation25 + $0xbc] sm:$0xf]
    %v5317 = vld [vmem:[#allocation25 + $0xc0] sm:$0xf]
    %v5318 = vld [vmem:[#allocation25 + $0xc4] sm:$0xf]
    %v5319 = vld [vmem:[#allocation25 + $0xc8] sm:$0xf]
    %v5320 = vld [vmem:[#allocation25 + $0xcc] sm:$0xf]
    %v5321 = vld [vmem:[#allocation25 + $0xd0] sm:$0xf]
    %v5322 = vld [vmem:[#allocation25 + $0xd4] sm:$0xf]
    %v5323 = vld [vmem:[#allocation25 + $0xd8] sm:$0xf]
    %v5324 = vld [vmem:[#allocation25 + $0xdc] sm:$0xf]
    %v5325 = vld [vmem:[#allocation25 + $0xe0] sm:$0xf]
    %v5326 = vld [vmem:[#allocation25 + $0xe4] sm:$0xf]
    %v5327 = vld [vmem:[#allocation25 + $0xe8] sm:$0xf]
    %v5328 = vld [vmem:[#allocation25 + $0xec] sm:$0xf]
    %v5329 = vld [vmem:[#allocation25 + $0xf0] sm:$0xf]
    %v5330 = vld [vmem:[#allocation25 + $0xf4] sm:$0xf]
    %v5331 = vld [vmem:[#allocation25 + $0xf8] sm:$0xf]
    %v5332 = vld [vmem:[#allocation25 + $0xfc] sm:$0xf]
    %v5333 = vld [vmem:[#allocation26] sm:$0x1]
    %v5335 = vlaneseq
    %v5336 = vshrl.u32 %v5335, 7
    %v5337 = vsub.s32 0, %v5336
    %v5338 = vrot.slane %v5333, %v5337
    %v5404 = vunpack.c.l.b16 %v5269
    %v5405 = vunpack.c.l.b16 %v5270
    %v5406 = vunpack.c.l.b16 %v5271
    %v5407 = vunpack.c.l.b16 %v5272
    %v5408 = vunpack.c.l.b16 %v5273
    %v5409 = vunpack.c.l.b16 %v5274
    %v5410 = vunpack.c.l.b16 %v5275
    %v5411 = vunpack.c.l.b16 %v5276
    %v5412 = vunpack.c.l.b16 %v5277
    %v5413 = vunpack.c.l.b16 %v5278
    %v5414 = vunpack.c.l.b16 %v5279
    %v5415 = vunpack.c.l.b16 %v5280
    %v5416 = vunpack.c.l.b16 %v5281
    %v5417 = vunpack.c.l.b16 %v5282
    %v5418 = vunpack.c.l.b16 %v5283
    %v5419 = vunpack.c.l.b16 %v5284
    %v5420 = vunpack.c.l.b16 %v5285
    %v5421 = vunpack.c.l.b16 %v5286
    %v5422 = vunpack.c.l.b16 %v5287
    %v5423 = vunpack.c.l.b16 %v5288
    %v5424 = vunpack.c.l.b16 %v5289
    %v5425 = vunpack.c.l.b16 %v5290
    %v5426 = vunpack.c.l.b16 %v5291
    %v5427 = vunpack.c.l.b16 %v5292
    %v5428 = vunpack.c.l.b16 %v5293
    %v5429 = vunpack.c.l.b16 %v5294
    %v5430 = vunpack.c.l.b16 %v5295
    %v5431 = vunpack.c.l.b16 %v5296
    %v5432 = vunpack.c.l.b16 %v5297
    %v5433 = vunpack.c.l.b16 %v5298
    %v5434 = vunpack.c.l.b16 %v5299
    %v5435 = vunpack.c.l.b16 %v5300
    %v5436 = vunpack.c.l.b16 %v5301
    %v5437 = vunpack.c.l.b16 %v5302
    %v5438 = vunpack.c.l.b16 %v5303
    %v5439 = vunpack.c.l.b16 %v5304
    %v5440 = vunpack.c.l.b16 %v5305
    %v5441 = vunpack.c.l.b16 %v5306
    %v5442 = vunpack.c.l.b16 %v5307
    %v5443 = vunpack.c.l.b16 %v5308
    %v5444 = vunpack.c.l.b16 %v5309
    %v5445 = vunpack.c.l.b16 %v5310
    %v5446 = vunpack.c.l.b16 %v5311
    %v5447 = vunpack.c.l.b16 %v5312
    %v5448 = vunpack.c.l.b16 %v5313
    %v5449 = vunpack.c.l.b16 %v5314
    %v5450 = vunpack.c.l.b16 %v5315
    %v5451 = vunpack.c.l.b16 %v5316
    %v5452 = vunpack.c.l.b16 %v5317
    %v5453 = vunpack.c.l.b16 %v5318
    %v5454 = vunpack.c.l.b16 %v5319
    %v5455 = vunpack.c.l.b16 %v5320
    %v5456 = vunpack.c.l.b16 %v5321
    %v5457 = vunpack.c.l.b16 %v5322
    %v5458 = vunpack.c.l.b16 %v5323
    %v5459 = vunpack.c.l.b16 %v5324
    %v5460 = vunpack.c.l.b16 %v5325
    %v5461 = vunpack.c.l.b16 %v5326
    %v5462 = vunpack.c.l.b16 %v5327
    %v5463 = vunpack.c.l.b16 %v5328
    %v5464 = vunpack.c.l.b16 %v5329
    %v5465 = vunpack.c.l.b16 %v5330
    %v5466 = vunpack.c.l.b16 %v5331
    %v5467 = vunpack.c.l.b16 %v5332
    %v5468 = vpack.c.b16 %v5405, %v5404
    %v5469 = vpack.c.b16 %v5407, %v5406
    %v5470 = vpack.c.b16 %v5409, %v5408
    %v5471 = vpack.c.b16 %v5411, %v5410
    %v5472 = vpack.c.b16 %v5413, %v5412
    %v5473 = vpack.c.b16 %v5415, %v5414
    %v5474 = vpack.c.b16 %v5417, %v5416
    %v5475 = vpack.c.b16 %v5419, %v5418
    %v5476 = vpack.c.b16 %v5421, %v5420
    %v5477 = vpack.c.b16 %v5423, %v5422
    %v5478 = vpack.c.b16 %v5425, %v5424
    %v5479 = vpack.c.b16 %v5427, %v5426
    %v5480 = vpack.c.b16 %v5429, %v5428
    %v5481 = vpack.c.b16 %v5431, %v5430
    %v5482 = vpack.c.b16 %v5433, %v5432
    %v5483 = vpack.c.b16 %v5435, %v5434
    %v5484 = vpack.c.b16 %v5437, %v5436
    %v5485 = vpack.c.b16 %v5439, %v5438
    %v5486 = vpack.c.b16 %v5441, %v5440
    %v5487 = vpack.c.b16 %v5443, %v5442
    %v5488 = vpack.c.b16 %v5445, %v5444
    %v5489 = vpack.c.b16 %v5447, %v5446
    %v5490 = vpack.c.b16 %v5449, %v5448
    %v5491 = vpack.c.b16 %v5451, %v5450
    %v5492 = vpack.c.b16 %v5453, %v5452
    %v5493 = vpack.c.b16 %v5455, %v5454
    %v5494 = vpack.c.b16 %v5457, %v5456
    %v5495 = vpack.c.b16 %v5459, %v5458
    %v5496 = vpack.c.b16 %v5461, %v5460
    %v5497 = vpack.c.b16 %v5463, %v5462
    %v5498 = vpack.c.b16 %v5465, %v5464
    %v5499 = vpack.c.b16 %v5467, %v5466
    %5532 = vmatprep.subr.bf16.mxu0 0
    %5533 = vmatpush1.bf16.msra.mxu0 %v5468
    %5534 = vmatprep.subr.bf16.mxu0 0
    %5535 = vmatpush1.bf16.msra.mxu0 %v5469
    %5536 = vmatprep.subr.bf16.mxu0 0
    %5537 = vmatpush1.bf16.msra.mxu0 %v5470
    %5538 = vmatprep.subr.bf16.mxu0 0
    %5539 = vmatpush1.bf16.msra.mxu0 %v5471
    %5540 = vmatprep.subr.bf16.mxu0 0
    %5541 = vmatpush1.bf16.msra.mxu0 %v5472
    %5542 = vmatprep.subr.bf16.mxu0 0
    %5543 = vmatpush1.bf16.msra.mxu0 %v5473
    %5544 = vmatprep.subr.bf16.mxu0 0
    %5545 = vmatpush1.bf16.msra.mxu0 %v5474
    %5546 = vmatprep.subr.bf16.mxu0 0
    %5547 = vmatpush1.bf16.msra.mxu0 %v5475
    %5548 = vmatprep.subr.bf16.mxu0 0
    %5549 = vmatpush1.bf16.msra.mxu0 %v5476
    %5550 = vmatprep.subr.bf16.mxu0 0
    %5551 = vmatpush1.bf16.msra.mxu0 %v5477
    %5552 = vmatprep.subr.bf16.mxu0 0
    %5553 = vmatpush1.bf16.msra.mxu0 %v5478
    %5554 = vmatprep.subr.bf16.mxu0 0
    %5555 = vmatpush1.bf16.msra.mxu0 %v5479
    %5556 = vmatprep.subr.bf16.mxu0 0
    %5557 = vmatpush1.bf16.msra.mxu0 %v5480
    %5558 = vmatprep.subr.bf16.mxu0 0
    %5559 = vmatpush1.bf16.msra.mxu0 %v5481
    %5560 = vmatprep.subr.bf16.mxu0 0
    %5561 = vmatpush1.bf16.msra.mxu0 %v5482
    %5562 = vmatprep.subr.bf16.mxu0 0
    %5563 = vmatpush1.bf16.msra.mxu0 %v5483
    %5564 = vmatprep.mubr.bf16.mxu0 %v5262
    %5565 = vmatmul.mubr.bf16.gmra.mrb[0].mxu0 %v5261
    %v5566 = vpop.f32.mrb[0].mxu0
    %v5567 = vadd.f32 %v5338, %v5566
    %v5568 = vpop.f32.mrb[0].mxu0
    %v5569 = vpop.f32.mrb[0].mxu0
    %v5570 = vpop.f32.mrb[0].mxu0
    %5571 = vdwg.mxu0
    %5572 = vmatprep.subr.bf16.mxu0 0
    %5573 = vmatpush1.bf16.msra.mxu0 %v5484
    %5574 = vmatprep.subr.bf16.mxu0 0
    %5575 = vmatpush1.bf16.msra.mxu0 %v5485
    %5576 = vmatprep.subr.bf16.mxu0 0
    %5577 = vmatpush1.bf16.msra.mxu0 %v5486
    %5578 = vmatprep.subr.bf16.mxu0 0
    %5579 = vmatpush1.bf16.msra.mxu0 %v5487
    %5580 = vmatprep.subr.bf16.mxu0 0
    %5581 = vmatpush1.bf16.msra.mxu0 %v5488
    %5582 = vmatprep.subr.bf16.mxu0 0
    %5583 = vmatpush1.bf16.msra.mxu0 %v5489
    %5584 = vmatprep.subr.bf16.mxu0 0
    %5585 = vmatpush1.bf16.msra.mxu0 %v5490
    %5586 = vmatprep.subr.bf16.mxu0 0
    %5587 = vmatpush1.bf16.msra.mxu0 %v5491
    %5588 = vmatprep.subr.bf16.mxu0 0
    %5589 = vmatpush1.bf16.msra.mxu0 %v5492
    %5590 = vmatprep.subr.bf16.mxu0 0
    %5591 = vmatpush1.bf16.msra.mxu0 %v5493
    %5592 = vmatprep.subr.bf16.mxu0 0
    %5593 = vmatpush1.bf16.msra.mxu0 %v5494
    %5594 = vmatprep.subr.bf16.mxu0 0
    %5595 = vmatpush1.bf16.msra.mxu0 %v5495
    %5596 = vmatprep.subr.bf16.mxu0 0
    %5597 = vmatpush1.bf16.msra.mxu0 %v5496
    %5598 = vmatprep.subr.bf16.mxu0 0
    %5599 = vmatpush1.bf16.msra.mxu0 %v5497
    %5600 = vmatprep.subr.bf16.mxu0 0
    %5601 = vmatpush1.bf16.msra.mxu0 %v5498
    %5602 = vmatprep.subr.bf16.mxu0 0
    %5603 = vmatpush1.bf16.msra.mxu0 %v5499
    %5604 = vmatprep.mubr.bf16.mxu0 %v5264
    %5605 = vmatmul.mubr.bf16.gmra.mrb[0].mxu0 %v5263
    %v5606 = vpop.f32.mrb[0].mxu0
    %v5607 = vadd.f32 %v5567, %v5606
    %v5608 = vpop.f32.mrb[0].mxu0
    %v5609 = vpop.f32.mrb[0].mxu0
    %v5610 = vpop.f32.mrb[0].mxu0
    %5611 = vdwg.mxu0
    %v5612 = vmax.f32 %v5607, 0.0
    %v5613 = vld [vmem:[#allocation28] sm:$0xf]
    %v5614 = vld [vmem:[#allocation28 + $0x4] sm:$0xf]
    %v5615 = vld [vmem:[#allocation28 + $0x8] sm:$0xf]
    %v5616 = vld [vmem:[#allocation28 + $0xc] sm:$0xf]
    %v5617 = vld [vmem:[#allocation28 + $0x10] sm:$0xf]
    %v5618 = vld [vmem:[#allocation28 + $0x14] sm:$0xf]
    %v5619 = vld [vmem:[#allocation28 + $0x18] sm:$0xf]
    %v5620 = vld [vmem:[#allocation28 + $0x1c] sm:$0xf]
    %v5621 = vld [vmem:[#allocation28 + $0x20] sm:$0xf]
    %v5622 = vld [vmem:[#allocation28 + $0x24] sm:$0xf]
    %v5623 = vld [vmem:[#allocation28 + $0x28] sm:$0xf]
    %v5624 = vld [vmem:[#allocation28 + $0x2c] sm:$0xf]
    %v5625 = vld [vmem:[#allocation28 + $0x30] sm:$0xf]
    %v5626 = vld [vmem:[#allocation28 + $0x34] sm:$0xf]
    %v5627 = vld [vmem:[#allocation28 + $0x38] sm:$0xf]
    %v5628 = vld [vmem:[#allocation28 + $0x3c] sm:$0xf]
    %v5629 = vld [vmem:[#allocation28 + $0x40] sm:$0xf]
    %v5630 = vld [vmem:[#allocation28 + $0x44] sm:$0xf]
    %v5631 = vld [vmem:[#allocation28 + $0x48] sm:$0xf]
    %v5632 = vld [vmem:[#allocation28 + $0x4c] sm:$0xf]
    %v5633 = vld [vmem:[#allocation28 + $0x50] sm:$0xf]
    %v5634 = vld [vmem:[#allocation28 + $0x54] sm:$0xf]
    %v5635 = vld [vmem:[#allocation28 + $0x58] sm:$0xf]
    %v5636 = vld [vmem:[#allocation28 + $0x5c] sm:$0xf]
    %v5637 = vld [vmem:[#allocation28 + $0x60] sm:$0xf]
    %v5638 = vld [vmem:[#allocation28 + $0x64] sm:$0xf]
    %v5639 = vld [vmem:[#allocation28 + $0x68] sm:$0xf]
    %v5640 = vld [vmem:[#allocation28 + $0x6c] sm:$0xf]
    %v5641 = vld [vmem:[#allocation28 + $0x70] sm:$0xf]
    %v5642 = vld [vmem:[#allocation28 + $0x74] sm:$0xf]
    %v5643 = vld [vmem:[#allocation28 + $0x78] sm:$0xf]
    %v5644 = vld [vmem:[#allocation28 + $0x7c] sm:$0xf]
    %v5645 = vld [vmem:[#allocation28 + $0x80] sm:$0xf]
    %v5646 = vld [vmem:[#allocation28 + $0x84] sm:$0xf]
    %v5647 = vld [vmem:[#allocation28 + $0x88] sm:$0xf]
    %v5648 = vld [vmem:[#allocation28 + $0x8c] sm:$0xf]
    %v5649 = vld [vmem:[#allocation28 + $0x90] sm:$0xf]
    %v5650 = vld [vmem:[#allocation28 + $0x94] sm:$0xf]
    %v5651 = vld [vmem:[#allocation28 + $0x98] sm:$0xf]
    %v5652 = vld [vmem:[#allocation28 + $0x9c] sm:$0xf]
    %v5653 = vld [vmem:[#allocation28 + $0xa0] sm:$0xf]
    %v5654 = vld [vmem:[#allocation28 + $0xa4] sm:$0xf]
    %v5655 = vld [vmem:[#allocation28 + $0xa8] sm:$0xf]
    %v5656 = vld [vmem:[#allocation28 + $0xac] sm:$0xf]
    %v5657 = vld [vmem:[#allocation28 + $0xb0] sm:$0xf]
    %v5658 = vld [vmem:[#allocation28 + $0xb4] sm:$0xf]
    %v5659 = vld [vmem:[#allocation28 + $0xb8] sm:$0xf]
    %v5660 = vld [vmem:[#allocation28 + $0xbc] sm:$0xf]
    %v5661 = vld [vmem:[#allocation28 + $0xc0] sm:$0xf]
    %v5662 = vld [vmem:[#allocation28 + $0xc4] sm:$0xf]
    %v5663 = vld [vmem:[#allocation28 + $0xc8] sm:$0xf]
    %v5664 = vld [vmem:[#allocation28 + $0xcc] sm:$0xf]
    %v5665 = vld [vmem:[#allocation28 + $0xd0] sm:$0xf]
    %v5666 = vld [vmem:[#allocation28 + $0xd4] sm:$0xf]
    %v5667 = vld [vmem:[#allocation28 + $0xd8] sm:$0xf]
    %v5668 = vld [vmem:[#allocation28 + $0xdc] sm:$0xf]
    %v5669 = vld [vmem:[#allocation28 + $0xe0] sm:$0xf]
    %v5670 = vld [vmem:[#allocation28 + $0xe4] sm:$0xf]
    %v5671 = vld [vmem:[#allocation28 + $0xe8] sm:$0xf]
    %v5672 = vld [vmem:[#allocation28 + $0xec] sm:$0xf]
    %v5673 = vld [vmem:[#allocation28 + $0xf0] sm:$0xf]
    %v5674 = vld [vmem:[#allocation28 + $0xf4] sm:$0xf]
    %v5675 = vld [vmem:[#allocation28 + $0xf8] sm:$0xf]
    %v5676 = vld [vmem:[#allocation28 + $0xfc] sm:$0xf]
    %v5677 = vld [vmem:[#allocation29] sm:$0x1]
    %v5679 = vlaneseq
    %v5680 = vshrl.u32 %v5679, 7
    %v5681 = vsub.s32 0, %v5680
    %v5682 = vrot.slane %v5677, %v5681
    %v5748 = vunpack.c.l.b16 %v5613
    %v5749 = vunpack.c.l.b16 %v5614
    %v5750 = vunpack.c.l.b16 %v5615
    %v5751 = vunpack.c.l.b16 %v5616
    %v5752 = vunpack.c.l.b16 %v5617
    %v5753 = vunpack.c.l.b16 %v5618
    %v5754 = vunpack.c.l.b16 %v5619
    %v5755 = vunpack.c.l.b16 %v5620
    %v5756 = vunpack.c.l.b16 %v5621
    %v5757 = vunpack.c.l.b16 %v5622
    %v5758 = vunpack.c.l.b16 %v5623
    %v5759 = vunpack.c.l.b16 %v5624
    %v5760 = vunpack.c.l.b16 %v5625
    %v5761 = vunpack.c.l.b16 %v5626
    %v5762 = vunpack.c.l.b16 %v5627
    %v5763 = vunpack.c.l.b16 %v5628
    %v5764 = vunpack.c.l.b16 %v5629
    %v5765 = vunpack.c.l.b16 %v5630
    %v5766 = vunpack.c.l.b16 %v5631
    %v5767 = vunpack.c.l.b16 %v5632
    %v5768 = vunpack.c.l.b16 %v5633
    %v5769 = vunpack.c.l.b16 %v5634
    %v5770 = vunpack.c.l.b16 %v5635
    %v5771 = vunpack.c.l.b16 %v5636
    %v5772 = vunpack.c.l.b16 %v5637
    %v5773 = vunpack.c.l.b16 %v5638
    %v5774 = vunpack.c.l.b16 %v5639
    %v5775 = vunpack.c.l.b16 %v5640
    %v5776 = vunpack.c.l.b16 %v5641
    %v5777 = vunpack.c.l.b16 %v5642
    %v5778 = vunpack.c.l.b16 %v5643
    %v5779 = vunpack.c.l.b16 %v5644
    %v5780 = vunpack.c.l.b16 %v5645
    %v5781 = vunpack.c.l.b16 %v5646
    %v5782 = vunpack.c.l.b16 %v5647
    %v5783 = vunpack.c.l.b16 %v5648
    %v5784 = vunpack.c.l.b16 %v5649
    %v5785 = vunpack.c.l.b16 %v5650
    %v5786 = vunpack.c.l.b16 %v5651
    %v5787 = vunpack.c.l.b16 %v5652
    %v5788 = vunpack.c.l.b16 %v5653
    %v5789 = vunpack.c.l.b16 %v5654
    %v5790 = vunpack.c.l.b16 %v5655
    %v5791 = vunpack.c.l.b16 %v5656
    %v5792 = vunpack.c.l.b16 %v5657
    %v5793 = vunpack.c.l.b16 %v5658
    %v5794 = vunpack.c.l.b16 %v5659
    %v5795 = vunpack.c.l.b16 %v5660
    %v5796 = vunpack.c.l.b16 %v5661
    %v5797 = vunpack.c.l.b16 %v5662
    %v5798 = vunpack.c.l.b16 %v5663
    %v5799 = vunpack.c.l.b16 %v5664
    %v5800 = vunpack.c.l.b16 %v5665
    %v5801 = vunpack.c.l.b16 %v5666
    %v5802 = vunpack.c.l.b16 %v5667
    %v5803 = vunpack.c.l.b16 %v5668
    %v5804 = vunpack.c.l.b16 %v5669
    %v5805 = vunpack.c.l.b16 %v5670
    %v5806 = vunpack.c.l.b16 %v5671
    %v5807 = vunpack.c.l.b16 %v5672
    %v5808 = vunpack.c.l.b16 %v5673
    %v5809 = vunpack.c.l.b16 %v5674
    %v5810 = vunpack.c.l.b16 %v5675
    %v5811 = vunpack.c.l.b16 %v5676
    %v5812 = vpack.c.b16 %v5749, %v5748
    %v5813 = vpack.c.b16 %v5751, %v5750
    %v5814 = vpack.c.b16 %v5753, %v5752
    %v5815 = vpack.c.b16 %v5755, %v5754
    %v5816 = vpack.c.b16 %v5757, %v5756
    %v5817 = vpack.c.b16 %v5759, %v5758
    %v5818 = vpack.c.b16 %v5761, %v5760
    %v5819 = vpack.c.b16 %v5763, %v5762
    %v5820 = vpack.c.b16 %v5765, %v5764
    %v5821 = vpack.c.b16 %v5767, %v5766
    %v5822 = vpack.c.b16 %v5769, %v5768
    %v5823 = vpack.c.b16 %v5771, %v5770
    %v5824 = vpack.c.b16 %v5773, %v5772
    %v5825 = vpack.c.b16 %v5775, %v5774
    %v5826 = vpack.c.b16 %v5777, %v5776
    %v5827 = vpack.c.b16 %v5779, %v5778
    %v5828 = vpack.c.b16 %v5781, %v5780
    %v5829 = vpack.c.b16 %v5783, %v5782
    %v5830 = vpack.c.b16 %v5785, %v5784
    %v5831 = vpack.c.b16 %v5787, %v5786
    %v5832 = vpack.c.b16 %v5789, %v5788
    %v5833 = vpack.c.b16 %v5791, %v5790
    %v5834 = vpack.c.b16 %v5793, %v5792
    %v5835 = vpack.c.b16 %v5795, %v5794
    %v5836 = vpack.c.b16 %v5797, %v5796
    %v5837 = vpack.c.b16 %v5799, %v5798
    %v5838 = vpack.c.b16 %v5801, %v5800
    %v5839 = vpack.c.b16 %v5803, %v5802
    %v5840 = vpack.c.b16 %v5805, %v5804
    %v5841 = vpack.c.b16 %v5807, %v5806
    %v5842 = vpack.c.b16 %v5809, %v5808
    %v5843 = vpack.c.b16 %v5811, %v5810
    %5876 = vmatprep.subr.bf16.mxu0 0
    %5877 = vmatpush1.bf16.msra.mxu0 %v5812
    %5878 = vmatprep.subr.bf16.mxu0 0
    %5879 = vmatpush1.bf16.msra.mxu0 %v5813
    %5880 = vmatprep.subr.bf16.mxu0 0
    %5881 = vmatpush1.bf16.msra.mxu0 %v5814
    %5882 = vmatprep.subr.bf16.mxu0 0
    %5883 = vmatpush1.bf16.msra.mxu0 %v5815
    %5884 = vmatprep.subr.bf16.mxu0 0
    %5885 = vmatpush1.bf16.msra.mxu0 %v5816
    %5886 = vmatprep.subr.bf16.mxu0 0
    %5887 = vmatpush1.bf16.msra.mxu0 %v5817
    %5888 = vmatprep.subr.bf16.mxu0 0
    %5889 = vmatpush1.bf16.msra.mxu0 %v5818
    %5890 = vmatprep.subr.bf16.mxu0 0
    %5891 = vmatpush1.bf16.msra.mxu0 %v5819
    %5892 = vmatprep.subr.bf16.mxu0 0
    %5893 = vmatpush1.bf16.msra.mxu0 %v5820
    %5894 = vmatprep.subr.bf16.mxu0 0
    %5895 = vmatpush1.bf16.msra.mxu0 %v5821
    %5896 = vmatprep.subr.bf16.mxu0 0
    %5897 = vmatpush1.bf16.msra.mxu0 %v5822
    %5898 = vmatprep.subr.bf16.mxu0 0
    %5899 = vmatpush1.bf16.msra.mxu0 %v5823
    %5900 = vmatprep.subr.bf16.mxu0 0
    %5901 = vmatpush1.bf16.msra.mxu0 %v5824
    %5902 = vmatprep.subr.bf16.mxu0 0
    %5903 = vmatpush1.bf16.msra.mxu0 %v5825
    %5904 = vmatprep.subr.bf16.mxu0 0
    %5905 = vmatpush1.bf16.msra.mxu0 %v5826
    %5906 = vmatprep.subr.bf16.mxu0 0
    %5907 = vmatpush1.bf16.msra.mxu0 %v5827
    %5908 = vmatprep.mubr.bf16.mxu0 %v5266
    %5909 = vmatmul.mubr.bf16.gmra.mrb[0].mxu0 %v5265
    %v5910 = vpop.f32.mrb[0].mxu0
    %v5911 = vadd.f32 %v5682, %v5910
    %v5912 = vpop.f32.mrb[0].mxu0
    %v5913 = vpop.f32.mrb[0].mxu0
    %v5914 = vpop.f32.mrb[0].mxu0
    %5915 = vdwg.mxu0
    %5916 = vmatprep.subr.bf16.mxu0 0
    %5917 = vmatpush1.bf16.msra.mxu0 %v5828
    %5918 = vmatprep.subr.bf16.mxu0 0
    %5919 = vmatpush1.bf16.msra.mxu0 %v5829
    %5920 = vmatprep.subr.bf16.mxu0 0
    %5921 = vmatpush1.bf16.msra.mxu0 %v5830
    %5922 = vmatprep.subr.bf16.mxu0 0
    %5923 = vmatpush1.bf16.msra.mxu0 %v5831
    %5924 = vmatprep.subr.bf16.mxu0 0
    %5925 = vmatpush1.bf16.msra.mxu0 %v5832
    %5926 = vmatprep.subr.bf16.mxu0 0
    %5927 = vmatpush1.bf16.msra.mxu0 %v5833
    %5928 = vmatprep.subr.bf16.mxu0 0
    %5929 = vmatpush1.bf16.msra.mxu0 %v5834
    %5930 = vmatprep.subr.bf16.mxu0 0
    %5931 = vmatpush1.bf16.msra.mxu0 %v5835
    %5932 = vmatprep.subr.bf16.mxu0 0
    %5933 = vmatpush1.bf16.msra.mxu0 %v5836
    %5934 = vmatprep.subr.bf16.mxu0 0
    %5935 = vmatpush1.bf16.msra.mxu0 %v5837
    %5936 = vmatprep.subr.bf16.mxu0 0
    %5937 = vmatpush1.bf16.msra.mxu0 %v5838
    %5938 = vmatprep.subr.bf16.mxu0 0
    %5939 = vmatpush1.bf16.msra.mxu0 %v5839
    %5940 = vmatprep.subr.bf16.mxu0 0
    %5941 = vmatpush1.bf16.msra.mxu0 %v5840
    %5942 = vmatprep.subr.bf16.mxu0 0
    %5943 = vmatpush1.bf16.msra.mxu0 %v5841
    %5944 = vmatprep.subr.bf16.mxu0 0
    %5945 = vmatpush1.bf16.msra.mxu0 %v5842
    %5946 = vmatprep.subr.bf16.mxu0 0
    %5947 = vmatpush1.bf16.msra.mxu0 %v5843
    %5948 = vmatprep.mubr.bf16.mxu0 %v5268
    %5949 = vmatmul.mubr.bf16.gmra.mrb[0].mxu0 %v5267
    %v5950 = vpop.f32.mrb[0].mxu0
    %v5951 = vadd.f32 %v5911, %v5950
    %v5952 = vpop.f32.mrb[0].mxu0
    %v5953 = vpop.f32.mrb[0].mxu0
    %v5954 = vpop.f32.mrb[0].mxu0
    %5955 = vdwg.mxu0
    %v5956 = vmax.f32 %v5951, 0.0
    %v5957 = vpack.c.bf16 %v5612, %v5612
    %v5958 = vpack.c.bf16 %v5956, %v5956
    %v5959 = vld [vmem:[%s19] sm:$0xf]
    %v5960 = vld [vmem:[%s19 + $0x4] sm:$0xf]
    %v5961 = vld [vmem:[%s19 + $0x8] sm:$0xf]
    %v5962 = vld [vmem:[%s19 + $0xc] sm:$0xf]
    %v5963 = vld [vmem:[%s19 + $0x10] sm:$0xf]
    %v5964 = vld [vmem:[%s19 + $0x14] sm:$0xf]
    %v5965 = vld [vmem:[%s19 + $0x18] sm:$0xf]
    %v5966 = vld [vmem:[%s19 + $0x1c] sm:$0xf]
    %v5967 = vld [vmem:[%s19 + $0x20] sm:$0xf]
    %v5968 = vld [vmem:[%s19 + $0x24] sm:$0xf]
    %v5969 = vld [vmem:[%s19 + $0x28] sm:$0xf]
    %v5970 = vld [vmem:[%s19 + $0x2c] sm:$0xf]
    %v5971 = vld [vmem:[%s19 + $0x30] sm:$0xf]
    %v5972 = vld [vmem:[%s19 + $0x34] sm:$0xf]
    %v5973 = vld [vmem:[%s19 + $0x38] sm:$0xf]
    %v5974 = vld [vmem:[%s19 + $0x3c] sm:$0xf]
    %v5975 = vld [vmem:[%s19 + $0x40] sm:$0xf]
    %v5976 = vld [vmem:[%s19 + $0x44] sm:$0xf]
    %v5977 = vld [vmem:[%s19 + $0x48] sm:$0xf]
    %v5978 = vld [vmem:[%s19 + $0x4c] sm:$0xf]
    %v5979 = vld [vmem:[%s19 + $0x50] sm:$0xf]
    %v5980 = vld [vmem:[%s19 + $0x54] sm:$0xf]
    %v5981 = vld [vmem:[%s19 + $0x58] sm:$0xf]
    %v5982 = vld [vmem:[%s19 + $0x5c] sm:$0xf]
    %v5983 = vld [vmem:[%s19 + $0x60] sm:$0xf]
    %v5984 = vld [vmem:[%s19 + $0x64] sm:$0xf]
    %v5985 = vld [vmem:[%s19 + $0x68] sm:$0xf]
    %v5986 = vld [vmem:[%s19 + $0x6c] sm:$0xf]
    %v5987 = vld [vmem:[%s19 + $0x70] sm:$0xf]
    %v5988 = vld [vmem:[%s19 + $0x74] sm:$0xf]
    %v5989 = vld [vmem:[%s19 + $0x78] sm:$0xf]
    %v5990 = vld [vmem:[%s19 + $0x7c] sm:$0xf]
    %v5991 = vld [vmem:[#allocation31] sm:$0x1]
    %v5993 = vlaneseq
    %v5994 = vshrl.u32 %v5993, 7
    %v5995 = vsub.s32 0, %v5994
    %v5996 = vrot.slane %v5991, %v5995
    %v6030 = vunpack.c.l.b16 %v5959
    %v6031 = vunpack.c.l.b16 %v5960
    %v6032 = vunpack.c.l.b16 %v5961
    %v6033 = vunpack.c.l.b16 %v5962
    %v6034 = vunpack.c.l.b16 %v5963
    %v6035 = vunpack.c.l.b16 %v5964
    %v6036 = vunpack.c.l.b16 %v5965
    %v6037 = vunpack.c.l.b16 %v5966
    %v6038 = vunpack.c.l.b16 %v5967
    %v6039 = vunpack.c.l.b16 %v5968
    %v6040 = vunpack.c.l.b16 %v5969
    %v6041 = vunpack.c.l.b16 %v5970
    %v6042 = vunpack.c.l.b16 %v5971
    %v6043 = vunpack.c.l.b16 %v5972
    %v6044 = vunpack.c.l.b16 %v5973
    %v6045 = vunpack.c.l.b16 %v5974
    %v6046 = vunpack.c.l.b16 %v5975
    %v6047 = vunpack.c.l.b16 %v5976
    %v6048 = vunpack.c.l.b16 %v5977
    %v6049 = vunpack.c.l.b16 %v5978
    %v6050 = vunpack.c.l.b16 %v5979
    %v6051 = vunpack.c.l.b16 %v5980
    %v6052 = vunpack.c.l.b16 %v5981
    %v6053 = vunpack.c.l.b16 %v5982
    %v6054 = vunpack.c.l.b16 %v5983
    %v6055 = vunpack.c.l.b16 %v5984
    %v6056 = vunpack.c.l.b16 %v5985
    %v6057 = vunpack.c.l.b16 %v5986
    %v6058 = vunpack.c.l.b16 %v5987
    %v6059 = vunpack.c.l.b16 %v5988
    %v6060 = vunpack.c.l.b16 %v5989
    %v6061 = vunpack.c.l.b16 %v5990
    %v6062 = vpack.c.b16 %v6031, %v6030
    %v6063 = vpack.c.b16 %v6033, %v6032
    %v6064 = vpack.c.b16 %v6035, %v6034
    %v6065 = vpack.c.b16 %v6037, %v6036
    %v6066 = vpack.c.b16 %v6039, %v6038
    %v6067 = vpack.c.b16 %v6041, %v6040
    %v6068 = vpack.c.b16 %v6043, %v6042
    %v6069 = vpack.c.b16 %v6045, %v6044
    %v6070 = vpack.c.b16 %v6047, %v6046
    %v6071 = vpack.c.b16 %v6049, %v6048
    %v6072 = vpack.c.b16 %v6051, %v6050
    %v6073 = vpack.c.b16 %v6053, %v6052
    %v6074 = vpack.c.b16 %v6055, %v6054
    %v6075 = vpack.c.b16 %v6057, %v6056
    %v6076 = vpack.c.b16 %v6059, %v6058
    %v6077 = vpack.c.b16 %v6061, %v6060
    %6094 = vmatprep.subr.bf16.mxu0 0
    %6095 = vmatpush1.bf16.msra.mxu0 %v6062
    %6096 = vmatprep.subr.bf16.mxu0 0
    %6097 = vmatpush1.bf16.msra.mxu0 %v6063
    %6098 = vmatprep.subr.bf16.mxu0 0
    %6099 = vmatpush1.bf16.msra.mxu0 %v6064
    %6100 = vmatprep.subr.bf16.mxu0 0
    %6101 = vmatpush1.bf16.msra.mxu0 %v6065
    %6102 = vmatprep.subr.bf16.mxu0 0
    %6103 = vmatpush1.bf16.msra.mxu0 %v6066
    %6104 = vmatprep.subr.bf16.mxu0 0
    %6105 = vmatpush1.bf16.msra.mxu0 %v6067
    %6106 = vmatprep.subr.bf16.mxu0 0
    %6107 = vmatpush1.bf16.msra.mxu0 %v6068
    %6108 = vmatprep.subr.bf16.mxu0 0
    %6109 = vmatpush1.bf16.msra.mxu0 %v6069
    %6110 = vmatprep.subr.bf16.mxu0 0
    %6111 = vmatpush1.bf16.msra.mxu0 %v6070
    %6112 = vmatprep.subr.bf16.mxu0 0
    %6113 = vmatpush1.bf16.msra.mxu0 %v6071
    %6114 = vmatprep.subr.bf16.mxu0 0
    %6115 = vmatpush1.bf16.msra.mxu0 %v6072
    %6116 = vmatprep.subr.bf16.mxu0 0
    %6117 = vmatpush1.bf16.msra.mxu0 %v6073
    %6118 = vmatprep.subr.bf16.mxu0 0
    %6119 = vmatpush1.bf16.msra.mxu0 %v6074
    %6120 = vmatprep.subr.bf16.mxu0 0
    %6121 = vmatpush1.bf16.msra.mxu0 %v6075
    %6122 = vmatprep.subr.bf16.mxu0 0
    %6123 = vmatpush1.bf16.msra.mxu0 %v6076
    %6124 = vmatprep.subr.bf16.mxu0 0
    %6125 = vmatpush1.bf16.msra.mxu0 %v6077
    %6126 = vmatprep.mubr.bf16.mxu0 %v5958
    %6127 = vmatmul.mubr.bf16.gmra.mrb[0].mxu0 %v5957
    %v6128 = vpop.f32.mrb[0].mxu0
    %v6129 = vadd.f32 %v5996, %v6128
    %v6130 = vpop.f32.mrb[0].mxu0
    %v6131 = vpop.f32.mrb[0].mxu0
    %v6132 = vpop.f32.mrb[0].mxu0
    %6133 = vdwg.mxu0
    %vm6134 = vcmask 279552
    %6135 = vst.msk [vmem:[#allocation32] sm:$0x3] %vm6134, %v6129
    // Predicated region
    $region146: #{tpu_custom_call.1} parent=1 // pred_check
      _
    $region147: #{tpu_custom_call.1} parent=1 // pred_check_branch
      %6137 = sbr.rel (0) target = $region149
    $region148: #{tpu_custom_call.1} parent=1 // pred_region
      %s6139 = ssub.s32 32, 32
      %6140 = vsyncadd [#allocation7], %s6139
      %s6142 = sshll.u32 [#allocation32], 4
      %s6143 = int_to_ptr.vmem [resolvable:$true] %s6142
      %6145 = dma.vmem_to_hbm [thread:$0]  %s6143, 32, %s21, [#allocation7]
    $region149: #{tpu_custom_call.1} parent=1 // pred_fallthru
      _
    // Predicated region
    $region150: #{tpu_custom_call.1} parent=1 // pred_check
      _
    $region151: #{tpu_custom_call.1} parent=1 // pred_check_branch
      %6147 = sbr.rel (0) target = $region153
    $region152: #{tpu_custom_call.1} parent=1 // pred_region
      %6148 = dma.done [#allocation7], 32
    $region153: #{tpu_custom_call.1} parent=1 // pred_fallthru
      _
    %6149 = vsyncpa [#allocation6], 1
    %6150 = vsyncpa [#allocation9], 1
    %6151 = vsyncpa [#allocation12], 1
    %6152 = vsyncpa [#allocation15], 1
    %6153 = vsyncpa [#allocation18], 1
    %6154 = vsyncpa [#allocation21], 1
    %6155 = vsyncpa [#allocation24], 1
    %6156 = vsyncpa [#allocation27], 1
    %6157 = vsyncpa [#allocation30], 1
    %6158 = vsyncpa [#allocation7], 1
  %6159 = vsyncmov [#allocation4]
  %s6160 = vpop.sfrf %6159
  %p6161 = scmp.eq.s32.totalorder %s6160, 0
  %p6162 = pneg %p6161
  %6164 = shalt.err (%p6162)
  %s6165 = scalar_lea.sflag [#allocation4], 1
  %6166 = vsyncmov %s6165
  %s6167 = vpop.sfrf %6166
  %p6168 = scmp.eq.s32.totalorder %s6167, 0
  %p6169 = pneg %p6168
  %6171 = shalt.err (%p6169)

</llo_original>
